<compile_context>
chip_gen: v7x
topology: tpu7x:2x2x1
jax: 0.10.0
libtpu: 0.0.40
codegen_flags: <defaults>
</compile_context>

<pallas_src>
import numpy as np
import jax
import jax.numpy as jnp
from jax.experimental import pallas as pl
from jax.experimental.pallas import tpu as pltpu  # noqa: F401  (TPU backend assumed)

# ----------------------------- configuration -------------------------------
B, S = 2, 8                  # batch, study_length
H, E = 32, 32                # hidden_size, embedding_length (x + PE must be valid)
N_LAYERS = 2                 # n_layers
N_HEADS = 4                  # attn_heads (hidden divisible by heads)
D_HEAD = H // N_HEADS
D_FF = 4 * H                 # feed_forward_hidden = hidden_size * 4
T = B * S                    # total token count
NHB = N_HEADS * B            # combined (head, batch) group count
EPS = 1e-6
NEG_INF = np.float32(-1e9)


# ----------------------------- kernel helpers ------------------------------
def _layer_norm(x, g, b):
    # BERT-pytorch LayerNorm: g * (x - mean) / (std + eps) + b, unbiased std.
    mu = jnp.mean(x, axis=-1, keepdims=True)
    d = x - mu
    var = jnp.sum(d * d, axis=-1, keepdims=True) * np.float32(1.0 / (x.shape[-1] - 1))
    inv = pl.reciprocal(jnp.sqrt(var) + EPS, approx=True)   # EUP, not VPU divide
    return g * (d * inv) + b


def _gelu(x):
    # BERT-pytorch GELU (tanh approximation).
    c = np.float32(np.sqrt(2.0 / np.pi))
    return 0.5 * x * (1.0 + jnp.tanh(c * (x + 0.044715 * (x * x * x))))


# ------------------------------- the kernel --------------------------------
def mvm_kernel(x_ref, pe_ref, mask_ref,
               wqkv_ref, bqkv_ref, wo_ref, w1_ref, b1_ref, w2_ref, vec_ref,
               wout_ref, bout_ref, o_ref):
    # Residual stream stays (B, S, H); PE added once.
    x = x_ref[...] + pe_ref[...]                                   # (B, S, H)

    # Additive key mask computed once: 0 where key visible, -1e9 where masked,
    # replicated over heads with leading-dim-only broadcast/reshape.
    mb = jnp.where(mask_ref[...] > 0.0, 0.0, NEG_INF)              # (B, 1, S)
    mbb = jnp.broadcast_to(mb[None], (N_HEADS, B, 1, S)).reshape(NHB, 1, S)
    # TODO(synk): dropout layers are identity here (inference / eval mode);
    # nn.LogSoftmax is constructed but never applied in forward(), so skipped.

    for l in range(N_LAYERS):                                      # static unroll
        vecs = vec_ref[l]                                          # (6, H)
        ln1_g, ln1_b = vecs[0:1], vecs[1:2]
        ln2_g, ln2_b = vecs[2:3], vecs[3:4]
        bo, b2 = vecs[4:5], vecs[5:6]

        # ---- attention sublayer: x + Attn(LN(x)) ---------------------------
        h = _layer_norm(x, ln1_g, ln1_b)                           # (B, S, H)
        # One (3*NH*B)-batched projection for Q|K|V (scale pre-folded into Q).
        hg = jnp.broadcast_to(h[None], (3 * N_HEADS, B, S, H)).reshape(3 * NHB, S, H)
        qkv = jnp.einsum('gsh,ghd->gsd', hg, wqkv_ref[l],
                         preferred_element_type=jnp.float32) + bqkv_ref[l]
        q = qkv[0:NHB]                                             # (NHB, S, D)
        k = qkv[NHB:2 * NHB]
        v = qkv[2 * NHB:]

        # Scores + softmax for every (head, batch) group at once.
        s = jnp.einsum('gqd,gkd->gqk', q, k,
                       preferred_element_type=jnp.float32)         # (NHB, S, S)
        s = s + mbb                                                # additive mask
        s = s - jnp.max(s, axis=-1, keepdims=True)
        p = jnp.exp(s)
        p = p * pl.reciprocal(jnp.sum(p, axis=-1, keepdims=True), approx=True)
        ctx = jnp.einsum('gqk,gkd->gqd', p, v,
                         preferred_element_type=jnp.float32)       # (NHB, S, D)

        # Output projection with the head-merge folded in: sum_h ctx_h @ Wo_h.
        proj = jnp.einsum('gsd,gdh->gsh', ctx, wo_ref[l],
                          preferred_element_type=jnp.float32)      # (NHB, S, H)
        attn = jnp.sum(proj.reshape(N_HEADS, B, S, H), axis=0)     # (B, S, H)
        x = x + attn + bo

        # ---- feed-forward sublayer: x + FFN(LN(x)) ---------------------------
        h2 = _layer_norm(x, ln2_g, ln2_b)
        w1b = jnp.broadcast_to(w1_ref[l][None], (B, H, D_FF))      # leading bcast
        w2b = jnp.broadcast_to(w2_ref[l][None], (B, D_FF, H))
        f = _gelu(jnp.einsum('bsh,bhf->bsf', h2, w1b,
                             preferred_element_type=jnp.float32) + b1_ref[l])
        x = x + jnp.einsum('bsf,bfh->bsh', f, w2b,
                           preferred_element_type=jnp.float32) + b2

    # Final nn.Linear(hidden_size, embedding_length): one contiguous 3-D store.
    woutb = jnp.broadcast_to(wout_ref[...][None], (B, H, E))
    o_ref[...] = jnp.einsum('bsh,bhe->bse', x, woutb,
                            preferred_element_type=jnp.float32) + bout_ref[...]


# ------------------------------- wrapper ------------------------------------
PACKED_ORDER = ("wqkv", "bqkv", "wo", "w1", "b1", "w2", "vecs", "wout", "bout")


def pack_params(params):
    """Repack canonical parameters into head-major consolidated slabs (host-side, once).

    Per-head slabs are additionally replicated across the batch (group index =
    head * B + b) so the kernel never rearranges weights in VMEM.
    """
    scale = np.float32(1.0 / np.sqrt(D_HEAD))

    def w_heads(w):   # (L, H, H) -> (L, NH, H, D): output col (h*D + d) -> [h, :, d]
        return jnp.transpose(w.reshape(N_LAYERS, H, N_HEADS, D_HEAD), (0, 2, 1, 3))

    def b_heads(b):   # (L, 1, H) -> (L, NH, 1, D)
        return b.reshape(N_LAYERS, N_HEADS, 1, D_HEAD)

    wqkv = jnp.concatenate([w_heads(params["wq"] * scale),   # scale folded into Q
                            w_heads(params["wk"]),
                            w_heads(params["wv"])], axis=1)          # (L, 3NH, H, D)
    bqkv = jnp.concatenate([b_heads(params["bq"] * scale),
                            b_heads(params["bk"]),
                            b_heads(params["bv"])], axis=1)          # (L, 3NH, 1, D)
    wo = params["wo"].reshape(N_LAYERS, N_HEADS, D_HEAD, H)          # (L, NH, D, H)

    # Replicate across batch: group g = head * B + b.
    wqkv = jnp.repeat(wqkv, B, axis=1)                               # (L, 3NH*B, H, D)
    bqkv = jnp.repeat(bqkv, B, axis=1)                               # (L, 3NH*B, 1, D)
    wo = jnp.repeat(wo, B, axis=1)                                   # (L, NH*B, D, H)

    vecs = jnp.concatenate([params["ln1_g"], params["ln1_b"],
                            params["ln2_g"], params["ln2_b"],
                            params["bo"], params["b2"]], axis=1)     # (L, 6, H)
    return dict(wqkv=wqkv, bqkv=bqkv, wo=wo,
                w1=params["w1"], b1=params["b1"], w2=params["w2"],
                vecs=vecs, wout=params["wout"], bout=params["bout"])


def masked_video_model(x, mask_label, pe, packed):
    maskf = mask_label.reshape(B, 1, S).astype(jnp.float32)
    args = (x, pe, maskf) + tuple(packed[k] for k in PACKED_ORDER)

    flops = N_LAYERS * (2 * T * H * 3 * H                        # qkv projection
                        + 2 * B * N_HEADS * S * S * D_HEAD * 2   # scores + pv
                        + 2 * T * H * H                          # output projection
                        + 2 * T * H * D_FF * 2                   # ffn
                        ) + 2 * T * H * E                        # final linear
    transcendentals = N_LAYERS * (B * N_HEADS * S * S + T * D_FF + 4 * T)
    bytes_accessed = int(sum(int(np.prod(a.shape)) for a in args) * 4 + B * S * E * 4)

    out = pl.pallas_call(
        mvm_kernel,
        out_shape=jax.ShapeDtypeStruct((B, S, E), jnp.float32),
        cost_estimate=pl.CostEstimate(flops=int(flops),
                                      transcendentals=int(transcendentals),
                                      bytes_accessed=bytes_accessed),
    )(*args)
    return out


# ---------------------- deterministic parameter setup -----------------------
def positional_embedding(seq_len, d_model):
    pos = np.arange(seq_len, dtype=np.float32)[:, None]
    div = np.exp(np.arange(0, d_model, 2, dtype=np.float32)
                 * -(np.log(10000.0) / d_model))
    pe = np.zeros((seq_len, d_model), dtype=np.float32)
    pe[:, 0::2] = np.sin(pos * div)
    pe[:, 1::2] = np.cos(pos * div)
    return jnp.asarray(pe)


def init_params(key):
    # Weights stored in (in, out) layout so the reference does x @ W + b.
    keys = jax.random.split(key, 14)

    def w(k, shape, scale=0.02):
        return scale * jax.random.normal(k, shape, jnp.float32)

    p = {}
    p["ln1_g"] = jnp.ones((N_LAYERS, 1, H), jnp.float32)
    p["ln1_b"] = jnp.zeros((N_LAYERS, 1, H), jnp.float32)
    p["ln2_g"] = jnp.ones((N_LAYERS, 1, H), jnp.float32)
    p["ln2_b"] = jnp.zeros((N_LAYERS, 1, H), jnp.float32)
    p["wq"] = w(keys[0], (N_LAYERS, H, H));     p["bq"] = w(keys[1], (N_LAYERS, 1, H), 0.01)
    p["wk"] = w(keys[2], (N_LAYERS, H, H));     p["bk"] = w(keys[3], (N_LAYERS, 1, H), 0.01)
    p["wv"] = w(keys[4], (N_LAYERS, H, H));     p["bv"] = w(keys[5], (N_LAYERS, 1, H), 0.01)
    p["wo"] = w(keys[6], (N_LAYERS, H, H));     p["bo"] = w(keys[7], (N_LAYERS, 1, H), 0.01)
    p["w1"] = w(keys[8], (N_LAYERS, H, D_FF));  p["b1"] = w(keys[9], (N_LAYERS, 1, D_FF), 0.01)
    p["w2"] = w(keys[10], (N_LAYERS, D_FF, H)); p["b2"] = w(keys[11], (N_LAYERS, 1, H), 0.01)
    p["wout"] = w(keys[12], (H, E));            p["bout"] = w(keys[13], (1, E), 0.01)
    return p


# ------------------------- pure-JAX reference -------------------------------
def reference_forward(x, mask_label, pe, params):
    key_keep = (mask_label > 0)[:, None, None, :]          # (B,1,1,S)

    def ln(t, g, b):
        mu = jnp.mean(t, -1, keepdims=True)
        d = t - mu
        var = jnp.sum(d * d, -1, keepdims=True) / (t.shape[-1] - 1)
        return g * d / (jnp.sqrt(var) + EPS) + b

    def gelu(t):
        c = np.sqrt(2.0 / np.pi)
        return 0.5 * t * (1.0 + jnp.tanh(c * (t + 0.044715 * t ** 3)))

    xc = x + pe[None]
    for l in range(N_LAYERS):
        n = ln(xc, params["ln1_g"][l], params["ln1_b"][l])
        q = n @ params["wq"][l] + params["bq"][l]
        k = n @ params["wk"][l] + params["bk"][l]
        v = n @ params["wv"][l] + params["bv"][l]
        qh = q.reshape(B, S, N_HEADS, D_HEAD)
        kh = k.reshape(B, S, N_HEADS, D_HEAD)
        vh = v.reshape(B, S, N_HEADS, D_HEAD)
        scores = jnp.einsum('bqnd,bknd->bnqk', qh, kh) / np.sqrt(D_HEAD)
        scores = jnp.where(key_keep, scores, NEG_INF)
        p = jax.nn.softmax(scores, axis=-1)
        attn = jnp.einsum('bnqk,bknd->bqnd', p, vh).reshape(B, S, H)
        xc = xc + (attn @ params["wo"][l] + params["bo"][l])
        n = ln(xc, params["ln2_g"][l], params["ln2_b"][l])
        f = gelu(n @ params["w1"][l] + params["b1"][l]) @ params["w2"][l] + params["b2"][l]
        xc = xc + f
    return xc @ params["wout"] + params["bout"]


# --------------------------------- main --------------------------------------
if __name__ == "__main__":
    key = jax.random.PRNGKey(0)
    kx, km, kp = jax.random.split(key, 3)

    x = jax.random.normal(kx, (B, S, H), jnp.float32)
    mask_label = jax.random.randint(km, (B, S), 0, 2).astype(jnp.int32)
    mask_label = mask_label.at[:, 0].set(1)          # ensure at least one visible key
    pe = positional_embedding(S, H)
    params = init_params(kp)
    packed = pack_params(params)

    out = jax.block_until_ready(masked_video_model(x, mask_label, pe, packed))

    with jax.default_matmul_precision("highest"):
        ref = jax.block_until_ready(reference_forward(x, mask_label, pe, params))

    assert out.shape == (B, S, E)
    if not np.allclose(np.asarray(out), np.asarray(ref), rtol=1e-2, atol=1e-2):
        raise AssertionError("Pallas output mismatch vs JAX reference")
    print("KERNEL_OK")
</pallas_src>

<mosaic_0001>
module attributes {stable_mosaic.version = 11 : i64} {
  func.func @mvm_kernel(%arg0: memref<2x8x32xf32, #tpu.memory_space<vmem>>, %arg1: memref<8x32xf32, #tpu.memory_space<vmem>>, %arg2: memref<2x1x8xf32, #tpu.memory_space<vmem>>, %arg3: memref<2x24x32x8xf32, #tpu.memory_space<vmem>>, %arg4: memref<2x24x1x8xf32, #tpu.memory_space<vmem>>, %arg5: memref<2x8x8x32xf32, #tpu.memory_space<vmem>>, %arg6: memref<2x32x128xf32, #tpu.memory_space<vmem>>, %arg7: memref<2x1x128xf32, #tpu.memory_space<vmem>>, %arg8: memref<2x128x32xf32, #tpu.memory_space<vmem>>, %arg9: memref<2x6x32xf32, #tpu.memory_space<vmem>>, %arg10: memref<32x32xf32, #tpu.memory_space<vmem>>, %arg11: memref<1x32xf32, #tpu.memory_space<vmem>>, %arg12: memref<2x8x32xf32, #tpu.memory_space<vmem>>) attributes {dimension_semantics = [], scalar_prefetch = 0 : i64, scratch_operands = 0 : i64, tpu.core_type = #tpu.core_type<tc>} {
    %c0 = arith.constant 0 : index
    %c0_0 = arith.constant 0 : index
    %c0_1 = arith.constant 0 : index
    %0 = vector.load %arg0[%c0, %c0_0, %c0_1] : memref<2x8x32xf32, #tpu.memory_space<vmem>>, vector<2x8x32xf32>
    %c0_2 = arith.constant 0 : index
    %c0_3 = arith.constant 0 : index
    %1 = vector.load %arg1[%c0_2, %c0_3] : memref<8x32xf32, #tpu.memory_space<vmem>>, vector<8x32xf32>
    %2 = vector.shape_cast %1 : vector<8x32xf32> to vector<1x8x32xf32>
    %3 = vector.broadcast %2 : vector<1x8x32xf32> to vector<2x8x32xf32>
    %4 = arith.addf %0, %3 : vector<2x8x32xf32>
    %c0_4 = arith.constant 0 : index
    %c0_5 = arith.constant 0 : index
    %c0_6 = arith.constant 0 : index
    %5 = vector.load %arg2[%c0_4, %c0_5, %c0_6] : memref<2x1x8xf32, #tpu.memory_space<vmem>>, vector<2x1x8xf32>
    %cst = arith.constant 0.000000e+00 : f32
    %6 = vector.broadcast %cst : f32 to vector<2x1x8xf32>
    %7 = arith.cmpf ogt, %5, %6 : vector<2x1x8xf32>
    %cst_7 = arith.constant 0.000000e+00 : f32
    %cst_8 = arith.constant -1.000000e+09 : f32
    %8 = vector.broadcast %cst_7 : f32 to vector<2x1x8xf32>
    %9 = vector.broadcast %cst_8 : f32 to vector<2x1x8xf32>
    %10 = arith.select %7, %8, %9 : vector<2x1x8xi1>, vector<2x1x8xf32>
    %11 = vector.shape_cast %10 : vector<2x1x8xf32> to vector<1x2x1x8xf32>
    %12 = vector.shape_cast %11 : vector<1x2x1x8xf32> to vector<1x2x1x8xf32>
    %13 = vector.broadcast %12 : vector<1x2x1x8xf32> to vector<4x2x1x8xf32>
    %14 = vector.shape_cast %13 : vector<4x2x1x8xf32> to vector<8x1x8xf32>
    %c0_9 = arith.constant 0 : index
    %c0_10 = arith.constant 0 : index
    %c0_11 = arith.constant 0 : index
    %15 = vector.load %arg9[%c0_9, %c0_10, %c0_11] : memref<2x6x32xf32, #tpu.memory_space<vmem>>, vector<1x6x32xf32>
    %16 = vector.shape_cast %15 : vector<1x6x32xf32> to vector<6x32xf32>
    %17 = vector.extract_strided_slice %16 {offsets = [0, 0], sizes = [1, 32], strides = [1, 1]} : vector<6x32xf32> to vector<1x32xf32>
    %18 = vector.extract_strided_slice %16 {offsets = [1, 0], sizes = [1, 32], strides = [1, 1]} : vector<6x32xf32> to vector<1x32xf32>
    %19 = vector.extract_strided_slice %16 {offsets = [2, 0], sizes = [1, 32], strides = [1, 1]} : vector<6x32xf32> to vector<1x32xf32>
    %20 = vector.extract_strided_slice %16 {offsets = [3, 0], sizes = [1, 32], strides = [1, 1]} : vector<6x32xf32> to vector<1x32xf32>
    %21 = vector.extract_strided_slice %16 {offsets = [4, 0], sizes = [1, 32], strides = [1, 1]} : vector<6x32xf32> to vector<1x32xf32>
    %22 = vector.extract_strided_slice %16 {offsets = [5, 0], sizes = [1, 32], strides = [1, 1]} : vector<6x32xf32> to vector<1x32xf32>
    %cst_12 = arith.constant dense<0.000000e+00> : vector<2x8xf32>
    %23 = vector.multi_reduction <add>, %4, %cst_12 [2] : vector<2x8x32xf32> to vector<2x8xf32>
    %24 = vector.shape_cast %23 : vector<2x8xf32> to vector<2x8x1xf32>
    %cst_13 = arith.constant 3.200000e+01 : f32
    %25 = vector.broadcast %cst_13 : f32 to vector<2x8x1xf32>
    %26 = arith.divf %24, %25 : vector<2x8x1xf32>
    %27 = vector.broadcast %26 : vector<2x8x1xf32> to vector<2x8x32xf32>
    %28 = arith.subf %4, %27 : vector<2x8x32xf32>
    %29 = arith.mulf %28, %28 : vector<2x8x32xf32>
    %cst_14 = arith.constant dense<0.000000e+00> : vector<2x8xf32>
    %30 = vector.multi_reduction <add>, %29, %cst_14 [2] : vector<2x8x32xf32> to vector<2x8xf32>
    %31 = vector.shape_cast %30 : vector<2x8xf32> to vector<2x8x1xf32>
    %cst_15 = arith.constant 0.0322580636 : f32
    %32 = vector.broadcast %cst_15 : f32 to vector<2x8x1xf32>
    %33 = arith.mulf %31, %32 : vector<2x8x1xf32>
    %34 = math.sqrt %33 : vector<2x8x1xf32>
    %cst_16 = arith.constant 9.99999997E-7 : f32
    %35 = vector.broadcast %cst_16 : f32 to vector<2x8x1xf32>
    %36 = arith.addf %34, %35 : vector<2x8x1xf32>
    %37 = tpu.reciprocal %36 {approx = true} : vector<2x8x1xf32> -> vector<2x8x1xf32>
    %38 = vector.broadcast %37 : vector<2x8x1xf32> to vector<2x8x32xf32>
    %39 = arith.mulf %28, %38 : vector<2x8x32xf32>
    %40 = vector.shape_cast %17 : vector<1x32xf32> to vector<1x1x32xf32>
    %41 = vector.broadcast %40 : vector<1x1x32xf32> to vector<2x8x32xf32>
    %42 = arith.mulf %41, %39 : vector<2x8x32xf32>
    %43 = vector.shape_cast %18 : vector<1x32xf32> to vector<1x1x32xf32>
    %44 = vector.broadcast %43 : vector<1x1x32xf32> to vector<2x8x32xf32>
    %45 = arith.addf %42, %44 : vector<2x8x32xf32>
    %46 = vector.shape_cast %45 : vector<2x8x32xf32> to vector<1x2x8x32xf32>
    %47 = vector.shape_cast %46 : vector<1x2x8x32xf32> to vector<1x2x8x32xf32>
    %48 = vector.broadcast %47 : vector<1x2x8x32xf32> to vector<12x2x8x32xf32>
    %49 = vector.shape_cast %48 : vector<12x2x8x32xf32> to vector<24x8x32xf32>
    %c0_17 = arith.constant 0 : index
    %c0_18 = arith.constant 0 : index
    %c0_19 = arith.constant 0 : index
    %c0_20 = arith.constant 0 : index
    %50 = vector.load %arg3[%c0_17, %c0_18, %c0_19, %c0_20] : memref<2x24x32x8xf32, #tpu.memory_space<vmem>>, vector<1x24x32x8xf32>
    %51 = vector.shape_cast %50 : vector<1x24x32x8xf32> to vector<24x32x8xf32>
    "tpu.trace_start"() <{level = 10 : i32, message = "gsh,ghd->gsd"}> : () -> ()
    %cst_21 = arith.constant dense<0.000000e+00> : vector<24x8x8xf32>
    %52 = tpu.matmul %49, %51, %cst_21 {dimension_numbers = #tpu.dot_dimension_numbers<[2], [1], [1], [2], [0, 0, 0, 1, 1, 2], [0], [0]>} : vector<24x8x32xf32>, vector<24x32x8xf32>, vector<24x8x8xf32> -> vector<24x8x8xf32>
    "tpu.trace_stop"() : () -> ()
    %c0_22 = arith.constant 0 : index
    %c0_23 = arith.constant 0 : index
    %c0_24 = arith.constant 0 : index
    %c0_25 = arith.constant 0 : index
    %53 = vector.load %arg4[%c0_22, %c0_23, %c0_24, %c0_25] : memref<2x24x1x8xf32, #tpu.memory_space<vmem>>, vector<1x24x1x8xf32>
    %54 = vector.shape_cast %53 : vector<1x24x1x8xf32> to vector<24x1x8xf32>
    %55 = vector.broadcast %54 : vector<24x1x8xf32> to vector<24x8x8xf32>
    %56 = arith.addf %52, %55 : vector<24x8x8xf32>
    %57 = vector.extract_strided_slice %56 {offsets = [0, 0, 0], sizes = [8, 8, 8], strides = [1, 1, 1]} : vector<24x8x8xf32> to vector<8x8x8xf32>
    %58 = vector.extract_strided_slice %56 {offsets = [8, 0, 0], sizes = [8, 8, 8], strides = [1, 1, 1]} : vector<24x8x8xf32> to vector<8x8x8xf32>
    %59 = vector.extract_strided_slice %56 {offsets = [16, 0, 0], sizes = [8, 8, 8], strides = [1, 1, 1]} : vector<24x8x8xf32> to vector<8x8x8xf32>
    "tpu.trace_start"() <{level = 10 : i32, message = "gqd,gkd->gqk"}> : () -> ()
    %cst_26 = arith.constant dense<0.000000e+00> : vector<8x8x8xf32>
    %60 = tpu.matmul %57, %58, %cst_26 {dimension_numbers = #tpu.dot_dimension_numbers<[2], [2], [1], [1], [0, 0, 0, 1, 1, 1], [0], [0]>} : vector<8x8x8xf32>, vector<8x8x8xf32>, vector<8x8x8xf32> -> vector<8x8x8xf32>
    "tpu.trace_stop"() : () -> ()
    %61 = vector.broadcast %14 : vector<8x1x8xf32> to vector<8x8x8xf32>
    %62 = arith.addf %60, %61 : vector<8x8x8xf32>
    %cst_27 = arith.constant dense<0xFF800000> : vector<8x8xf32>
    %63 = vector.multi_reduction <maximumf>, %62, %cst_27 [2] : vector<8x8x8xf32> to vector<8x8xf32>
    %64 = vector.shape_cast %63 : vector<8x8xf32> to vector<8x8x1xf32>
    %65 = vector.broadcast %64 : vector<8x8x1xf32> to vector<8x8x8xf32>
    %66 = arith.subf %62, %65 : vector<8x8x8xf32>
    %67 = math.exp %66 : vector<8x8x8xf32>
    %cst_28 = arith.constant dense<0.000000e+00> : vector<8x8xf32>
    %68 = vector.multi_reduction <add>, %67, %cst_28 [2] : vector<8x8x8xf32> to vector<8x8xf32>
    %69 = vector.shape_cast %68 : vector<8x8xf32> to vector<8x8x1xf32>
    %70 = tpu.reciprocal %69 {approx = true} : vector<8x8x1xf32> -> vector<8x8x1xf32>
    %71 = vector.broadcast %70 : vector<8x8x1xf32> to vector<8x8x8xf32>
    %72 = arith.mulf %67, %71 : vector<8x8x8xf32>
    "tpu.trace_start"() <{level = 10 : i32, message = "gqk,gkd->gqd"}> : () -> ()
    %cst_29 = arith.constant dense<0.000000e+00> : vector<8x8x8xf32>
    %73 = tpu.matmul %72, %59, %cst_29 {dimension_numbers = #tpu.dot_dimension_numbers<[2], [1], [1], [2], [0, 0, 0, 1, 1, 2], [0], [0]>} : vector<8x8x8xf32>, vector<8x8x8xf32>, vector<8x8x8xf32> -> vector<8x8x8xf32>
    "tpu.trace_stop"() : () -> ()
    %c0_30 = arith.constant 0 : index
    %c0_31 = arith.constant 0 : index
    %c0_32 = arith.constant 0 : index
    %c0_33 = arith.constant 0 : index
    %74 = vector.load %arg5[%c0_30, %c0_31, %c0_32, %c0_33] : memref<2x8x8x32xf32, #tpu.memory_space<vmem>>, vector<1x8x8x32xf32>
    %75 = vector.shape_cast %74 : vector<1x8x8x32xf32> to vector<8x8x32xf32>
    "tpu.trace_start"() <{level = 10 : i32, message = "gsd,gdh->gsh"}> : () -> ()
    %cst_34 = arith.constant dense<0.000000e+00> : vector<8x8x32xf32>
    %76 = tpu.matmul %73, %75, %cst_34 {dimension_numbers = #tpu.dot_dimension_numbers<[2], [1], [1], [2], [0, 0, 0, 1, 1, 2], [0], [0]>} : vector<8x8x8xf32>, vector<8x8x32xf32>, vector<8x8x32xf32> -> vector<8x8x32xf32>
    "tpu.trace_stop"() : () -> ()
    %77 = vector.shape_cast %76 : vector<8x8x32xf32> to vector<4x2x8x32xf32>
    %cst_35 = arith.constant dense<0.000000e+00> : vector<2x8x32xf32>
    %78 = vector.multi_reduction <add>, %77, %cst_35 [0] : vector<4x2x8x32xf32> to vector<2x8x32xf32>
    %79 = arith.addf %4, %78 : vector<2x8x32xf32>
    %80 = vector.shape_cast %21 : vector<1x32xf32> to vector<1x1x32xf32>
    %81 = vector.broadcast %80 : vector<1x1x32xf32> to vector<2x8x32xf32>
    %82 = arith.addf %79, %81 : vector<2x8x32xf32>
    %cst_36 = arith.constant dense<0.000000e+00> : vector<2x8xf32>
    %83 = vector.multi_reduction <add>, %82, %cst_36 [2] : vector<2x8x32xf32> to vector<2x8xf32>
    %84 = vector.shape_cast %83 : vector<2x8xf32> to vector<2x8x1xf32>
    %cst_37 = arith.constant 3.200000e+01 : f32
    %85 = vector.broadcast %cst_37 : f32 to vector<2x8x1xf32>
    %86 = arith.divf %84, %85 : vector<2x8x1xf32>
    %87 = vector.broadcast %86 : vector<2x8x1xf32> to vector<2x8x32xf32>
    %88 = arith.subf %82, %87 : vector<2x8x32xf32>
    %89 = arith.mulf %88, %88 : vector<2x8x32xf32>
    %cst_38 = arith.constant dense<0.000000e+00> : vector<2x8xf32>
    %90 = vector.multi_reduction <add>, %89, %cst_38 [2] : vector<2x8x32xf32> to vector<2x8xf32>
    %91 = vector.shape_cast %90 : vector<2x8xf32> to vector<2x8x1xf32>
    %cst_39 = arith.constant 0.0322580636 : f32
    %92 = vector.broadcast %cst_39 : f32 to vector<2x8x1xf32>
    %93 = arith.mulf %91, %92 : vector<2x8x1xf32>
    %94 = math.sqrt %93 : vector<2x8x1xf32>
    %cst_40 = arith.constant 9.99999997E-7 : f32
    %95 = vector.broadcast %cst_40 : f32 to vector<2x8x1xf32>
    %96 = arith.addf %94, %95 : vector<2x8x1xf32>
    %97 = tpu.reciprocal %96 {approx = true} : vector<2x8x1xf32> -> vector<2x8x1xf32>
    %98 = vector.broadcast %97 : vector<2x8x1xf32> to vector<2x8x32xf32>
    %99 = arith.mulf %88, %98 : vector<2x8x32xf32>
    %100 = vector.shape_cast %19 : vector<1x32xf32> to vector<1x1x32xf32>
    %101 = vector.broadcast %100 : vector<1x1x32xf32> to vector<2x8x32xf32>
    %102 = arith.mulf %101, %99 : vector<2x8x32xf32>
    %103 = vector.shape_cast %20 : vector<1x32xf32> to vector<1x1x32xf32>
    %104 = vector.broadcast %103 : vector<1x1x32xf32> to vector<2x8x32xf32>
    %105 = arith.addf %102, %104 : vector<2x8x32xf32>
    %c0_41 = arith.constant 0 : index
    %c0_42 = arith.constant 0 : index
    %c0_43 = arith.constant 0 : index
    %106 = vector.load %arg6[%c0_41, %c0_42, %c0_43] : memref<2x32x128xf32, #tpu.memory_space<vmem>>, vector<1x32x128xf32>
    %107 = vector.shape_cast %106 : vector<1x32x128xf32> to vector<32x128xf32>
    %108 = vector.shape_cast %107 : vector<32x128xf32> to vector<1x32x128xf32>
    %109 = vector.shape_cast %108 : vector<1x32x128xf32> to vector<1x32x128xf32>
    %110 = vector.broadcast %109 : vector<1x32x128xf32> to vector<2x32x128xf32>
    %c0_44 = arith.constant 0 : index
    %c0_45 = arith.constant 0 : index
    %c0_46 = arith.constant 0 : index
    %111 = vector.load %arg8[%c0_44, %c0_45, %c0_46] : memref<2x128x32xf32, #tpu.memory_space<vmem>>, vector<1x128x32xf32>
    %112 = vector.shape_cast %111 : vector<1x128x32xf32> to vector<128x32xf32>
    %113 = vector.shape_cast %112 : vector<128x32xf32> to vector<1x128x32xf32>
    %114 = vector.shape_cast %113 : vector<1x128x32xf32> to vector<1x128x32xf32>
    %115 = vector.broadcast %114 : vector<1x128x32xf32> to vector<2x128x32xf32>
    "tpu.trace_start"() <{level = 10 : i32, message = "bsh,bhf->bsf"}> : () -> ()
    %cst_47 = arith.constant dense<0.000000e+00> : vector<2x8x128xf32>
    %116 = tpu.matmul %105, %110, %cst_47 {dimension_numbers = #tpu.dot_dimension_numbers<[2], [1], [1], [2], [0, 0, 0, 1, 1, 2], [0], [0]>} : vector<2x8x32xf32>, vector<2x32x128xf32>, vector<2x8x128xf32> -> vector<2x8x128xf32>
    "tpu.trace_stop"() : () -> ()
    %c0_48 = arith.constant 0 : index
    %c0_49 = arith.constant 0 : index
    %c0_50 = arith.constant 0 : index
    %117 = vector.load %arg7[%c0_48, %c0_49, %c0_50] : memref<2x1x128xf32, #tpu.memory_space<vmem>>, vector<1x1x128xf32>
    %118 = vector.shape_cast %117 : vector<1x1x128xf32> to vector<1x128xf32>
    %119 = vector.shape_cast %118 : vector<1x128xf32> to vector<1x1x128xf32>
    %120 = vector.broadcast %119 : vector<1x1x128xf32> to vector<2x8x128xf32>
    %121 = arith.addf %116, %120 : vector<2x8x128xf32>
    %cst_51 = arith.constant 5.000000e-01 : f32
    %122 = vector.broadcast %cst_51 : f32 to vector<2x8x128xf32>
    %123 = arith.mulf %122, %121 : vector<2x8x128xf32>
    %124 = arith.mulf %121, %121 : vector<2x8x128xf32>
    %125 = arith.mulf %124, %121 : vector<2x8x128xf32>
    %cst_52 = arith.constant 4.471500e-02 : f32
    %126 = vector.broadcast %cst_52 : f32 to vector<2x8x128xf32>
    %127 = arith.mulf %126, %125 : vector<2x8x128xf32>
    %128 = arith.addf %121, %127 : vector<2x8x128xf32>
    %cst_53 = arith.constant 0.797884583 : f32
    %129 = vector.broadcast %cst_53 : f32 to vector<2x8x128xf32>
    %130 = arith.mulf %129, %128 : vector<2x8x128xf32>
    %131 = math.tanh %130 : vector<2x8x128xf32>
    %cst_54 = arith.constant 1.000000e+00 : f32
    %132 = vector.broadcast %cst_54 : f32 to vector<2x8x128xf32>
    %133 = arith.addf %132, %131 : vector<2x8x128xf32>
    %134 = arith.mulf %123, %133 : vector<2x8x128xf32>
    "tpu.trace_start"() <{level = 10 : i32, message = "bsf,bfh->bsh"}> : () -> ()
    %cst_55 = arith.constant dense<0.000000e+00> : vector<2x8x32xf32>
    %135 = tpu.matmul %134, %115, %cst_55 {dimension_numbers = #tpu.dot_dimension_numbers<[2], [1], [1], [2], [0, 0, 0, 1, 1, 2], [0], [0]>} : vector<2x8x128xf32>, vector<2x128x32xf32>, vector<2x8x32xf32> -> vector<2x8x32xf32>
    "tpu.trace_stop"() : () -> ()
    %136 = arith.addf %82, %135 : vector<2x8x32xf32>
    %137 = vector.shape_cast %22 : vector<1x32xf32> to vector<1x1x32xf32>
    %138 = vector.broadcast %137 : vector<1x1x32xf32> to vector<2x8x32xf32>
    %139 = arith.addf %136, %138 : vector<2x8x32xf32>
    %c1 = arith.constant 1 : index
    %c0_56 = arith.constant 0 : index
    %c0_57 = arith.constant 0 : index
    %140 = vector.load %arg9[%c1, %c0_56, %c0_57] : memref<2x6x32xf32, #tpu.memory_space<vmem>>, vector<1x6x32xf32>
    %141 = vector.shape_cast %140 : vector<1x6x32xf32> to vector<6x32xf32>
    %142 = vector.extract_strided_slice %141 {offsets = [0, 0], sizes = [1, 32], strides = [1, 1]} : vector<6x32xf32> to vector<1x32xf32>
    %143 = vector.extract_strided_slice %141 {offsets = [1, 0], sizes = [1, 32], strides = [1, 1]} : vector<6x32xf32> to vector<1x32xf32>
    %144 = vector.extract_strided_slice %141 {offsets = [2, 0], sizes = [1, 32], strides = [1, 1]} : vector<6x32xf32> to vector<1x32xf32>
    %145 = vector.extract_strided_slice %141 {offsets = [3, 0], sizes = [1, 32], strides = [1, 1]} : vector<6x32xf32> to vector<1x32xf32>
    %146 = vector.extract_strided_slice %141 {offsets = [4, 0], sizes = [1, 32], strides = [1, 1]} : vector<6x32xf32> to vector<1x32xf32>
    %147 = vector.extract_strided_slice %141 {offsets = [5, 0], sizes = [1, 32], strides = [1, 1]} : vector<6x32xf32> to vector<1x32xf32>
    %cst_58 = arith.constant dense<0.000000e+00> : vector<2x8xf32>
    %148 = vector.multi_reduction <add>, %139, %cst_58 [2] : vector<2x8x32xf32> to vector<2x8xf32>
    %149 = vector.shape_cast %148 : vector<2x8xf32> to vector<2x8x1xf32>
    %cst_59 = arith.constant 3.200000e+01 : f32
    %150 = vector.broadcast %cst_59 : f32 to vector<2x8x1xf32>
    %151 = arith.divf %149, %150 : vector<2x8x1xf32>
    %152 = vector.broadcast %151 : vector<2x8x1xf32> to vector<2x8x32xf32>
    %153 = arith.subf %139, %152 : vector<2x8x32xf32>
    %154 = arith.mulf %153, %153 : vector<2x8x32xf32>
    %cst_60 = arith.constant dense<0.000000e+00> : vector<2x8xf32>
    %155 = vector.multi_reduction <add>, %154, %cst_60 [2] : vector<2x8x32xf32> to vector<2x8xf32>
    %156 = vector.shape_cast %155 : vector<2x8xf32> to vector<2x8x1xf32>
    %cst_61 = arith.constant 0.0322580636 : f32
    %157 = vector.broadcast %cst_61 : f32 to vector<2x8x1xf32>
    %158 = arith.mulf %156, %157 : vector<2x8x1xf32>
    %159 = math.sqrt %158 : vector<2x8x1xf32>
    %cst_62 = arith.constant 9.99999997E-7 : f32
    %160 = vector.broadcast %cst_62 : f32 to vector<2x8x1xf32>
    %161 = arith.addf %159, %160 : vector<2x8x1xf32>
    %162 = tpu.reciprocal %161 {approx = true} : vector<2x8x1xf32> -> vector<2x8x1xf32>
    %163 = vector.broadcast %162 : vector<2x8x1xf32> to vector<2x8x32xf32>
    %164 = arith.mulf %153, %163 : vector<2x8x32xf32>
    %165 = vector.shape_cast %142 : vector<1x32xf32> to vector<1x1x32xf32>
    %166 = vector.broadcast %165 : vector<1x1x32xf32> to vector<2x8x32xf32>
    %167 = arith.mulf %166, %164 : vector<2x8x32xf32>
    %168 = vector.shape_cast %143 : vector<1x32xf32> to vector<1x1x32xf32>
    %169 = vector.broadcast %168 : vector<1x1x32xf32> to vector<2x8x32xf32>
    %170 = arith.addf %167, %169 : vector<2x8x32xf32>
    %171 = vector.shape_cast %170 : vector<2x8x32xf32> to vector<1x2x8x32xf32>
    %172 = vector.shape_cast %171 : vector<1x2x8x32xf32> to vector<1x2x8x32xf32>
    %173 = vector.broadcast %172 : vector<1x2x8x32xf32> to vector<12x2x8x32xf32>
    %174 = vector.shape_cast %173 : vector<12x2x8x32xf32> to vector<24x8x32xf32>
    %c1_63 = arith.constant 1 : index
    %c0_64 = arith.constant 0 : index
    %c0_65 = arith.constant 0 : index
    %c0_66 = arith.constant 0 : index
    %175 = vector.load %arg3[%c1_63, %c0_64, %c0_65, %c0_66] : memref<2x24x32x8xf32, #tpu.memory_space<vmem>>, vector<1x24x32x8xf32>
    %176 = vector.shape_cast %175 : vector<1x24x32x8xf32> to vector<24x32x8xf32>
    "tpu.trace_start"() <{level = 10 : i32, message = "gsh,ghd->gsd"}> : () -> ()
    %cst_67 = arith.constant dense<0.000000e+00> : vector<24x8x8xf32>
    %177 = tpu.matmul %174, %176, %cst_67 {dimension_numbers = #tpu.dot_dimension_numbers<[2], [1], [1], [2], [0, 0, 0, 1, 1, 2], [0], [0]>} : vector<24x8x32xf32>, vector<24x32x8xf32>, vector<24x8x8xf32> -> vector<24x8x8xf32>
    "tpu.trace_stop"() : () -> ()
    %c1_68 = arith.constant 1 : index
    %c0_69 = arith.constant 0 : index
    %c0_70 = arith.constant 0 : index
    %c0_71 = arith.constant 0 : index
    %178 = vector.load %arg4[%c1_68, %c0_69, %c0_70, %c0_71] : memref<2x24x1x8xf32, #tpu.memory_space<vmem>>, vector<1x24x1x8xf32>
    %179 = vector.shape_cast %178 : vector<1x24x1x8xf32> to vector<24x1x8xf32>
    %180 = vector.broadcast %179 : vector<24x1x8xf32> to vector<24x8x8xf32>
    %181 = arith.addf %177, %180 : vector<24x8x8xf32>
    %182 = vector.extract_strided_slice %181 {offsets = [0, 0, 0], sizes = [8, 8, 8], strides = [1, 1, 1]} : vector<24x8x8xf32> to vector<8x8x8xf32>
    %183 = vector.extract_strided_slice %181 {offsets = [8, 0, 0], sizes = [8, 8, 8], strides = [1, 1, 1]} : vector<24x8x8xf32> to vector<8x8x8xf32>
    %184 = vector.extract_strided_slice %181 {offsets = [16, 0, 0], sizes = [8, 8, 8], strides = [1, 1, 1]} : vector<24x8x8xf32> to vector<8x8x8xf32>
    "tpu.trace_start"() <{level = 10 : i32, message = "gqd,gkd->gqk"}> : () -> ()
    %cst_72 = arith.constant dense<0.000000e+00> : vector<8x8x8xf32>
    %185 = tpu.matmul %182, %183, %cst_72 {dimension_numbers = #tpu.dot_dimension_numbers<[2], [2], [1], [1], [0, 0, 0, 1, 1, 1], [0], [0]>} : vector<8x8x8xf32>, vector<8x8x8xf32>, vector<8x8x8xf32> -> vector<8x8x8xf32>
    "tpu.trace_stop"() : () -> ()
    %186 = vector.broadcast %14 : vector<8x1x8xf32> to vector<8x8x8xf32>
    %187 = arith.addf %185, %186 : vector<8x8x8xf32>
    %cst_73 = arith.constant dense<0xFF800000> : vector<8x8xf32>
    %188 = vector.multi_reduction <maximumf>, %187, %cst_73 [2] : vector<8x8x8xf32> to vector<8x8xf32>
    %189 = vector.shape_cast %188 : vector<8x8xf32> to vector<8x8x1xf32>
    %190 = vector.broadcast %189 : vector<8x8x1xf32> to vector<8x8x8xf32>
    %191 = arith.subf %187, %190 : vector<8x8x8xf32>
    %192 = math.exp %191 : vector<8x8x8xf32>
    %cst_74 = arith.constant dense<0.000000e+00> : vector<8x8xf32>
    %193 = vector.multi_reduction <add>, %192, %cst_74 [2] : vector<8x8x8xf32> to vector<8x8xf32>
    %194 = vector.shape_cast %193 : vector<8x8xf32> to vector<8x8x1xf32>
    %195 = tpu.reciprocal %194 {approx = true} : vector<8x8x1xf32> -> vector<8x8x1xf32>
    %196 = vector.broadcast %195 : vector<8x8x1xf32> to vector<8x8x8xf32>
    %197 = arith.mulf %192, %196 : vector<8x8x8xf32>
    "tpu.trace_start"() <{level = 10 : i32, message = "gqk,gkd->gqd"}> : () -> ()
    %cst_75 = arith.constant dense<0.000000e+00> : vector<8x8x8xf32>
    %198 = tpu.matmul %197, %184, %cst_75 {dimension_numbers = #tpu.dot_dimension_numbers<[2], [1], [1], [2], [0, 0, 0, 1, 1, 2], [0], [0]>} : vector<8x8x8xf32>, vector<8x8x8xf32>, vector<8x8x8xf32> -> vector<8x8x8xf32>
    "tpu.trace_stop"() : () -> ()
    %c1_76 = arith.constant 1 : index
    %c0_77 = arith.constant 0 : index
    %c0_78 = arith.constant 0 : index
    %c0_79 = arith.constant 0 : index
    %199 = vector.load %arg5[%c1_76, %c0_77, %c0_78, %c0_79] : memref<2x8x8x32xf32, #tpu.memory_space<vmem>>, vector<1x8x8x32xf32>
    %200 = vector.shape_cast %199 : vector<1x8x8x32xf32> to vector<8x8x32xf32>
    "tpu.trace_start"() <{level = 10 : i32, message = "gsd,gdh->gsh"}> : () -> ()
    %cst_80 = arith.constant dense<0.000000e+00> : vector<8x8x32xf32>
    %201 = tpu.matmul %198, %200, %cst_80 {dimension_numbers = #tpu.dot_dimension_numbers<[2], [1], [1], [2], [0, 0, 0, 1, 1, 2], [0], [0]>} : vector<8x8x8xf32>, vector<8x8x32xf32>, vector<8x8x32xf32> -> vector<8x8x32xf32>
    "tpu.trace_stop"() : () -> ()
    %202 = vector.shape_cast %201 : vector<8x8x32xf32> to vector<4x2x8x32xf32>
    %cst_81 = arith.constant dense<0.000000e+00> : vector<2x8x32xf32>
    %203 = vector.multi_reduction <add>, %202, %cst_81 [0] : vector<4x2x8x32xf32> to vector<2x8x32xf32>
    %204 = arith.addf %139, %203 : vector<2x8x32xf32>
    %205 = vector.shape_cast %146 : vector<1x32xf32> to vector<1x1x32xf32>
    %206 = vector.broadcast %205 : vector<1x1x32xf32> to vector<2x8x32xf32>
    %207 = arith.addf %204, %206 : vector<2x8x32xf32>
    %cst_82 = arith.constant dense<0.000000e+00> : vector<2x8xf32>
    %208 = vector.multi_reduction <add>, %207, %cst_82 [2] : vector<2x8x32xf32> to vector<2x8xf32>
    %209 = vector.shape_cast %208 : vector<2x8xf32> to vector<2x8x1xf32>
    %cst_83 = arith.constant 3.200000e+01 : f32
    %210 = vector.broadcast %cst_83 : f32 to vector<2x8x1xf32>
    %211 = arith.divf %209, %210 : vector<2x8x1xf32>
    %212 = vector.broadcast %211 : vector<2x8x1xf32> to vector<2x8x32xf32>
    %213 = arith.subf %207, %212 : vector<2x8x32xf32>
    %214 = arith.mulf %213, %213 : vector<2x8x32xf32>
    %cst_84 = arith.constant dense<0.000000e+00> : vector<2x8xf32>
    %215 = vector.multi_reduction <add>, %214, %cst_84 [2] : vector<2x8x32xf32> to vector<2x8xf32>
    %216 = vector.shape_cast %215 : vector<2x8xf32> to vector<2x8x1xf32>
    %cst_85 = arith.constant 0.0322580636 : f32
    %217 = vector.broadcast %cst_85 : f32 to vector<2x8x1xf32>
    %218 = arith.mulf %216, %217 : vector<2x8x1xf32>
    %219 = math.sqrt %218 : vector<2x8x1xf32>
    %cst_86 = arith.constant 9.99999997E-7 : f32
    %220 = vector.broadcast %cst_86 : f32 to vector<2x8x1xf32>
    %221 = arith.addf %219, %220 : vector<2x8x1xf32>
    %222 = tpu.reciprocal %221 {approx = true} : vector<2x8x1xf32> -> vector<2x8x1xf32>
    %223 = vector.broadcast %222 : vector<2x8x1xf32> to vector<2x8x32xf32>
    %224 = arith.mulf %213, %223 : vector<2x8x32xf32>
    %225 = vector.shape_cast %144 : vector<1x32xf32> to vector<1x1x32xf32>
    %226 = vector.broadcast %225 : vector<1x1x32xf32> to vector<2x8x32xf32>
    %227 = arith.mulf %226, %224 : vector<2x8x32xf32>
    %228 = vector.shape_cast %145 : vector<1x32xf32> to vector<1x1x32xf32>
    %229 = vector.broadcast %228 : vector<1x1x32xf32> to vector<2x8x32xf32>
    %230 = arith.addf %227, %229 : vector<2x8x32xf32>
    %c1_87 = arith.constant 1 : index
    %c0_88 = arith.constant 0 : index
    %c0_89 = arith.constant 0 : index
    %231 = vector.load %arg6[%c1_87, %c0_88, %c0_89] : memref<2x32x128xf32, #tpu.memory_space<vmem>>, vector<1x32x128xf32>
    %232 = vector.shape_cast %231 : vector<1x32x128xf32> to vector<32x128xf32>
    %233 = vector.shape_cast %232 : vector<32x128xf32> to vector<1x32x128xf32>
    %234 = vector.shape_cast %233 : vector<1x32x128xf32> to vector<1x32x128xf32>
    %235 = vector.broadcast %234 : vector<1x32x128xf32> to vector<2x32x128xf32>
    %c1_90 = arith.constant 1 : index
    %c0_91 = arith.constant 0 : index
    %c0_92 = arith.constant 0 : index
    %236 = vector.load %arg8[%c1_90, %c0_91, %c0_92] : memref<2x128x32xf32, #tpu.memory_space<vmem>>, vector<1x128x32xf32>
    %237 = vector.shape_cast %236 : vector<1x128x32xf32> to vector<128x32xf32>
    %238 = vector.shape_cast %237 : vector<128x32xf32> to vector<1x128x32xf32>
    %239 = vector.shape_cast %238 : vector<1x128x32xf32> to vector<1x128x32xf32>
    %240 = vector.broadcast %239 : vector<1x128x32xf32> to vector<2x128x32xf32>
    "tpu.trace_start"() <{level = 10 : i32, message = "bsh,bhf->bsf"}> : () -> ()
    %cst_93 = arith.constant dense<0.000000e+00> : vector<2x8x128xf32>
    %241 = tpu.matmul %230, %235, %cst_93 {dimension_numbers = #tpu.dot_dimension_numbers<[2], [1], [1], [2], [0, 0, 0, 1, 1, 2], [0], [0]>} : vector<2x8x32xf32>, vector<2x32x128xf32>, vector<2x8x128xf32> -> vector<2x8x128xf32>
    "tpu.trace_stop"() : () -> ()
    %c1_94 = arith.constant 1 : index
    %c0_95 = arith.constant 0 : index
    %c0_96 = arith.constant 0 : index
    %242 = vector.load %arg7[%c1_94, %c0_95, %c0_96] : memref<2x1x128xf32, #tpu.memory_space<vmem>>, vector<1x1x128xf32>
    %243 = vector.shape_cast %242 : vector<1x1x128xf32> to vector<1x128xf32>
    %244 = vector.shape_cast %243 : vector<1x128xf32> to vector<1x1x128xf32>
    %245 = vector.broadcast %244 : vector<1x1x128xf32> to vector<2x8x128xf32>
    %246 = arith.addf %241, %245 : vector<2x8x128xf32>
    %cst_97 = arith.constant 5.000000e-01 : f32
    %247 = vector.broadcast %cst_97 : f32 to vector<2x8x128xf32>
    %248 = arith.mulf %247, %246 : vector<2x8x128xf32>
    %249 = arith.mulf %246, %246 : vector<2x8x128xf32>
    %250 = arith.mulf %249, %246 : vector<2x8x128xf32>
    %cst_98 = arith.constant 4.471500e-02 : f32
    %251 = vector.broadcast %cst_98 : f32 to vector<2x8x128xf32>
    %252 = arith.mulf %251, %250 : vector<2x8x128xf32>
    %253 = arith.addf %246, %252 : vector<2x8x128xf32>
    %cst_99 = arith.constant 0.797884583 : f32
    %254 = vector.broadcast %cst_99 : f32 to vector<2x8x128xf32>
    %255 = arith.mulf %254, %253 : vector<2x8x128xf32>
    %256 = math.tanh %255 : vector<2x8x128xf32>
    %cst_100 = arith.constant 1.000000e+00 : f32
    %257 = vector.broadcast %cst_100 : f32 to vector<2x8x128xf32>
    %258 = arith.addf %257, %256 : vector<2x8x128xf32>
    %259 = arith.mulf %248, %258 : vector<2x8x128xf32>
    "tpu.trace_start"() <{level = 10 : i32, message = "bsf,bfh->bsh"}> : () -> ()
    %cst_101 = arith.constant dense<0.000000e+00> : vector<2x8x32xf32>
    %260 = tpu.matmul %259, %240, %cst_101 {dimension_numbers = #tpu.dot_dimension_numbers<[2], [1], [1], [2], [0, 0, 0, 1, 1, 2], [0], [0]>} : vector<2x8x128xf32>, vector<2x128x32xf32>, vector<2x8x32xf32> -> vector<2x8x32xf32>
    "tpu.trace_stop"() : () -> ()
    %261 = arith.addf %207, %260 : vector<2x8x32xf32>
    %262 = vector.shape_cast %147 : vector<1x32xf32> to vector<1x1x32xf32>
    %263 = vector.broadcast %262 : vector<1x1x32xf32> to vector<2x8x32xf32>
    %264 = arith.addf %261, %263 : vector<2x8x32xf32>
    %c0_102 = arith.constant 0 : index
    %c0_103 = arith.constant 0 : index
    %265 = vector.load %arg10[%c0_102, %c0_103] : memref<32x32xf32, #tpu.memory_space<vmem>>, vector<32x32xf32>
    %266 = vector.shape_cast %265 : vector<32x32xf32> to vector<1x32x32xf32>
    %267 = vector.shape_cast %266 : vector<1x32x32xf32> to vector<1x32x32xf32>
    %268 = vector.broadcast %267 : vector<1x32x32xf32> to vector<2x32x32xf32>
    "tpu.trace_start"() <{level = 10 : i32, message = "bsh,bhe->bse"}> : () -> ()
    %cst_104 = arith.constant dense<0.000000e+00> : vector<2x8x32xf32>
    %269 = tpu.matmul %264, %268, %cst_104 {dimension_numbers = #tpu.dot_dimension_numbers<[2], [1], [1], [2], [0, 0, 0, 1, 1, 2], [0], [0]>} : vector<2x8x32xf32>, vector<2x32x32xf32>, vector<2x8x32xf32> -> vector<2x8x32xf32>
    "tpu.trace_stop"() : () -> ()
    %c0_105 = arith.constant 0 : index
    %c0_106 = arith.constant 0 : index
    %270 = vector.load %arg11[%c0_105, %c0_106] : memref<1x32xf32, #tpu.memory_space<vmem>>, vector<1x32xf32>
    %271 = vector.shape_cast %270 : vector<1x32xf32> to vector<1x1x32xf32>
    %272 = vector.broadcast %271 : vector<1x1x32xf32> to vector<2x8x32xf32>
    %273 = arith.addf %269, %272 : vector<2x8x32xf32>
    %c0_107 = arith.constant 0 : index
    %c0_108 = arith.constant 0 : index
    %c0_109 = arith.constant 0 : index
    %274 = vector.load %arg12[%c0_107, %c0_108, %c0_109] : memref<2x8x32xf32, #tpu.memory_space<vmem>>, vector<2x8x32xf32>
    tpu.vector_store %arg12[%c0_107, %c0_108, %c0_109], %273 {strides = array<i32>} : memref<2x8x32xf32, #tpu.memory_space<vmem>>, vector<2x8x32xf32>,
    return
  }
}

</mosaic_0001>

<llo_original>
// kernel: tpu_custom_call.1
$region0: #{tpu_custom_call.1}
  #allocation0 [shape = 'u32[]', space=smem, size = 0x4, offset = 0x4, fixed_abs, tag = 'smem constant byte address 0x4 - core index']
  #allocation1 [shape = 'u32[144,128]{1,0:T(1,128)}', space=vmem, size = 0x12000, scoped, tag = 'internal scratch']
  %s0 = inlined_call_operand.vmem [shape: f32[2,8,32], index: 0, kind: input, shape index: {}]
  %s1 = inlined_call_operand.vmem [shape: f32[8,32], index: 1, kind: input, shape index: {}]
  %s2 = inlined_call_operand.vmem [shape: f32[2,1,8], index: 2, kind: input, shape index: {}]
  %s3 = inlined_call_operand.vmem [shape: f32[2,24,32,8], index: 3, kind: input, shape index: {}]
  %s4 = inlined_call_operand.vmem [shape: f32[2,24,1,8], index: 4, kind: input, shape index: {}]
  %s5 = inlined_call_operand.vmem [shape: f32[2,8,8,32], index: 5, kind: input, shape index: {}]
  %s6 = inlined_call_operand.vmem [shape: f32[2,32,128], index: 6, kind: input, shape index: {}]
  %s7 = inlined_call_operand.vmem [shape: f32[2,1,128], index: 7, kind: input, shape index: {}]
  %s8 = inlined_call_operand.vmem [shape: f32[2,128,32], index: 8, kind: input, shape index: {}]
  %s9 = inlined_call_operand.vmem [shape: f32[2,6,32], index: 9, kind: input, shape index: {}]
  %s10 = inlined_call_operand.vmem [shape: f32[32,32], index: 10, kind: input, shape index: {}]
  %s11 = inlined_call_operand.vmem [shape: f32[1,32], index: 11, kind: input, shape index: {}]
  %s12 = inlined_call_operand.hbm [shape: f32[2,8,32], index: 12, kind: output, shape index: {}]
  %s13 = sld [smem:[#allocation0]]
  $region58: #{tpu_custom_call.1} parent=0
    _
  %s15 = ssub.s32 1, %s13
  %s16 = scalar_select 0, %s15, %s13
  $region1: #{tpu_custom_call.1} parent=0
    #allocation2 [shape = 'u8[8192]{0}', space=vmem, size = 0x2000, scoped, tag = 'output window, operand 0, single buffered']
    #allocation3 [shape = 's32[1]{0}', space=sflag, size = 0x4, scoped, tag = 'scoped memory for tpu_custom_call.1']
    %17 = vsyncpa [#allocation3], 0
    // Predicated region
    $region2: #{tpu_custom_call.1} parent=1 // pred_check
      _
    $region3: #{tpu_custom_call.1} parent=1 // pred_check_branch
      %19 = sbr.rel (0) target = $region5
    $region4: #{tpu_custom_call.1} parent=1 // pred_region
      _
    $region5: #{tpu_custom_call.1} parent=1 // pred_fallthru
      _
    // Predicated region
    $region6: #{tpu_custom_call.1} parent=1 // pred_check
      _
    $region7: #{tpu_custom_call.1} parent=1 // pred_check_branch
      %21 = sbr.rel (0) target = $region9
    $region8: #{tpu_custom_call.1} parent=1 // pred_region
      _
    $region9: #{tpu_custom_call.1} parent=1 // pred_fallthru
      _
    // Predicated region
    $region10: #{tpu_custom_call.1} parent=1 // pred_check
      _
    $region11: #{tpu_custom_call.1} parent=1 // pred_check_branch
      %23 = sbr.rel (0) target = $region13
    $region12: #{tpu_custom_call.1} parent=1 // pred_region
      _
    $region13: #{tpu_custom_call.1} parent=1 // pred_fallthru
      _
    // Predicated region
    $region14: #{tpu_custom_call.1} parent=1 // pred_check
      _
    $region15: #{tpu_custom_call.1} parent=1 // pred_check_branch
      %25 = sbr.rel (0) target = $region17
    $region16: #{tpu_custom_call.1} parent=1 // pred_region
      _
    $region17: #{tpu_custom_call.1} parent=1 // pred_fallthru
      _
    // Predicated region
    $region18: #{tpu_custom_call.1} parent=1 // pred_check
      _
    $region19: #{tpu_custom_call.1} parent=1 // pred_check_branch
      %27 = sbr.rel (0) target = $region21
    $region20: #{tpu_custom_call.1} parent=1 // pred_region
      _
    $region21: #{tpu_custom_call.1} parent=1 // pred_fallthru
      _
    // Predicated region
    $region22: #{tpu_custom_call.1} parent=1 // pred_check
      _
    $region23: #{tpu_custom_call.1} parent=1 // pred_check_branch
      %29 = sbr.rel (0) target = $region25
    $region24: #{tpu_custom_call.1} parent=1 // pred_region
      _
    $region25: #{tpu_custom_call.1} parent=1 // pred_fallthru
      _
    // Predicated region
    $region26: #{tpu_custom_call.1} parent=1 // pred_check
      _
    $region27: #{tpu_custom_call.1} parent=1 // pred_check_branch
      %31 = sbr.rel (0) target = $region29
    $region28: #{tpu_custom_call.1} parent=1 // pred_region
      _
    $region29: #{tpu_custom_call.1} parent=1 // pred_fallthru
      _
    // Predicated region
    $region30: #{tpu_custom_call.1} parent=1 // pred_check
      _
    $region31: #{tpu_custom_call.1} parent=1 // pred_check_branch
      %33 = sbr.rel (0) target = $region33
    $region32: #{tpu_custom_call.1} parent=1 // pred_region
      _
    $region33: #{tpu_custom_call.1} parent=1 // pred_fallthru
      _
    // Predicated region
    $region34: #{tpu_custom_call.1} parent=1 // pred_check
      _
    $region35: #{tpu_custom_call.1} parent=1 // pred_check_branch
      %35 = sbr.rel (0) target = $region37
    $region36: #{tpu_custom_call.1} parent=1 // pred_region
      _
    $region37: #{tpu_custom_call.1} parent=1 // pred_fallthru
      _
    // Predicated region
    $region38: #{tpu_custom_call.1} parent=1 // pred_check
      _
    $region39: #{tpu_custom_call.1} parent=1 // pred_check_branch
      %37 = sbr.rel (0) target = $region41
    $region40: #{tpu_custom_call.1} parent=1 // pred_region
      _
    $region41: #{tpu_custom_call.1} parent=1 // pred_fallthru
      _
    // Predicated region
    $region42: #{tpu_custom_call.1} parent=1 // pred_check
      _
    $region43: #{tpu_custom_call.1} parent=1 // pred_check_branch
      %39 = sbr.rel (0) target = $region45
    $region44: #{tpu_custom_call.1} parent=1 // pred_region
      _
    $region45: #{tpu_custom_call.1} parent=1 // pred_fallthru
      _
    // Predicated region
    $region46: #{tpu_custom_call.1} parent=1 // pred_check
      _
    $region47: #{tpu_custom_call.1} parent=1 // pred_check_branch
      %41 = sbr.rel (0) target = $region49
    $region48: #{tpu_custom_call.1} parent=1 // pred_region
      _
    $region49: #{tpu_custom_call.1} parent=1 // pred_fallthru
      _
    %v42 = vld [vmem:[%s0] sm:$0xff]
    %v43 = vld [vmem:[%s0 + $0x8] sm:$0xff]
    %v44 = vld [vmem:[%s1] sm:$0xff]
    %v45 = vadd.f32 %v42, %v44
    %v46 = vadd.f32 %v43, %v44
    %v47 = vld [vmem:[%s2] sm:$0x1]
    %v48 = vld [vmem:[%s2 + $0x1] sm:$0x1]
    %vm49 = vcmp.gt.f32.partialorder %v47, 0.0
    %vm50 = vcmp.gt.f32.partialorder %v48, 0.0
    %v51 = vsel %vm49, 0.0, -1e+09
    %v52 = vsel %vm50, 0.0, -1e+09
    %v53 = vld [vmem:[%s9] sm:$0x3f]
    %vm54 = vcmask 261120
    %v55 = vsel %vm54, %v45, 0.0
    %56 = vadd.xlane.f32.xlu0 %v55
    %v57 = vpop.xlane.xlu0 %56
    %v58 = vsel %vm54, %v46, 0.0
    %59 = vadd.xlane.f32.xlu0 %v58
    %v60 = vpop.xlane.xlu0 %59
    %v61 = vrcp.pop 32.0
    %v62 = vmul.f32 %v57, %v61
    %v63 = vmul.f32 %v60, %v61
    %v64 = vsub.f32 %v45, %v62
    %v65 = vsub.f32 %v46, %v63
    %v66 = vmul.f32 %v64, %v64
    %v67 = vmul.f32 %v65, %v65
    %v68 = vsel %vm54, %v66, 0.0
    %69 = vadd.xlane.f32.xlu0 %v68
    %v70 = vpop.xlane.xlu0 %69
    %v71 = vsel %vm54, %v67, 0.0
    %72 = vadd.xlane.f32.xlu0 %v71
    %v73 = vpop.xlane.xlu0 %72
    %v74 = vmul.f32 %v70, 0.032258064
    %v75 = vmul.f32 %v73, 0.032258064
    %v76 = vrsqrt.pop %v74
    %v77 = vmul.f32 %v74, %v76
    %vm78 = vcmp.eq.f32.partialorder %v74, inf
    %v79 = vsel %vm78, %v74, %v77
    %vm80 = vcmp.eq.f32.partialorder %v74, 0.0
    %v81 = vand.u32 %v74, 2147483648
    %v82 = vsel %vm80, %v81, %v79
    %v83 = vrsqrt.pop %v75
    %v84 = vmul.f32 %v75, %v83
    %vm85 = vcmp.eq.f32.partialorder %v75, inf
    %v86 = vsel %vm85, %v75, %v84
    %vm87 = vcmp.eq.f32.partialorder %v75, 0.0
    %v88 = vand.u32 %v75, 2147483648
    %v89 = vsel %vm87, %v88, %v86
    %v90 = vadd.f32 %v82, 1e-06
    %v91 = vadd.f32 %v89, 1e-06
    %v92 = vrcp.pop %v90
    %v93 = vrcp.pop %v91
    %v94 = vmul.f32 %v64, %v92
    %v95 = vmul.f32 %v65, %v93
    %v96 = vlaneseq
    %v97 = vshrl.u32 %v96, 7
    %v98 = vsub.s32 0, %v97
    %v99 = vrot.slane %v53, %v98
    %v100 = vmul.f32 %v99, %v94
    %v101 = vmul.f32 %v99, %v95
    %v102 = vlaneseq
    %v103 = vshrl.u32 %v102, 7
    %v104 = vsub.s32 1, %v103
    %v105 = vrot.slane %v53, %v104
    %v106 = vadd.f32 %v100, %v105
    %v107 = vadd.f32 %v101, %v105
    %v108 = vld [vmem:[%s3] sm:$0xff]
    %v109 = vld [vmem:[%s3 + $0x8] sm:$0xff]
    %v110 = vld [vmem:[%s3 + $0x10] sm:$0xff]
    %v111 = vld [vmem:[%s3 + $0x18] sm:$0xff]
    %v112 = vld [vmem:[%s3 + $0x20] sm:$0xff]
    %v113 = vld [vmem:[%s3 + $0x28] sm:$0xff]
    %v114 = vld [vmem:[%s3 + $0x30] sm:$0xff]
    %v115 = vld [vmem:[%s3 + $0x38] sm:$0xff]
    %v116 = vld [vmem:[%s3 + $0x40] sm:$0xff]
    %v117 = vld [vmem:[%s3 + $0x48] sm:$0xff]
    %v118 = vld [vmem:[%s3 + $0x50] sm:$0xff]
    %v119 = vld [vmem:[%s3 + $0x58] sm:$0xff]
    %v120 = vld [vmem:[%s3 + $0x60] sm:$0xff]
    %v121 = vld [vmem:[%s3 + $0x68] sm:$0xff]
    %v122 = vld [vmem:[%s3 + $0x70] sm:$0xff]
    %v123 = vld [vmem:[%s3 + $0x78] sm:$0xff]
    %v124 = vld [vmem:[%s3 + $0x80] sm:$0xff]
    %v125 = vld [vmem:[%s3 + $0x88] sm:$0xff]
    %v126 = vld [vmem:[%s3 + $0x90] sm:$0xff]
    %v127 = vld [vmem:[%s3 + $0x98] sm:$0xff]
    %v128 = vld [vmem:[%s3 + $0xa0] sm:$0xff]
    %v129 = vld [vmem:[%s3 + $0xa8] sm:$0xff]
    %v130 = vld [vmem:[%s3 + $0xb0] sm:$0xff]
    %v131 = vld [vmem:[%s3 + $0xb8] sm:$0xff]
    %v132 = vld [vmem:[%s3 + $0xc0] sm:$0xff]
    %v133 = vld [vmem:[%s3 + $0xc8] sm:$0xff]
    %v134 = vld [vmem:[%s3 + $0xd0] sm:$0xff]
    %v135 = vld [vmem:[%s3 + $0xd8] sm:$0xff]
    %v136 = vld [vmem:[%s3 + $0xe0] sm:$0xff]
    %v137 = vld [vmem:[%s3 + $0xe8] sm:$0xff]
    %v138 = vld [vmem:[%s3 + $0xf0] sm:$0xff]
    %v139 = vld [vmem:[%s3 + $0xf8] sm:$0xff]
    %v140 = vld [vmem:[%s3 + $0x100] sm:$0xff]
    %v141 = vld [vmem:[%s3 + $0x108] sm:$0xff]
    %v142 = vld [vmem:[%s3 + $0x110] sm:$0xff]
    %v143 = vld [vmem:[%s3 + $0x118] sm:$0xff]
    %v144 = vld [vmem:[%s3 + $0x120] sm:$0xff]
    %v145 = vld [vmem:[%s3 + $0x128] sm:$0xff]
    %v146 = vld [vmem:[%s3 + $0x130] sm:$0xff]
    %v147 = vld [vmem:[%s3 + $0x138] sm:$0xff]
    %v148 = vld [vmem:[%s3 + $0x140] sm:$0xff]
    %v149 = vld [vmem:[%s3 + $0x148] sm:$0xff]
    %v150 = vld [vmem:[%s3 + $0x150] sm:$0xff]
    %v151 = vld [vmem:[%s3 + $0x158] sm:$0xff]
    %v152 = vld [vmem:[%s3 + $0x160] sm:$0xff]
    %v153 = vld [vmem:[%s3 + $0x168] sm:$0xff]
    %v154 = vld [vmem:[%s3 + $0x170] sm:$0xff]
    %v155 = vld [vmem:[%s3 + $0x178] sm:$0xff]
    %v156 = vld [vmem:[%s3 + $0x180] sm:$0xff]
    %v157 = vld [vmem:[%s3 + $0x188] sm:$0xff]
    %v158 = vld [vmem:[%s3 + $0x190] sm:$0xff]
    %v159 = vld [vmem:[%s3 + $0x198] sm:$0xff]
    %v160 = vld [vmem:[%s3 + $0x1a0] sm:$0xff]
    %v161 = vld [vmem:[%s3 + $0x1a8] sm:$0xff]
    %v162 = vld [vmem:[%s3 + $0x1b0] sm:$0xff]
    %v163 = vld [vmem:[%s3 + $0x1b8] sm:$0xff]
    %v164 = vld [vmem:[%s3 + $0x1c0] sm:$0xff]
    %v165 = vld [vmem:[%s3 + $0x1c8] sm:$0xff]
    %v166 = vld [vmem:[%s3 + $0x1d0] sm:$0xff]
    %v167 = vld [vmem:[%s3 + $0x1d8] sm:$0xff]
    %v168 = vld [vmem:[%s3 + $0x1e0] sm:$0xff]
    %v169 = vld [vmem:[%s3 + $0x1e8] sm:$0xff]
    %v170 = vld [vmem:[%s3 + $0x1f0] sm:$0xff]
    %v171 = vld [vmem:[%s3 + $0x1f8] sm:$0xff]
    %v172 = vld [vmem:[%s3 + $0x200] sm:$0xff]
    %v173 = vld [vmem:[%s3 + $0x208] sm:$0xff]
    %v174 = vld [vmem:[%s3 + $0x210] sm:$0xff]
    %v175 = vld [vmem:[%s3 + $0x218] sm:$0xff]
    %v176 = vld [vmem:[%s3 + $0x220] sm:$0xff]
    %v177 = vld [vmem:[%s3 + $0x228] sm:$0xff]
    %v178 = vld [vmem:[%s3 + $0x230] sm:$0xff]
    %v179 = vld [vmem:[%s3 + $0x238] sm:$0xff]
    %v180 = vld [vmem:[%s3 + $0x240] sm:$0xff]
    %v181 = vld [vmem:[%s3 + $0x248] sm:$0xff]
    %v182 = vld [vmem:[%s3 + $0x250] sm:$0xff]
    %v183 = vld [vmem:[%s3 + $0x258] sm:$0xff]
    %v184 = vld [vmem:[%s3 + $0x260] sm:$0xff]
    %v185 = vld [vmem:[%s3 + $0x268] sm:$0xff]
    %v186 = vld [vmem:[%s3 + $0x270] sm:$0xff]
    %v187 = vld [vmem:[%s3 + $0x278] sm:$0xff]
    %v188 = vld [vmem:[%s3 + $0x280] sm:$0xff]
    %v189 = vld [vmem:[%s3 + $0x288] sm:$0xff]
    %v190 = vld [vmem:[%s3 + $0x290] sm:$0xff]
    %v191 = vld [vmem:[%s3 + $0x298] sm:$0xff]
    %v192 = vld [vmem:[%s3 + $0x2a0] sm:$0xff]
    %v193 = vld [vmem:[%s3 + $0x2a8] sm:$0xff]
    %v194 = vld [vmem:[%s3 + $0x2b0] sm:$0xff]
    %v195 = vld [vmem:[%s3 + $0x2b8] sm:$0xff]
    %v196 = vld [vmem:[%s3 + $0x2c0] sm:$0xff]
    %v197 = vld [vmem:[%s3 + $0x2c8] sm:$0xff]
    %v198 = vld [vmem:[%s3 + $0x2d0] sm:$0xff]
    %v199 = vld [vmem:[%s3 + $0x2d8] sm:$0xff]
    %v200 = vld [vmem:[%s3 + $0x2e0] sm:$0xff]
    %v201 = vld [vmem:[%s3 + $0x2e8] sm:$0xff]
    %v202 = vld [vmem:[%s3 + $0x2f0] sm:$0xff]
    %v203 = vld [vmem:[%s3 + $0x2f8] sm:$0xff]
    %v204 = vld [vmem:[%s4] sm:$0x1]
    %v205 = vld [vmem:[%s4 + $0x1] sm:$0x1]
    %v206 = vld [vmem:[%s4 + $0x2] sm:$0x1]
    %v207 = vld [vmem:[%s4 + $0x3] sm:$0x1]
    %v208 = vld [vmem:[%s4 + $0x4] sm:$0x1]
    %v209 = vld [vmem:[%s4 + $0x5] sm:$0x1]
    %v210 = vld [vmem:[%s4 + $0x6] sm:$0x1]
    %v211 = vld [vmem:[%s4 + $0x7] sm:$0x1]
    %v212 = vld [vmem:[%s4 + $0x8] sm:$0x1]
    %v213 = vld [vmem:[%s4 + $0x9] sm:$0x1]
    %v214 = vld [vmem:[%s4 + $0xa] sm:$0x1]
    %v215 = vld [vmem:[%s4 + $0xb] sm:$0x1]
    %v216 = vld [vmem:[%s4 + $0xc] sm:$0x1]
    %v217 = vld [vmem:[%s4 + $0xd] sm:$0x1]
    %v218 = vld [vmem:[%s4 + $0xe] sm:$0x1]
    %v219 = vld [vmem:[%s4 + $0xf] sm:$0x1]
    %v220 = vld [vmem:[%s4 + $0x10] sm:$0x1]
    %v221 = vld [vmem:[%s4 + $0x11] sm:$0x1]
    %v222 = vld [vmem:[%s4 + $0x12] sm:$0x1]
    %v223 = vld [vmem:[%s4 + $0x13] sm:$0x1]
    %v224 = vld [vmem:[%s4 + $0x14] sm:$0x1]
    %v225 = vld [vmem:[%s4 + $0x15] sm:$0x1]
    %v226 = vld [vmem:[%s4 + $0x16] sm:$0x1]
    %v227 = vld [vmem:[%s4 + $0x17] sm:$0x1]
    %v252 = vlaneseq
    %v253 = vshrl.u32 %v252, 7
    %v254 = vsub.s32 0, %v253
    %v255 = vrot.slane %v204, %v254
    %v256 = vlaneseq
    %v257 = vshrl.u32 %v256, 7
    %v258 = vsub.s32 0, %v257
    %v259 = vrot.slane %v205, %v258
    %v260 = vlaneseq
    %v261 = vshrl.u32 %v260, 7
    %v262 = vsub.s32 0, %v261
    %v263 = vrot.slane %v206, %v262
    %v264 = vlaneseq
    %v265 = vshrl.u32 %v264, 7
    %v266 = vsub.s32 0, %v265
    %v267 = vrot.slane %v207, %v266
    %v268 = vlaneseq
    %v269 = vshrl.u32 %v268, 7
    %v270 = vsub.s32 0, %v269
    %v271 = vrot.slane %v208, %v270
    %v272 = vlaneseq
    %v273 = vshrl.u32 %v272, 7
    %v274 = vsub.s32 0, %v273
    %v275 = vrot.slane %v209, %v274
    %v276 = vlaneseq
    %v277 = vshrl.u32 %v276, 7
    %v278 = vsub.s32 0, %v277
    %v279 = vrot.slane %v210, %v278
    %v280 = vlaneseq
    %v281 = vshrl.u32 %v280, 7
    %v282 = vsub.s32 0, %v281
    %v283 = vrot.slane %v211, %v282
    %v284 = vlaneseq
    %v285 = vshrl.u32 %v284, 7
    %v286 = vsub.s32 0, %v285
    %v287 = vrot.slane %v212, %v286
    %v288 = vlaneseq
    %v289 = vshrl.u32 %v288, 7
    %v290 = vsub.s32 0, %v289
    %v291 = vrot.slane %v213, %v290
    %v292 = vlaneseq
    %v293 = vshrl.u32 %v292, 7
    %v294 = vsub.s32 0, %v293
    %v295 = vrot.slane %v214, %v294
    %v296 = vlaneseq
    %v297 = vshrl.u32 %v296, 7
    %v298 = vsub.s32 0, %v297
    %v299 = vrot.slane %v215, %v298
    %v300 = vlaneseq
    %v301 = vshrl.u32 %v300, 7
    %v302 = vsub.s32 0, %v301
    %v303 = vrot.slane %v216, %v302
    %v304 = vlaneseq
    %v305 = vshrl.u32 %v304, 7
    %v306 = vsub.s32 0, %v305
    %v307 = vrot.slane %v217, %v306
    %v308 = vlaneseq
    %v309 = vshrl.u32 %v308, 7
    %v310 = vsub.s32 0, %v309
    %v311 = vrot.slane %v218, %v310
    %v312 = vlaneseq
    %v313 = vshrl.u32 %v312, 7
    %v314 = vsub.s32 0, %v313
    %v315 = vrot.slane %v219, %v314
    %v316 = vlaneseq
    %v317 = vshrl.u32 %v316, 7
    %v318 = vsub.s32 0, %v317
    %v319 = vrot.slane %v220, %v318
    %v320 = vlaneseq
    %v321 = vshrl.u32 %v320, 7
    %v322 = vsub.s32 0, %v321
    %v323 = vrot.slane %v221, %v322
    %v324 = vlaneseq
    %v325 = vshrl.u32 %v324, 7
    %v326 = vsub.s32 0, %v325
    %v327 = vrot.slane %v222, %v326
    %v328 = vlaneseq
    %v329 = vshrl.u32 %v328, 7
    %v330 = vsub.s32 0, %v329
    %v331 = vrot.slane %v223, %v330
    %v332 = vlaneseq
    %v333 = vshrl.u32 %v332, 7
    %v334 = vsub.s32 0, %v333
    %v335 = vrot.slane %v224, %v334
    %v336 = vlaneseq
    %v337 = vshrl.u32 %v336, 7
    %v338 = vsub.s32 0, %v337
    %v339 = vrot.slane %v225, %v338
    %v340 = vlaneseq
    %v341 = vshrl.u32 %v340, 7
    %v342 = vsub.s32 0, %v341
    %v343 = vrot.slane %v226, %v342
    %v344 = vlaneseq
    %v345 = vshrl.u32 %v344, 7
    %v346 = vsub.s32 0, %v345
    %v347 = vrot.slane %v227, %v346
    %v373 = vsel %vm54, %v106, 0
    %375 = vmatprep.subr.mxu0 0.0
    %376 = vmatpush1.msra.mxu0 %v108
    %377 = vmatprep.subr.mxu0 0.0
    %378 = vmatpush1.msra.mxu0 %v109
    %379 = vmatprep.subr.mxu0 0.0
    %380 = vmatpush1.msra.mxu0 %v110
    %381 = vmatprep.subr.mxu0 0.0
    %382 = vmatpush1.msra.mxu0 %v111
    %383 = vmatprep.subr.mxu0 0.0
    %384 = vmatpush1.msra.mxu0 0.0
    %385 = vmatprep.subr.mxu0 0.0
    %386 = vmatpush1.msra.mxu0 0.0
    %387 = vmatprep.subr.mxu0 0.0
    %388 = vmatpush1.msra.mxu0 0.0
    %389 = vmatprep.subr.mxu0 0.0
    %390 = vmatpush1.msra.mxu0 0.0
    %391 = vmatprep.subr.mxu0 0.0
    %392 = vmatpush1.msra.mxu0 0.0
    %393 = vmatprep.subr.mxu0 0.0
    %394 = vmatpush1.msra.mxu0 0.0
    %395 = vmatprep.subr.mxu0 0.0
    %396 = vmatpush1.msra.mxu0 0.0
    %397 = vmatprep.subr.mxu0 0.0
    %398 = vmatpush1.msra.mxu0 0.0
    %399 = vmatprep.subr.mxu0 0.0
    %400 = vmatpush1.msra.mxu0 0.0
    %401 = vmatprep.subr.mxu0 0.0
    %402 = vmatpush1.msra.mxu0 0.0
    %403 = vmatprep.subr.mxu0 0.0
    %404 = vmatpush1.msra.mxu0 0.0
    %405 = vmatprep.subr.mxu0 0.0
    %406 = vmatpush1.msra.mxu0 0.0
    %407 = vmatprep.subr.mxu0 0.0
    %408 = vmatpush1.msra.mxu0 0.0
    %409 = vmatprep.subr.mxu0 0.0
    %410 = vmatpush1.msra.mxu0 0.0
    %411 = vmatprep.subr.mxu0 0.0
    %412 = vmatpush1.msra.mxu0 0.0
    %413 = vmatprep.subr.mxu0 0.0
    %414 = vmatpush1.msra.mxu0 0.0
    %415 = vmatprep.subr.mxu0 0.0
    %416 = vmatpush1.msra.mxu0 0.0
    %417 = vmatprep.subr.mxu0 0.0
    %418 = vmatpush1.msra.mxu0 0.0
    %419 = vmatprep.subr.mxu0 0.0
    %420 = vmatpush1.msra.mxu0 0.0
    %421 = vmatprep.subr.mxu0 0.0
    %422 = vmatpush1.msra.mxu0 0.0
    %423 = vmatprep.subr.mxu0 0.0
    %424 = vmatpush1.msra.mxu0 0.0
    %425 = vmatprep.subr.mxu0 0.0
    %426 = vmatpush1.msra.mxu0 0.0
    %427 = vmatprep.subr.mxu0 0.0
    %428 = vmatpush1.msra.mxu0 0.0
    %429 = vmatprep.subr.mxu0 0.0
    %430 = vmatpush1.msra.mxu0 0.0
    %431 = vmatprep.subr.mxu0 0.0
    %432 = vmatpush1.msra.mxu0 0.0
    %433 = vmatprep.subr.mxu0 0.0
    %434 = vmatpush1.msra.mxu0 0.0
    %435 = vmatprep.subr.mxu0 0.0
    %436 = vmatpush1.msra.mxu0 0.0
    %437 = vmatprep.subr.mxu0 0.0
    %438 = vmatpush1.msra.mxu0 0.0
    %439 = vmatprep.mubr.f32.mxu0 0.0
    %440 = vmatmul.mubr.f32.gmra.mrb[0].mxu0 %v373
    %v441 = vpop.f32.mrb[0].mxu0
    %v442 = vadd.f32 %v255, %v441
    %v443 = vpop.f32.mrb[0].mxu0
    %444 = vdwg.mxu0
    %v446 = vsel %vm54, %v107, 0
    %448 = vmatprep.subr.mxu0 0.0
    %449 = vmatpush1.msra.mxu0 %v112
    %450 = vmatprep.subr.mxu0 0.0
    %451 = vmatpush1.msra.mxu0 %v113
    %452 = vmatprep.subr.mxu0 0.0
    %453 = vmatpush1.msra.mxu0 %v114
    %454 = vmatprep.subr.mxu0 0.0
    %455 = vmatpush1.msra.mxu0 %v115
    %456 = vmatprep.subr.mxu0 0.0
    %457 = vmatpush1.msra.mxu0 0.0
    %458 = vmatprep.subr.mxu0 0.0
    %459 = vmatpush1.msra.mxu0 0.0
    %460 = vmatprep.subr.mxu0 0.0
    %461 = vmatpush1.msra.mxu0 0.0
    %462 = vmatprep.subr.mxu0 0.0
    %463 = vmatpush1.msra.mxu0 0.0
    %464 = vmatprep.subr.mxu0 0.0
    %465 = vmatpush1.msra.mxu0 0.0
    %466 = vmatprep.subr.mxu0 0.0
    %467 = vmatpush1.msra.mxu0 0.0
    %468 = vmatprep.subr.mxu0 0.0
    %469 = vmatpush1.msra.mxu0 0.0
    %470 = vmatprep.subr.mxu0 0.0
    %471 = vmatpush1.msra.mxu0 0.0
    %472 = vmatprep.subr.mxu0 0.0
    %473 = vmatpush1.msra.mxu0 0.0
    %474 = vmatprep.subr.mxu0 0.0
    %475 = vmatpush1.msra.mxu0 0.0
    %476 = vmatprep.subr.mxu0 0.0
    %477 = vmatpush1.msra.mxu0 0.0
    %478 = vmatprep.subr.mxu0 0.0
    %479 = vmatpush1.msra.mxu0 0.0
    %480 = vmatprep.subr.mxu0 0.0
    %481 = vmatpush1.msra.mxu0 0.0
    %482 = vmatprep.subr.mxu0 0.0
    %483 = vmatpush1.msra.mxu0 0.0
    %484 = vmatprep.subr.mxu0 0.0
    %485 = vmatpush1.msra.mxu0 0.0
    %486 = vmatprep.subr.mxu0 0.0
    %487 = vmatpush1.msra.mxu0 0.0
    %488 = vmatprep.subr.mxu0 0.0
    %489 = vmatpush1.msra.mxu0 0.0
    %490 = vmatprep.subr.mxu0 0.0
    %491 = vmatpush1.msra.mxu0 0.0
    %492 = vmatprep.subr.mxu0 0.0
    %493 = vmatpush1.msra.mxu0 0.0
    %494 = vmatprep.subr.mxu0 0.0
    %495 = vmatpush1.msra.mxu0 0.0
    %496 = vmatprep.subr.mxu0 0.0
    %497 = vmatpush1.msra.mxu0 0.0
    %498 = vmatprep.subr.mxu0 0.0
    %499 = vmatpush1.msra.mxu0 0.0
    %500 = vmatprep.subr.mxu0 0.0
    %501 = vmatpush1.msra.mxu0 0.0
    %502 = vmatprep.subr.mxu0 0.0
    %503 = vmatpush1.msra.mxu0 0.0
    %504 = vmatprep.subr.mxu0 0.0
    %505 = vmatpush1.msra.mxu0 0.0
    %506 = vmatprep.subr.mxu0 0.0
    %507 = vmatpush1.msra.mxu0 0.0
    %508 = vmatprep.subr.mxu0 0.0
    %509 = vmatpush1.msra.mxu0 0.0
    %510 = vmatprep.subr.mxu0 0.0
    %511 = vmatpush1.msra.mxu0 0.0
    %512 = vmatprep.mubr.f32.mxu0 0.0
    %513 = vmatmul.mubr.f32.gmra.mrb[0].mxu0 %v446
    %v514 = vpop.f32.mrb[0].mxu0
    %v515 = vadd.f32 %v259, %v514
    %v516 = vpop.f32.mrb[0].mxu0
    %517 = vdwg.mxu0
    %518 = vmatprep.subr.mxu0 0.0
    %519 = vmatpush1.msra.mxu0 %v116
    %520 = vmatprep.subr.mxu0 0.0
    %521 = vmatpush1.msra.mxu0 %v117
    %522 = vmatprep.subr.mxu0 0.0
    %523 = vmatpush1.msra.mxu0 %v118
    %524 = vmatprep.subr.mxu0 0.0
    %525 = vmatpush1.msra.mxu0 %v119
    %526 = vmatprep.subr.mxu0 0.0
    %527 = vmatpush1.msra.mxu0 0.0
    %528 = vmatprep.subr.mxu0 0.0
    %529 = vmatpush1.msra.mxu0 0.0
    %530 = vmatprep.subr.mxu0 0.0
    %531 = vmatpush1.msra.mxu0 0.0
    %532 = vmatprep.subr.mxu0 0.0
    %533 = vmatpush1.msra.mxu0 0.0
    %534 = vmatprep.subr.mxu0 0.0
    %535 = vmatpush1.msra.mxu0 0.0
    %536 = vmatprep.subr.mxu0 0.0
    %537 = vmatpush1.msra.mxu0 0.0
    %538 = vmatprep.subr.mxu0 0.0
    %539 = vmatpush1.msra.mxu0 0.0
    %540 = vmatprep.subr.mxu0 0.0
    %541 = vmatpush1.msra.mxu0 0.0
    %542 = vmatprep.subr.mxu0 0.0
    %543 = vmatpush1.msra.mxu0 0.0
    %544 = vmatprep.subr.mxu0 0.0
    %545 = vmatpush1.msra.mxu0 0.0
    %546 = vmatprep.subr.mxu0 0.0
    %547 = vmatpush1.msra.mxu0 0.0
    %548 = vmatprep.subr.mxu0 0.0
    %549 = vmatpush1.msra.mxu0 0.0
    %550 = vmatprep.subr.mxu0 0.0
    %551 = vmatpush1.msra.mxu0 0.0
    %552 = vmatprep.subr.mxu0 0.0
    %553 = vmatpush1.msra.mxu0 0.0
    %554 = vmatprep.subr.mxu0 0.0
    %555 = vmatpush1.msra.mxu0 0.0
    %556 = vmatprep.subr.mxu0 0.0
    %557 = vmatpush1.msra.mxu0 0.0
    %558 = vmatprep.subr.mxu0 0.0
    %559 = vmatpush1.msra.mxu0 0.0
    %560 = vmatprep.subr.mxu0 0.0
    %561 = vmatpush1.msra.mxu0 0.0
    %562 = vmatprep.subr.mxu0 0.0
    %563 = vmatpush1.msra.mxu0 0.0
    %564 = vmatprep.subr.mxu0 0.0
    %565 = vmatpush1.msra.mxu0 0.0
    %566 = vmatprep.subr.mxu0 0.0
    %567 = vmatpush1.msra.mxu0 0.0
    %568 = vmatprep.subr.mxu0 0.0
    %569 = vmatpush1.msra.mxu0 0.0
    %570 = vmatprep.subr.mxu0 0.0
    %571 = vmatpush1.msra.mxu0 0.0
    %572 = vmatprep.subr.mxu0 0.0
    %573 = vmatpush1.msra.mxu0 0.0
    %574 = vmatprep.subr.mxu0 0.0
    %575 = vmatpush1.msra.mxu0 0.0
    %576 = vmatprep.subr.mxu0 0.0
    %577 = vmatpush1.msra.mxu0 0.0
    %578 = vmatprep.subr.mxu0 0.0
    %579 = vmatpush1.msra.mxu0 0.0
    %580 = vmatprep.subr.mxu0 0.0
    %581 = vmatpush1.msra.mxu0 0.0
    %582 = vmatprep.mubr.f32.mxu0 0.0
    %583 = vmatmul.mubr.f32.gmra.mrb[0].mxu0 %v373
    %v584 = vpop.f32.mrb[0].mxu0
    %v585 = vadd.f32 %v263, %v584
    %v586 = vpop.f32.mrb[0].mxu0
    %587 = vdwg.mxu0
    %588 = vmatprep.subr.mxu0 0.0
    %589 = vmatpush1.msra.mxu0 %v120
    %590 = vmatprep.subr.mxu0 0.0
    %591 = vmatpush1.msra.mxu0 %v121
    %592 = vmatprep.subr.mxu0 0.0
    %593 = vmatpush1.msra.mxu0 %v122
    %594 = vmatprep.subr.mxu0 0.0
    %595 = vmatpush1.msra.mxu0 %v123
    %596 = vmatprep.subr.mxu0 0.0
    %597 = vmatpush1.msra.mxu0 0.0
    %598 = vmatprep.subr.mxu0 0.0
    %599 = vmatpush1.msra.mxu0 0.0
    %600 = vmatprep.subr.mxu0 0.0
    %601 = vmatpush1.msra.mxu0 0.0
    %602 = vmatprep.subr.mxu0 0.0
    %603 = vmatpush1.msra.mxu0 0.0
    %604 = vmatprep.subr.mxu0 0.0
    %605 = vmatpush1.msra.mxu0 0.0
    %606 = vmatprep.subr.mxu0 0.0
    %607 = vmatpush1.msra.mxu0 0.0
    %608 = vmatprep.subr.mxu0 0.0
    %609 = vmatpush1.msra.mxu0 0.0
    %610 = vmatprep.subr.mxu0 0.0
    %611 = vmatpush1.msra.mxu0 0.0
    %612 = vmatprep.subr.mxu0 0.0
    %613 = vmatpush1.msra.mxu0 0.0
    %614 = vmatprep.subr.mxu0 0.0
    %615 = vmatpush1.msra.mxu0 0.0
    %616 = vmatprep.subr.mxu0 0.0
    %617 = vmatpush1.msra.mxu0 0.0
    %618 = vmatprep.subr.mxu0 0.0
    %619 = vmatpush1.msra.mxu0 0.0
    %620 = vmatprep.subr.mxu0 0.0
    %621 = vmatpush1.msra.mxu0 0.0
    %622 = vmatprep.subr.mxu0 0.0
    %623 = vmatpush1.msra.mxu0 0.0
    %624 = vmatprep.subr.mxu0 0.0
    %625 = vmatpush1.msra.mxu0 0.0
    %626 = vmatprep.subr.mxu0 0.0
    %627 = vmatpush1.msra.mxu0 0.0
    %628 = vmatprep.subr.mxu0 0.0
    %629 = vmatpush1.msra.mxu0 0.0
    %630 = vmatprep.subr.mxu0 0.0
    %631 = vmatpush1.msra.mxu0 0.0
    %632 = vmatprep.subr.mxu0 0.0
    %633 = vmatpush1.msra.mxu0 0.0
    %634 = vmatprep.subr.mxu0 0.0
    %635 = vmatpush1.msra.mxu0 0.0
    %636 = vmatprep.subr.mxu0 0.0
    %637 = vmatpush1.msra.mxu0 0.0
    %638 = vmatprep.subr.mxu0 0.0
    %639 = vmatpush1.msra.mxu0 0.0
    %640 = vmatprep.subr.mxu0 0.0
    %641 = vmatpush1.msra.mxu0 0.0
    %642 = vmatprep.subr.mxu0 0.0
    %643 = vmatpush1.msra.mxu0 0.0
    %644 = vmatprep.subr.mxu0 0.0
    %645 = vmatpush1.msra.mxu0 0.0
    %646 = vmatprep.subr.mxu0 0.0
    %647 = vmatpush1.msra.mxu0 0.0
    %648 = vmatprep.subr.mxu0 0.0
    %649 = vmatpush1.msra.mxu0 0.0
    %650 = vmatprep.subr.mxu0 0.0
    %651 = vmatpush1.msra.mxu0 0.0
    %652 = vmatprep.mubr.f32.mxu0 0.0
    %653 = vmatmul.mubr.f32.gmra.mrb[0].mxu0 %v446
    %v654 = vpop.f32.mrb[0].mxu0
    %v655 = vadd.f32 %v267, %v654
    %v656 = vpop.f32.mrb[0].mxu0
    %657 = vdwg.mxu0
    %658 = vmatprep.subr.mxu0 0.0
    %659 = vmatpush1.msra.mxu0 %v124
    %660 = vmatprep.subr.mxu0 0.0
    %661 = vmatpush1.msra.mxu0 %v125
    %662 = vmatprep.subr.mxu0 0.0
    %663 = vmatpush1.msra.mxu0 %v126
    %664 = vmatprep.subr.mxu0 0.0
    %665 = vmatpush1.msra.mxu0 %v127
    %666 = vmatprep.subr.mxu0 0.0
    %667 = vmatpush1.msra.mxu0 0.0
    %668 = vmatprep.subr.mxu0 0.0
    %669 = vmatpush1.msra.mxu0 0.0
    %670 = vmatprep.subr.mxu0 0.0
    %671 = vmatpush1.msra.mxu0 0.0
    %672 = vmatprep.subr.mxu0 0.0
    %673 = vmatpush1.msra.mxu0 0.0
    %674 = vmatprep.subr.mxu0 0.0
    %675 = vmatpush1.msra.mxu0 0.0
    %676 = vmatprep.subr.mxu0 0.0
    %677 = vmatpush1.msra.mxu0 0.0
    %678 = vmatprep.subr.mxu0 0.0
    %679 = vmatpush1.msra.mxu0 0.0
    %680 = vmatprep.subr.mxu0 0.0
    %681 = vmatpush1.msra.mxu0 0.0
    %682 = vmatprep.subr.mxu0 0.0
    %683 = vmatpush1.msra.mxu0 0.0
    %684 = vmatprep.subr.mxu0 0.0
    %685 = vmatpush1.msra.mxu0 0.0
    %686 = vmatprep.subr.mxu0 0.0
    %687 = vmatpush1.msra.mxu0 0.0
    %688 = vmatprep.subr.mxu0 0.0
    %689 = vmatpush1.msra.mxu0 0.0
    %690 = vmatprep.subr.mxu0 0.0
    %691 = vmatpush1.msra.mxu0 0.0
    %692 = vmatprep.subr.mxu0 0.0
    %693 = vmatpush1.msra.mxu0 0.0
    %694 = vmatprep.subr.mxu0 0.0
    %695 = vmatpush1.msra.mxu0 0.0
    %696 = vmatprep.subr.mxu0 0.0
    %697 = vmatpush1.msra.mxu0 0.0
    %698 = vmatprep.subr.mxu0 0.0
    %699 = vmatpush1.msra.mxu0 0.0
    %700 = vmatprep.subr.mxu0 0.0
    %701 = vmatpush1.msra.mxu0 0.0
    %702 = vmatprep.subr.mxu0 0.0
    %703 = vmatpush1.msra.mxu0 0.0
    %704 = vmatprep.subr.mxu0 0.0
    %705 = vmatpush1.msra.mxu0 0.0
    %706 = vmatprep.subr.mxu0 0.0
    %707 = vmatpush1.msra.mxu0 0.0
    %708 = vmatprep.subr.mxu0 0.0
    %709 = vmatpush1.msra.mxu0 0.0
    %710 = vmatprep.subr.mxu0 0.0
    %711 = vmatpush1.msra.mxu0 0.0
    %712 = vmatprep.subr.mxu0 0.0
    %713 = vmatpush1.msra.mxu0 0.0
    %714 = vmatprep.subr.mxu0 0.0
    %715 = vmatpush1.msra.mxu0 0.0
    %716 = vmatprep.subr.mxu0 0.0
    %717 = vmatpush1.msra.mxu0 0.0
    %718 = vmatprep.subr.mxu0 0.0
    %719 = vmatpush1.msra.mxu0 0.0
    %720 = vmatprep.subr.mxu0 0.0
    %721 = vmatpush1.msra.mxu0 0.0
    %722 = vmatprep.mubr.f32.mxu0 0.0
    %723 = vmatmul.mubr.f32.gmra.mrb[0].mxu0 %v373
    %v724 = vpop.f32.mrb[0].mxu0
    %v725 = vadd.f32 %v271, %v724
    %v726 = vpop.f32.mrb[0].mxu0
    %727 = vdwg.mxu0
    %728 = vmatprep.subr.mxu0 0.0
    %729 = vmatpush1.msra.mxu0 %v128
    %730 = vmatprep.subr.mxu0 0.0
    %731 = vmatpush1.msra.mxu0 %v129
    %732 = vmatprep.subr.mxu0 0.0
    %733 = vmatpush1.msra.mxu0 %v130
    %734 = vmatprep.subr.mxu0 0.0
    %735 = vmatpush1.msra.mxu0 %v131
    %736 = vmatprep.subr.mxu0 0.0
    %737 = vmatpush1.msra.mxu0 0.0
    %738 = vmatprep.subr.mxu0 0.0
    %739 = vmatpush1.msra.mxu0 0.0
    %740 = vmatprep.subr.mxu0 0.0
    %741 = vmatpush1.msra.mxu0 0.0
    %742 = vmatprep.subr.mxu0 0.0
    %743 = vmatpush1.msra.mxu0 0.0
    %744 = vmatprep.subr.mxu0 0.0
    %745 = vmatpush1.msra.mxu0 0.0
    %746 = vmatprep.subr.mxu0 0.0
    %747 = vmatpush1.msra.mxu0 0.0
    %748 = vmatprep.subr.mxu0 0.0
    %749 = vmatpush1.msra.mxu0 0.0
    %750 = vmatprep.subr.mxu0 0.0
    %751 = vmatpush1.msra.mxu0 0.0
    %752 = vmatprep.subr.mxu0 0.0
    %753 = vmatpush1.msra.mxu0 0.0
    %754 = vmatprep.subr.mxu0 0.0
    %755 = vmatpush1.msra.mxu0 0.0
    %756 = vmatprep.subr.mxu0 0.0
    %757 = vmatpush1.msra.mxu0 0.0
    %758 = vmatprep.subr.mxu0 0.0
    %759 = vmatpush1.msra.mxu0 0.0
    %760 = vmatprep.subr.mxu0 0.0
    %761 = vmatpush1.msra.mxu0 0.0
    %762 = vmatprep.subr.mxu0 0.0
    %763 = vmatpush1.msra.mxu0 0.0
    %764 = vmatprep.subr.mxu0 0.0
    %765 = vmatpush1.msra.mxu0 0.0
    %766 = vmatprep.subr.mxu0 0.0
    %767 = vmatpush1.msra.mxu0 0.0
    %768 = vmatprep.subr.mxu0 0.0
    %769 = vmatpush1.msra.mxu0 0.0
    %770 = vmatprep.subr.mxu0 0.0
    %771 = vmatpush1.msra.mxu0 0.0
    %772 = vmatprep.subr.mxu0 0.0
    %773 = vmatpush1.msra.mxu0 0.0
    %774 = vmatprep.subr.mxu0 0.0
    %775 = vmatpush1.msra.mxu0 0.0
    %776 = vmatprep.subr.mxu0 0.0
    %777 = vmatpush1.msra.mxu0 0.0
    %778 = vmatprep.subr.mxu0 0.0
    %779 = vmatpush1.msra.mxu0 0.0
    %780 = vmatprep.subr.mxu0 0.0
    %781 = vmatpush1.msra.mxu0 0.0
    %782 = vmatprep.subr.mxu0 0.0
    %783 = vmatpush1.msra.mxu0 0.0
    %784 = vmatprep.subr.mxu0 0.0
    %785 = vmatpush1.msra.mxu0 0.0
    %786 = vmatprep.subr.mxu0 0.0
    %787 = vmatpush1.msra.mxu0 0.0
    %788 = vmatprep.subr.mxu0 0.0
    %789 = vmatpush1.msra.mxu0 0.0
    %790 = vmatprep.subr.mxu0 0.0
    %791 = vmatpush1.msra.mxu0 0.0
    %792 = vmatprep.mubr.f32.mxu0 0.0
    %793 = vmatmul.mubr.f32.gmra.mrb[0].mxu0 %v446
    %v794 = vpop.f32.mrb[0].mxu0
    %v795 = vadd.f32 %v275, %v794
    %v796 = vpop.f32.mrb[0].mxu0
    %797 = vdwg.mxu0
    %798 = vmatprep.subr.mxu0 0.0
    %799 = vmatpush1.msra.mxu0 %v132
    %800 = vmatprep.subr.mxu0 0.0
    %801 = vmatpush1.msra.mxu0 %v133
    %802 = vmatprep.subr.mxu0 0.0
    %803 = vmatpush1.msra.mxu0 %v134
    %804 = vmatprep.subr.mxu0 0.0
    %805 = vmatpush1.msra.mxu0 %v135
    %806 = vmatprep.subr.mxu0 0.0
    %807 = vmatpush1.msra.mxu0 0.0
    %808 = vmatprep.subr.mxu0 0.0
    %809 = vmatpush1.msra.mxu0 0.0
    %810 = vmatprep.subr.mxu0 0.0
    %811 = vmatpush1.msra.mxu0 0.0
    %812 = vmatprep.subr.mxu0 0.0
    %813 = vmatpush1.msra.mxu0 0.0
    %814 = vmatprep.subr.mxu0 0.0
    %815 = vmatpush1.msra.mxu0 0.0
    %816 = vmatprep.subr.mxu0 0.0
    %817 = vmatpush1.msra.mxu0 0.0
    %818 = vmatprep.subr.mxu0 0.0
    %819 = vmatpush1.msra.mxu0 0.0
    %820 = vmatprep.subr.mxu0 0.0
    %821 = vmatpush1.msra.mxu0 0.0
    %822 = vmatprep.subr.mxu0 0.0
    %823 = vmatpush1.msra.mxu0 0.0
    %824 = vmatprep.subr.mxu0 0.0
    %825 = vmatpush1.msra.mxu0 0.0
    %826 = vmatprep.subr.mxu0 0.0
    %827 = vmatpush1.msra.mxu0 0.0
    %828 = vmatprep.subr.mxu0 0.0
    %829 = vmatpush1.msra.mxu0 0.0
    %830 = vmatprep.subr.mxu0 0.0
    %831 = vmatpush1.msra.mxu0 0.0
    %832 = vmatprep.subr.mxu0 0.0
    %833 = vmatpush1.msra.mxu0 0.0
    %834 = vmatprep.subr.mxu0 0.0
    %835 = vmatpush1.msra.mxu0 0.0
    %836 = vmatprep.subr.mxu0 0.0
    %837 = vmatpush1.msra.mxu0 0.0
    %838 = vmatprep.subr.mxu0 0.0
    %839 = vmatpush1.msra.mxu0 0.0
    %840 = vmatprep.subr.mxu0 0.0
    %841 = vmatpush1.msra.mxu0 0.0
    %842 = vmatprep.subr.mxu0 0.0
    %843 = vmatpush1.msra.mxu0 0.0
    %844 = vmatprep.subr.mxu0 0.0
    %845 = vmatpush1.msra.mxu0 0.0
    %846 = vmatprep.subr.mxu0 0.0
    %847 = vmatpush1.msra.mxu0 0.0
    %848 = vmatprep.subr.mxu0 0.0
    %849 = vmatpush1.msra.mxu0 0.0
    %850 = vmatprep.subr.mxu0 0.0
    %851 = vmatpush1.msra.mxu0 0.0
    %852 = vmatprep.subr.mxu0 0.0
    %853 = vmatpush1.msra.mxu0 0.0
    %854 = vmatprep.subr.mxu0 0.0
    %855 = vmatpush1.msra.mxu0 0.0
    %856 = vmatprep.subr.mxu0 0.0
    %857 = vmatpush1.msra.mxu0 0.0
    %858 = vmatprep.subr.mxu0 0.0
    %859 = vmatpush1.msra.mxu0 0.0
    %860 = vmatprep.subr.mxu0 0.0
    %861 = vmatpush1.msra.mxu0 0.0
    %862 = vmatprep.mubr.f32.mxu0 0.0
    %863 = vmatmul.mubr.f32.gmra.mrb[0].mxu0 %v373
    %v864 = vpop.f32.mrb[0].mxu0
    %v865 = vadd.f32 %v279, %v864
    %v866 = vpop.f32.mrb[0].mxu0
    %867 = vdwg.mxu0
    %868 = vmatprep.subr.mxu0 0.0
    %869 = vmatpush1.msra.mxu0 %v136
    %870 = vmatprep.subr.mxu0 0.0
    %871 = vmatpush1.msra.mxu0 %v137
    %872 = vmatprep.subr.mxu0 0.0
    %873 = vmatpush1.msra.mxu0 %v138
    %874 = vmatprep.subr.mxu0 0.0
    %875 = vmatpush1.msra.mxu0 %v139
    %876 = vmatprep.subr.mxu0 0.0
    %877 = vmatpush1.msra.mxu0 0.0
    %878 = vmatprep.subr.mxu0 0.0
    %879 = vmatpush1.msra.mxu0 0.0
    %880 = vmatprep.subr.mxu0 0.0
    %881 = vmatpush1.msra.mxu0 0.0
    %882 = vmatprep.subr.mxu0 0.0
    %883 = vmatpush1.msra.mxu0 0.0
    %884 = vmatprep.subr.mxu0 0.0
    %885 = vmatpush1.msra.mxu0 0.0
    %886 = vmatprep.subr.mxu0 0.0
    %887 = vmatpush1.msra.mxu0 0.0
    %888 = vmatprep.subr.mxu0 0.0
    %889 = vmatpush1.msra.mxu0 0.0
    %890 = vmatprep.subr.mxu0 0.0
    %891 = vmatpush1.msra.mxu0 0.0
    %892 = vmatprep.subr.mxu0 0.0
    %893 = vmatpush1.msra.mxu0 0.0
    %894 = vmatprep.subr.mxu0 0.0
    %895 = vmatpush1.msra.mxu0 0.0
    %896 = vmatprep.subr.mxu0 0.0
    %897 = vmatpush1.msra.mxu0 0.0
    %898 = vmatprep.subr.mxu0 0.0
    %899 = vmatpush1.msra.mxu0 0.0
    %900 = vmatprep.subr.mxu0 0.0
    %901 = vmatpush1.msra.mxu0 0.0
    %902 = vmatprep.subr.mxu0 0.0
    %903 = vmatpush1.msra.mxu0 0.0
    %904 = vmatprep.subr.mxu0 0.0
    %905 = vmatpush1.msra.mxu0 0.0
    %906 = vmatprep.subr.mxu0 0.0
    %907 = vmatpush1.msra.mxu0 0.0
    %908 = vmatprep.subr.mxu0 0.0
    %909 = vmatpush1.msra.mxu0 0.0
    %910 = vmatprep.subr.mxu0 0.0
    %911 = vmatpush1.msra.mxu0 0.0
    %912 = vmatprep.subr.mxu0 0.0
    %913 = vmatpush1.msra.mxu0 0.0
    %914 = vmatprep.subr.mxu0 0.0
    %915 = vmatpush1.msra.mxu0 0.0
    %916 = vmatprep.subr.mxu0 0.0
    %917 = vmatpush1.msra.mxu0 0.0
    %918 = vmatprep.subr.mxu0 0.0
    %919 = vmatpush1.msra.mxu0 0.0
    %920 = vmatprep.subr.mxu0 0.0
    %921 = vmatpush1.msra.mxu0 0.0
    %922 = vmatprep.subr.mxu0 0.0
    %923 = vmatpush1.msra.mxu0 0.0
    %924 = vmatprep.subr.mxu0 0.0
    %925 = vmatpush1.msra.mxu0 0.0
    %926 = vmatprep.subr.mxu0 0.0
    %927 = vmatpush1.msra.mxu0 0.0
    %928 = vmatprep.subr.mxu0 0.0
    %929 = vmatpush1.msra.mxu0 0.0
    %930 = vmatprep.subr.mxu0 0.0
    %931 = vmatpush1.msra.mxu0 0.0
    %932 = vmatprep.mubr.f32.mxu0 0.0
    %933 = vmatmul.mubr.f32.gmra.mrb[0].mxu0 %v446
    %v934 = vpop.f32.mrb[0].mxu0
    %v935 = vadd.f32 %v283, %v934
    %v936 = vpop.f32.mrb[0].mxu0
    %937 = vdwg.mxu0
    %938 = vmatprep.subr.mxu0 0.0
    %939 = vmatpush1.msra.mxu0 %v140
    %940 = vmatprep.subr.mxu0 0.0
    %941 = vmatpush1.msra.mxu0 %v141
    %942 = vmatprep.subr.mxu0 0.0
    %943 = vmatpush1.msra.mxu0 %v142
    %944 = vmatprep.subr.mxu0 0.0
    %945 = vmatpush1.msra.mxu0 %v143
    %946 = vmatprep.subr.mxu0 0.0
    %947 = vmatpush1.msra.mxu0 0.0
    %948 = vmatprep.subr.mxu0 0.0
    %949 = vmatpush1.msra.mxu0 0.0
    %950 = vmatprep.subr.mxu0 0.0
    %951 = vmatpush1.msra.mxu0 0.0
    %952 = vmatprep.subr.mxu0 0.0
    %953 = vmatpush1.msra.mxu0 0.0
    %954 = vmatprep.subr.mxu0 0.0
    %955 = vmatpush1.msra.mxu0 0.0
    %956 = vmatprep.subr.mxu0 0.0
    %957 = vmatpush1.msra.mxu0 0.0
    %958 = vmatprep.subr.mxu0 0.0
    %959 = vmatpush1.msra.mxu0 0.0
    %960 = vmatprep.subr.mxu0 0.0
    %961 = vmatpush1.msra.mxu0 0.0
    %962 = vmatprep.subr.mxu0 0.0
    %963 = vmatpush1.msra.mxu0 0.0
    %964 = vmatprep.subr.mxu0 0.0
    %965 = vmatpush1.msra.mxu0 0.0
    %966 = vmatprep.subr.mxu0 0.0
    %967 = vmatpush1.msra.mxu0 0.0
    %968 = vmatprep.subr.mxu0 0.0
    %969 = vmatpush1.msra.mxu0 0.0
    %970 = vmatprep.subr.mxu0 0.0
    %971 = vmatpush1.msra.mxu0 0.0
    %972 = vmatprep.subr.mxu0 0.0
    %973 = vmatpush1.msra.mxu0 0.0
    %974 = vmatprep.subr.mxu0 0.0
    %975 = vmatpush1.msra.mxu0 0.0
    %976 = vmatprep.subr.mxu0 0.0
    %977 = vmatpush1.msra.mxu0 0.0
    %978 = vmatprep.subr.mxu0 0.0
    %979 = vmatpush1.msra.mxu0 0.0
    %980 = vmatprep.subr.mxu0 0.0
    %981 = vmatpush1.msra.mxu0 0.0
    %982 = vmatprep.subr.mxu0 0.0
    %983 = vmatpush1.msra.mxu0 0.0
    %984 = vmatprep.subr.mxu0 0.0
    %985 = vmatpush1.msra.mxu0 0.0
    %986 = vmatprep.subr.mxu0 0.0
    %987 = vmatpush1.msra.mxu0 0.0
    %988 = vmatprep.subr.mxu0 0.0
    %989 = vmatpush1.msra.mxu0 0.0
    %990 = vmatprep.subr.mxu0 0.0
    %991 = vmatpush1.msra.mxu0 0.0
    %992 = vmatprep.subr.mxu0 0.0
    %993 = vmatpush1.msra.mxu0 0.0
    %994 = vmatprep.subr.mxu0 0.0
    %995 = vmatpush1.msra.mxu0 0.0
    %996 = vmatprep.subr.mxu0 0.0
    %997 = vmatpush1.msra.mxu0 0.0
    %998 = vmatprep.subr.mxu0 0.0
    %999 = vmatpush1.msra.mxu0 0.0
    %1000 = vmatprep.subr.mxu0 0.0
    %1001 = vmatpush1.msra.mxu0 0.0
    %1002 = vmatprep.mubr.f32.mxu0 0.0
    %1003 = vmatmul.mubr.f32.gmra.mrb[0].mxu0 %v373
    %v1004 = vpop.f32.mrb[0].mxu0
    %v1005 = vadd.f32 %v287, %v1004
    %v1006 = vpop.f32.mrb[0].mxu0
    %1007 = vdwg.mxu0
    %1008 = vmatprep.subr.mxu0 0.0
    %1009 = vmatpush1.msra.mxu0 %v144
    %1010 = vmatprep.subr.mxu0 0.0
    %1011 = vmatpush1.msra.mxu0 %v145
    %1012 = vmatprep.subr.mxu0 0.0
    %1013 = vmatpush1.msra.mxu0 %v146
    %1014 = vmatprep.subr.mxu0 0.0
    %1015 = vmatpush1.msra.mxu0 %v147
    %1016 = vmatprep.subr.mxu0 0.0
    %1017 = vmatpush1.msra.mxu0 0.0
    %1018 = vmatprep.subr.mxu0 0.0
    %1019 = vmatpush1.msra.mxu0 0.0
    %1020 = vmatprep.subr.mxu0 0.0
    %1021 = vmatpush1.msra.mxu0 0.0
    %1022 = vmatprep.subr.mxu0 0.0
    %1023 = vmatpush1.msra.mxu0 0.0
    %1024 = vmatprep.subr.mxu0 0.0
    %1025 = vmatpush1.msra.mxu0 0.0
    %1026 = vmatprep.subr.mxu0 0.0
    %1027 = vmatpush1.msra.mxu0 0.0
    %1028 = vmatprep.subr.mxu0 0.0
    %1029 = vmatpush1.msra.mxu0 0.0
    %1030 = vmatprep.subr.mxu0 0.0
    %1031 = vmatpush1.msra.mxu0 0.0
    %1032 = vmatprep.subr.mxu0 0.0
    %1033 = vmatpush1.msra.mxu0 0.0
    %1034 = vmatprep.subr.mxu0 0.0
    %1035 = vmatpush1.msra.mxu0 0.0
    %1036 = vmatprep.subr.mxu0 0.0
    %1037 = vmatpush1.msra.mxu0 0.0
    %1038 = vmatprep.subr.mxu0 0.0
    %1039 = vmatpush1.msra.mxu0 0.0
    %1040 = vmatprep.subr.mxu0 0.0
    %1041 = vmatpush1.msra.mxu0 0.0
    %1042 = vmatprep.subr.mxu0 0.0
    %1043 = vmatpush1.msra.mxu0 0.0
    %1044 = vmatprep.subr.mxu0 0.0
    %1045 = vmatpush1.msra.mxu0 0.0
    %1046 = vmatprep.subr.mxu0 0.0
    %1047 = vmatpush1.msra.mxu0 0.0
    %1048 = vmatprep.subr.mxu0 0.0
    %1049 = vmatpush1.msra.mxu0 0.0
    %1050 = vmatprep.subr.mxu0 0.0
    %1051 = vmatpush1.msra.mxu0 0.0
    %1052 = vmatprep.subr.mxu0 0.0
    %1053 = vmatpush1.msra.mxu0 0.0
    %1054 = vmatprep.subr.mxu0 0.0
    %1055 = vmatpush1.msra.mxu0 0.0
    %1056 = vmatprep.subr.mxu0 0.0
    %1057 = vmatpush1.msra.mxu0 0.0
    %1058 = vmatprep.subr.mxu0 0.0
    %1059 = vmatpush1.msra.mxu0 0.0
    %1060 = vmatprep.subr.mxu0 0.0
    %1061 = vmatpush1.msra.mxu0 0.0
    %1062 = vmatprep.subr.mxu0 0.0
    %1063 = vmatpush1.msra.mxu0 0.0
    %1064 = vmatprep.subr.mxu0 0.0
    %1065 = vmatpush1.msra.mxu0 0.0
    %1066 = vmatprep.subr.mxu0 0.0
    %1067 = vmatpush1.msra.mxu0 0.0
    %1068 = vmatprep.subr.mxu0 0.0
    %1069 = vmatpush1.msra.mxu0 0.0
    %1070 = vmatprep.subr.mxu0 0.0
    %1071 = vmatpush1.msra.mxu0 0.0
    %1072 = vmatprep.mubr.f32.mxu0 0.0
    %1073 = vmatmul.mubr.f32.gmra.mrb[0].mxu0 %v446
    %v1074 = vpop.f32.mrb[0].mxu0
    %v1075 = vadd.f32 %v291, %v1074
    %v1076 = vpop.f32.mrb[0].mxu0
    %1077 = vdwg.mxu0
    %1078 = vmatprep.subr.mxu0 0.0
    %1079 = vmatpush1.msra.mxu0 %v148
    %1080 = vmatprep.subr.mxu0 0.0
    %1081 = vmatpush1.msra.mxu0 %v149
    %1082 = vmatprep.subr.mxu0 0.0
    %1083 = vmatpush1.msra.mxu0 %v150
    %1084 = vmatprep.subr.mxu0 0.0
    %1085 = vmatpush1.msra.mxu0 %v151
    %1086 = vmatprep.subr.mxu0 0.0
    %1087 = vmatpush1.msra.mxu0 0.0
    %1088 = vmatprep.subr.mxu0 0.0
    %1089 = vmatpush1.msra.mxu0 0.0
    %1090 = vmatprep.subr.mxu0 0.0
    %1091 = vmatpush1.msra.mxu0 0.0
    %1092 = vmatprep.subr.mxu0 0.0
    %1093 = vmatpush1.msra.mxu0 0.0
    %1094 = vmatprep.subr.mxu0 0.0
    %1095 = vmatpush1.msra.mxu0 0.0
    %1096 = vmatprep.subr.mxu0 0.0
    %1097 = vmatpush1.msra.mxu0 0.0
    %1098 = vmatprep.subr.mxu0 0.0
    %1099 = vmatpush1.msra.mxu0 0.0
    %1100 = vmatprep.subr.mxu0 0.0
    %1101 = vmatpush1.msra.mxu0 0.0
    %1102 = vmatprep.subr.mxu0 0.0
    %1103 = vmatpush1.msra.mxu0 0.0
    %1104 = vmatprep.subr.mxu0 0.0
    %1105 = vmatpush1.msra.mxu0 0.0
    %1106 = vmatprep.subr.mxu0 0.0
    %1107 = vmatpush1.msra.mxu0 0.0
    %1108 = vmatprep.subr.mxu0 0.0
    %1109 = vmatpush1.msra.mxu0 0.0
    %1110 = vmatprep.subr.mxu0 0.0
    %1111 = vmatpush1.msra.mxu0 0.0
    %1112 = vmatprep.subr.mxu0 0.0
    %1113 = vmatpush1.msra.mxu0 0.0
    %1114 = vmatprep.subr.mxu0 0.0
    %1115 = vmatpush1.msra.mxu0 0.0
    %1116 = vmatprep.subr.mxu0 0.0
    %1117 = vmatpush1.msra.mxu0 0.0
    %1118 = vmatprep.subr.mxu0 0.0
    %1119 = vmatpush1.msra.mxu0 0.0
    %1120 = vmatprep.subr.mxu0 0.0
    %1121 = vmatpush1.msra.mxu0 0.0
    %1122 = vmatprep.subr.mxu0 0.0
    %1123 = vmatpush1.msra.mxu0 0.0
    %1124 = vmatprep.subr.mxu0 0.0
    %1125 = vmatpush1.msra.mxu0 0.0
    %1126 = vmatprep.subr.mxu0 0.0
    %1127 = vmatpush1.msra.mxu0 0.0
    %1128 = vmatprep.subr.mxu0 0.0
    %1129 = vmatpush1.msra.mxu0 0.0
    %1130 = vmatprep.subr.mxu0 0.0
    %1131 = vmatpush1.msra.mxu0 0.0
    %1132 = vmatprep.subr.mxu0 0.0
    %1133 = vmatpush1.msra.mxu0 0.0
    %1134 = vmatprep.subr.mxu0 0.0
    %1135 = vmatpush1.msra.mxu0 0.0
    %1136 = vmatprep.subr.mxu0 0.0
    %1137 = vmatpush1.msra.mxu0 0.0
    %1138 = vmatprep.subr.mxu0 0.0
    %1139 = vmatpush1.msra.mxu0 0.0
    %1140 = vmatprep.subr.mxu0 0.0
    %1141 = vmatpush1.msra.mxu0 0.0
    %1142 = vmatprep.mubr.f32.mxu0 0.0
    %1143 = vmatmul.mubr.f32.gmra.mrb[0].mxu0 %v373
    %v1144 = vpop.f32.mrb[0].mxu0
    %v1145 = vadd.f32 %v295, %v1144
    %v1146 = vpop.f32.mrb[0].mxu0
    %1147 = vdwg.mxu0
    %1148 = vmatprep.subr.mxu0 0.0
    %1149 = vmatpush1.msra.mxu0 %v152
    %1150 = vmatprep.subr.mxu0 0.0
    %1151 = vmatpush1.msra.mxu0 %v153
    %1152 = vmatprep.subr.mxu0 0.0
    %1153 = vmatpush1.msra.mxu0 %v154
    %1154 = vmatprep.subr.mxu0 0.0
    %1155 = vmatpush1.msra.mxu0 %v155
    %1156 = vmatprep.subr.mxu0 0.0
    %1157 = vmatpush1.msra.mxu0 0.0
    %1158 = vmatprep.subr.mxu0 0.0
    %1159 = vmatpush1.msra.mxu0 0.0
    %1160 = vmatprep.subr.mxu0 0.0
    %1161 = vmatpush1.msra.mxu0 0.0
    %1162 = vmatprep.subr.mxu0 0.0
    %1163 = vmatpush1.msra.mxu0 0.0
    %1164 = vmatprep.subr.mxu0 0.0
    %1165 = vmatpush1.msra.mxu0 0.0
    %1166 = vmatprep.subr.mxu0 0.0
    %1167 = vmatpush1.msra.mxu0 0.0
    %1168 = vmatprep.subr.mxu0 0.0
    %1169 = vmatpush1.msra.mxu0 0.0
    %1170 = vmatprep.subr.mxu0 0.0
    %1171 = vmatpush1.msra.mxu0 0.0
    %1172 = vmatprep.subr.mxu0 0.0
    %1173 = vmatpush1.msra.mxu0 0.0
    %1174 = vmatprep.subr.mxu0 0.0
    %1175 = vmatpush1.msra.mxu0 0.0
    %1176 = vmatprep.subr.mxu0 0.0
    %1177 = vmatpush1.msra.mxu0 0.0
    %1178 = vmatprep.subr.mxu0 0.0
    %1179 = vmatpush1.msra.mxu0 0.0
    %1180 = vmatprep.subr.mxu0 0.0
    %1181 = vmatpush1.msra.mxu0 0.0
    %1182 = vmatprep.subr.mxu0 0.0
    %1183 = vmatpush1.msra.mxu0 0.0
    %1184 = vmatprep.subr.mxu0 0.0
    %1185 = vmatpush1.msra.mxu0 0.0
    %1186 = vmatprep.subr.mxu0 0.0
    %1187 = vmatpush1.msra.mxu0 0.0
    %1188 = vmatprep.subr.mxu0 0.0
    %1189 = vmatpush1.msra.mxu0 0.0
    %1190 = vmatprep.subr.mxu0 0.0
    %1191 = vmatpush1.msra.mxu0 0.0
    %1192 = vmatprep.subr.mxu0 0.0
    %1193 = vmatpush1.msra.mxu0 0.0
    %1194 = vmatprep.subr.mxu0 0.0
    %1195 = vmatpush1.msra.mxu0 0.0
    %1196 = vmatprep.subr.mxu0 0.0
    %1197 = vmatpush1.msra.mxu0 0.0
    %1198 = vmatprep.subr.mxu0 0.0
    %1199 = vmatpush1.msra.mxu0 0.0
    %1200 = vmatprep.subr.mxu0 0.0
    %1201 = vmatpush1.msra.mxu0 0.0
    %1202 = vmatprep.subr.mxu0 0.0
    %1203 = vmatpush1.msra.mxu0 0.0
    %1204 = vmatprep.subr.mxu0 0.0
    %1205 = vmatpush1.msra.mxu0 0.0
    %1206 = vmatprep.subr.mxu0 0.0
    %1207 = vmatpush1.msra.mxu0 0.0
    %1208 = vmatprep.subr.mxu0 0.0
    %1209 = vmatpush1.msra.mxu0 0.0
    %1210 = vmatprep.subr.mxu0 0.0
    %1211 = vmatpush1.msra.mxu0 0.0
    %1212 = vmatprep.mubr.f32.mxu0 0.0
    %1213 = vmatmul.mubr.f32.gmra.mrb[0].mxu0 %v446
    %v1214 = vpop.f32.mrb[0].mxu0
    %v1215 = vadd.f32 %v299, %v1214
    %v1216 = vpop.f32.mrb[0].mxu0
    %1217 = vdwg.mxu0
    %1218 = vmatprep.subr.mxu0 0.0
    %1219 = vmatpush1.msra.mxu0 %v156
    %1220 = vmatprep.subr.mxu0 0.0
    %1221 = vmatpush1.msra.mxu0 %v157
    %1222 = vmatprep.subr.mxu0 0.0
    %1223 = vmatpush1.msra.mxu0 %v158
    %1224 = vmatprep.subr.mxu0 0.0
    %1225 = vmatpush1.msra.mxu0 %v159
    %1226 = vmatprep.subr.mxu0 0.0
    %1227 = vmatpush1.msra.mxu0 0.0
    %1228 = vmatprep.subr.mxu0 0.0
    %1229 = vmatpush1.msra.mxu0 0.0
    %1230 = vmatprep.subr.mxu0 0.0
    %1231 = vmatpush1.msra.mxu0 0.0
    %1232 = vmatprep.subr.mxu0 0.0
    %1233 = vmatpush1.msra.mxu0 0.0
    %1234 = vmatprep.subr.mxu0 0.0
    %1235 = vmatpush1.msra.mxu0 0.0
    %1236 = vmatprep.subr.mxu0 0.0
    %1237 = vmatpush1.msra.mxu0 0.0
    %1238 = vmatprep.subr.mxu0 0.0
    %1239 = vmatpush1.msra.mxu0 0.0
    %1240 = vmatprep.subr.mxu0 0.0
    %1241 = vmatpush1.msra.mxu0 0.0
    %1242 = vmatprep.subr.mxu0 0.0
    %1243 = vmatpush1.msra.mxu0 0.0
    %1244 = vmatprep.subr.mxu0 0.0
    %1245 = vmatpush1.msra.mxu0 0.0
    %1246 = vmatprep.subr.mxu0 0.0
    %1247 = vmatpush1.msra.mxu0 0.0
    %1248 = vmatprep.subr.mxu0 0.0
    %1249 = vmatpush1.msra.mxu0 0.0
    %1250 = vmatprep.subr.mxu0 0.0
    %1251 = vmatpush1.msra.mxu0 0.0
    %1252 = vmatprep.subr.mxu0 0.0
    %1253 = vmatpush1.msra.mxu0 0.0
    %1254 = vmatprep.subr.mxu0 0.0
    %1255 = vmatpush1.msra.mxu0 0.0
    %1256 = vmatprep.subr.mxu0 0.0
    %1257 = vmatpush1.msra.mxu0 0.0
    %1258 = vmatprep.subr.mxu0 0.0
    %1259 = vmatpush1.msra.mxu0 0.0
    %1260 = vmatprep.subr.mxu0 0.0
    %1261 = vmatpush1.msra.mxu0 0.0
    %1262 = vmatprep.subr.mxu0 0.0
    %1263 = vmatpush1.msra.mxu0 0.0
    %1264 = vmatprep.subr.mxu0 0.0
    %1265 = vmatpush1.msra.mxu0 0.0
    %1266 = vmatprep.subr.mxu0 0.0
    %1267 = vmatpush1.msra.mxu0 0.0
    %1268 = vmatprep.subr.mxu0 0.0
    %1269 = vmatpush1.msra.mxu0 0.0
    %1270 = vmatprep.subr.mxu0 0.0
    %1271 = vmatpush1.msra.mxu0 0.0
    %1272 = vmatprep.subr.mxu0 0.0
    %1273 = vmatpush1.msra.mxu0 0.0
    %1274 = vmatprep.subr.mxu0 0.0
    %1275 = vmatpush1.msra.mxu0 0.0
    %1276 = vmatprep.subr.mxu0 0.0
    %1277 = vmatpush1.msra.mxu0 0.0
    %1278 = vmatprep.subr.mxu0 0.0
    %1279 = vmatpush1.msra.mxu0 0.0
    %1280 = vmatprep.subr.mxu0 0.0
    %1281 = vmatpush1.msra.mxu0 0.0
    %1282 = vmatprep.mubr.f32.mxu0 0.0
    %1283 = vmatmul.mubr.f32.gmra.mrb[0].mxu0 %v373
    %v1284 = vpop.f32.mrb[0].mxu0
    %v1285 = vadd.f32 %v303, %v1284
    %v1286 = vpop.f32.mrb[0].mxu0
    %1287 = vdwg.mxu0
    %1288 = vmatprep.subr.mxu0 0.0
    %1289 = vmatpush1.msra.mxu0 %v160
    %1290 = vmatprep.subr.mxu0 0.0
    %1291 = vmatpush1.msra.mxu0 %v161
    %1292 = vmatprep.subr.mxu0 0.0
    %1293 = vmatpush1.msra.mxu0 %v162
    %1294 = vmatprep.subr.mxu0 0.0
    %1295 = vmatpush1.msra.mxu0 %v163
    %1296 = vmatprep.subr.mxu0 0.0
    %1297 = vmatpush1.msra.mxu0 0.0
    %1298 = vmatprep.subr.mxu0 0.0
    %1299 = vmatpush1.msra.mxu0 0.0
    %1300 = vmatprep.subr.mxu0 0.0
    %1301 = vmatpush1.msra.mxu0 0.0
    %1302 = vmatprep.subr.mxu0 0.0
    %1303 = vmatpush1.msra.mxu0 0.0
    %1304 = vmatprep.subr.mxu0 0.0
    %1305 = vmatpush1.msra.mxu0 0.0
    %1306 = vmatprep.subr.mxu0 0.0
    %1307 = vmatpush1.msra.mxu0 0.0
    %1308 = vmatprep.subr.mxu0 0.0
    %1309 = vmatpush1.msra.mxu0 0.0
    %1310 = vmatprep.subr.mxu0 0.0
    %1311 = vmatpush1.msra.mxu0 0.0
    %1312 = vmatprep.subr.mxu0 0.0
    %1313 = vmatpush1.msra.mxu0 0.0
    %1314 = vmatprep.subr.mxu0 0.0
    %1315 = vmatpush1.msra.mxu0 0.0
    %1316 = vmatprep.subr.mxu0 0.0
    %1317 = vmatpush1.msra.mxu0 0.0
    %1318 = vmatprep.subr.mxu0 0.0
    %1319 = vmatpush1.msra.mxu0 0.0
    %1320 = vmatprep.subr.mxu0 0.0
    %1321 = vmatpush1.msra.mxu0 0.0
    %1322 = vmatprep.subr.mxu0 0.0
    %1323 = vmatpush1.msra.mxu0 0.0
    %1324 = vmatprep.subr.mxu0 0.0
    %1325 = vmatpush1.msra.mxu0 0.0
    %1326 = vmatprep.subr.mxu0 0.0
    %1327 = vmatpush1.msra.mxu0 0.0
    %1328 = vmatprep.subr.mxu0 0.0
    %1329 = vmatpush1.msra.mxu0 0.0
    %1330 = vmatprep.subr.mxu0 0.0
    %1331 = vmatpush1.msra.mxu0 0.0
    %1332 = vmatprep.subr.mxu0 0.0
    %1333 = vmatpush1.msra.mxu0 0.0
    %1334 = vmatprep.subr.mxu0 0.0
    %1335 = vmatpush1.msra.mxu0 0.0
    %1336 = vmatprep.subr.mxu0 0.0
    %1337 = vmatpush1.msra.mxu0 0.0
    %1338 = vmatprep.subr.mxu0 0.0
    %1339 = vmatpush1.msra.mxu0 0.0
    %1340 = vmatprep.subr.mxu0 0.0
    %1341 = vmatpush1.msra.mxu0 0.0
    %1342 = vmatprep.subr.mxu0 0.0
    %1343 = vmatpush1.msra.mxu0 0.0
    %1344 = vmatprep.subr.mxu0 0.0
    %1345 = vmatpush1.msra.mxu0 0.0
    %1346 = vmatprep.subr.mxu0 0.0
    %1347 = vmatpush1.msra.mxu0 0.0
    %1348 = vmatprep.subr.mxu0 0.0
    %1349 = vmatpush1.msra.mxu0 0.0
    %1350 = vmatprep.subr.mxu0 0.0
    %1351 = vmatpush1.msra.mxu0 0.0
    %1352 = vmatprep.mubr.f32.mxu0 0.0
    %1353 = vmatmul.mubr.f32.gmra.mrb[0].mxu0 %v446
    %v1354 = vpop.f32.mrb[0].mxu0
    %v1355 = vadd.f32 %v307, %v1354
    %v1356 = vpop.f32.mrb[0].mxu0
    %1357 = vdwg.mxu0
    %1358 = vmatprep.subr.mxu0 0.0
    %1359 = vmatpush1.msra.mxu0 %v164
    %1360 = vmatprep.subr.mxu0 0.0
    %1361 = vmatpush1.msra.mxu0 %v165
    %1362 = vmatprep.subr.mxu0 0.0
    %1363 = vmatpush1.msra.mxu0 %v166
    %1364 = vmatprep.subr.mxu0 0.0
    %1365 = vmatpush1.msra.mxu0 %v167
    %1366 = vmatprep.subr.mxu0 0.0
    %1367 = vmatpush1.msra.mxu0 0.0
    %1368 = vmatprep.subr.mxu0 0.0
    %1369 = vmatpush1.msra.mxu0 0.0
    %1370 = vmatprep.subr.mxu0 0.0
    %1371 = vmatpush1.msra.mxu0 0.0
    %1372 = vmatprep.subr.mxu0 0.0
    %1373 = vmatpush1.msra.mxu0 0.0
    %1374 = vmatprep.subr.mxu0 0.0
    %1375 = vmatpush1.msra.mxu0 0.0
    %1376 = vmatprep.subr.mxu0 0.0
    %1377 = vmatpush1.msra.mxu0 0.0
    %1378 = vmatprep.subr.mxu0 0.0
    %1379 = vmatpush1.msra.mxu0 0.0
    %1380 = vmatprep.subr.mxu0 0.0
    %1381 = vmatpush1.msra.mxu0 0.0
    %1382 = vmatprep.subr.mxu0 0.0
    %1383 = vmatpush1.msra.mxu0 0.0
    %1384 = vmatprep.subr.mxu0 0.0
    %1385 = vmatpush1.msra.mxu0 0.0
    %1386 = vmatprep.subr.mxu0 0.0
    %1387 = vmatpush1.msra.mxu0 0.0
    %1388 = vmatprep.subr.mxu0 0.0
    %1389 = vmatpush1.msra.mxu0 0.0
    %1390 = vmatprep.subr.mxu0 0.0
    %1391 = vmatpush1.msra.mxu0 0.0
    %1392 = vmatprep.subr.mxu0 0.0
    %1393 = vmatpush1.msra.mxu0 0.0
    %1394 = vmatprep.subr.mxu0 0.0
    %1395 = vmatpush1.msra.mxu0 0.0
    %1396 = vmatprep.subr.mxu0 0.0
    %1397 = vmatpush1.msra.mxu0 0.0
    %1398 = vmatprep.subr.mxu0 0.0
    %1399 = vmatpush1.msra.mxu0 0.0
    %1400 = vmatprep.subr.mxu0 0.0
    %1401 = vmatpush1.msra.mxu0 0.0
    %1402 = vmatprep.subr.mxu0 0.0
    %1403 = vmatpush1.msra.mxu0 0.0
    %1404 = vmatprep.subr.mxu0 0.0
    %1405 = vmatpush1.msra.mxu0 0.0
    %1406 = vmatprep.subr.mxu0 0.0
    %1407 = vmatpush1.msra.mxu0 0.0
    %1408 = vmatprep.subr.mxu0 0.0
    %1409 = vmatpush1.msra.mxu0 0.0
    %1410 = vmatprep.subr.mxu0 0.0
    %1411 = vmatpush1.msra.mxu0 0.0
    %1412 = vmatprep.subr.mxu0 0.0
    %1413 = vmatpush1.msra.mxu0 0.0
    %1414 = vmatprep.subr.mxu0 0.0
    %1415 = vmatpush1.msra.mxu0 0.0
    %1416 = vmatprep.subr.mxu0 0.0
    %1417 = vmatpush1.msra.mxu0 0.0
    %1418 = vmatprep.subr.mxu0 0.0
    %1419 = vmatpush1.msra.mxu0 0.0
    %1420 = vmatprep.subr.mxu0 0.0
    %1421 = vmatpush1.msra.mxu0 0.0
    %1422 = vmatprep.mubr.f32.mxu0 0.0
    %1423 = vmatmul.mubr.f32.gmra.mrb[0].mxu0 %v373
    %v1424 = vpop.f32.mrb[0].mxu0
    %v1425 = vadd.f32 %v311, %v1424
    %v1426 = vpop.f32.mrb[0].mxu0
    %1427 = vdwg.mxu0
    %1428 = vmatprep.subr.mxu0 0.0
    %1429 = vmatpush1.msra.mxu0 %v168
    %1430 = vmatprep.subr.mxu0 0.0
    %1431 = vmatpush1.msra.mxu0 %v169
    %1432 = vmatprep.subr.mxu0 0.0
    %1433 = vmatpush1.msra.mxu0 %v170
    %1434 = vmatprep.subr.mxu0 0.0
    %1435 = vmatpush1.msra.mxu0 %v171
    %1436 = vmatprep.subr.mxu0 0.0
    %1437 = vmatpush1.msra.mxu0 0.0
    %1438 = vmatprep.subr.mxu0 0.0
    %1439 = vmatpush1.msra.mxu0 0.0
    %1440 = vmatprep.subr.mxu0 0.0
    %1441 = vmatpush1.msra.mxu0 0.0
    %1442 = vmatprep.subr.mxu0 0.0
    %1443 = vmatpush1.msra.mxu0 0.0
    %1444 = vmatprep.subr.mxu0 0.0
    %1445 = vmatpush1.msra.mxu0 0.0
    %1446 = vmatprep.subr.mxu0 0.0
    %1447 = vmatpush1.msra.mxu0 0.0
    %1448 = vmatprep.subr.mxu0 0.0
    %1449 = vmatpush1.msra.mxu0 0.0
    %1450 = vmatprep.subr.mxu0 0.0
    %1451 = vmatpush1.msra.mxu0 0.0
    %1452 = vmatprep.subr.mxu0 0.0
    %1453 = vmatpush1.msra.mxu0 0.0
    %1454 = vmatprep.subr.mxu0 0.0
    %1455 = vmatpush1.msra.mxu0 0.0
    %1456 = vmatprep.subr.mxu0 0.0
    %1457 = vmatpush1.msra.mxu0 0.0
    %1458 = vmatprep.subr.mxu0 0.0
    %1459 = vmatpush1.msra.mxu0 0.0
    %1460 = vmatprep.subr.mxu0 0.0
    %1461 = vmatpush1.msra.mxu0 0.0
    %1462 = vmatprep.subr.mxu0 0.0
    %1463 = vmatpush1.msra.mxu0 0.0
    %1464 = vmatprep.subr.mxu0 0.0
    %1465 = vmatpush1.msra.mxu0 0.0
    %1466 = vmatprep.subr.mxu0 0.0
    %1467 = vmatpush1.msra.mxu0 0.0
    %1468 = vmatprep.subr.mxu0 0.0
    %1469 = vmatpush1.msra.mxu0 0.0
    %1470 = vmatprep.subr.mxu0 0.0
    %1471 = vmatpush1.msra.mxu0 0.0
    %1472 = vmatprep.subr.mxu0 0.0
    %1473 = vmatpush1.msra.mxu0 0.0
    %1474 = vmatprep.subr.mxu0 0.0
    %1475 = vmatpush1.msra.mxu0 0.0
    %1476 = vmatprep.subr.mxu0 0.0
    %1477 = vmatpush1.msra.mxu0 0.0
    %1478 = vmatprep.subr.mxu0 0.0
    %1479 = vmatpush1.msra.mxu0 0.0
    %1480 = vmatprep.subr.mxu0 0.0
    %1481 = vmatpush1.msra.mxu0 0.0
    %1482 = vmatprep.subr.mxu0 0.0
    %1483 = vmatpush1.msra.mxu0 0.0
    %1484 = vmatprep.subr.mxu0 0.0
    %1485 = vmatpush1.msra.mxu0 0.0
    %1486 = vmatprep.subr.mxu0 0.0
    %1487 = vmatpush1.msra.mxu0 0.0
    %1488 = vmatprep.subr.mxu0 0.0
    %1489 = vmatpush1.msra.mxu0 0.0
    %1490 = vmatprep.subr.mxu0 0.0
    %1491 = vmatpush1.msra.mxu0 0.0
    %1492 = vmatprep.mubr.f32.mxu0 0.0
    %1493 = vmatmul.mubr.f32.gmra.mrb[0].mxu0 %v446
    %v1494 = vpop.f32.mrb[0].mxu0
    %v1495 = vadd.f32 %v315, %v1494
    %v1496 = vpop.f32.mrb[0].mxu0
    %1497 = vdwg.mxu0
    %1498 = vmatprep.subr.mxu0 0.0
    %1499 = vmatpush1.msra.mxu0 %v172
    %1500 = vmatprep.subr.mxu0 0.0
    %1501 = vmatpush1.msra.mxu0 %v173
    %1502 = vmatprep.subr.mxu0 0.0
    %1503 = vmatpush1.msra.mxu0 %v174
    %1504 = vmatprep.subr.mxu0 0.0
    %1505 = vmatpush1.msra.mxu0 %v175
    %1506 = vmatprep.subr.mxu0 0.0
    %1507 = vmatpush1.msra.mxu0 0.0
    %1508 = vmatprep.subr.mxu0 0.0
    %1509 = vmatpush1.msra.mxu0 0.0
    %1510 = vmatprep.subr.mxu0 0.0
    %1511 = vmatpush1.msra.mxu0 0.0
    %1512 = vmatprep.subr.mxu0 0.0
    %1513 = vmatpush1.msra.mxu0 0.0
    %1514 = vmatprep.subr.mxu0 0.0
    %1515 = vmatpush1.msra.mxu0 0.0
    %1516 = vmatprep.subr.mxu0 0.0
    %1517 = vmatpush1.msra.mxu0 0.0
    %1518 = vmatprep.subr.mxu0 0.0
    %1519 = vmatpush1.msra.mxu0 0.0
    %1520 = vmatprep.subr.mxu0 0.0
    %1521 = vmatpush1.msra.mxu0 0.0
    %1522 = vmatprep.subr.mxu0 0.0
    %1523 = vmatpush1.msra.mxu0 0.0
    %1524 = vmatprep.subr.mxu0 0.0
    %1525 = vmatpush1.msra.mxu0 0.0
    %1526 = vmatprep.subr.mxu0 0.0
    %1527 = vmatpush1.msra.mxu0 0.0
    %1528 = vmatprep.subr.mxu0 0.0
    %1529 = vmatpush1.msra.mxu0 0.0
    %1530 = vmatprep.subr.mxu0 0.0
    %1531 = vmatpush1.msra.mxu0 0.0
    %1532 = vmatprep.subr.mxu0 0.0
    %1533 = vmatpush1.msra.mxu0 0.0
    %1534 = vmatprep.subr.mxu0 0.0
    %1535 = vmatpush1.msra.mxu0 0.0
    %1536 = vmatprep.subr.mxu0 0.0
    %1537 = vmatpush1.msra.mxu0 0.0
    %1538 = vmatprep.subr.mxu0 0.0
    %1539 = vmatpush1.msra.mxu0 0.0
    %1540 = vmatprep.subr.mxu0 0.0
    %1541 = vmatpush1.msra.mxu0 0.0
    %1542 = vmatprep.subr.mxu0 0.0
    %1543 = vmatpush1.msra.mxu0 0.0
    %1544 = vmatprep.subr.mxu0 0.0
    %1545 = vmatpush1.msra.mxu0 0.0
    %1546 = vmatprep.subr.mxu0 0.0
    %1547 = vmatpush1.msra.mxu0 0.0
    %1548 = vmatprep.subr.mxu0 0.0
    %1549 = vmatpush1.msra.mxu0 0.0
    %1550 = vmatprep.subr.mxu0 0.0
    %1551 = vmatpush1.msra.mxu0 0.0
    %1552 = vmatprep.subr.mxu0 0.0
    %1553 = vmatpush1.msra.mxu0 0.0
    %1554 = vmatprep.subr.mxu0 0.0
    %1555 = vmatpush1.msra.mxu0 0.0
    %1556 = vmatprep.subr.mxu0 0.0
    %1557 = vmatpush1.msra.mxu0 0.0
    %1558 = vmatprep.subr.mxu0 0.0
    %1559 = vmatpush1.msra.mxu0 0.0
    %1560 = vmatprep.subr.mxu0 0.0
    %1561 = vmatpush1.msra.mxu0 0.0
    %1562 = vmatprep.mubr.f32.mxu0 0.0
    %1563 = vmatmul.mubr.f32.gmra.mrb[0].mxu0 %v373
    %v1564 = vpop.f32.mrb[0].mxu0
    %v1565 = vadd.f32 %v319, %v1564
    %v1566 = vpop.f32.mrb[0].mxu0
    %1567 = vdwg.mxu0
    %1568 = vmatprep.subr.mxu0 0.0
    %1569 = vmatpush1.msra.mxu0 %v176
    %1570 = vmatprep.subr.mxu0 0.0
    %1571 = vmatpush1.msra.mxu0 %v177
    %1572 = vmatprep.subr.mxu0 0.0
    %1573 = vmatpush1.msra.mxu0 %v178
    %1574 = vmatprep.subr.mxu0 0.0
    %1575 = vmatpush1.msra.mxu0 %v179
    %1576 = vmatprep.subr.mxu0 0.0
    %1577 = vmatpush1.msra.mxu0 0.0
    %1578 = vmatprep.subr.mxu0 0.0
    %1579 = vmatpush1.msra.mxu0 0.0
    %1580 = vmatprep.subr.mxu0 0.0
    %1581 = vmatpush1.msra.mxu0 0.0
    %1582 = vmatprep.subr.mxu0 0.0
    %1583 = vmatpush1.msra.mxu0 0.0
    %1584 = vmatprep.subr.mxu0 0.0
    %1585 = vmatpush1.msra.mxu0 0.0
    %1586 = vmatprep.subr.mxu0 0.0
    %1587 = vmatpush1.msra.mxu0 0.0
    %1588 = vmatprep.subr.mxu0 0.0
    %1589 = vmatpush1.msra.mxu0 0.0
    %1590 = vmatprep.subr.mxu0 0.0
    %1591 = vmatpush1.msra.mxu0 0.0
    %1592 = vmatprep.subr.mxu0 0.0
    %1593 = vmatpush1.msra.mxu0 0.0
    %1594 = vmatprep.subr.mxu0 0.0
    %1595 = vmatpush1.msra.mxu0 0.0
    %1596 = vmatprep.subr.mxu0 0.0
    %1597 = vmatpush1.msra.mxu0 0.0
    %1598 = vmatprep.subr.mxu0 0.0
    %1599 = vmatpush1.msra.mxu0 0.0
    %1600 = vmatprep.subr.mxu0 0.0
    %1601 = vmatpush1.msra.mxu0 0.0
    %1602 = vmatprep.subr.mxu0 0.0
    %1603 = vmatpush1.msra.mxu0 0.0
    %1604 = vmatprep.subr.mxu0 0.0
    %1605 = vmatpush1.msra.mxu0 0.0
    %1606 = vmatprep.subr.mxu0 0.0
    %1607 = vmatpush1.msra.mxu0 0.0
    %1608 = vmatprep.subr.mxu0 0.0
    %1609 = vmatpush1.msra.mxu0 0.0
    %1610 = vmatprep.subr.mxu0 0.0
    %1611 = vmatpush1.msra.mxu0 0.0
    %1612 = vmatprep.subr.mxu0 0.0
    %1613 = vmatpush1.msra.mxu0 0.0
    %1614 = vmatprep.subr.mxu0 0.0
    %1615 = vmatpush1.msra.mxu0 0.0
    %1616 = vmatprep.subr.mxu0 0.0
    %1617 = vmatpush1.msra.mxu0 0.0
    %1618 = vmatprep.subr.mxu0 0.0
    %1619 = vmatpush1.msra.mxu0 0.0
    %1620 = vmatprep.subr.mxu0 0.0
    %1621 = vmatpush1.msra.mxu0 0.0
    %1622 = vmatprep.subr.mxu0 0.0
    %1623 = vmatpush1.msra.mxu0 0.0
    %1624 = vmatprep.subr.mxu0 0.0
    %1625 = vmatpush1.msra.mxu0 0.0
    %1626 = vmatprep.subr.mxu0 0.0
    %1627 = vmatpush1.msra.mxu0 0.0
    %1628 = vmatprep.subr.mxu0 0.0
    %1629 = vmatpush1.msra.mxu0 0.0
    %1630 = vmatprep.subr.mxu0 0.0
    %1631 = vmatpush1.msra.mxu0 0.0
    %1632 = vmatprep.mubr.f32.mxu0 0.0
    %1633 = vmatmul.mubr.f32.gmra.mrb[0].mxu0 %v446
    %v1634 = vpop.f32.mrb[0].mxu0
    %v1635 = vadd.f32 %v323, %v1634
    %v1636 = vpop.f32.mrb[0].mxu0
    %1637 = vdwg.mxu0
    %1638 = vmatprep.subr.mxu0 0.0
    %1639 = vmatpush1.msra.mxu0 %v180
    %1640 = vmatprep.subr.mxu0 0.0
    %1641 = vmatpush1.msra.mxu0 %v181
    %1642 = vmatprep.subr.mxu0 0.0
    %1643 = vmatpush1.msra.mxu0 %v182
    %1644 = vmatprep.subr.mxu0 0.0
    %1645 = vmatpush1.msra.mxu0 %v183
    %1646 = vmatprep.subr.mxu0 0.0
    %1647 = vmatpush1.msra.mxu0 0.0
    %1648 = vmatprep.subr.mxu0 0.0
    %1649 = vmatpush1.msra.mxu0 0.0
    %1650 = vmatprep.subr.mxu0 0.0
    %1651 = vmatpush1.msra.mxu0 0.0
    %1652 = vmatprep.subr.mxu0 0.0
    %1653 = vmatpush1.msra.mxu0 0.0
    %1654 = vmatprep.subr.mxu0 0.0
    %1655 = vmatpush1.msra.mxu0 0.0
    %1656 = vmatprep.subr.mxu0 0.0
    %1657 = vmatpush1.msra.mxu0 0.0
    %1658 = vmatprep.subr.mxu0 0.0
    %1659 = vmatpush1.msra.mxu0 0.0
    %1660 = vmatprep.subr.mxu0 0.0
    %1661 = vmatpush1.msra.mxu0 0.0
    %1662 = vmatprep.subr.mxu0 0.0
    %1663 = vmatpush1.msra.mxu0 0.0
    %1664 = vmatprep.subr.mxu0 0.0
    %1665 = vmatpush1.msra.mxu0 0.0
    %1666 = vmatprep.subr.mxu0 0.0
    %1667 = vmatpush1.msra.mxu0 0.0
    %1668 = vmatprep.subr.mxu0 0.0
    %1669 = vmatpush1.msra.mxu0 0.0
    %1670 = vmatprep.subr.mxu0 0.0
    %1671 = vmatpush1.msra.mxu0 0.0
    %1672 = vmatprep.subr.mxu0 0.0
    %1673 = vmatpush1.msra.mxu0 0.0
    %1674 = vmatprep.subr.mxu0 0.0
    %1675 = vmatpush1.msra.mxu0 0.0
    %1676 = vmatprep.subr.mxu0 0.0
    %1677 = vmatpush1.msra.mxu0 0.0
    %1678 = vmatprep.subr.mxu0 0.0
    %1679 = vmatpush1.msra.mxu0 0.0
    %1680 = vmatprep.subr.mxu0 0.0
    %1681 = vmatpush1.msra.mxu0 0.0
    %1682 = vmatprep.subr.mxu0 0.0
    %1683 = vmatpush1.msra.mxu0 0.0
    %1684 = vmatprep.subr.mxu0 0.0
    %1685 = vmatpush1.msra.mxu0 0.0
    %1686 = vmatprep.subr.mxu0 0.0
    %1687 = vmatpush1.msra.mxu0 0.0
    %1688 = vmatprep.subr.mxu0 0.0
    %1689 = vmatpush1.msra.mxu0 0.0
    %1690 = vmatprep.subr.mxu0 0.0
    %1691 = vmatpush1.msra.mxu0 0.0
    %1692 = vmatprep.subr.mxu0 0.0
    %1693 = vmatpush1.msra.mxu0 0.0
    %1694 = vmatprep.subr.mxu0 0.0
    %1695 = vmatpush1.msra.mxu0 0.0
    %1696 = vmatprep.subr.mxu0 0.0
    %1697 = vmatpush1.msra.mxu0 0.0
    %1698 = vmatprep.subr.mxu0 0.0
    %1699 = vmatpush1.msra.mxu0 0.0
    %1700 = vmatprep.subr.mxu0 0.0
    %1701 = vmatpush1.msra.mxu0 0.0
    %1702 = vmatprep.mubr.f32.mxu0 0.0
    %1703 = vmatmul.mubr.f32.gmra.mrb[0].mxu0 %v373
    %v1704 = vpop.f32.mrb[0].mxu0
    %v1705 = vadd.f32 %v327, %v1704
    %v1706 = vpop.f32.mrb[0].mxu0
    %1707 = vdwg.mxu0
    %1708 = vmatprep.subr.mxu0 0.0
    %1709 = vmatpush1.msra.mxu0 %v184
    %1710 = vmatprep.subr.mxu0 0.0
    %1711 = vmatpush1.msra.mxu0 %v185
    %1712 = vmatprep.subr.mxu0 0.0
    %1713 = vmatpush1.msra.mxu0 %v186
    %1714 = vmatprep.subr.mxu0 0.0
    %1715 = vmatpush1.msra.mxu0 %v187
    %1716 = vmatprep.subr.mxu0 0.0
    %1717 = vmatpush1.msra.mxu0 0.0
    %1718 = vmatprep.subr.mxu0 0.0
    %1719 = vmatpush1.msra.mxu0 0.0
    %1720 = vmatprep.subr.mxu0 0.0
    %1721 = vmatpush1.msra.mxu0 0.0
    %1722 = vmatprep.subr.mxu0 0.0
    %1723 = vmatpush1.msra.mxu0 0.0
    %1724 = vmatprep.subr.mxu0 0.0
    %1725 = vmatpush1.msra.mxu0 0.0
    %1726 = vmatprep.subr.mxu0 0.0
    %1727 = vmatpush1.msra.mxu0 0.0
    %1728 = vmatprep.subr.mxu0 0.0
    %1729 = vmatpush1.msra.mxu0 0.0
    %1730 = vmatprep.subr.mxu0 0.0
    %1731 = vmatpush1.msra.mxu0 0.0
    %1732 = vmatprep.subr.mxu0 0.0
    %1733 = vmatpush1.msra.mxu0 0.0
    %1734 = vmatprep.subr.mxu0 0.0
    %1735 = vmatpush1.msra.mxu0 0.0
    %1736 = vmatprep.subr.mxu0 0.0
    %1737 = vmatpush1.msra.mxu0 0.0
    %1738 = vmatprep.subr.mxu0 0.0
    %1739 = vmatpush1.msra.mxu0 0.0
    %1740 = vmatprep.subr.mxu0 0.0
    %1741 = vmatpush1.msra.mxu0 0.0
    %1742 = vmatprep.subr.mxu0 0.0
    %1743 = vmatpush1.msra.mxu0 0.0
    %1744 = vmatprep.subr.mxu0 0.0
    %1745 = vmatpush1.msra.mxu0 0.0
    %1746 = vmatprep.subr.mxu0 0.0
    %1747 = vmatpush1.msra.mxu0 0.0
    %1748 = vmatprep.subr.mxu0 0.0
    %1749 = vmatpush1.msra.mxu0 0.0
    %1750 = vmatprep.subr.mxu0 0.0
    %1751 = vmatpush1.msra.mxu0 0.0
    %1752 = vmatprep.subr.mxu0 0.0
    %1753 = vmatpush1.msra.mxu0 0.0
    %1754 = vmatprep.subr.mxu0 0.0
    %1755 = vmatpush1.msra.mxu0 0.0
    %1756 = vmatprep.subr.mxu0 0.0
    %1757 = vmatpush1.msra.mxu0 0.0
    %1758 = vmatprep.subr.mxu0 0.0
    %1759 = vmatpush1.msra.mxu0 0.0
    %1760 = vmatprep.subr.mxu0 0.0
    %1761 = vmatpush1.msra.mxu0 0.0
    %1762 = vmatprep.subr.mxu0 0.0
    %1763 = vmatpush1.msra.mxu0 0.0
    %1764 = vmatprep.subr.mxu0 0.0
    %1765 = vmatpush1.msra.mxu0 0.0
    %1766 = vmatprep.subr.mxu0 0.0
    %1767 = vmatpush1.msra.mxu0 0.0
    %1768 = vmatprep.subr.mxu0 0.0
    %1769 = vmatpush1.msra.mxu0 0.0
    %1770 = vmatprep.subr.mxu0 0.0
    %1771 = vmatpush1.msra.mxu0 0.0
    %1772 = vmatprep.mubr.f32.mxu0 0.0
    %1773 = vmatmul.mubr.f32.gmra.mrb[0].mxu0 %v446
    %v1774 = vpop.f32.mrb[0].mxu0
    %v1775 = vadd.f32 %v331, %v1774
    %v1776 = vpop.f32.mrb[0].mxu0
    %1777 = vdwg.mxu0
    %1778 = vmatprep.subr.mxu0 0.0
    %1779 = vmatpush1.msra.mxu0 %v188
    %1780 = vmatprep.subr.mxu0 0.0
    %1781 = vmatpush1.msra.mxu0 %v189
    %1782 = vmatprep.subr.mxu0 0.0
    %1783 = vmatpush1.msra.mxu0 %v190
    %1784 = vmatprep.subr.mxu0 0.0
    %1785 = vmatpush1.msra.mxu0 %v191
    %1786 = vmatprep.subr.mxu0 0.0
    %1787 = vmatpush1.msra.mxu0 0.0
    %1788 = vmatprep.subr.mxu0 0.0
    %1789 = vmatpush1.msra.mxu0 0.0
    %1790 = vmatprep.subr.mxu0 0.0
    %1791 = vmatpush1.msra.mxu0 0.0
    %1792 = vmatprep.subr.mxu0 0.0
    %1793 = vmatpush1.msra.mxu0 0.0
    %1794 = vmatprep.subr.mxu0 0.0
    %1795 = vmatpush1.msra.mxu0 0.0
    %1796 = vmatprep.subr.mxu0 0.0
    %1797 = vmatpush1.msra.mxu0 0.0
    %1798 = vmatprep.subr.mxu0 0.0
    %1799 = vmatpush1.msra.mxu0 0.0
    %1800 = vmatprep.subr.mxu0 0.0
    %1801 = vmatpush1.msra.mxu0 0.0
    %1802 = vmatprep.subr.mxu0 0.0
    %1803 = vmatpush1.msra.mxu0 0.0
    %1804 = vmatprep.subr.mxu0 0.0
    %1805 = vmatpush1.msra.mxu0 0.0
    %1806 = vmatprep.subr.mxu0 0.0
    %1807 = vmatpush1.msra.mxu0 0.0
    %1808 = vmatprep.subr.mxu0 0.0
    %1809 = vmatpush1.msra.mxu0 0.0
    %1810 = vmatprep.subr.mxu0 0.0
    %1811 = vmatpush1.msra.mxu0 0.0
    %1812 = vmatprep.subr.mxu0 0.0
    %1813 = vmatpush1.msra.mxu0 0.0
    %1814 = vmatprep.subr.mxu0 0.0
    %1815 = vmatpush1.msra.mxu0 0.0
    %1816 = vmatprep.subr.mxu0 0.0
    %1817 = vmatpush1.msra.mxu0 0.0
    %1818 = vmatprep.subr.mxu0 0.0
    %1819 = vmatpush1.msra.mxu0 0.0
    %1820 = vmatprep.subr.mxu0 0.0
    %1821 = vmatpush1.msra.mxu0 0.0
    %1822 = vmatprep.subr.mxu0 0.0
    %1823 = vmatpush1.msra.mxu0 0.0
    %1824 = vmatprep.subr.mxu0 0.0
    %1825 = vmatpush1.msra.mxu0 0.0
    %1826 = vmatprep.subr.mxu0 0.0
    %1827 = vmatpush1.msra.mxu0 0.0
    %1828 = vmatprep.subr.mxu0 0.0
    %1829 = vmatpush1.msra.mxu0 0.0
    %1830 = vmatprep.subr.mxu0 0.0
    %1831 = vmatpush1.msra.mxu0 0.0
    %1832 = vmatprep.subr.mxu0 0.0
    %1833 = vmatpush1.msra.mxu0 0.0
    %1834 = vmatprep.subr.mxu0 0.0
    %1835 = vmatpush1.msra.mxu0 0.0
    %1836 = vmatprep.subr.mxu0 0.0
    %1837 = vmatpush1.msra.mxu0 0.0
    %1838 = vmatprep.subr.mxu0 0.0
    %1839 = vmatpush1.msra.mxu0 0.0
    %1840 = vmatprep.subr.mxu0 0.0
    %1841 = vmatpush1.msra.mxu0 0.0
    %1842 = vmatprep.mubr.f32.mxu0 0.0
    %1843 = vmatmul.mubr.f32.gmra.mrb[0].mxu0 %v373
    %v1844 = vpop.f32.mrb[0].mxu0
    %v1845 = vadd.f32 %v335, %v1844
    %v1846 = vpop.f32.mrb[0].mxu0
    %1847 = vdwg.mxu0
    %1848 = vmatprep.subr.mxu0 0.0
    %1849 = vmatpush1.msra.mxu0 %v192
    %1850 = vmatprep.subr.mxu0 0.0
    %1851 = vmatpush1.msra.mxu0 %v193
    %1852 = vmatprep.subr.mxu0 0.0
    %1853 = vmatpush1.msra.mxu0 %v194
    %1854 = vmatprep.subr.mxu0 0.0
    %1855 = vmatpush1.msra.mxu0 %v195
    %1856 = vmatprep.subr.mxu0 0.0
    %1857 = vmatpush1.msra.mxu0 0.0
    %1858 = vmatprep.subr.mxu0 0.0
    %1859 = vmatpush1.msra.mxu0 0.0
    %1860 = vmatprep.subr.mxu0 0.0
    %1861 = vmatpush1.msra.mxu0 0.0
    %1862 = vmatprep.subr.mxu0 0.0
    %1863 = vmatpush1.msra.mxu0 0.0
    %1864 = vmatprep.subr.mxu0 0.0
    %1865 = vmatpush1.msra.mxu0 0.0
    %1866 = vmatprep.subr.mxu0 0.0
    %1867 = vmatpush1.msra.mxu0 0.0
    %1868 = vmatprep.subr.mxu0 0.0
    %1869 = vmatpush1.msra.mxu0 0.0
    %1870 = vmatprep.subr.mxu0 0.0
    %1871 = vmatpush1.msra.mxu0 0.0
    %1872 = vmatprep.subr.mxu0 0.0
    %1873 = vmatpush1.msra.mxu0 0.0
    %1874 = vmatprep.subr.mxu0 0.0
    %1875 = vmatpush1.msra.mxu0 0.0
    %1876 = vmatprep.subr.mxu0 0.0
    %1877 = vmatpush1.msra.mxu0 0.0
    %1878 = vmatprep.subr.mxu0 0.0
    %1879 = vmatpush1.msra.mxu0 0.0
    %1880 = vmatprep.subr.mxu0 0.0
    %1881 = vmatpush1.msra.mxu0 0.0
    %1882 = vmatprep.subr.mxu0 0.0
    %1883 = vmatpush1.msra.mxu0 0.0
    %1884 = vmatprep.subr.mxu0 0.0
    %1885 = vmatpush1.msra.mxu0 0.0
    %1886 = vmatprep.subr.mxu0 0.0
    %1887 = vmatpush1.msra.mxu0 0.0
    %1888 = vmatprep.subr.mxu0 0.0
    %1889 = vmatpush1.msra.mxu0 0.0
    %1890 = vmatprep.subr.mxu0 0.0
    %1891 = vmatpush1.msra.mxu0 0.0
    %1892 = vmatprep.subr.mxu0 0.0
    %1893 = vmatpush1.msra.mxu0 0.0
    %1894 = vmatprep.subr.mxu0 0.0
    %1895 = vmatpush1.msra.mxu0 0.0
    %1896 = vmatprep.subr.mxu0 0.0
    %1897 = vmatpush1.msra.mxu0 0.0
    %1898 = vmatprep.subr.mxu0 0.0
    %1899 = vmatpush1.msra.mxu0 0.0
    %1900 = vmatprep.subr.mxu0 0.0
    %1901 = vmatpush1.msra.mxu0 0.0
    %1902 = vmatprep.subr.mxu0 0.0
    %1903 = vmatpush1.msra.mxu0 0.0
    %1904 = vmatprep.subr.mxu0 0.0
    %1905 = vmatpush1.msra.mxu0 0.0
    %1906 = vmatprep.subr.mxu0 0.0
    %1907 = vmatpush1.msra.mxu0 0.0
    %1908 = vmatprep.subr.mxu0 0.0
    %1909 = vmatpush1.msra.mxu0 0.0
    %1910 = vmatprep.subr.mxu0 0.0
    %1911 = vmatpush1.msra.mxu0 0.0
    %1912 = vmatprep.mubr.f32.mxu0 0.0
    %1913 = vmatmul.mubr.f32.gmra.mrb[0].mxu0 %v446
    %v1914 = vpop.f32.mrb[0].mxu0
    %v1915 = vadd.f32 %v339, %v1914
    %v1916 = vpop.f32.mrb[0].mxu0
    %1917 = vdwg.mxu0
    %1918 = vmatprep.subr.mxu0 0.0
    %1919 = vmatpush1.msra.mxu0 %v196
    %1920 = vmatprep.subr.mxu0 0.0
    %1921 = vmatpush1.msra.mxu0 %v197
    %1922 = vmatprep.subr.mxu0 0.0
    %1923 = vmatpush1.msra.mxu0 %v198
    %1924 = vmatprep.subr.mxu0 0.0
    %1925 = vmatpush1.msra.mxu0 %v199
    %1926 = vmatprep.subr.mxu0 0.0
    %1927 = vmatpush1.msra.mxu0 0.0
    %1928 = vmatprep.subr.mxu0 0.0
    %1929 = vmatpush1.msra.mxu0 0.0
    %1930 = vmatprep.subr.mxu0 0.0
    %1931 = vmatpush1.msra.mxu0 0.0
    %1932 = vmatprep.subr.mxu0 0.0
    %1933 = vmatpush1.msra.mxu0 0.0
    %1934 = vmatprep.subr.mxu0 0.0
    %1935 = vmatpush1.msra.mxu0 0.0
    %1936 = vmatprep.subr.mxu0 0.0
    %1937 = vmatpush1.msra.mxu0 0.0
    %1938 = vmatprep.subr.mxu0 0.0
    %1939 = vmatpush1.msra.mxu0 0.0
    %1940 = vmatprep.subr.mxu0 0.0
    %1941 = vmatpush1.msra.mxu0 0.0
    %1942 = vmatprep.subr.mxu0 0.0
    %1943 = vmatpush1.msra.mxu0 0.0
    %1944 = vmatprep.subr.mxu0 0.0
    %1945 = vmatpush1.msra.mxu0 0.0
    %1946 = vmatprep.subr.mxu0 0.0
    %1947 = vmatpush1.msra.mxu0 0.0
    %1948 = vmatprep.subr.mxu0 0.0
    %1949 = vmatpush1.msra.mxu0 0.0
    %1950 = vmatprep.subr.mxu0 0.0
    %1951 = vmatpush1.msra.mxu0 0.0
    %1952 = vmatprep.subr.mxu0 0.0
    %1953 = vmatpush1.msra.mxu0 0.0
    %1954 = vmatprep.subr.mxu0 0.0
    %1955 = vmatpush1.msra.mxu0 0.0
    %1956 = vmatprep.subr.mxu0 0.0
    %1957 = vmatpush1.msra.mxu0 0.0
    %1958 = vmatprep.subr.mxu0 0.0
    %1959 = vmatpush1.msra.mxu0 0.0
    %1960 = vmatprep.subr.mxu0 0.0
    %1961 = vmatpush1.msra.mxu0 0.0
    %1962 = vmatprep.subr.mxu0 0.0
    %1963 = vmatpush1.msra.mxu0 0.0
    %1964 = vmatprep.subr.mxu0 0.0
    %1965 = vmatpush1.msra.mxu0 0.0
    %1966 = vmatprep.subr.mxu0 0.0
    %1967 = vmatpush1.msra.mxu0 0.0
    %1968 = vmatprep.subr.mxu0 0.0
    %1969 = vmatpush1.msra.mxu0 0.0
    %1970 = vmatprep.subr.mxu0 0.0
    %1971 = vmatpush1.msra.mxu0 0.0
    %1972 = vmatprep.subr.mxu0 0.0
    %1973 = vmatpush1.msra.mxu0 0.0
    %1974 = vmatprep.subr.mxu0 0.0
    %1975 = vmatpush1.msra.mxu0 0.0
    %1976 = vmatprep.subr.mxu0 0.0
    %1977 = vmatpush1.msra.mxu0 0.0
    %1978 = vmatprep.subr.mxu0 0.0
    %1979 = vmatpush1.msra.mxu0 0.0
    %1980 = vmatprep.subr.mxu0 0.0
    %1981 = vmatpush1.msra.mxu0 0.0
    %1982 = vmatprep.mubr.f32.mxu0 0.0
    %1983 = vmatmul.mubr.f32.gmra.mrb[0].mxu0 %v373
    %v1984 = vpop.f32.mrb[0].mxu0
    %v1985 = vadd.f32 %v343, %v1984
    %v1986 = vpop.f32.mrb[0].mxu0
    %1987 = vdwg.mxu0
    %1988 = vmatprep.subr.mxu0 0.0
    %1989 = vmatpush1.msra.mxu0 %v200
    %1990 = vmatprep.subr.mxu0 0.0
    %1991 = vmatpush1.msra.mxu0 %v201
    %1992 = vmatprep.subr.mxu0 0.0
    %1993 = vmatpush1.msra.mxu0 %v202
    %1994 = vmatprep.subr.mxu0 0.0
    %1995 = vmatpush1.msra.mxu0 %v203
    %1996 = vmatprep.subr.mxu0 0.0
    %1997 = vmatpush1.msra.mxu0 0.0
    %1998 = vmatprep.subr.mxu0 0.0
    %1999 = vmatpush1.msra.mxu0 0.0
    %2000 = vmatprep.subr.mxu0 0.0
    %2001 = vmatpush1.msra.mxu0 0.0
    %2002 = vmatprep.subr.mxu0 0.0
    %2003 = vmatpush1.msra.mxu0 0.0
    %2004 = vmatprep.subr.mxu0 0.0
    %2005 = vmatpush1.msra.mxu0 0.0
    %2006 = vmatprep.subr.mxu0 0.0
    %2007 = vmatpush1.msra.mxu0 0.0
    %2008 = vmatprep.subr.mxu0 0.0
    %2009 = vmatpush1.msra.mxu0 0.0
    %2010 = vmatprep.subr.mxu0 0.0
    %2011 = vmatpush1.msra.mxu0 0.0
    %2012 = vmatprep.subr.mxu0 0.0
    %2013 = vmatpush1.msra.mxu0 0.0
    %2014 = vmatprep.subr.mxu0 0.0
    %2015 = vmatpush1.msra.mxu0 0.0
    %2016 = vmatprep.subr.mxu0 0.0
    %2017 = vmatpush1.msra.mxu0 0.0
    %2018 = vmatprep.subr.mxu0 0.0
    %2019 = vmatpush1.msra.mxu0 0.0
    %2020 = vmatprep.subr.mxu0 0.0
    %2021 = vmatpush1.msra.mxu0 0.0
    %2022 = vmatprep.subr.mxu0 0.0
    %2023 = vmatpush1.msra.mxu0 0.0
    %2024 = vmatprep.subr.mxu0 0.0
    %2025 = vmatpush1.msra.mxu0 0.0
    %2026 = vmatprep.subr.mxu0 0.0
    %2027 = vmatpush1.msra.mxu0 0.0
    %2028 = vmatprep.subr.mxu0 0.0
    %2029 = vmatpush1.msra.mxu0 0.0
    %2030 = vmatprep.subr.mxu0 0.0
    %2031 = vmatpush1.msra.mxu0 0.0
    %2032 = vmatprep.subr.mxu0 0.0
    %2033 = vmatpush1.msra.mxu0 0.0
    %2034 = vmatprep.subr.mxu0 0.0
    %2035 = vmatpush1.msra.mxu0 0.0
    %2036 = vmatprep.subr.mxu0 0.0
    %2037 = vmatpush1.msra.mxu0 0.0
    %2038 = vmatprep.subr.mxu0 0.0
    %2039 = vmatpush1.msra.mxu0 0.0
    %2040 = vmatprep.subr.mxu0 0.0
    %2041 = vmatpush1.msra.mxu0 0.0
    %2042 = vmatprep.subr.mxu0 0.0
    %2043 = vmatpush1.msra.mxu0 0.0
    %2044 = vmatprep.subr.mxu0 0.0
    %2045 = vmatpush1.msra.mxu0 0.0
    %2046 = vmatprep.subr.mxu0 0.0
    %2047 = vmatpush1.msra.mxu0 0.0
    %2048 = vmatprep.subr.mxu0 0.0
    %2049 = vmatpush1.msra.mxu0 0.0
    %2050 = vmatprep.subr.mxu0 0.0
    %2051 = vmatpush1.msra.mxu0 0.0
    %2052 = vmatprep.mubr.f32.mxu0 0.0
    %2053 = vmatmul.mubr.f32.gmra.mrb[0].mxu0 %v446
    %v2054 = vpop.f32.mrb[0].mxu0
    %v2055 = vadd.f32 %v347, %v2054
    %v2056 = vpop.f32.mrb[0].mxu0
    %2057 = vdwg.mxu0
    %v2060 = vlaneseq
    %v2061 = vshrl.u32 %v2060, 7
    %v2062 = vsub.s32 0, %v2061
    %v2063 = vrot.slane %v51, %v2062
    %v2064 = vlaneseq
    %v2065 = vshrl.u32 %v2064, 7
    %v2066 = vsub.s32 0, %v2065
    %v2067 = vrot.slane %v52, %v2066
    %vm2070 = vcmask 64512
    %v2072 = vsel %vm2070, %v442, 0
    %v2075 = vsel %vm2070, %v1005, 0
    %2077 = vmatprep.subr.mxu0 0.0
    %2078 = vmatpush1.xpose.msra.mxu0 %v2075
    %2079 = vmatprep.subr.mxu0 0.0
    %2080 = vmatpush1.xpose.msra.mxu0 0.0
    %2081 = vmatprep.subr.mxu0 0.0
    %2082 = vmatpush1.xpose.msra.mxu0 0.0
    %2083 = vmatprep.subr.mxu0 0.0
    %2084 = vmatpush1.xpose.msra.mxu0 0.0
    %2085 = vmatprep.subr.mxu0 0.0
    %2086 = vmatpush1.xpose.msra.mxu0 0.0
    %2087 = vmatprep.subr.mxu0 0.0
    %2088 = vmatpush1.xpose.msra.mxu0 0.0
    %2089 = vmatprep.subr.mxu0 0.0
    %2090 = vmatpush1.xpose.msra.mxu0 0.0
    %2091 = vmatprep.subr.mxu0 0.0
    %2092 = vmatpush1.xpose.msra.mxu0 0.0
    %2093 = vmatprep.subr.mxu0 0.0
    %2094 = vmatpush1.xpose.msra.mxu0 0.0
    %2095 = vmatprep.subr.mxu0 0.0
    %2096 = vmatpush1.xpose.msra.mxu0 0.0
    %2097 = vmatprep.subr.mxu0 0.0
    %2098 = vmatpush1.xpose.msra.mxu0 0.0
    %2099 = vmatprep.subr.mxu0 0.0
    %2100 = vmatpush1.xpose.msra.mxu0 0.0
    %2101 = vmatprep.subr.mxu0 0.0
    %2102 = vmatpush1.xpose.msra.mxu0 0.0
    %2103 = vmatprep.subr.mxu0 0.0
    %2104 = vmatpush1.xpose.msra.mxu0 0.0
    %2105 = vmatprep.subr.mxu0 0.0
    %2106 = vmatpush1.xpose.msra.mxu0 0.0
    %2107 = vmatprep.subr.mxu0 0.0
    %2108 = vmatpush1.xpose.msra.mxu0 0.0
    %2109 = vmatprep.subr.mxu0 0.0
    %2110 = vmatpush1.xpose.msra.mxu0 0.0
    %2111 = vmatprep.subr.mxu0 0.0
    %2112 = vmatpush1.xpose.msra.mxu0 0.0
    %2113 = vmatprep.subr.mxu0 0.0
    %2114 = vmatpush1.xpose.msra.mxu0 0.0
    %2115 = vmatprep.subr.mxu0 0.0
    %2116 = vmatpush1.xpose.msra.mxu0 0.0
    %2117 = vmatprep.subr.mxu0 0.0
    %2118 = vmatpush1.xpose.msra.mxu0 0.0
    %2119 = vmatprep.subr.mxu0 0.0
    %2120 = vmatpush1.xpose.msra.mxu0 0.0
    %2121 = vmatprep.subr.mxu0 0.0
    %2122 = vmatpush1.xpose.msra.mxu0 0.0
    %2123 = vmatprep.subr.mxu0 0.0
    %2124 = vmatpush1.xpose.msra.mxu0 0.0
    %2125 = vmatprep.subr.mxu0 0.0
    %2126 = vmatpush1.xpose.msra.mxu0 0.0
    %2127 = vmatprep.subr.mxu0 0.0
    %2128 = vmatpush1.xpose.msra.mxu0 0.0
    %2129 = vmatprep.subr.mxu0 0.0
    %2130 = vmatpush1.xpose.msra.mxu0 0.0
    %2131 = vmatprep.subr.mxu0 0.0
    %2132 = vmatpush1.xpose.msra.mxu0 0.0
    %2133 = vmatprep.subr.mxu0 0.0
    %2134 = vmatpush1.xpose.msra.mxu0 0.0
    %2135 = vmatprep.subr.mxu0 0.0
    %2136 = vmatpush1.xpose.msra.mxu0 0.0
    %2137 = vmatprep.subr.mxu0 0.0
    %2138 = vmatpush1.xpose.msra.mxu0 0.0
    %2139 = vmatprep.subr.mxu0 0.0
    %2140 = vmatpush1.xpose.msra.mxu0 0.0
    %2141 = vmatprep.mubr.f32.mxu0 0.0
    %2142 = vmatmul.mubr.f32.gmra.mrb[0].mxu0 %v2072
    %v2143 = vpop.f32.mrb[0].mxu0
    %v2144 = vadd.f32 %v2063, %v2143
    %v2145 = vpop.f32.mrb[0].mxu0
    %2146 = vdwg.mxu0
    %v2148 = vsel %vm2070, %v515, 0
    %v2151 = vsel %vm2070, %v1075, 0
    %2153 = vmatprep.subr.mxu0 0.0
    %2154 = vmatpush1.xpose.msra.mxu0 %v2151
    %2155 = vmatprep.subr.mxu0 0.0
    %2156 = vmatpush1.xpose.msra.mxu0 0.0
    %2157 = vmatprep.subr.mxu0 0.0
    %2158 = vmatpush1.xpose.msra.mxu0 0.0
    %2159 = vmatprep.subr.mxu0 0.0
    %2160 = vmatpush1.xpose.msra.mxu0 0.0
    %2161 = vmatprep.subr.mxu0 0.0
    %2162 = vmatpush1.xpose.msra.mxu0 0.0
    %2163 = vmatprep.subr.mxu0 0.0
    %2164 = vmatpush1.xpose.msra.mxu0 0.0
    %2165 = vmatprep.subr.mxu0 0.0
    %2166 = vmatpush1.xpose.msra.mxu0 0.0
    %2167 = vmatprep.subr.mxu0 0.0
    %2168 = vmatpush1.xpose.msra.mxu0 0.0
    %2169 = vmatprep.subr.mxu0 0.0
    %2170 = vmatpush1.xpose.msra.mxu0 0.0
    %2171 = vmatprep.subr.mxu0 0.0
    %2172 = vmatpush1.xpose.msra.mxu0 0.0
    %2173 = vmatprep.subr.mxu0 0.0
    %2174 = vmatpush1.xpose.msra.mxu0 0.0
    %2175 = vmatprep.subr.mxu0 0.0
    %2176 = vmatpush1.xpose.msra.mxu0 0.0
    %2177 = vmatprep.subr.mxu0 0.0
    %2178 = vmatpush1.xpose.msra.mxu0 0.0
    %2179 = vmatprep.subr.mxu0 0.0
    %2180 = vmatpush1.xpose.msra.mxu0 0.0
    %2181 = vmatprep.subr.mxu0 0.0
    %2182 = vmatpush1.xpose.msra.mxu0 0.0
    %2183 = vmatprep.subr.mxu0 0.0
    %2184 = vmatpush1.xpose.msra.mxu0 0.0
    %2185 = vmatprep.subr.mxu0 0.0
    %2186 = vmatpush1.xpose.msra.mxu0 0.0
    %2187 = vmatprep.subr.mxu0 0.0
    %2188 = vmatpush1.xpose.msra.mxu0 0.0
    %2189 = vmatprep.subr.mxu0 0.0
    %2190 = vmatpush1.xpose.msra.mxu0 0.0
    %2191 = vmatprep.subr.mxu0 0.0
    %2192 = vmatpush1.xpose.msra.mxu0 0.0
    %2193 = vmatprep.subr.mxu0 0.0
    %2194 = vmatpush1.xpose.msra.mxu0 0.0
    %2195 = vmatprep.subr.mxu0 0.0
    %2196 = vmatpush1.xpose.msra.mxu0 0.0
    %2197 = vmatprep.subr.mxu0 0.0
    %2198 = vmatpush1.xpose.msra.mxu0 0.0
    %2199 = vmatprep.subr.mxu0 0.0
    %2200 = vmatpush1.xpose.msra.mxu0 0.0
    %2201 = vmatprep.subr.mxu0 0.0
    %2202 = vmatpush1.xpose.msra.mxu0 0.0
    %2203 = vmatprep.subr.mxu0 0.0
    %2204 = vmatpush1.xpose.msra.mxu0 0.0
    %2205 = vmatprep.subr.mxu0 0.0
    %2206 = vmatpush1.xpose.msra.mxu0 0.0
    %2207 = vmatprep.subr.mxu0 0.0
    %2208 = vmatpush1.xpose.msra.mxu0 0.0
    %2209 = vmatprep.subr.mxu0 0.0
    %2210 = vmatpush1.xpose.msra.mxu0 0.0
    %2211 = vmatprep.subr.mxu0 0.0
    %2212 = vmatpush1.xpose.msra.mxu0 0.0
    %2213 = vmatprep.subr.mxu0 0.0
    %2214 = vmatpush1.xpose.msra.mxu0 0.0
    %2215 = vmatprep.subr.mxu0 0.0
    %2216 = vmatpush1.xpose.msra.mxu0 0.0
    %2217 = vmatprep.mubr.f32.mxu0 0.0
    %2218 = vmatmul.mubr.f32.gmra.mrb[0].mxu0 %v2148
    %v2219 = vpop.f32.mrb[0].mxu0
    %v2220 = vadd.f32 %v2067, %v2219
    %v2221 = vpop.f32.mrb[0].mxu0
    %2222 = vdwg.mxu0
    %v2224 = vsel %vm2070, %v585, 0
    %v2227 = vsel %vm2070, %v1145, 0
    %2229 = vmatprep.subr.mxu0 0.0
    %2230 = vmatpush1.xpose.msra.mxu0 %v2227
    %2231 = vmatprep.subr.mxu0 0.0
    %2232 = vmatpush1.xpose.msra.mxu0 0.0
    %2233 = vmatprep.subr.mxu0 0.0
    %2234 = vmatpush1.xpose.msra.mxu0 0.0
    %2235 = vmatprep.subr.mxu0 0.0
    %2236 = vmatpush1.xpose.msra.mxu0 0.0
    %2237 = vmatprep.subr.mxu0 0.0
    %2238 = vmatpush1.xpose.msra.mxu0 0.0
    %2239 = vmatprep.subr.mxu0 0.0
    %2240 = vmatpush1.xpose.msra.mxu0 0.0
    %2241 = vmatprep.subr.mxu0 0.0
    %2242 = vmatpush1.xpose.msra.mxu0 0.0
    %2243 = vmatprep.subr.mxu0 0.0
    %2244 = vmatpush1.xpose.msra.mxu0 0.0
    %2245 = vmatprep.subr.mxu0 0.0
    %2246 = vmatpush1.xpose.msra.mxu0 0.0
    %2247 = vmatprep.subr.mxu0 0.0
    %2248 = vmatpush1.xpose.msra.mxu0 0.0
    %2249 = vmatprep.subr.mxu0 0.0
    %2250 = vmatpush1.xpose.msra.mxu0 0.0
    %2251 = vmatprep.subr.mxu0 0.0
    %2252 = vmatpush1.xpose.msra.mxu0 0.0
    %2253 = vmatprep.subr.mxu0 0.0
    %2254 = vmatpush1.xpose.msra.mxu0 0.0
    %2255 = vmatprep.subr.mxu0 0.0
    %2256 = vmatpush1.xpose.msra.mxu0 0.0
    %2257 = vmatprep.subr.mxu0 0.0
    %2258 = vmatpush1.xpose.msra.mxu0 0.0
    %2259 = vmatprep.subr.mxu0 0.0
    %2260 = vmatpush1.xpose.msra.mxu0 0.0
    %2261 = vmatprep.subr.mxu0 0.0
    %2262 = vmatpush1.xpose.msra.mxu0 0.0
    %2263 = vmatprep.subr.mxu0 0.0
    %2264 = vmatpush1.xpose.msra.mxu0 0.0
    %2265 = vmatprep.subr.mxu0 0.0
    %2266 = vmatpush1.xpose.msra.mxu0 0.0
    %2267 = vmatprep.subr.mxu0 0.0
    %2268 = vmatpush1.xpose.msra.mxu0 0.0
    %2269 = vmatprep.subr.mxu0 0.0
    %2270 = vmatpush1.xpose.msra.mxu0 0.0
    %2271 = vmatprep.subr.mxu0 0.0
    %2272 = vmatpush1.xpose.msra.mxu0 0.0
    %2273 = vmatprep.subr.mxu0 0.0
    %2274 = vmatpush1.xpose.msra.mxu0 0.0
    %2275 = vmatprep.subr.mxu0 0.0
    %2276 = vmatpush1.xpose.msra.mxu0 0.0
    %2277 = vmatprep.subr.mxu0 0.0
    %2278 = vmatpush1.xpose.msra.mxu0 0.0
    %2279 = vmatprep.subr.mxu0 0.0
    %2280 = vmatpush1.xpose.msra.mxu0 0.0
    %2281 = vmatprep.subr.mxu0 0.0
    %2282 = vmatpush1.xpose.msra.mxu0 0.0
    %2283 = vmatprep.subr.mxu0 0.0
    %2284 = vmatpush1.xpose.msra.mxu0 0.0
    %2285 = vmatprep.subr.mxu0 0.0
    %2286 = vmatpush1.xpose.msra.mxu0 0.0
    %2287 = vmatprep.subr.mxu0 0.0
    %2288 = vmatpush1.xpose.msra.mxu0 0.0
    %2289 = vmatprep.subr.mxu0 0.0
    %2290 = vmatpush1.xpose.msra.mxu0 0.0
    %2291 = vmatprep.subr.mxu0 0.0
    %2292 = vmatpush1.xpose.msra.mxu0 0.0
    %2293 = vmatprep.mubr.f32.mxu0 0.0
    %2294 = vmatmul.mubr.f32.gmra.mrb[0].mxu0 %v2224
    %v2295 = vpop.f32.mrb[0].mxu0
    %v2296 = vadd.f32 %v2063, %v2295
    %v2297 = vpop.f32.mrb[0].mxu0
    %2298 = vdwg.mxu0
    %v2300 = vsel %vm2070, %v655, 0
    %v2303 = vsel %vm2070, %v1215, 0
    %2305 = vmatprep.subr.mxu0 0.0
    %2306 = vmatpush1.xpose.msra.mxu0 %v2303
    %2307 = vmatprep.subr.mxu0 0.0
    %2308 = vmatpush1.xpose.msra.mxu0 0.0
    %2309 = vmatprep.subr.mxu0 0.0
    %2310 = vmatpush1.xpose.msra.mxu0 0.0
    %2311 = vmatprep.subr.mxu0 0.0
    %2312 = vmatpush1.xpose.msra.mxu0 0.0
    %2313 = vmatprep.subr.mxu0 0.0
    %2314 = vmatpush1.xpose.msra.mxu0 0.0
    %2315 = vmatprep.subr.mxu0 0.0
    %2316 = vmatpush1.xpose.msra.mxu0 0.0
    %2317 = vmatprep.subr.mxu0 0.0
    %2318 = vmatpush1.xpose.msra.mxu0 0.0
    %2319 = vmatprep.subr.mxu0 0.0
    %2320 = vmatpush1.xpose.msra.mxu0 0.0
    %2321 = vmatprep.subr.mxu0 0.0
    %2322 = vmatpush1.xpose.msra.mxu0 0.0
    %2323 = vmatprep.subr.mxu0 0.0
    %2324 = vmatpush1.xpose.msra.mxu0 0.0
    %2325 = vmatprep.subr.mxu0 0.0
    %2326 = vmatpush1.xpose.msra.mxu0 0.0
    %2327 = vmatprep.subr.mxu0 0.0
    %2328 = vmatpush1.xpose.msra.mxu0 0.0
    %2329 = vmatprep.subr.mxu0 0.0
    %2330 = vmatpush1.xpose.msra.mxu0 0.0
    %2331 = vmatprep.subr.mxu0 0.0
    %2332 = vmatpush1.xpose.msra.mxu0 0.0
    %2333 = vmatprep.subr.mxu0 0.0
    %2334 = vmatpush1.xpose.msra.mxu0 0.0
    %2335 = vmatprep.subr.mxu0 0.0
    %2336 = vmatpush1.xpose.msra.mxu0 0.0
    %2337 = vmatprep.subr.mxu0 0.0
    %2338 = vmatpush1.xpose.msra.mxu0 0.0
    %2339 = vmatprep.subr.mxu0 0.0
    %2340 = vmatpush1.xpose.msra.mxu0 0.0
    %2341 = vmatprep.subr.mxu0 0.0
    %2342 = vmatpush1.xpose.msra.mxu0 0.0
    %2343 = vmatprep.subr.mxu0 0.0
    %2344 = vmatpush1.xpose.msra.mxu0 0.0
    %2345 = vmatprep.subr.mxu0 0.0
    %2346 = vmatpush1.xpose.msra.mxu0 0.0
    %2347 = vmatprep.subr.mxu0 0.0
    %2348 = vmatpush1.xpose.msra.mxu0 0.0
    %2349 = vmatprep.subr.mxu0 0.0
    %2350 = vmatpush1.xpose.msra.mxu0 0.0
    %2351 = vmatprep.subr.mxu0 0.0
    %2352 = vmatpush1.xpose.msra.mxu0 0.0
    %2353 = vmatprep.subr.mxu0 0.0
    %2354 = vmatpush1.xpose.msra.mxu0 0.0
    %2355 = vmatprep.subr.mxu0 0.0
    %2356 = vmatpush1.xpose.msra.mxu0 0.0
    %2357 = vmatprep.subr.mxu0 0.0
    %2358 = vmatpush1.xpose.msra.mxu0 0.0
    %2359 = vmatprep.subr.mxu0 0.0
    %2360 = vmatpush1.xpose.msra.mxu0 0.0
    %2361 = vmatprep.subr.mxu0 0.0
    %2362 = vmatpush1.xpose.msra.mxu0 0.0
    %2363 = vmatprep.subr.mxu0 0.0
    %2364 = vmatpush1.xpose.msra.mxu0 0.0
    %2365 = vmatprep.subr.mxu0 0.0
    %2366 = vmatpush1.xpose.msra.mxu0 0.0
    %2367 = vmatprep.subr.mxu0 0.0
    %2368 = vmatpush1.xpose.msra.mxu0 0.0
    %2369 = vmatprep.mubr.f32.mxu0 0.0
    %2370 = vmatmul.mubr.f32.gmra.mrb[0].mxu0 %v2300
    %v2371 = vpop.f32.mrb[0].mxu0
    %v2372 = vadd.f32 %v2067, %v2371
    %v2373 = vpop.f32.mrb[0].mxu0
    %2374 = vdwg.mxu0
    %v2376 = vsel %vm2070, %v725, 0
    %v2379 = vsel %vm2070, %v1285, 0
    %2381 = vmatprep.subr.mxu0 0.0
    %2382 = vmatpush1.xpose.msra.mxu0 %v2379
    %2383 = vmatprep.subr.mxu0 0.0
    %2384 = vmatpush1.xpose.msra.mxu0 0.0
    %2385 = vmatprep.subr.mxu0 0.0
    %2386 = vmatpush1.xpose.msra.mxu0 0.0
    %2387 = vmatprep.subr.mxu0 0.0
    %2388 = vmatpush1.xpose.msra.mxu0 0.0
    %2389 = vmatprep.subr.mxu0 0.0
    %2390 = vmatpush1.xpose.msra.mxu0 0.0
    %2391 = vmatprep.subr.mxu0 0.0
    %2392 = vmatpush1.xpose.msra.mxu0 0.0
    %2393 = vmatprep.subr.mxu0 0.0
    %2394 = vmatpush1.xpose.msra.mxu0 0.0
    %2395 = vmatprep.subr.mxu0 0.0
    %2396 = vmatpush1.xpose.msra.mxu0 0.0
    %2397 = vmatprep.subr.mxu0 0.0
    %2398 = vmatpush1.xpose.msra.mxu0 0.0
    %2399 = vmatprep.subr.mxu0 0.0
    %2400 = vmatpush1.xpose.msra.mxu0 0.0
    %2401 = vmatprep.subr.mxu0 0.0
    %2402 = vmatpush1.xpose.msra.mxu0 0.0
    %2403 = vmatprep.subr.mxu0 0.0
    %2404 = vmatpush1.xpose.msra.mxu0 0.0
    %2405 = vmatprep.subr.mxu0 0.0
    %2406 = vmatpush1.xpose.msra.mxu0 0.0
    %2407 = vmatprep.subr.mxu0 0.0
    %2408 = vmatpush1.xpose.msra.mxu0 0.0
    %2409 = vmatprep.subr.mxu0 0.0
    %2410 = vmatpush1.xpose.msra.mxu0 0.0
    %2411 = vmatprep.subr.mxu0 0.0
    %2412 = vmatpush1.xpose.msra.mxu0 0.0
    %2413 = vmatprep.subr.mxu0 0.0
    %2414 = vmatpush1.xpose.msra.mxu0 0.0
    %2415 = vmatprep.subr.mxu0 0.0
    %2416 = vmatpush1.xpose.msra.mxu0 0.0
    %2417 = vmatprep.subr.mxu0 0.0
    %2418 = vmatpush1.xpose.msra.mxu0 0.0
    %2419 = vmatprep.subr.mxu0 0.0
    %2420 = vmatpush1.xpose.msra.mxu0 0.0
    %2421 = vmatprep.subr.mxu0 0.0
    %2422 = vmatpush1.xpose.msra.mxu0 0.0
    %2423 = vmatprep.subr.mxu0 0.0
    %2424 = vmatpush1.xpose.msra.mxu0 0.0
    %2425 = vmatprep.subr.mxu0 0.0
    %2426 = vmatpush1.xpose.msra.mxu0 0.0
    %2427 = vmatprep.subr.mxu0 0.0
    %2428 = vmatpush1.xpose.msra.mxu0 0.0
    %2429 = vmatprep.subr.mxu0 0.0
    %2430 = vmatpush1.xpose.msra.mxu0 0.0
    %2431 = vmatprep.subr.mxu0 0.0
    %2432 = vmatpush1.xpose.msra.mxu0 0.0
    %2433 = vmatprep.subr.mxu0 0.0
    %2434 = vmatpush1.xpose.msra.mxu0 0.0
    %2435 = vmatprep.subr.mxu0 0.0
    %2436 = vmatpush1.xpose.msra.mxu0 0.0
    %2437 = vmatprep.subr.mxu0 0.0
    %2438 = vmatpush1.xpose.msra.mxu0 0.0
    %2439 = vmatprep.subr.mxu0 0.0
    %2440 = vmatpush1.xpose.msra.mxu0 0.0
    %2441 = vmatprep.subr.mxu0 0.0
    %2442 = vmatpush1.xpose.msra.mxu0 0.0
    %2443 = vmatprep.subr.mxu0 0.0
    %2444 = vmatpush1.xpose.msra.mxu0 0.0
    %2445 = vmatprep.mubr.f32.mxu0 0.0
    %2446 = vmatmul.mubr.f32.gmra.mrb[0].mxu0 %v2376
    %v2447 = vpop.f32.mrb[0].mxu0
    %v2448 = vadd.f32 %v2063, %v2447
    %v2449 = vpop.f32.mrb[0].mxu0
    %2450 = vdwg.mxu0
    %v2452 = vsel %vm2070, %v795, 0
    %v2455 = vsel %vm2070, %v1355, 0
    %2457 = vmatprep.subr.mxu0 0.0
    %2458 = vmatpush1.xpose.msra.mxu0 %v2455
    %2459 = vmatprep.subr.mxu0 0.0
    %2460 = vmatpush1.xpose.msra.mxu0 0.0
    %2461 = vmatprep.subr.mxu0 0.0
    %2462 = vmatpush1.xpose.msra.mxu0 0.0
    %2463 = vmatprep.subr.mxu0 0.0
    %2464 = vmatpush1.xpose.msra.mxu0 0.0
    %2465 = vmatprep.subr.mxu0 0.0
    %2466 = vmatpush1.xpose.msra.mxu0 0.0
    %2467 = vmatprep.subr.mxu0 0.0
    %2468 = vmatpush1.xpose.msra.mxu0 0.0
    %2469 = vmatprep.subr.mxu0 0.0
    %2470 = vmatpush1.xpose.msra.mxu0 0.0
    %2471 = vmatprep.subr.mxu0 0.0
    %2472 = vmatpush1.xpose.msra.mxu0 0.0
    %2473 = vmatprep.subr.mxu0 0.0
    %2474 = vmatpush1.xpose.msra.mxu0 0.0
    %2475 = vmatprep.subr.mxu0 0.0
    %2476 = vmatpush1.xpose.msra.mxu0 0.0
    %2477 = vmatprep.subr.mxu0 0.0
    %2478 = vmatpush1.xpose.msra.mxu0 0.0
    %2479 = vmatprep.subr.mxu0 0.0
    %2480 = vmatpush1.xpose.msra.mxu0 0.0
    %2481 = vmatprep.subr.mxu0 0.0
    %2482 = vmatpush1.xpose.msra.mxu0 0.0
    %2483 = vmatprep.subr.mxu0 0.0
    %2484 = vmatpush1.xpose.msra.mxu0 0.0
    %2485 = vmatprep.subr.mxu0 0.0
    %2486 = vmatpush1.xpose.msra.mxu0 0.0
    %2487 = vmatprep.subr.mxu0 0.0
    %2488 = vmatpush1.xpose.msra.mxu0 0.0
    %2489 = vmatprep.subr.mxu0 0.0
    %2490 = vmatpush1.xpose.msra.mxu0 0.0
    %2491 = vmatprep.subr.mxu0 0.0
    %2492 = vmatpush1.xpose.msra.mxu0 0.0
    %2493 = vmatprep.subr.mxu0 0.0
    %2494 = vmatpush1.xpose.msra.mxu0 0.0
    %2495 = vmatprep.subr.mxu0 0.0
    %2496 = vmatpush1.xpose.msra.mxu0 0.0
    %2497 = vmatprep.subr.mxu0 0.0
    %2498 = vmatpush1.xpose.msra.mxu0 0.0
    %2499 = vmatprep.subr.mxu0 0.0
    %2500 = vmatpush1.xpose.msra.mxu0 0.0
    %2501 = vmatprep.subr.mxu0 0.0
    %2502 = vmatpush1.xpose.msra.mxu0 0.0
    %2503 = vmatprep.subr.mxu0 0.0
    %2504 = vmatpush1.xpose.msra.mxu0 0.0
    %2505 = vmatprep.subr.mxu0 0.0
    %2506 = vmatpush1.xpose.msra.mxu0 0.0
    %2507 = vmatprep.subr.mxu0 0.0
    %2508 = vmatpush1.xpose.msra.mxu0 0.0
    %2509 = vmatprep.subr.mxu0 0.0
    %2510 = vmatpush1.xpose.msra.mxu0 0.0
    %2511 = vmatprep.subr.mxu0 0.0
    %2512 = vmatpush1.xpose.msra.mxu0 0.0
    %2513 = vmatprep.subr.mxu0 0.0
    %2514 = vmatpush1.xpose.msra.mxu0 0.0
    %2515 = vmatprep.subr.mxu0 0.0
    %2516 = vmatpush1.xpose.msra.mxu0 0.0
    %2517 = vmatprep.subr.mxu0 0.0
    %2518 = vmatpush1.xpose.msra.mxu0 0.0
    %2519 = vmatprep.subr.mxu0 0.0
    %2520 = vmatpush1.xpose.msra.mxu0 0.0
    %2521 = vmatprep.mubr.f32.mxu0 0.0
    %2522 = vmatmul.mubr.f32.gmra.mrb[0].mxu0 %v2452
    %v2523 = vpop.f32.mrb[0].mxu0
    %v2524 = vadd.f32 %v2067, %v2523
    %v2525 = vpop.f32.mrb[0].mxu0
    %2526 = vdwg.mxu0
    %v2528 = vsel %vm2070, %v865, 0
    %v2531 = vsel %vm2070, %v1425, 0
    %2533 = vmatprep.subr.mxu0 0.0
    %2534 = vmatpush1.xpose.msra.mxu0 %v2531
    %2535 = vmatprep.subr.mxu0 0.0
    %2536 = vmatpush1.xpose.msra.mxu0 0.0
    %2537 = vmatprep.subr.mxu0 0.0
    %2538 = vmatpush1.xpose.msra.mxu0 0.0
    %2539 = vmatprep.subr.mxu0 0.0
    %2540 = vmatpush1.xpose.msra.mxu0 0.0
    %2541 = vmatprep.subr.mxu0 0.0
    %2542 = vmatpush1.xpose.msra.mxu0 0.0
    %2543 = vmatprep.subr.mxu0 0.0
    %2544 = vmatpush1.xpose.msra.mxu0 0.0
    %2545 = vmatprep.subr.mxu0 0.0
    %2546 = vmatpush1.xpose.msra.mxu0 0.0
    %2547 = vmatprep.subr.mxu0 0.0
    %2548 = vmatpush1.xpose.msra.mxu0 0.0
    %2549 = vmatprep.subr.mxu0 0.0
    %2550 = vmatpush1.xpose.msra.mxu0 0.0
    %2551 = vmatprep.subr.mxu0 0.0
    %2552 = vmatpush1.xpose.msra.mxu0 0.0
    %2553 = vmatprep.subr.mxu0 0.0
    %2554 = vmatpush1.xpose.msra.mxu0 0.0
    %2555 = vmatprep.subr.mxu0 0.0
    %2556 = vmatpush1.xpose.msra.mxu0 0.0
    %2557 = vmatprep.subr.mxu0 0.0
    %2558 = vmatpush1.xpose.msra.mxu0 0.0
    %2559 = vmatprep.subr.mxu0 0.0
    %2560 = vmatpush1.xpose.msra.mxu0 0.0
    %2561 = vmatprep.subr.mxu0 0.0
    %2562 = vmatpush1.xpose.msra.mxu0 0.0
    %2563 = vmatprep.subr.mxu0 0.0
    %2564 = vmatpush1.xpose.msra.mxu0 0.0
    %2565 = vmatprep.subr.mxu0 0.0
    %2566 = vmatpush1.xpose.msra.mxu0 0.0
    %2567 = vmatprep.subr.mxu0 0.0
    %2568 = vmatpush1.xpose.msra.mxu0 0.0
    %2569 = vmatprep.subr.mxu0 0.0
    %2570 = vmatpush1.xpose.msra.mxu0 0.0
    %2571 = vmatprep.subr.mxu0 0.0
    %2572 = vmatpush1.xpose.msra.mxu0 0.0
    %2573 = vmatprep.subr.mxu0 0.0
    %2574 = vmatpush1.xpose.msra.mxu0 0.0
    %2575 = vmatprep.subr.mxu0 0.0
    %2576 = vmatpush1.xpose.msra.mxu0 0.0
    %2577 = vmatprep.subr.mxu0 0.0
    %2578 = vmatpush1.xpose.msra.mxu0 0.0
    %2579 = vmatprep.subr.mxu0 0.0
    %2580 = vmatpush1.xpose.msra.mxu0 0.0
    %2581 = vmatprep.subr.mxu0 0.0
    %2582 = vmatpush1.xpose.msra.mxu0 0.0
    %2583 = vmatprep.subr.mxu0 0.0
    %2584 = vmatpush1.xpose.msra.mxu0 0.0
    %2585 = vmatprep.subr.mxu0 0.0
    %2586 = vmatpush1.xpose.msra.mxu0 0.0
    %2587 = vmatprep.subr.mxu0 0.0
    %2588 = vmatpush1.xpose.msra.mxu0 0.0
    %2589 = vmatprep.subr.mxu0 0.0
    %2590 = vmatpush1.xpose.msra.mxu0 0.0
    %2591 = vmatprep.subr.mxu0 0.0
    %2592 = vmatpush1.xpose.msra.mxu0 0.0
    %2593 = vmatprep.subr.mxu0 0.0
    %2594 = vmatpush1.xpose.msra.mxu0 0.0
    %2595 = vmatprep.subr.mxu0 0.0
    %2596 = vmatpush1.xpose.msra.mxu0 0.0
    %2597 = vmatprep.mubr.f32.mxu0 0.0
    %2598 = vmatmul.mubr.f32.gmra.mrb[0].mxu0 %v2528
    %v2599 = vpop.f32.mrb[0].mxu0
    %v2600 = vadd.f32 %v2063, %v2599
    %v2601 = vpop.f32.mrb[0].mxu0
    %2602 = vdwg.mxu0
    %v2604 = vsel %vm2070, %v935, 0
    %v2607 = vsel %vm2070, %v1495, 0
    %2609 = vmatprep.subr.mxu0 0.0
    %2610 = vmatpush1.xpose.msra.mxu0 %v2607
    %2611 = vmatprep.subr.mxu0 0.0
    %2612 = vmatpush1.xpose.msra.mxu0 0.0
    %2613 = vmatprep.subr.mxu0 0.0
    %2614 = vmatpush1.xpose.msra.mxu0 0.0
    %2615 = vmatprep.subr.mxu0 0.0
    %2616 = vmatpush1.xpose.msra.mxu0 0.0
    %2617 = vmatprep.subr.mxu0 0.0
    %2618 = vmatpush1.xpose.msra.mxu0 0.0
    %2619 = vmatprep.subr.mxu0 0.0
    %2620 = vmatpush1.xpose.msra.mxu0 0.0
    %2621 = vmatprep.subr.mxu0 0.0
    %2622 = vmatpush1.xpose.msra.mxu0 0.0
    %2623 = vmatprep.subr.mxu0 0.0
    %2624 = vmatpush1.xpose.msra.mxu0 0.0
    %2625 = vmatprep.subr.mxu0 0.0
    %2626 = vmatpush1.xpose.msra.mxu0 0.0
    %2627 = vmatprep.subr.mxu0 0.0
    %2628 = vmatpush1.xpose.msra.mxu0 0.0
    %2629 = vmatprep.subr.mxu0 0.0
    %2630 = vmatpush1.xpose.msra.mxu0 0.0
    %2631 = vmatprep.subr.mxu0 0.0
    %2632 = vmatpush1.xpose.msra.mxu0 0.0
    %2633 = vmatprep.subr.mxu0 0.0
    %2634 = vmatpush1.xpose.msra.mxu0 0.0
    %2635 = vmatprep.subr.mxu0 0.0
    %2636 = vmatpush1.xpose.msra.mxu0 0.0
    %2637 = vmatprep.subr.mxu0 0.0
    %2638 = vmatpush1.xpose.msra.mxu0 0.0
    %2639 = vmatprep.subr.mxu0 0.0
    %2640 = vmatpush1.xpose.msra.mxu0 0.0
    %2641 = vmatprep.subr.mxu0 0.0
    %2642 = vmatpush1.xpose.msra.mxu0 0.0
    %2643 = vmatprep.subr.mxu0 0.0
    %2644 = vmatpush1.xpose.msra.mxu0 0.0
    %2645 = vmatprep.subr.mxu0 0.0
    %2646 = vmatpush1.xpose.msra.mxu0 0.0
    %2647 = vmatprep.subr.mxu0 0.0
    %2648 = vmatpush1.xpose.msra.mxu0 0.0
    %2649 = vmatprep.subr.mxu0 0.0
    %2650 = vmatpush1.xpose.msra.mxu0 0.0
    %2651 = vmatprep.subr.mxu0 0.0
    %2652 = vmatpush1.xpose.msra.mxu0 0.0
    %2653 = vmatprep.subr.mxu0 0.0
    %2654 = vmatpush1.xpose.msra.mxu0 0.0
    %2655 = vmatprep.subr.mxu0 0.0
    %2656 = vmatpush1.xpose.msra.mxu0 0.0
    %2657 = vmatprep.subr.mxu0 0.0
    %2658 = vmatpush1.xpose.msra.mxu0 0.0
    %2659 = vmatprep.subr.mxu0 0.0
    %2660 = vmatpush1.xpose.msra.mxu0 0.0
    %2661 = vmatprep.subr.mxu0 0.0
    %2662 = vmatpush1.xpose.msra.mxu0 0.0
    %2663 = vmatprep.subr.mxu0 0.0
    %2664 = vmatpush1.xpose.msra.mxu0 0.0
    %2665 = vmatprep.subr.mxu0 0.0
    %2666 = vmatpush1.xpose.msra.mxu0 0.0
    %2667 = vmatprep.subr.mxu0 0.0
    %2668 = vmatpush1.xpose.msra.mxu0 0.0
    %2669 = vmatprep.subr.mxu0 0.0
    %2670 = vmatpush1.xpose.msra.mxu0 0.0
    %2671 = vmatprep.subr.mxu0 0.0
    %2672 = vmatpush1.xpose.msra.mxu0 0.0
    %2673 = vmatprep.mubr.f32.mxu0 0.0
    %2674 = vmatmul.mubr.f32.gmra.mrb[0].mxu0 %v2604
    %v2675 = vpop.f32.mrb[0].mxu0
    %v2676 = vadd.f32 %v2067, %v2675
    %v2677 = vpop.f32.mrb[0].mxu0
    %2678 = vdwg.mxu0
    %v2679 = vsel %vm2070, %v2144, -inf
    %2680 = vmax.xlane.f32.xlu0 %v2679
    %v2681 = vpop.xlane.xlu0 %2680
    %v2682 = vsel %vm2070, %v2220, -inf
    %2683 = vmax.xlane.f32.xlu0 %v2682
    %v2684 = vpop.xlane.xlu0 %2683
    %v2685 = vsel %vm2070, %v2296, -inf
    %2686 = vmax.xlane.f32.xlu0 %v2685
    %v2687 = vpop.xlane.xlu0 %2686
    %v2688 = vsel %vm2070, %v2372, -inf
    %2689 = vmax.xlane.f32.xlu0 %v2688
    %v2690 = vpop.xlane.xlu0 %2689
    %v2691 = vsel %vm2070, %v2448, -inf
    %2692 = vmax.xlane.f32.xlu0 %v2691
    %v2693 = vpop.xlane.xlu0 %2692
    %v2694 = vsel %vm2070, %v2524, -inf
    %2695 = vmax.xlane.f32.xlu0 %v2694
    %v2696 = vpop.xlane.xlu0 %2695
    %v2697 = vsel %vm2070, %v2600, -inf
    %2698 = vmax.xlane.f32.xlu0 %v2697
    %v2699 = vpop.xlane.xlu0 %2698
    %v2700 = vsel %vm2070, %v2676, -inf
    %2701 = vmax.xlane.f32.xlu0 %v2700
    %v2702 = vpop.xlane.xlu0 %2701
    %v2703 = vsub.f32 %v2144, %v2681
    %v2704 = vsub.f32 %v2220, %v2684
    %v2705 = vsub.f32 %v2296, %v2687
    %v2706 = vsub.f32 %v2372, %v2690
    %v2707 = vsub.f32 %v2448, %v2693
    %v2708 = vsub.f32 %v2524, %v2696
    %v2709 = vsub.f32 %v2600, %v2699
    %v2710 = vsub.f32 %v2676, %v2702
    %v2711 = vmul.f32 %v2703, 1.442695
    %v2712 = vpow.pop %v2711
    %v2713 = vmul.f32 %v2704, 1.442695
    %v2714 = vpow.pop %v2713
    %v2715 = vmul.f32 %v2705, 1.442695
    %v2716 = vpow.pop %v2715
    %v2717 = vmul.f32 %v2706, 1.442695
    %v2718 = vpow.pop %v2717
    %v2719 = vmul.f32 %v2707, 1.442695
    %v2720 = vpow.pop %v2719
    %v2721 = vmul.f32 %v2708, 1.442695
    %v2722 = vpow.pop %v2721
    %v2723 = vmul.f32 %v2709, 1.442695
    %v2724 = vpow.pop %v2723
    %v2725 = vmul.f32 %v2710, 1.442695
    %v2726 = vpow.pop %v2725
    %v2727 = vsel %vm2070, %v2712, 0.0
    %2728 = vadd.xlane.f32.xlu0 %v2727
    %v2729 = vpop.xlane.xlu0 %2728
    %v2730 = vsel %vm2070, %v2714, 0.0
    %2731 = vadd.xlane.f32.xlu0 %v2730
    %v2732 = vpop.xlane.xlu0 %2731
    %v2733 = vsel %vm2070, %v2716, 0.0
    %2734 = vadd.xlane.f32.xlu0 %v2733
    %v2735 = vpop.xlane.xlu0 %2734
    %v2736 = vsel %vm2070, %v2718, 0.0
    %2737 = vadd.xlane.f32.xlu0 %v2736
    %v2738 = vpop.xlane.xlu0 %2737
    %v2739 = vsel %vm2070, %v2720, 0.0
    %2740 = vadd.xlane.f32.xlu0 %v2739
    %v2741 = vpop.xlane.xlu0 %2740
    %v2742 = vsel %vm2070, %v2722, 0.0
    %2743 = vadd.xlane.f32.xlu0 %v2742
    %v2744 = vpop.xlane.xlu0 %2743
    %v2745 = vsel %vm2070, %v2724, 0.0
    %2746 = vadd.xlane.f32.xlu0 %v2745
    %v2747 = vpop.xlane.xlu0 %2746
    %v2748 = vsel %vm2070, %v2726, 0.0
    %2749 = vadd.xlane.f32.xlu0 %v2748
    %v2750 = vpop.xlane.xlu0 %2749
    %v2751 = vrcp.pop %v2729
    %v2752 = vrcp.pop %v2732
    %v2753 = vrcp.pop %v2735
    %v2754 = vrcp.pop %v2738
    %v2755 = vrcp.pop %v2741
    %v2756 = vrcp.pop %v2744
    %v2757 = vrcp.pop %v2747
    %v2758 = vrcp.pop %v2750
    %v2759 = vmul.f32 %v2712, %v2751
    %v2760 = vmul.f32 %v2714, %v2752
    %v2761 = vmul.f32 %v2716, %v2753
    %v2762 = vmul.f32 %v2718, %v2754
    %v2763 = vmul.f32 %v2720, %v2755
    %v2764 = vmul.f32 %v2722, %v2756
    %v2765 = vmul.f32 %v2724, %v2757
    %v2766 = vmul.f32 %v2726, %v2758
    %v2768 = vsel %vm2070, %v2759, 0
    %2770 = vmatprep.subr.mxu0 0.0
    %2771 = vmatpush1.msra.mxu0 %v1565
    %2772 = vmatprep.subr.mxu0 0.0
    %2773 = vmatpush1.msra.mxu0 0.0
    %2774 = vmatprep.subr.mxu0 0.0
    %2775 = vmatpush1.msra.mxu0 0.0
    %2776 = vmatprep.subr.mxu0 0.0
    %2777 = vmatpush1.msra.mxu0 0.0
    %2778 = vmatprep.subr.mxu0 0.0
    %2779 = vmatpush1.msra.mxu0 0.0
    %2780 = vmatprep.subr.mxu0 0.0
    %2781 = vmatpush1.msra.mxu0 0.0
    %2782 = vmatprep.subr.mxu0 0.0
    %2783 = vmatpush1.msra.mxu0 0.0
    %2784 = vmatprep.subr.mxu0 0.0
    %2785 = vmatpush1.msra.mxu0 0.0
    %2786 = vmatprep.subr.mxu0 0.0
    %2787 = vmatpush1.msra.mxu0 0.0
    %2788 = vmatprep.subr.mxu0 0.0
    %2789 = vmatpush1.msra.mxu0 0.0
    %2790 = vmatprep.subr.mxu0 0.0
    %2791 = vmatpush1.msra.mxu0 0.0
    %2792 = vmatprep.subr.mxu0 0.0
    %2793 = vmatpush1.msra.mxu0 0.0
    %2794 = vmatprep.subr.mxu0 0.0
    %2795 = vmatpush1.msra.mxu0 0.0
    %2796 = vmatprep.subr.mxu0 0.0
    %2797 = vmatpush1.msra.mxu0 0.0
    %2798 = vmatprep.subr.mxu0 0.0
    %2799 = vmatpush1.msra.mxu0 0.0
    %2800 = vmatprep.subr.mxu0 0.0
    %2801 = vmatpush1.msra.mxu0 0.0
    %2802 = vmatprep.subr.mxu0 0.0
    %2803 = vmatpush1.msra.mxu0 0.0
    %2804 = vmatprep.subr.mxu0 0.0
    %2805 = vmatpush1.msra.mxu0 0.0
    %2806 = vmatprep.subr.mxu0 0.0
    %2807 = vmatpush1.msra.mxu0 0.0
    %2808 = vmatprep.subr.mxu0 0.0
    %2809 = vmatpush1.msra.mxu0 0.0
    %2810 = vmatprep.subr.mxu0 0.0
    %2811 = vmatpush1.msra.mxu0 0.0
    %2812 = vmatprep.subr.mxu0 0.0
    %2813 = vmatpush1.msra.mxu0 0.0
    %2814 = vmatprep.subr.mxu0 0.0
    %2815 = vmatpush1.msra.mxu0 0.0
    %2816 = vmatprep.subr.mxu0 0.0
    %2817 = vmatpush1.msra.mxu0 0.0
    %2818 = vmatprep.subr.mxu0 0.0
    %2819 = vmatpush1.msra.mxu0 0.0
    %2820 = vmatprep.subr.mxu0 0.0
    %2821 = vmatpush1.msra.mxu0 0.0
    %2822 = vmatprep.subr.mxu0 0.0
    %2823 = vmatpush1.msra.mxu0 0.0
    %2824 = vmatprep.subr.mxu0 0.0
    %2825 = vmatpush1.msra.mxu0 0.0
    %2826 = vmatprep.subr.mxu0 0.0
    %2827 = vmatpush1.msra.mxu0 0.0
    %2828 = vmatprep.subr.mxu0 0.0
    %2829 = vmatpush1.msra.mxu0 0.0
    %2830 = vmatprep.subr.mxu0 0.0
    %2831 = vmatpush1.msra.mxu0 0.0
    %2832 = vmatprep.subr.mxu0 0.0
    %2833 = vmatpush1.msra.mxu0 0.0
    %2834 = vmatprep.mubr.f32.mxu0 0.0
    %2835 = vmatmul.mubr.f32.gmra.mrb[0].mxu0 %v2768
    %v2836 = vpop.f32.mrb[0].mxu0
    %v2837 = vadd.f32 0.0, %v2836
    %v2838 = vpop.f32.mrb[0].mxu0
    %2839 = vdwg.mxu0
    %v2841 = vsel %vm2070, %v2760, 0
    %2843 = vmatprep.subr.mxu0 0.0
    %2844 = vmatpush1.msra.mxu0 %v1635
    %2845 = vmatprep.subr.mxu0 0.0
    %2846 = vmatpush1.msra.mxu0 0.0
    %2847 = vmatprep.subr.mxu0 0.0
    %2848 = vmatpush1.msra.mxu0 0.0
    %2849 = vmatprep.subr.mxu0 0.0
    %2850 = vmatpush1.msra.mxu0 0.0
    %2851 = vmatprep.subr.mxu0 0.0
    %2852 = vmatpush1.msra.mxu0 0.0
    %2853 = vmatprep.subr.mxu0 0.0
    %2854 = vmatpush1.msra.mxu0 0.0
    %2855 = vmatprep.subr.mxu0 0.0
    %2856 = vmatpush1.msra.mxu0 0.0
    %2857 = vmatprep.subr.mxu0 0.0
    %2858 = vmatpush1.msra.mxu0 0.0
    %2859 = vmatprep.subr.mxu0 0.0
    %2860 = vmatpush1.msra.mxu0 0.0
    %2861 = vmatprep.subr.mxu0 0.0
    %2862 = vmatpush1.msra.mxu0 0.0
    %2863 = vmatprep.subr.mxu0 0.0
    %2864 = vmatpush1.msra.mxu0 0.0
    %2865 = vmatprep.subr.mxu0 0.0
    %2866 = vmatpush1.msra.mxu0 0.0
    %2867 = vmatprep.subr.mxu0 0.0
    %2868 = vmatpush1.msra.mxu0 0.0
    %2869 = vmatprep.subr.mxu0 0.0
    %2870 = vmatpush1.msra.mxu0 0.0
    %2871 = vmatprep.subr.mxu0 0.0
    %2872 = vmatpush1.msra.mxu0 0.0
    %2873 = vmatprep.subr.mxu0 0.0
    %2874 = vmatpush1.msra.mxu0 0.0
    %2875 = vmatprep.subr.mxu0 0.0
    %2876 = vmatpush1.msra.mxu0 0.0
    %2877 = vmatprep.subr.mxu0 0.0
    %2878 = vmatpush1.msra.mxu0 0.0
    %2879 = vmatprep.subr.mxu0 0.0
    %2880 = vmatpush1.msra.mxu0 0.0
    %2881 = vmatprep.subr.mxu0 0.0
    %2882 = vmatpush1.msra.mxu0 0.0
    %2883 = vmatprep.subr.mxu0 0.0
    %2884 = vmatpush1.msra.mxu0 0.0
    %2885 = vmatprep.subr.mxu0 0.0
    %2886 = vmatpush1.msra.mxu0 0.0
    %2887 = vmatprep.subr.mxu0 0.0
    %2888 = vmatpush1.msra.mxu0 0.0
    %2889 = vmatprep.subr.mxu0 0.0
    %2890 = vmatpush1.msra.mxu0 0.0
    %2891 = vmatprep.subr.mxu0 0.0
    %2892 = vmatpush1.msra.mxu0 0.0
    %2893 = vmatprep.subr.mxu0 0.0
    %2894 = vmatpush1.msra.mxu0 0.0
    %2895 = vmatprep.subr.mxu0 0.0
    %2896 = vmatpush1.msra.mxu0 0.0
    %2897 = vmatprep.subr.mxu0 0.0
    %2898 = vmatpush1.msra.mxu0 0.0
    %2899 = vmatprep.subr.mxu0 0.0
    %2900 = vmatpush1.msra.mxu0 0.0
    %2901 = vmatprep.subr.mxu0 0.0
    %2902 = vmatpush1.msra.mxu0 0.0
    %2903 = vmatprep.subr.mxu0 0.0
    %2904 = vmatpush1.msra.mxu0 0.0
    %2905 = vmatprep.subr.mxu0 0.0
    %2906 = vmatpush1.msra.mxu0 0.0
    %2907 = vmatprep.mubr.f32.mxu0 0.0
    %2908 = vmatmul.mubr.f32.gmra.mrb[0].mxu0 %v2841
    %v2909 = vpop.f32.mrb[0].mxu0
    %v2910 = vadd.f32 0.0, %v2909
    %v2911 = vpop.f32.mrb[0].mxu0
    %2912 = vdwg.mxu0
    %v2914 = vsel %vm2070, %v2761, 0
    %2916 = vmatprep.subr.mxu0 0.0
    %2917 = vmatpush1.msra.mxu0 %v1705
    %2918 = vmatprep.subr.mxu0 0.0
    %2919 = vmatpush1.msra.mxu0 0.0
    %2920 = vmatprep.subr.mxu0 0.0
    %2921 = vmatpush1.msra.mxu0 0.0
    %2922 = vmatprep.subr.mxu0 0.0
    %2923 = vmatpush1.msra.mxu0 0.0
    %2924 = vmatprep.subr.mxu0 0.0
    %2925 = vmatpush1.msra.mxu0 0.0
    %2926 = vmatprep.subr.mxu0 0.0
    %2927 = vmatpush1.msra.mxu0 0.0
    %2928 = vmatprep.subr.mxu0 0.0
    %2929 = vmatpush1.msra.mxu0 0.0
    %2930 = vmatprep.subr.mxu0 0.0
    %2931 = vmatpush1.msra.mxu0 0.0
    %2932 = vmatprep.subr.mxu0 0.0
    %2933 = vmatpush1.msra.mxu0 0.0
    %2934 = vmatprep.subr.mxu0 0.0
    %2935 = vmatpush1.msra.mxu0 0.0
    %2936 = vmatprep.subr.mxu0 0.0
    %2937 = vmatpush1.msra.mxu0 0.0
    %2938 = vmatprep.subr.mxu0 0.0
    %2939 = vmatpush1.msra.mxu0 0.0
    %2940 = vmatprep.subr.mxu0 0.0
    %2941 = vmatpush1.msra.mxu0 0.0
    %2942 = vmatprep.subr.mxu0 0.0
    %2943 = vmatpush1.msra.mxu0 0.0
    %2944 = vmatprep.subr.mxu0 0.0
    %2945 = vmatpush1.msra.mxu0 0.0
    %2946 = vmatprep.subr.mxu0 0.0
    %2947 = vmatpush1.msra.mxu0 0.0
    %2948 = vmatprep.subr.mxu0 0.0
    %2949 = vmatpush1.msra.mxu0 0.0
    %2950 = vmatprep.subr.mxu0 0.0
    %2951 = vmatpush1.msra.mxu0 0.0
    %2952 = vmatprep.subr.mxu0 0.0
    %2953 = vmatpush1.msra.mxu0 0.0
    %2954 = vmatprep.subr.mxu0 0.0
    %2955 = vmatpush1.msra.mxu0 0.0
    %2956 = vmatprep.subr.mxu0 0.0
    %2957 = vmatpush1.msra.mxu0 0.0
    %2958 = vmatprep.subr.mxu0 0.0
    %2959 = vmatpush1.msra.mxu0 0.0
    %2960 = vmatprep.subr.mxu0 0.0
    %2961 = vmatpush1.msra.mxu0 0.0
    %2962 = vmatprep.subr.mxu0 0.0
    %2963 = vmatpush1.msra.mxu0 0.0
    %2964 = vmatprep.subr.mxu0 0.0
    %2965 = vmatpush1.msra.mxu0 0.0
    %2966 = vmatprep.subr.mxu0 0.0
    %2967 = vmatpush1.msra.mxu0 0.0
    %2968 = vmatprep.subr.mxu0 0.0
    %2969 = vmatpush1.msra.mxu0 0.0
    %2970 = vmatprep.subr.mxu0 0.0
    %2971 = vmatpush1.msra.mxu0 0.0
    %2972 = vmatprep.subr.mxu0 0.0
    %2973 = vmatpush1.msra.mxu0 0.0
    %2974 = vmatprep.subr.mxu0 0.0
    %2975 = vmatpush1.msra.mxu0 0.0
    %2976 = vmatprep.subr.mxu0 0.0
    %2977 = vmatpush1.msra.mxu0 0.0
    %2978 = vmatprep.subr.mxu0 0.0
    %2979 = vmatpush1.msra.mxu0 0.0
    %2980 = vmatprep.mubr.f32.mxu0 0.0
    %2981 = vmatmul.mubr.f32.gmra.mrb[0].mxu0 %v2914
    %v2982 = vpop.f32.mrb[0].mxu0
    %v2983 = vadd.f32 0.0, %v2982
    %v2984 = vpop.f32.mrb[0].mxu0
    %2985 = vdwg.mxu0
    %v2987 = vsel %vm2070, %v2762, 0
    %2989 = vmatprep.subr.mxu0 0.0
    %2990 = vmatpush1.msra.mxu0 %v1775
    %2991 = vmatprep.subr.mxu0 0.0
    %2992 = vmatpush1.msra.mxu0 0.0
    %2993 = vmatprep.subr.mxu0 0.0
    %2994 = vmatpush1.msra.mxu0 0.0
    %2995 = vmatprep.subr.mxu0 0.0
    %2996 = vmatpush1.msra.mxu0 0.0
    %2997 = vmatprep.subr.mxu0 0.0
    %2998 = vmatpush1.msra.mxu0 0.0
    %2999 = vmatprep.subr.mxu0 0.0
    %3000 = vmatpush1.msra.mxu0 0.0
    %3001 = vmatprep.subr.mxu0 0.0
    %3002 = vmatpush1.msra.mxu0 0.0
    %3003 = vmatprep.subr.mxu0 0.0
    %3004 = vmatpush1.msra.mxu0 0.0
    %3005 = vmatprep.subr.mxu0 0.0
    %3006 = vmatpush1.msra.mxu0 0.0
    %3007 = vmatprep.subr.mxu0 0.0
    %3008 = vmatpush1.msra.mxu0 0.0
    %3009 = vmatprep.subr.mxu0 0.0
    %3010 = vmatpush1.msra.mxu0 0.0
    %3011 = vmatprep.subr.mxu0 0.0
    %3012 = vmatpush1.msra.mxu0 0.0
    %3013 = vmatprep.subr.mxu0 0.0
    %3014 = vmatpush1.msra.mxu0 0.0
    %3015 = vmatprep.subr.mxu0 0.0
    %3016 = vmatpush1.msra.mxu0 0.0
    %3017 = vmatprep.subr.mxu0 0.0
    %3018 = vmatpush1.msra.mxu0 0.0
    %3019 = vmatprep.subr.mxu0 0.0
    %3020 = vmatpush1.msra.mxu0 0.0
    %3021 = vmatprep.subr.mxu0 0.0
    %3022 = vmatpush1.msra.mxu0 0.0
    %3023 = vmatprep.subr.mxu0 0.0
    %3024 = vmatpush1.msra.mxu0 0.0
    %3025 = vmatprep.subr.mxu0 0.0
    %3026 = vmatpush1.msra.mxu0 0.0
    %3027 = vmatprep.subr.mxu0 0.0
    %3028 = vmatpush1.msra.mxu0 0.0
    %3029 = vmatprep.subr.mxu0 0.0
    %3030 = vmatpush1.msra.mxu0 0.0
    %3031 = vmatprep.subr.mxu0 0.0
    %3032 = vmatpush1.msra.mxu0 0.0
    %3033 = vmatprep.subr.mxu0 0.0
    %3034 = vmatpush1.msra.mxu0 0.0
    %3035 = vmatprep.subr.mxu0 0.0
    %3036 = vmatpush1.msra.mxu0 0.0
    %3037 = vmatprep.subr.mxu0 0.0
    %3038 = vmatpush1.msra.mxu0 0.0
    %3039 = vmatprep.subr.mxu0 0.0
    %3040 = vmatpush1.msra.mxu0 0.0
    %3041 = vmatprep.subr.mxu0 0.0
    %3042 = vmatpush1.msra.mxu0 0.0
    %3043 = vmatprep.subr.mxu0 0.0
    %3044 = vmatpush1.msra.mxu0 0.0
    %3045 = vmatprep.subr.mxu0 0.0
    %3046 = vmatpush1.msra.mxu0 0.0
    %3047 = vmatprep.subr.mxu0 0.0
    %3048 = vmatpush1.msra.mxu0 0.0
    %3049 = vmatprep.subr.mxu0 0.0
    %3050 = vmatpush1.msra.mxu0 0.0
    %3051 = vmatprep.subr.mxu0 0.0
    %3052 = vmatpush1.msra.mxu0 0.0
    %3053 = vmatprep.mubr.f32.mxu0 0.0
    %3054 = vmatmul.mubr.f32.gmra.mrb[0].mxu0 %v2987
    %v3055 = vpop.f32.mrb[0].mxu0
    %v3056 = vadd.f32 0.0, %v3055
    %v3057 = vpop.f32.mrb[0].mxu0
    %3058 = vdwg.mxu0
    %v3060 = vsel %vm2070, %v2763, 0
    %3062 = vmatprep.subr.mxu0 0.0
    %3063 = vmatpush1.msra.mxu0 %v1845
    %3064 = vmatprep.subr.mxu0 0.0
    %3065 = vmatpush1.msra.mxu0 0.0
    %3066 = vmatprep.subr.mxu0 0.0
    %3067 = vmatpush1.msra.mxu0 0.0
    %3068 = vmatprep.subr.mxu0 0.0
    %3069 = vmatpush1.msra.mxu0 0.0
    %3070 = vmatprep.subr.mxu0 0.0
    %3071 = vmatpush1.msra.mxu0 0.0
    %3072 = vmatprep.subr.mxu0 0.0
    %3073 = vmatpush1.msra.mxu0 0.0
    %3074 = vmatprep.subr.mxu0 0.0
    %3075 = vmatpush1.msra.mxu0 0.0
    %3076 = vmatprep.subr.mxu0 0.0
    %3077 = vmatpush1.msra.mxu0 0.0
    %3078 = vmatprep.subr.mxu0 0.0
    %3079 = vmatpush1.msra.mxu0 0.0
    %3080 = vmatprep.subr.mxu0 0.0
    %3081 = vmatpush1.msra.mxu0 0.0
    %3082 = vmatprep.subr.mxu0 0.0
    %3083 = vmatpush1.msra.mxu0 0.0
    %3084 = vmatprep.subr.mxu0 0.0
    %3085 = vmatpush1.msra.mxu0 0.0
    %3086 = vmatprep.subr.mxu0 0.0
    %3087 = vmatpush1.msra.mxu0 0.0
    %3088 = vmatprep.subr.mxu0 0.0
    %3089 = vmatpush1.msra.mxu0 0.0
    %3090 = vmatprep.subr.mxu0 0.0
    %3091 = vmatpush1.msra.mxu0 0.0
    %3092 = vmatprep.subr.mxu0 0.0
    %3093 = vmatpush1.msra.mxu0 0.0
    %3094 = vmatprep.subr.mxu0 0.0
    %3095 = vmatpush1.msra.mxu0 0.0
    %3096 = vmatprep.subr.mxu0 0.0
    %3097 = vmatpush1.msra.mxu0 0.0
    %3098 = vmatprep.subr.mxu0 0.0
    %3099 = vmatpush1.msra.mxu0 0.0
    %3100 = vmatprep.subr.mxu0 0.0
    %3101 = vmatpush1.msra.mxu0 0.0
    %3102 = vmatprep.subr.mxu0 0.0
    %3103 = vmatpush1.msra.mxu0 0.0
    %3104 = vmatprep.subr.mxu0 0.0
    %3105 = vmatpush1.msra.mxu0 0.0
    %3106 = vmatprep.subr.mxu0 0.0
    %3107 = vmatpush1.msra.mxu0 0.0
    %3108 = vmatprep.subr.mxu0 0.0
    %3109 = vmatpush1.msra.mxu0 0.0
    %3110 = vmatprep.subr.mxu0 0.0
    %3111 = vmatpush1.msra.mxu0 0.0
    %3112 = vmatprep.subr.mxu0 0.0
    %3113 = vmatpush1.msra.mxu0 0.0
    %3114 = vmatprep.subr.mxu0 0.0
    %3115 = vmatpush1.msra.mxu0 0.0
    %3116 = vmatprep.subr.mxu0 0.0
    %3117 = vmatpush1.msra.mxu0 0.0
    %3118 = vmatprep.subr.mxu0 0.0
    %3119 = vmatpush1.msra.mxu0 0.0
    %3120 = vmatprep.subr.mxu0 0.0
    %3121 = vmatpush1.msra.mxu0 0.0
    %3122 = vmatprep.subr.mxu0 0.0
    %3123 = vmatpush1.msra.mxu0 0.0
    %3124 = vmatprep.subr.mxu0 0.0
    %3125 = vmatpush1.msra.mxu0 0.0
    %3126 = vmatprep.mubr.f32.mxu0 0.0
    %3127 = vmatmul.mubr.f32.gmra.mrb[0].mxu0 %v3060
    %v3128 = vpop.f32.mrb[0].mxu0
    %v3129 = vadd.f32 0.0, %v3128
    %v3130 = vpop.f32.mrb[0].mxu0
    %3131 = vdwg.mxu0
    %v3133 = vsel %vm2070, %v2764, 0
    %3135 = vmatprep.subr.mxu0 0.0
    %3136 = vmatpush1.msra.mxu0 %v1915
    %3137 = vmatprep.subr.mxu0 0.0
    %3138 = vmatpush1.msra.mxu0 0.0
    %3139 = vmatprep.subr.mxu0 0.0
    %3140 = vmatpush1.msra.mxu0 0.0
    %3141 = vmatprep.subr.mxu0 0.0
    %3142 = vmatpush1.msra.mxu0 0.0
    %3143 = vmatprep.subr.mxu0 0.0
    %3144 = vmatpush1.msra.mxu0 0.0
    %3145 = vmatprep.subr.mxu0 0.0
    %3146 = vmatpush1.msra.mxu0 0.0
    %3147 = vmatprep.subr.mxu0 0.0
    %3148 = vmatpush1.msra.mxu0 0.0
    %3149 = vmatprep.subr.mxu0 0.0
    %3150 = vmatpush1.msra.mxu0 0.0
    %3151 = vmatprep.subr.mxu0 0.0
    %3152 = vmatpush1.msra.mxu0 0.0
    %3153 = vmatprep.subr.mxu0 0.0
    %3154 = vmatpush1.msra.mxu0 0.0
    %3155 = vmatprep.subr.mxu0 0.0
    %3156 = vmatpush1.msra.mxu0 0.0
    %3157 = vmatprep.subr.mxu0 0.0
    %3158 = vmatpush1.msra.mxu0 0.0
    %3159 = vmatprep.subr.mxu0 0.0
    %3160 = vmatpush1.msra.mxu0 0.0
    %3161 = vmatprep.subr.mxu0 0.0
    %3162 = vmatpush1.msra.mxu0 0.0
    %3163 = vmatprep.subr.mxu0 0.0
    %3164 = vmatpush1.msra.mxu0 0.0
    %3165 = vmatprep.subr.mxu0 0.0
    %3166 = vmatpush1.msra.mxu0 0.0
    %3167 = vmatprep.subr.mxu0 0.0
    %3168 = vmatpush1.msra.mxu0 0.0
    %3169 = vmatprep.subr.mxu0 0.0
    %3170 = vmatpush1.msra.mxu0 0.0
    %3171 = vmatprep.subr.mxu0 0.0
    %3172 = vmatpush1.msra.mxu0 0.0
    %3173 = vmatprep.subr.mxu0 0.0
    %3174 = vmatpush1.msra.mxu0 0.0
    %3175 = vmatprep.subr.mxu0 0.0
    %3176 = vmatpush1.msra.mxu0 0.0
    %3177 = vmatprep.subr.mxu0 0.0
    %3178 = vmatpush1.msra.mxu0 0.0
    %3179 = vmatprep.subr.mxu0 0.0
    %3180 = vmatpush1.msra.mxu0 0.0
    %3181 = vmatprep.subr.mxu0 0.0
    %3182 = vmatpush1.msra.mxu0 0.0
    %3183 = vmatprep.subr.mxu0 0.0
    %3184 = vmatpush1.msra.mxu0 0.0
    %3185 = vmatprep.subr.mxu0 0.0
    %3186 = vmatpush1.msra.mxu0 0.0
    %3187 = vmatprep.subr.mxu0 0.0
    %3188 = vmatpush1.msra.mxu0 0.0
    %3189 = vmatprep.subr.mxu0 0.0
    %3190 = vmatpush1.msra.mxu0 0.0
    %3191 = vmatprep.subr.mxu0 0.0
    %3192 = vmatpush1.msra.mxu0 0.0
    %3193 = vmatprep.subr.mxu0 0.0
    %3194 = vmatpush1.msra.mxu0 0.0
    %3195 = vmatprep.subr.mxu0 0.0
    %3196 = vmatpush1.msra.mxu0 0.0
    %3197 = vmatprep.subr.mxu0 0.0
    %3198 = vmatpush1.msra.mxu0 0.0
    %3199 = vmatprep.mubr.f32.mxu0 0.0
    %3200 = vmatmul.mubr.f32.gmra.mrb[0].mxu0 %v3133
    %v3201 = vpop.f32.mrb[0].mxu0
    %v3202 = vadd.f32 0.0, %v3201
    %v3203 = vpop.f32.mrb[0].mxu0
    %3204 = vdwg.mxu0
    %v3206 = vsel %vm2070, %v2765, 0
    %3208 = vmatprep.subr.mxu0 0.0
    %3209 = vmatpush1.msra.mxu0 %v1985
    %3210 = vmatprep.subr.mxu0 0.0
    %3211 = vmatpush1.msra.mxu0 0.0
    %3212 = vmatprep.subr.mxu0 0.0
    %3213 = vmatpush1.msra.mxu0 0.0
    %3214 = vmatprep.subr.mxu0 0.0
    %3215 = vmatpush1.msra.mxu0 0.0
    %3216 = vmatprep.subr.mxu0 0.0
    %3217 = vmatpush1.msra.mxu0 0.0
    %3218 = vmatprep.subr.mxu0 0.0
    %3219 = vmatpush1.msra.mxu0 0.0
    %3220 = vmatprep.subr.mxu0 0.0
    %3221 = vmatpush1.msra.mxu0 0.0
    %3222 = vmatprep.subr.mxu0 0.0
    %3223 = vmatpush1.msra.mxu0 0.0
    %3224 = vmatprep.subr.mxu0 0.0
    %3225 = vmatpush1.msra.mxu0 0.0
    %3226 = vmatprep.subr.mxu0 0.0
    %3227 = vmatpush1.msra.mxu0 0.0
    %3228 = vmatprep.subr.mxu0 0.0
    %3229 = vmatpush1.msra.mxu0 0.0
    %3230 = vmatprep.subr.mxu0 0.0
    %3231 = vmatpush1.msra.mxu0 0.0
    %3232 = vmatprep.subr.mxu0 0.0
    %3233 = vmatpush1.msra.mxu0 0.0
    %3234 = vmatprep.subr.mxu0 0.0
    %3235 = vmatpush1.msra.mxu0 0.0
    %3236 = vmatprep.subr.mxu0 0.0
    %3237 = vmatpush1.msra.mxu0 0.0
    %3238 = vmatprep.subr.mxu0 0.0
    %3239 = vmatpush1.msra.mxu0 0.0
    %3240 = vmatprep.subr.mxu0 0.0
    %3241 = vmatpush1.msra.mxu0 0.0
    %3242 = vmatprep.subr.mxu0 0.0
    %3243 = vmatpush1.msra.mxu0 0.0
    %3244 = vmatprep.subr.mxu0 0.0
    %3245 = vmatpush1.msra.mxu0 0.0
    %3246 = vmatprep.subr.mxu0 0.0
    %3247 = vmatpush1.msra.mxu0 0.0
    %3248 = vmatprep.subr.mxu0 0.0
    %3249 = vmatpush1.msra.mxu0 0.0
    %3250 = vmatprep.subr.mxu0 0.0
    %3251 = vmatpush1.msra.mxu0 0.0
    %3252 = vmatprep.subr.mxu0 0.0
    %3253 = vmatpush1.msra.mxu0 0.0
    %3254 = vmatprep.subr.mxu0 0.0
    %3255 = vmatpush1.msra.mxu0 0.0
    %3256 = vmatprep.subr.mxu0 0.0
    %3257 = vmatpush1.msra.mxu0 0.0
    %3258 = vmatprep.subr.mxu0 0.0
    %3259 = vmatpush1.msra.mxu0 0.0
    %3260 = vmatprep.subr.mxu0 0.0
    %3261 = vmatpush1.msra.mxu0 0.0
    %3262 = vmatprep.subr.mxu0 0.0
    %3263 = vmatpush1.msra.mxu0 0.0
    %3264 = vmatprep.subr.mxu0 0.0
    %3265 = vmatpush1.msra.mxu0 0.0
    %3266 = vmatprep.subr.mxu0 0.0
    %3267 = vmatpush1.msra.mxu0 0.0
    %3268 = vmatprep.subr.mxu0 0.0
    %3269 = vmatpush1.msra.mxu0 0.0
    %3270 = vmatprep.subr.mxu0 0.0
    %3271 = vmatpush1.msra.mxu0 0.0
    %3272 = vmatprep.mubr.f32.mxu0 0.0
    %3273 = vmatmul.mubr.f32.gmra.mrb[0].mxu0 %v3206
    %v3274 = vpop.f32.mrb[0].mxu0
    %v3275 = vadd.f32 0.0, %v3274
    %v3276 = vpop.f32.mrb[0].mxu0
    %3277 = vdwg.mxu0
    %v3279 = vsel %vm2070, %v2766, 0
    %3281 = vmatprep.subr.mxu0 0.0
    %3282 = vmatpush1.msra.mxu0 %v2055
    %3283 = vmatprep.subr.mxu0 0.0
    %3284 = vmatpush1.msra.mxu0 0.0
    %3285 = vmatprep.subr.mxu0 0.0
    %3286 = vmatpush1.msra.mxu0 0.0
    %3287 = vmatprep.subr.mxu0 0.0
    %3288 = vmatpush1.msra.mxu0 0.0
    %3289 = vmatprep.subr.mxu0 0.0
    %3290 = vmatpush1.msra.mxu0 0.0
    %3291 = vmatprep.subr.mxu0 0.0
    %3292 = vmatpush1.msra.mxu0 0.0
    %3293 = vmatprep.subr.mxu0 0.0
    %3294 = vmatpush1.msra.mxu0 0.0
    %3295 = vmatprep.subr.mxu0 0.0
    %3296 = vmatpush1.msra.mxu0 0.0
    %3297 = vmatprep.subr.mxu0 0.0
    %3298 = vmatpush1.msra.mxu0 0.0
    %3299 = vmatprep.subr.mxu0 0.0
    %3300 = vmatpush1.msra.mxu0 0.0
    %3301 = vmatprep.subr.mxu0 0.0
    %3302 = vmatpush1.msra.mxu0 0.0
    %3303 = vmatprep.subr.mxu0 0.0
    %3304 = vmatpush1.msra.mxu0 0.0
    %3305 = vmatprep.subr.mxu0 0.0
    %3306 = vmatpush1.msra.mxu0 0.0
    %3307 = vmatprep.subr.mxu0 0.0
    %3308 = vmatpush1.msra.mxu0 0.0
    %3309 = vmatprep.subr.mxu0 0.0
    %3310 = vmatpush1.msra.mxu0 0.0
    %3311 = vmatprep.subr.mxu0 0.0
    %3312 = vmatpush1.msra.mxu0 0.0
    %3313 = vmatprep.subr.mxu0 0.0
    %3314 = vmatpush1.msra.mxu0 0.0
    %3315 = vmatprep.subr.mxu0 0.0
    %3316 = vmatpush1.msra.mxu0 0.0
    %3317 = vmatprep.subr.mxu0 0.0
    %3318 = vmatpush1.msra.mxu0 0.0
    %3319 = vmatprep.subr.mxu0 0.0
    %3320 = vmatpush1.msra.mxu0 0.0
    %3321 = vmatprep.subr.mxu0 0.0
    %3322 = vmatpush1.msra.mxu0 0.0
    %3323 = vmatprep.subr.mxu0 0.0
    %3324 = vmatpush1.msra.mxu0 0.0
    %3325 = vmatprep.subr.mxu0 0.0
    %3326 = vmatpush1.msra.mxu0 0.0
    %3327 = vmatprep.subr.mxu0 0.0
    %3328 = vmatpush1.msra.mxu0 0.0
    %3329 = vmatprep.subr.mxu0 0.0
    %3330 = vmatpush1.msra.mxu0 0.0
    %3331 = vmatprep.subr.mxu0 0.0
    %3332 = vmatpush1.msra.mxu0 0.0
    %3333 = vmatprep.subr.mxu0 0.0
    %3334 = vmatpush1.msra.mxu0 0.0
    %3335 = vmatprep.subr.mxu0 0.0
    %3336 = vmatpush1.msra.mxu0 0.0
    %3337 = vmatprep.subr.mxu0 0.0
    %3338 = vmatpush1.msra.mxu0 0.0
    %3339 = vmatprep.subr.mxu0 0.0
    %3340 = vmatpush1.msra.mxu0 0.0
    %3341 = vmatprep.subr.mxu0 0.0
    %3342 = vmatpush1.msra.mxu0 0.0
    %3343 = vmatprep.subr.mxu0 0.0
    %3344 = vmatpush1.msra.mxu0 0.0
    %3345 = vmatprep.mubr.f32.mxu0 0.0
    %3346 = vmatmul.mubr.f32.gmra.mrb[0].mxu0 %v3279
    %v3347 = vpop.f32.mrb[0].mxu0
    %v3348 = vadd.f32 0.0, %v3347
    %v3349 = vpop.f32.mrb[0].mxu0
    %3350 = vdwg.mxu0
    %v3351 = vld [vmem:[%s5] sm:$0xff]
    %v3352 = vld [vmem:[%s5 + $0x8] sm:$0xff]
    %v3353 = vld [vmem:[%s5 + $0x10] sm:$0xff]
    %v3354 = vld [vmem:[%s5 + $0x18] sm:$0xff]
    %v3355 = vld [vmem:[%s5 + $0x20] sm:$0xff]
    %v3356 = vld [vmem:[%s5 + $0x28] sm:$0xff]
    %v3357 = vld [vmem:[%s5 + $0x30] sm:$0xff]
    %v3358 = vld [vmem:[%s5 + $0x38] sm:$0xff]
    %v3360 = vsel %vm2070, %v2837, 0
    %3362 = vmatprep.subr.mxu0 0.0
    %3363 = vmatpush1.msra.mxu0 %v3351
    %3364 = vmatprep.subr.mxu0 0.0
    %3365 = vmatpush1.msra.mxu0 0.0
    %3366 = vmatprep.subr.mxu0 0.0
    %3367 = vmatpush1.msra.mxu0 0.0
    %3368 = vmatprep.subr.mxu0 0.0
    %3369 = vmatpush1.msra.mxu0 0.0
    %3370 = vmatprep.subr.mxu0 0.0
    %3371 = vmatpush1.msra.mxu0 0.0
    %3372 = vmatprep.subr.mxu0 0.0
    %3373 = vmatpush1.msra.mxu0 0.0
    %3374 = vmatprep.subr.mxu0 0.0
    %3375 = vmatpush1.msra.mxu0 0.0
    %3376 = vmatprep.subr.mxu0 0.0
    %3377 = vmatpush1.msra.mxu0 0.0
    %3378 = vmatprep.subr.mxu0 0.0
    %3379 = vmatpush1.msra.mxu0 0.0
    %3380 = vmatprep.subr.mxu0 0.0
    %3381 = vmatpush1.msra.mxu0 0.0
    %3382 = vmatprep.subr.mxu0 0.0
    %3383 = vmatpush1.msra.mxu0 0.0
    %3384 = vmatprep.subr.mxu0 0.0
    %3385 = vmatpush1.msra.mxu0 0.0
    %3386 = vmatprep.subr.mxu0 0.0
    %3387 = vmatpush1.msra.mxu0 0.0
    %3388 = vmatprep.subr.mxu0 0.0
    %3389 = vmatpush1.msra.mxu0 0.0
    %3390 = vmatprep.subr.mxu0 0.0
    %3391 = vmatpush1.msra.mxu0 0.0
    %3392 = vmatprep.subr.mxu0 0.0
    %3393 = vmatpush1.msra.mxu0 0.0
    %3394 = vmatprep.subr.mxu0 0.0
    %3395 = vmatpush1.msra.mxu0 0.0
    %3396 = vmatprep.subr.mxu0 0.0
    %3397 = vmatpush1.msra.mxu0 0.0
    %3398 = vmatprep.subr.mxu0 0.0
    %3399 = vmatpush1.msra.mxu0 0.0
    %3400 = vmatprep.subr.mxu0 0.0
    %3401 = vmatpush1.msra.mxu0 0.0
    %3402 = vmatprep.subr.mxu0 0.0
    %3403 = vmatpush1.msra.mxu0 0.0
    %3404 = vmatprep.subr.mxu0 0.0
    %3405 = vmatpush1.msra.mxu0 0.0
    %3406 = vmatprep.subr.mxu0 0.0
    %3407 = vmatpush1.msra.mxu0 0.0
    %3408 = vmatprep.subr.mxu0 0.0
    %3409 = vmatpush1.msra.mxu0 0.0
    %3410 = vmatprep.subr.mxu0 0.0
    %3411 = vmatpush1.msra.mxu0 0.0
    %3412 = vmatprep.subr.mxu0 0.0
    %3413 = vmatpush1.msra.mxu0 0.0
    %3414 = vmatprep.subr.mxu0 0.0
    %3415 = vmatpush1.msra.mxu0 0.0
    %3416 = vmatprep.subr.mxu0 0.0
    %3417 = vmatpush1.msra.mxu0 0.0
    %3418 = vmatprep.subr.mxu0 0.0
    %3419 = vmatpush1.msra.mxu0 0.0
    %3420 = vmatprep.subr.mxu0 0.0
    %3421 = vmatpush1.msra.mxu0 0.0
    %3422 = vmatprep.subr.mxu0 0.0
    %3423 = vmatpush1.msra.mxu0 0.0
    %3424 = vmatprep.subr.mxu0 0.0
    %3425 = vmatpush1.msra.mxu0 0.0
    %3426 = vmatprep.mubr.f32.mxu0 0.0
    %3427 = vmatmul.mubr.f32.gmra.mrb[0].mxu0 %v3360
    %v3428 = vpop.f32.mrb[0].mxu0
    %v3429 = vadd.f32 0.0, %v3428
    %v3430 = vpop.f32.mrb[0].mxu0
    %3431 = vdwg.mxu0
    %v3433 = vsel %vm2070, %v2910, 0
    %3435 = vmatprep.subr.mxu0 0.0
    %3436 = vmatpush1.msra.mxu0 %v3352
    %3437 = vmatprep.subr.mxu0 0.0
    %3438 = vmatpush1.msra.mxu0 0.0
    %3439 = vmatprep.subr.mxu0 0.0
    %3440 = vmatpush1.msra.mxu0 0.0
    %3441 = vmatprep.subr.mxu0 0.0
    %3442 = vmatpush1.msra.mxu0 0.0
    %3443 = vmatprep.subr.mxu0 0.0
    %3444 = vmatpush1.msra.mxu0 0.0
    %3445 = vmatprep.subr.mxu0 0.0
    %3446 = vmatpush1.msra.mxu0 0.0
    %3447 = vmatprep.subr.mxu0 0.0
    %3448 = vmatpush1.msra.mxu0 0.0
    %3449 = vmatprep.subr.mxu0 0.0
    %3450 = vmatpush1.msra.mxu0 0.0
    %3451 = vmatprep.subr.mxu0 0.0
    %3452 = vmatpush1.msra.mxu0 0.0
    %3453 = vmatprep.subr.mxu0 0.0
    %3454 = vmatpush1.msra.mxu0 0.0
    %3455 = vmatprep.subr.mxu0 0.0
    %3456 = vmatpush1.msra.mxu0 0.0
    %3457 = vmatprep.subr.mxu0 0.0
    %3458 = vmatpush1.msra.mxu0 0.0
    %3459 = vmatprep.subr.mxu0 0.0
    %3460 = vmatpush1.msra.mxu0 0.0
    %3461 = vmatprep.subr.mxu0 0.0
    %3462 = vmatpush1.msra.mxu0 0.0
    %3463 = vmatprep.subr.mxu0 0.0
    %3464 = vmatpush1.msra.mxu0 0.0
    %3465 = vmatprep.subr.mxu0 0.0
    %3466 = vmatpush1.msra.mxu0 0.0
    %3467 = vmatprep.subr.mxu0 0.0
    %3468 = vmatpush1.msra.mxu0 0.0
    %3469 = vmatprep.subr.mxu0 0.0
    %3470 = vmatpush1.msra.mxu0 0.0
    %3471 = vmatprep.subr.mxu0 0.0
    %3472 = vmatpush1.msra.mxu0 0.0
    %3473 = vmatprep.subr.mxu0 0.0
    %3474 = vmatpush1.msra.mxu0 0.0
    %3475 = vmatprep.subr.mxu0 0.0
    %3476 = vmatpush1.msra.mxu0 0.0
    %3477 = vmatprep.subr.mxu0 0.0
    %3478 = vmatpush1.msra.mxu0 0.0
    %3479 = vmatprep.subr.mxu0 0.0
    %3480 = vmatpush1.msra.mxu0 0.0
    %3481 = vmatprep.subr.mxu0 0.0
    %3482 = vmatpush1.msra.mxu0 0.0
    %3483 = vmatprep.subr.mxu0 0.0
    %3484 = vmatpush1.msra.mxu0 0.0
    %3485 = vmatprep.subr.mxu0 0.0
    %3486 = vmatpush1.msra.mxu0 0.0
    %3487 = vmatprep.subr.mxu0 0.0
    %3488 = vmatpush1.msra.mxu0 0.0
    %3489 = vmatprep.subr.mxu0 0.0
    %3490 = vmatpush1.msra.mxu0 0.0
    %3491 = vmatprep.subr.mxu0 0.0
    %3492 = vmatpush1.msra.mxu0 0.0
    %3493 = vmatprep.subr.mxu0 0.0
    %3494 = vmatpush1.msra.mxu0 0.0
    %3495 = vmatprep.subr.mxu0 0.0
    %3496 = vmatpush1.msra.mxu0 0.0
    %3497 = vmatprep.subr.mxu0 0.0
    %3498 = vmatpush1.msra.mxu0 0.0
    %3499 = vmatprep.mubr.f32.mxu0 0.0
    %3500 = vmatmul.mubr.f32.gmra.mrb[0].mxu0 %v3433
    %v3501 = vpop.f32.mrb[0].mxu0
    %v3502 = vadd.f32 0.0, %v3501
    %v3503 = vpop.f32.mrb[0].mxu0
    %3504 = vdwg.mxu0
    %v3506 = vsel %vm2070, %v2983, 0
    %3508 = vmatprep.subr.mxu0 0.0
    %3509 = vmatpush1.msra.mxu0 %v3353
    %3510 = vmatprep.subr.mxu0 0.0
    %3511 = vmatpush1.msra.mxu0 0.0
    %3512 = vmatprep.subr.mxu0 0.0
    %3513 = vmatpush1.msra.mxu0 0.0
    %3514 = vmatprep.subr.mxu0 0.0
    %3515 = vmatpush1.msra.mxu0 0.0
    %3516 = vmatprep.subr.mxu0 0.0
    %3517 = vmatpush1.msra.mxu0 0.0
    %3518 = vmatprep.subr.mxu0 0.0
    %3519 = vmatpush1.msra.mxu0 0.0
    %3520 = vmatprep.subr.mxu0 0.0
    %3521 = vmatpush1.msra.mxu0 0.0
    %3522 = vmatprep.subr.mxu0 0.0
    %3523 = vmatpush1.msra.mxu0 0.0
    %3524 = vmatprep.subr.mxu0 0.0
    %3525 = vmatpush1.msra.mxu0 0.0
    %3526 = vmatprep.subr.mxu0 0.0
    %3527 = vmatpush1.msra.mxu0 0.0
    %3528 = vmatprep.subr.mxu0 0.0
    %3529 = vmatpush1.msra.mxu0 0.0
    %3530 = vmatprep.subr.mxu0 0.0
    %3531 = vmatpush1.msra.mxu0 0.0
    %3532 = vmatprep.subr.mxu0 0.0
    %3533 = vmatpush1.msra.mxu0 0.0
    %3534 = vmatprep.subr.mxu0 0.0
    %3535 = vmatpush1.msra.mxu0 0.0
    %3536 = vmatprep.subr.mxu0 0.0
    %3537 = vmatpush1.msra.mxu0 0.0
    %3538 = vmatprep.subr.mxu0 0.0
    %3539 = vmatpush1.msra.mxu0 0.0
    %3540 = vmatprep.subr.mxu0 0.0
    %3541 = vmatpush1.msra.mxu0 0.0
    %3542 = vmatprep.subr.mxu0 0.0
    %3543 = vmatpush1.msra.mxu0 0.0
    %3544 = vmatprep.subr.mxu0 0.0
    %3545 = vmatpush1.msra.mxu0 0.0
    %3546 = vmatprep.subr.mxu0 0.0
    %3547 = vmatpush1.msra.mxu0 0.0
    %3548 = vmatprep.subr.mxu0 0.0
    %3549 = vmatpush1.msra.mxu0 0.0
    %3550 = vmatprep.subr.mxu0 0.0
    %3551 = vmatpush1.msra.mxu0 0.0
    %3552 = vmatprep.subr.mxu0 0.0
    %3553 = vmatpush1.msra.mxu0 0.0
    %3554 = vmatprep.subr.mxu0 0.0
    %3555 = vmatpush1.msra.mxu0 0.0
    %3556 = vmatprep.subr.mxu0 0.0
    %3557 = vmatpush1.msra.mxu0 0.0
    %3558 = vmatprep.subr.mxu0 0.0
    %3559 = vmatpush1.msra.mxu0 0.0
    %3560 = vmatprep.subr.mxu0 0.0
    %3561 = vmatpush1.msra.mxu0 0.0
    %3562 = vmatprep.subr.mxu0 0.0
    %3563 = vmatpush1.msra.mxu0 0.0
    %3564 = vmatprep.subr.mxu0 0.0
    %3565 = vmatpush1.msra.mxu0 0.0
    %3566 = vmatprep.subr.mxu0 0.0
    %3567 = vmatpush1.msra.mxu0 0.0
    %3568 = vmatprep.subr.mxu0 0.0
    %3569 = vmatpush1.msra.mxu0 0.0
    %3570 = vmatprep.subr.mxu0 0.0
    %3571 = vmatpush1.msra.mxu0 0.0
    %3572 = vmatprep.mubr.f32.mxu0 0.0
    %3573 = vmatmul.mubr.f32.gmra.mrb[0].mxu0 %v3506
    %v3574 = vpop.f32.mrb[0].mxu0
    %v3575 = vadd.f32 0.0, %v3574
    %v3576 = vpop.f32.mrb[0].mxu0
    %3577 = vdwg.mxu0
    %v3579 = vsel %vm2070, %v3056, 0
    %3581 = vmatprep.subr.mxu0 0.0
    %3582 = vmatpush1.msra.mxu0 %v3354
    %3583 = vmatprep.subr.mxu0 0.0
    %3584 = vmatpush1.msra.mxu0 0.0
    %3585 = vmatprep.subr.mxu0 0.0
    %3586 = vmatpush1.msra.mxu0 0.0
    %3587 = vmatprep.subr.mxu0 0.0
    %3588 = vmatpush1.msra.mxu0 0.0
    %3589 = vmatprep.subr.mxu0 0.0
    %3590 = vmatpush1.msra.mxu0 0.0
    %3591 = vmatprep.subr.mxu0 0.0
    %3592 = vmatpush1.msra.mxu0 0.0
    %3593 = vmatprep.subr.mxu0 0.0
    %3594 = vmatpush1.msra.mxu0 0.0
    %3595 = vmatprep.subr.mxu0 0.0
    %3596 = vmatpush1.msra.mxu0 0.0
    %3597 = vmatprep.subr.mxu0 0.0
    %3598 = vmatpush1.msra.mxu0 0.0
    %3599 = vmatprep.subr.mxu0 0.0
    %3600 = vmatpush1.msra.mxu0 0.0
    %3601 = vmatprep.subr.mxu0 0.0
    %3602 = vmatpush1.msra.mxu0 0.0
    %3603 = vmatprep.subr.mxu0 0.0
    %3604 = vmatpush1.msra.mxu0 0.0
    %3605 = vmatprep.subr.mxu0 0.0
    %3606 = vmatpush1.msra.mxu0 0.0
    %3607 = vmatprep.subr.mxu0 0.0
    %3608 = vmatpush1.msra.mxu0 0.0
    %3609 = vmatprep.subr.mxu0 0.0
    %3610 = vmatpush1.msra.mxu0 0.0
    %3611 = vmatprep.subr.mxu0 0.0
    %3612 = vmatpush1.msra.mxu0 0.0
    %3613 = vmatprep.subr.mxu0 0.0
    %3614 = vmatpush1.msra.mxu0 0.0
    %3615 = vmatprep.subr.mxu0 0.0
    %3616 = vmatpush1.msra.mxu0 0.0
    %3617 = vmatprep.subr.mxu0 0.0
    %3618 = vmatpush1.msra.mxu0 0.0
    %3619 = vmatprep.subr.mxu0 0.0
    %3620 = vmatpush1.msra.mxu0 0.0
    %3621 = vmatprep.subr.mxu0 0.0
    %3622 = vmatpush1.msra.mxu0 0.0
    %3623 = vmatprep.subr.mxu0 0.0
    %3624 = vmatpush1.msra.mxu0 0.0
    %3625 = vmatprep.subr.mxu0 0.0
    %3626 = vmatpush1.msra.mxu0 0.0
    %3627 = vmatprep.subr.mxu0 0.0
    %3628 = vmatpush1.msra.mxu0 0.0
    %3629 = vmatprep.subr.mxu0 0.0
    %3630 = vmatpush1.msra.mxu0 0.0
    %3631 = vmatprep.subr.mxu0 0.0
    %3632 = vmatpush1.msra.mxu0 0.0
    %3633 = vmatprep.subr.mxu0 0.0
    %3634 = vmatpush1.msra.mxu0 0.0
    %3635 = vmatprep.subr.mxu0 0.0
    %3636 = vmatpush1.msra.mxu0 0.0
    %3637 = vmatprep.subr.mxu0 0.0
    %3638 = vmatpush1.msra.mxu0 0.0
    %3639 = vmatprep.subr.mxu0 0.0
    %3640 = vmatpush1.msra.mxu0 0.0
    %3641 = vmatprep.subr.mxu0 0.0
    %3642 = vmatpush1.msra.mxu0 0.0
    %3643 = vmatprep.subr.mxu0 0.0
    %3644 = vmatpush1.msra.mxu0 0.0
    %3645 = vmatprep.mubr.f32.mxu0 0.0
    %3646 = vmatmul.mubr.f32.gmra.mrb[0].mxu0 %v3579
    %v3647 = vpop.f32.mrb[0].mxu0
    %v3648 = vadd.f32 0.0, %v3647
    %v3649 = vpop.f32.mrb[0].mxu0
    %3650 = vdwg.mxu0
    %v3652 = vsel %vm2070, %v3129, 0
    %3654 = vmatprep.subr.mxu0 0.0
    %3655 = vmatpush1.msra.mxu0 %v3355
    %3656 = vmatprep.subr.mxu0 0.0
    %3657 = vmatpush1.msra.mxu0 0.0
    %3658 = vmatprep.subr.mxu0 0.0
    %3659 = vmatpush1.msra.mxu0 0.0
    %3660 = vmatprep.subr.mxu0 0.0
    %3661 = vmatpush1.msra.mxu0 0.0
    %3662 = vmatprep.subr.mxu0 0.0
    %3663 = vmatpush1.msra.mxu0 0.0
    %3664 = vmatprep.subr.mxu0 0.0
    %3665 = vmatpush1.msra.mxu0 0.0
    %3666 = vmatprep.subr.mxu0 0.0
    %3667 = vmatpush1.msra.mxu0 0.0
    %3668 = vmatprep.subr.mxu0 0.0
    %3669 = vmatpush1.msra.mxu0 0.0
    %3670 = vmatprep.subr.mxu0 0.0
    %3671 = vmatpush1.msra.mxu0 0.0
    %3672 = vmatprep.subr.mxu0 0.0
    %3673 = vmatpush1.msra.mxu0 0.0
    %3674 = vmatprep.subr.mxu0 0.0
    %3675 = vmatpush1.msra.mxu0 0.0
    %3676 = vmatprep.subr.mxu0 0.0
    %3677 = vmatpush1.msra.mxu0 0.0
    %3678 = vmatprep.subr.mxu0 0.0
    %3679 = vmatpush1.msra.mxu0 0.0
    %3680 = vmatprep.subr.mxu0 0.0
    %3681 = vmatpush1.msra.mxu0 0.0
    %3682 = vmatprep.subr.mxu0 0.0
    %3683 = vmatpush1.msra.mxu0 0.0
    %3684 = vmatprep.subr.mxu0 0.0
    %3685 = vmatpush1.msra.mxu0 0.0
    %3686 = vmatprep.subr.mxu0 0.0
    %3687 = vmatpush1.msra.mxu0 0.0
    %3688 = vmatprep.subr.mxu0 0.0
    %3689 = vmatpush1.msra.mxu0 0.0
    %3690 = vmatprep.subr.mxu0 0.0
    %3691 = vmatpush1.msra.mxu0 0.0
    %3692 = vmatprep.subr.mxu0 0.0
    %3693 = vmatpush1.msra.mxu0 0.0
    %3694 = vmatprep.subr.mxu0 0.0
    %3695 = vmatpush1.msra.mxu0 0.0
    %3696 = vmatprep.subr.mxu0 0.0
    %3697 = vmatpush1.msra.mxu0 0.0
    %3698 = vmatprep.subr.mxu0 0.0
    %3699 = vmatpush1.msra.mxu0 0.0
    %3700 = vmatprep.subr.mxu0 0.0
    %3701 = vmatpush1.msra.mxu0 0.0
    %3702 = vmatprep.subr.mxu0 0.0
    %3703 = vmatpush1.msra.mxu0 0.0
    %3704 = vmatprep.subr.mxu0 0.0
    %3705 = vmatpush1.msra.mxu0 0.0
    %3706 = vmatprep.subr.mxu0 0.0
    %3707 = vmatpush1.msra.mxu0 0.0
    %3708 = vmatprep.subr.mxu0 0.0
    %3709 = vmatpush1.msra.mxu0 0.0
    %3710 = vmatprep.subr.mxu0 0.0
    %3711 = vmatpush1.msra.mxu0 0.0
    %3712 = vmatprep.subr.mxu0 0.0
    %3713 = vmatpush1.msra.mxu0 0.0
    %3714 = vmatprep.subr.mxu0 0.0
    %3715 = vmatpush1.msra.mxu0 0.0
    %3716 = vmatprep.subr.mxu0 0.0
    %3717 = vmatpush1.msra.mxu0 0.0
    %3718 = vmatprep.mubr.f32.mxu0 0.0
    %3719 = vmatmul.mubr.f32.gmra.mrb[0].mxu0 %v3652
    %v3720 = vpop.f32.mrb[0].mxu0
    %v3721 = vadd.f32 0.0, %v3720
    %v3722 = vpop.f32.mrb[0].mxu0
    %3723 = vdwg.mxu0
    %v3725 = vsel %vm2070, %v3202, 0
    %3727 = vmatprep.subr.mxu0 0.0
    %3728 = vmatpush1.msra.mxu0 %v3356
    %3729 = vmatprep.subr.mxu0 0.0
    %3730 = vmatpush1.msra.mxu0 0.0
    %3731 = vmatprep.subr.mxu0 0.0
    %3732 = vmatpush1.msra.mxu0 0.0
    %3733 = vmatprep.subr.mxu0 0.0
    %3734 = vmatpush1.msra.mxu0 0.0
    %3735 = vmatprep.subr.mxu0 0.0
    %3736 = vmatpush1.msra.mxu0 0.0
    %3737 = vmatprep.subr.mxu0 0.0
    %3738 = vmatpush1.msra.mxu0 0.0
    %3739 = vmatprep.subr.mxu0 0.0
    %3740 = vmatpush1.msra.mxu0 0.0
    %3741 = vmatprep.subr.mxu0 0.0
    %3742 = vmatpush1.msra.mxu0 0.0
    %3743 = vmatprep.subr.mxu0 0.0
    %3744 = vmatpush1.msra.mxu0 0.0
    %3745 = vmatprep.subr.mxu0 0.0
    %3746 = vmatpush1.msra.mxu0 0.0
    %3747 = vmatprep.subr.mxu0 0.0
    %3748 = vmatpush1.msra.mxu0 0.0
    %3749 = vmatprep.subr.mxu0 0.0
    %3750 = vmatpush1.msra.mxu0 0.0
    %3751 = vmatprep.subr.mxu0 0.0
    %3752 = vmatpush1.msra.mxu0 0.0
    %3753 = vmatprep.subr.mxu0 0.0
    %3754 = vmatpush1.msra.mxu0 0.0
    %3755 = vmatprep.subr.mxu0 0.0
    %3756 = vmatpush1.msra.mxu0 0.0
    %3757 = vmatprep.subr.mxu0 0.0
    %3758 = vmatpush1.msra.mxu0 0.0
    %3759 = vmatprep.subr.mxu0 0.0
    %3760 = vmatpush1.msra.mxu0 0.0
    %3761 = vmatprep.subr.mxu0 0.0
    %3762 = vmatpush1.msra.mxu0 0.0
    %3763 = vmatprep.subr.mxu0 0.0
    %3764 = vmatpush1.msra.mxu0 0.0
    %3765 = vmatprep.subr.mxu0 0.0
    %3766 = vmatpush1.msra.mxu0 0.0
    %3767 = vmatprep.subr.mxu0 0.0
    %3768 = vmatpush1.msra.mxu0 0.0
    %3769 = vmatprep.subr.mxu0 0.0
    %3770 = vmatpush1.msra.mxu0 0.0
    %3771 = vmatprep.subr.mxu0 0.0
    %3772 = vmatpush1.msra.mxu0 0.0
    %3773 = vmatprep.subr.mxu0 0.0
    %3774 = vmatpush1.msra.mxu0 0.0
    %3775 = vmatprep.subr.mxu0 0.0
    %3776 = vmatpush1.msra.mxu0 0.0
    %3777 = vmatprep.subr.mxu0 0.0
    %3778 = vmatpush1.msra.mxu0 0.0
    %3779 = vmatprep.subr.mxu0 0.0
    %3780 = vmatpush1.msra.mxu0 0.0
    %3781 = vmatprep.subr.mxu0 0.0
    %3782 = vmatpush1.msra.mxu0 0.0
    %3783 = vmatprep.subr.mxu0 0.0
    %3784 = vmatpush1.msra.mxu0 0.0
    %3785 = vmatprep.subr.mxu0 0.0
    %3786 = vmatpush1.msra.mxu0 0.0
    %3787 = vmatprep.subr.mxu0 0.0
    %3788 = vmatpush1.msra.mxu0 0.0
    %3789 = vmatprep.subr.mxu0 0.0
    %3790 = vmatpush1.msra.mxu0 0.0
    %3791 = vmatprep.mubr.f32.mxu0 0.0
    %3792 = vmatmul.mubr.f32.gmra.mrb[0].mxu0 %v3725
    %v3793 = vpop.f32.mrb[0].mxu0
    %v3794 = vadd.f32 0.0, %v3793
    %v3795 = vpop.f32.mrb[0].mxu0
    %3796 = vdwg.mxu0
    %v3798 = vsel %vm2070, %v3275, 0
    %3800 = vmatprep.subr.mxu0 0.0
    %3801 = vmatpush1.msra.mxu0 %v3357
    %3802 = vmatprep.subr.mxu0 0.0
    %3803 = vmatpush1.msra.mxu0 0.0
    %3804 = vmatprep.subr.mxu0 0.0
    %3805 = vmatpush1.msra.mxu0 0.0
    %3806 = vmatprep.subr.mxu0 0.0
    %3807 = vmatpush1.msra.mxu0 0.0
    %3808 = vmatprep.subr.mxu0 0.0
    %3809 = vmatpush1.msra.mxu0 0.0
    %3810 = vmatprep.subr.mxu0 0.0
    %3811 = vmatpush1.msra.mxu0 0.0
    %3812 = vmatprep.subr.mxu0 0.0
    %3813 = vmatpush1.msra.mxu0 0.0
    %3814 = vmatprep.subr.mxu0 0.0
    %3815 = vmatpush1.msra.mxu0 0.0
    %3816 = vmatprep.subr.mxu0 0.0
    %3817 = vmatpush1.msra.mxu0 0.0
    %3818 = vmatprep.subr.mxu0 0.0
    %3819 = vmatpush1.msra.mxu0 0.0
    %3820 = vmatprep.subr.mxu0 0.0
    %3821 = vmatpush1.msra.mxu0 0.0
    %3822 = vmatprep.subr.mxu0 0.0
    %3823 = vmatpush1.msra.mxu0 0.0
    %3824 = vmatprep.subr.mxu0 0.0
    %3825 = vmatpush1.msra.mxu0 0.0
    %3826 = vmatprep.subr.mxu0 0.0
    %3827 = vmatpush1.msra.mxu0 0.0
    %3828 = vmatprep.subr.mxu0 0.0
    %3829 = vmatpush1.msra.mxu0 0.0
    %3830 = vmatprep.subr.mxu0 0.0
    %3831 = vmatpush1.msra.mxu0 0.0
    %3832 = vmatprep.subr.mxu0 0.0
    %3833 = vmatpush1.msra.mxu0 0.0
    %3834 = vmatprep.subr.mxu0 0.0
    %3835 = vmatpush1.msra.mxu0 0.0
    %3836 = vmatprep.subr.mxu0 0.0
    %3837 = vmatpush1.msra.mxu0 0.0
    %3838 = vmatprep.subr.mxu0 0.0
    %3839 = vmatpush1.msra.mxu0 0.0
    %3840 = vmatprep.subr.mxu0 0.0
    %3841 = vmatpush1.msra.mxu0 0.0
    %3842 = vmatprep.subr.mxu0 0.0
    %3843 = vmatpush1.msra.mxu0 0.0
    %3844 = vmatprep.subr.mxu0 0.0
    %3845 = vmatpush1.msra.mxu0 0.0
    %3846 = vmatprep.subr.mxu0 0.0
    %3847 = vmatpush1.msra.mxu0 0.0
    %3848 = vmatprep.subr.mxu0 0.0
    %3849 = vmatpush1.msra.mxu0 0.0
    %3850 = vmatprep.subr.mxu0 0.0
    %3851 = vmatpush1.msra.mxu0 0.0
    %3852 = vmatprep.subr.mxu0 0.0
    %3853 = vmatpush1.msra.mxu0 0.0
    %3854 = vmatprep.subr.mxu0 0.0
    %3855 = vmatpush1.msra.mxu0 0.0
    %3856 = vmatprep.subr.mxu0 0.0
    %3857 = vmatpush1.msra.mxu0 0.0
    %3858 = vmatprep.subr.mxu0 0.0
    %3859 = vmatpush1.msra.mxu0 0.0
    %3860 = vmatprep.subr.mxu0 0.0
    %3861 = vmatpush1.msra.mxu0 0.0
    %3862 = vmatprep.subr.mxu0 0.0
    %3863 = vmatpush1.msra.mxu0 0.0
    %3864 = vmatprep.mubr.f32.mxu0 0.0
    %3865 = vmatmul.mubr.f32.gmra.mrb[0].mxu0 %v3798
    %v3866 = vpop.f32.mrb[0].mxu0
    %v3867 = vadd.f32 0.0, %v3866
    %v3868 = vpop.f32.mrb[0].mxu0
    %3869 = vdwg.mxu0
    %v3871 = vsel %vm2070, %v3348, 0
    %3873 = vmatprep.subr.mxu0 0.0
    %3874 = vmatpush1.msra.mxu0 %v3358
    %3875 = vmatprep.subr.mxu0 0.0
    %3876 = vmatpush1.msra.mxu0 0.0
    %3877 = vmatprep.subr.mxu0 0.0
    %3878 = vmatpush1.msra.mxu0 0.0
    %3879 = vmatprep.subr.mxu0 0.0
    %3880 = vmatpush1.msra.mxu0 0.0
    %3881 = vmatprep.subr.mxu0 0.0
    %3882 = vmatpush1.msra.mxu0 0.0
    %3883 = vmatprep.subr.mxu0 0.0
    %3884 = vmatpush1.msra.mxu0 0.0
    %3885 = vmatprep.subr.mxu0 0.0
    %3886 = vmatpush1.msra.mxu0 0.0
    %3887 = vmatprep.subr.mxu0 0.0
    %3888 = vmatpush1.msra.mxu0 0.0
    %3889 = vmatprep.subr.mxu0 0.0
    %3890 = vmatpush1.msra.mxu0 0.0
    %3891 = vmatprep.subr.mxu0 0.0
    %3892 = vmatpush1.msra.mxu0 0.0
    %3893 = vmatprep.subr.mxu0 0.0
    %3894 = vmatpush1.msra.mxu0 0.0
    %3895 = vmatprep.subr.mxu0 0.0
    %3896 = vmatpush1.msra.mxu0 0.0
    %3897 = vmatprep.subr.mxu0 0.0
    %3898 = vmatpush1.msra.mxu0 0.0
    %3899 = vmatprep.subr.mxu0 0.0
    %3900 = vmatpush1.msra.mxu0 0.0
    %3901 = vmatprep.subr.mxu0 0.0
    %3902 = vmatpush1.msra.mxu0 0.0
    %3903 = vmatprep.subr.mxu0 0.0
    %3904 = vmatpush1.msra.mxu0 0.0
    %3905 = vmatprep.subr.mxu0 0.0
    %3906 = vmatpush1.msra.mxu0 0.0
    %3907 = vmatprep.subr.mxu0 0.0
    %3908 = vmatpush1.msra.mxu0 0.0
    %3909 = vmatprep.subr.mxu0 0.0
    %3910 = vmatpush1.msra.mxu0 0.0
    %3911 = vmatprep.subr.mxu0 0.0
    %3912 = vmatpush1.msra.mxu0 0.0
    %3913 = vmatprep.subr.mxu0 0.0
    %3914 = vmatpush1.msra.mxu0 0.0
    %3915 = vmatprep.subr.mxu0 0.0
    %3916 = vmatpush1.msra.mxu0 0.0
    %3917 = vmatprep.subr.mxu0 0.0
    %3918 = vmatpush1.msra.mxu0 0.0
    %3919 = vmatprep.subr.mxu0 0.0
    %3920 = vmatpush1.msra.mxu0 0.0
    %3921 = vmatprep.subr.mxu0 0.0
    %3922 = vmatpush1.msra.mxu0 0.0
    %3923 = vmatprep.subr.mxu0 0.0
    %3924 = vmatpush1.msra.mxu0 0.0
    %3925 = vmatprep.subr.mxu0 0.0
    %3926 = vmatpush1.msra.mxu0 0.0
    %3927 = vmatprep.subr.mxu0 0.0
    %3928 = vmatpush1.msra.mxu0 0.0
    %3929 = vmatprep.subr.mxu0 0.0
    %3930 = vmatpush1.msra.mxu0 0.0
    %3931 = vmatprep.subr.mxu0 0.0
    %3932 = vmatpush1.msra.mxu0 0.0
    %3933 = vmatprep.subr.mxu0 0.0
    %3934 = vmatpush1.msra.mxu0 0.0
    %3935 = vmatprep.subr.mxu0 0.0
    %3936 = vmatpush1.msra.mxu0 0.0
    %3937 = vmatprep.mubr.f32.mxu0 0.0
    %3938 = vmatmul.mubr.f32.gmra.mrb[0].mxu0 %v3871
    %v3939 = vpop.f32.mrb[0].mxu0
    %v3940 = vadd.f32 0.0, %v3939
    %v3941 = vpop.f32.mrb[0].mxu0
    %3942 = vdwg.mxu0
    %v3943 = vsel %vm54, %v3429, 0.0
    %v3944 = vsel %vm54, %v3575, 0.0
    %v3945 = vadd.f32 %v3943, %v3944
    %v3946 = vsel %vm54, %v3721, 0.0
    %v3947 = vadd.f32 %v3945, %v3946
    %v3948 = vsel %vm54, %v3867, 0.0
    %v3949 = vadd.f32 %v3947, %v3948
    %v3950 = vsel %vm54, %v3502, 0.0
    %v3951 = vsel %vm54, %v3648, 0.0
    %v3952 = vadd.f32 %v3950, %v3951
    %v3953 = vsel %vm54, %v3794, 0.0
    %v3954 = vadd.f32 %v3952, %v3953
    %v3955 = vsel %vm54, %v3940, 0.0
    %v3956 = vadd.f32 %v3954, %v3955
    %v3957 = vadd.f32 %v45, %v3949
    %v3958 = vadd.f32 %v46, %v3956
    %v3959 = vlaneseq
    %v3960 = vshrl.u32 %v3959, 7
    %v3961 = vsub.s32 4, %v3960
    %v3962 = vrot.slane %v53, %v3961
    %v3963 = vadd.f32 %v3957, %v3962
    %v3964 = vadd.f32 %v3958, %v3962
    %v3965 = vsel %vm54, %v3963, 0.0
    %3966 = vadd.xlane.f32.xlu0 %v3965
    %v3967 = vpop.xlane.xlu0 %3966
    %v3968 = vsel %vm54, %v3964, 0.0
    %3969 = vadd.xlane.f32.xlu0 %v3968
    %v3970 = vpop.xlane.xlu0 %3969
    %v3971 = vmul.f32 %v3967, %v61
    %v3972 = vmul.f32 %v3970, %v61
    %v3973 = vsub.f32 %v3963, %v3971
    %v3974 = vsub.f32 %v3964, %v3972
    %v3975 = vmul.f32 %v3973, %v3973
    %v3976 = vmul.f32 %v3974, %v3974
    %v3977 = vsel %vm54, %v3975, 0.0
    %3978 = vadd.xlane.f32.xlu0 %v3977
    %v3979 = vpop.xlane.xlu0 %3978
    %v3980 = vsel %vm54, %v3976, 0.0
    %3981 = vadd.xlane.f32.xlu0 %v3980
    %v3982 = vpop.xlane.xlu0 %3981
    %v3983 = vmul.f32 %v3979, 0.032258064
    %v3984 = vmul.f32 %v3982, 0.032258064
    %v3985 = vrsqrt.pop %v3983
    %v3986 = vmul.f32 %v3983, %v3985
    %vm3987 = vcmp.eq.f32.partialorder %v3983, inf
    %v3988 = vsel %vm3987, %v3983, %v3986
    %vm3989 = vcmp.eq.f32.partialorder %v3983, 0.0
    %v3990 = vand.u32 %v3983, 2147483648
    %v3991 = vsel %vm3989, %v3990, %v3988
    %v3992 = vrsqrt.pop %v3984
    %v3993 = vmul.f32 %v3984, %v3992
    %vm3994 = vcmp.eq.f32.partialorder %v3984, inf
    %v3995 = vsel %vm3994, %v3984, %v3993
    %vm3996 = vcmp.eq.f32.partialorder %v3984, 0.0
    %v3997 = vand.u32 %v3984, 2147483648
    %v3998 = vsel %vm3996, %v3997, %v3995
    %v3999 = vadd.f32 %v3991, 1e-06
    %v4000 = vadd.f32 %v3998, 1e-06
    %v4001 = vrcp.pop %v3999
    %v4002 = vrcp.pop %v4000
    %v4003 = vmul.f32 %v3973, %v4001
    %v4004 = vmul.f32 %v3974, %v4002
    %v4005 = vlaneseq
    %v4006 = vshrl.u32 %v4005, 7
    %v4007 = vsub.s32 2, %v4006
    %v4008 = vrot.slane %v53, %v4007
    %v4009 = vmul.f32 %v4008, %v4003
    %v4010 = vmul.f32 %v4008, %v4004
    %v4011 = vlaneseq
    %v4012 = vshrl.u32 %v4011, 7
    %v4013 = vsub.s32 3, %v4012
    %v4014 = vrot.slane %v53, %v4013
    %v4015 = vadd.f32 %v4009, %v4014
    %v4016 = vadd.f32 %v4010, %v4014
    %v4017 = vld [vmem:[%s6] sm:$0xff]
    %v4018 = vld [vmem:[%s6 + $0x8] sm:$0xff]
    %v4019 = vld [vmem:[%s6 + $0x10] sm:$0xff]
    %v4020 = vld [vmem:[%s6 + $0x18] sm:$0xff]
    %v4021 = vld [vmem:[%s8] sm:$0xff]
    %v4022 = vld [vmem:[%s8 + $0x8] sm:$0xff]
    %v4023 = vld [vmem:[%s8 + $0x10] sm:$0xff]
    %v4024 = vld [vmem:[%s8 + $0x18] sm:$0xff]
    %v4025 = vld [vmem:[%s8 + $0x20] sm:$0xff]
    %v4026 = vld [vmem:[%s8 + $0x28] sm:$0xff]
    %v4027 = vld [vmem:[%s8 + $0x30] sm:$0xff]
    %v4028 = vld [vmem:[%s8 + $0x38] sm:$0xff]
    %v4029 = vld [vmem:[%s8 + $0x40] sm:$0xff]
    %v4030 = vld [vmem:[%s8 + $0x48] sm:$0xff]
    %v4031 = vld [vmem:[%s8 + $0x50] sm:$0xff]
    %v4032 = vld [vmem:[%s8 + $0x58] sm:$0xff]
    %v4033 = vld [vmem:[%s8 + $0x60] sm:$0xff]
    %v4034 = vld [vmem:[%s8 + $0x68] sm:$0xff]
    %v4035 = vld [vmem:[%s8 + $0x70] sm:$0xff]
    %v4036 = vld [vmem:[%s8 + $0x78] sm:$0xff]
    %v4037 = vld [vmem:[%s7] sm:$0x1]
    %v4039 = vlaneseq
    %v4040 = vshrl.u32 %v4039, 7
    %v4041 = vsub.s32 0, %v4040
    %v4042 = vrot.slane %v4037, %v4041
    %v4045 = vsel %vm54, %v4015, 0
    %4047 = vmatprep.subr.mxu0 0.0
    %4048 = vmatpush1.msra.mxu0 %v4017
    %4049 = vmatprep.subr.mxu0 0.0
    %4050 = vmatpush1.msra.mxu0 %v4018
    %4051 = vmatprep.subr.mxu0 0.0
    %4052 = vmatpush1.msra.mxu0 %v4019
    %4053 = vmatprep.subr.mxu0 0.0
    %4054 = vmatpush1.msra.mxu0 %v4020
    %4055 = vmatprep.subr.mxu0 0.0
    %4056 = vmatpush1.msra.mxu0 0.0
    %4057 = vmatprep.subr.mxu0 0.0
    %4058 = vmatpush1.msra.mxu0 0.0
    %4059 = vmatprep.subr.mxu0 0.0
    %4060 = vmatpush1.msra.mxu0 0.0
    %4061 = vmatprep.subr.mxu0 0.0
    %4062 = vmatpush1.msra.mxu0 0.0
    %4063 = vmatprep.subr.mxu0 0.0
    %4064 = vmatpush1.msra.mxu0 0.0
    %4065 = vmatprep.subr.mxu0 0.0
    %4066 = vmatpush1.msra.mxu0 0.0
    %4067 = vmatprep.subr.mxu0 0.0
    %4068 = vmatpush1.msra.mxu0 0.0
    %4069 = vmatprep.subr.mxu0 0.0
    %4070 = vmatpush1.msra.mxu0 0.0
    %4071 = vmatprep.subr.mxu0 0.0
    %4072 = vmatpush1.msra.mxu0 0.0
    %4073 = vmatprep.subr.mxu0 0.0
    %4074 = vmatpush1.msra.mxu0 0.0
    %4075 = vmatprep.subr.mxu0 0.0
    %4076 = vmatpush1.msra.mxu0 0.0
    %4077 = vmatprep.subr.mxu0 0.0
    %4078 = vmatpush1.msra.mxu0 0.0
    %4079 = vmatprep.subr.mxu0 0.0
    %4080 = vmatpush1.msra.mxu0 0.0
    %4081 = vmatprep.subr.mxu0 0.0
    %4082 = vmatpush1.msra.mxu0 0.0
    %4083 = vmatprep.subr.mxu0 0.0
    %4084 = vmatpush1.msra.mxu0 0.0
    %4085 = vmatprep.subr.mxu0 0.0
    %4086 = vmatpush1.msra.mxu0 0.0
    %4087 = vmatprep.subr.mxu0 0.0
    %4088 = vmatpush1.msra.mxu0 0.0
    %4089 = vmatprep.subr.mxu0 0.0
    %4090 = vmatpush1.msra.mxu0 0.0
    %4091 = vmatprep.subr.mxu0 0.0
    %4092 = vmatpush1.msra.mxu0 0.0
    %4093 = vmatprep.subr.mxu0 0.0
    %4094 = vmatpush1.msra.mxu0 0.0
    %4095 = vmatprep.subr.mxu0 0.0
    %4096 = vmatpush1.msra.mxu0 0.0
    %4097 = vmatprep.subr.mxu0 0.0
    %4098 = vmatpush1.msra.mxu0 0.0
    %4099 = vmatprep.subr.mxu0 0.0
    %4100 = vmatpush1.msra.mxu0 0.0
    %4101 = vmatprep.subr.mxu0 0.0
    %4102 = vmatpush1.msra.mxu0 0.0
    %4103 = vmatprep.subr.mxu0 0.0
    %4104 = vmatpush1.msra.mxu0 0.0
    %4105 = vmatprep.subr.mxu0 0.0
    %4106 = vmatpush1.msra.mxu0 0.0
    %4107 = vmatprep.subr.mxu0 0.0
    %4108 = vmatpush1.msra.mxu0 0.0
    %4109 = vmatprep.subr.mxu0 0.0
    %4110 = vmatpush1.msra.mxu0 0.0
    %4111 = vmatprep.mubr.f32.mxu0 0.0
    %4112 = vmatmul.mubr.f32.gmra.mrb[0].mxu0 %v4045
    %v4113 = vpop.f32.mrb[0].mxu0
    %v4114 = vadd.f32 %v4042, %v4113
    %v4115 = vpop.f32.mrb[0].mxu0
    %4116 = vdwg.mxu0
    %v4118 = vsel %vm54, %v4016, 0
    %4120 = vmatprep.subr.mxu0 0.0
    %4121 = vmatpush1.msra.mxu0 %v4017
    %4122 = vmatprep.subr.mxu0 0.0
    %4123 = vmatpush1.msra.mxu0 %v4018
    %4124 = vmatprep.subr.mxu0 0.0
    %4125 = vmatpush1.msra.mxu0 %v4019
    %4126 = vmatprep.subr.mxu0 0.0
    %4127 = vmatpush1.msra.mxu0 %v4020
    %4128 = vmatprep.subr.mxu0 0.0
    %4129 = vmatpush1.msra.mxu0 0.0
    %4130 = vmatprep.subr.mxu0 0.0
    %4131 = vmatpush1.msra.mxu0 0.0
    %4132 = vmatprep.subr.mxu0 0.0
    %4133 = vmatpush1.msra.mxu0 0.0
    %4134 = vmatprep.subr.mxu0 0.0
    %4135 = vmatpush1.msra.mxu0 0.0
    %4136 = vmatprep.subr.mxu0 0.0
    %4137 = vmatpush1.msra.mxu0 0.0
    %4138 = vmatprep.subr.mxu0 0.0
    %4139 = vmatpush1.msra.mxu0 0.0
    %4140 = vmatprep.subr.mxu0 0.0
    %4141 = vmatpush1.msra.mxu0 0.0
    %4142 = vmatprep.subr.mxu0 0.0
    %4143 = vmatpush1.msra.mxu0 0.0
    %4144 = vmatprep.subr.mxu0 0.0
    %4145 = vmatpush1.msra.mxu0 0.0
    %4146 = vmatprep.subr.mxu0 0.0
    %4147 = vmatpush1.msra.mxu0 0.0
    %4148 = vmatprep.subr.mxu0 0.0
    %4149 = vmatpush1.msra.mxu0 0.0
    %4150 = vmatprep.subr.mxu0 0.0
    %4151 = vmatpush1.msra.mxu0 0.0
    %4152 = vmatprep.subr.mxu0 0.0
    %4153 = vmatpush1.msra.mxu0 0.0
    %4154 = vmatprep.subr.mxu0 0.0
    %4155 = vmatpush1.msra.mxu0 0.0
    %4156 = vmatprep.subr.mxu0 0.0
    %4157 = vmatpush1.msra.mxu0 0.0
    %4158 = vmatprep.subr.mxu0 0.0
    %4159 = vmatpush1.msra.mxu0 0.0
    %4160 = vmatprep.subr.mxu0 0.0
    %4161 = vmatpush1.msra.mxu0 0.0
    %4162 = vmatprep.subr.mxu0 0.0
    %4163 = vmatpush1.msra.mxu0 0.0
    %4164 = vmatprep.subr.mxu0 0.0
    %4165 = vmatpush1.msra.mxu0 0.0
    %4166 = vmatprep.subr.mxu0 0.0
    %4167 = vmatpush1.msra.mxu0 0.0
    %4168 = vmatprep.subr.mxu0 0.0
    %4169 = vmatpush1.msra.mxu0 0.0
    %4170 = vmatprep.subr.mxu0 0.0
    %4171 = vmatpush1.msra.mxu0 0.0
    %4172 = vmatprep.subr.mxu0 0.0
    %4173 = vmatpush1.msra.mxu0 0.0
    %4174 = vmatprep.subr.mxu0 0.0
    %4175 = vmatpush1.msra.mxu0 0.0
    %4176 = vmatprep.subr.mxu0 0.0
    %4177 = vmatpush1.msra.mxu0 0.0
    %4178 = vmatprep.subr.mxu0 0.0
    %4179 = vmatpush1.msra.mxu0 0.0
    %4180 = vmatprep.subr.mxu0 0.0
    %4181 = vmatpush1.msra.mxu0 0.0
    %4182 = vmatprep.subr.mxu0 0.0
    %4183 = vmatpush1.msra.mxu0 0.0
    %4184 = vmatprep.mubr.f32.mxu0 0.0
    %4185 = vmatmul.mubr.f32.gmra.mrb[0].mxu0 %v4118
    %v4186 = vpop.f32.mrb[0].mxu0
    %v4187 = vadd.f32 %v4042, %v4186
    %v4188 = vpop.f32.mrb[0].mxu0
    %4189 = vdwg.mxu0
    %v4190 = vmul.f32 %v4114, 0.5
    %v4191 = vmul.f32 %v4187, 0.5
    %v4192 = vmul.f32 %v4114, %v4114
    %v4193 = vmul.f32 %v4187, %v4187
    %v4194 = vmul.f32 %v4192, %v4114
    %v4195 = vmul.f32 %v4193, %v4187
    %v4196 = vmul.f32 %v4194, 0.044715
    %v4197 = vmul.f32 %v4195, 0.044715
    %v4198 = vadd.f32 %v4114, %v4196
    %v4199 = vadd.f32 %v4187, %v4197
    %v4200 = vmul.f32 %v4198, 0.7978846
    %v4201 = vmul.f32 %v4199, 0.7978846
    %v4202 = vtanh.pop %v4200
    %v4203 = vtanh.pop %v4201
    %v4204 = vadd.f32 %v4202, 1.0
    %v4205 = vadd.f32 %v4203, 1.0
    %v4206 = vmul.f32 %v4190, %v4204
    %v4207 = vmul.f32 %v4191, %v4205
    %4208 = vmatprep.subr.mxu0 0.0
    %4209 = vmatpush1.msra.mxu0 %v4021
    %4210 = vmatprep.subr.mxu0 0.0
    %4211 = vmatpush1.msra.mxu0 %v4022
    %4212 = vmatprep.subr.mxu0 0.0
    %4213 = vmatpush1.msra.mxu0 %v4023
    %4214 = vmatprep.subr.mxu0 0.0
    %4215 = vmatpush1.msra.mxu0 %v4024
    %4216 = vmatprep.subr.mxu0 0.0
    %4217 = vmatpush1.msra.mxu0 %v4025
    %4218 = vmatprep.subr.mxu0 0.0
    %4219 = vmatpush1.msra.mxu0 %v4026
    %4220 = vmatprep.subr.mxu0 0.0
    %4221 = vmatpush1.msra.mxu0 %v4027
    %4222 = vmatprep.subr.mxu0 0.0
    %4223 = vmatpush1.msra.mxu0 %v4028
    %4224 = vmatprep.subr.mxu0 0.0
    %4225 = vmatpush1.msra.mxu0 %v4029
    %4226 = vmatprep.subr.mxu0 0.0
    %4227 = vmatpush1.msra.mxu0 %v4030
    %4228 = vmatprep.subr.mxu0 0.0
    %4229 = vmatpush1.msra.mxu0 %v4031
    %4230 = vmatprep.subr.mxu0 0.0
    %4231 = vmatpush1.msra.mxu0 %v4032
    %4232 = vmatprep.subr.mxu0 0.0
    %4233 = vmatpush1.msra.mxu0 %v4033
    %4234 = vmatprep.subr.mxu0 0.0
    %4235 = vmatpush1.msra.mxu0 %v4034
    %4236 = vmatprep.subr.mxu0 0.0
    %4237 = vmatpush1.msra.mxu0 %v4035
    %4238 = vmatprep.subr.mxu0 0.0
    %4239 = vmatpush1.msra.mxu0 %v4036
    %4240 = vmatprep.subr.mxu0 0.0
    %4241 = vmatpush1.msra.mxu0 0.0
    %4242 = vmatprep.subr.mxu0 0.0
    %4243 = vmatpush1.msra.mxu0 0.0
    %4244 = vmatprep.subr.mxu0 0.0
    %4245 = vmatpush1.msra.mxu0 0.0
    %4246 = vmatprep.subr.mxu0 0.0
    %4247 = vmatpush1.msra.mxu0 0.0
    %4248 = vmatprep.subr.mxu0 0.0
    %4249 = vmatpush1.msra.mxu0 0.0
    %4250 = vmatprep.subr.mxu0 0.0
    %4251 = vmatpush1.msra.mxu0 0.0
    %4252 = vmatprep.subr.mxu0 0.0
    %4253 = vmatpush1.msra.mxu0 0.0
    %4254 = vmatprep.subr.mxu0 0.0
    %4255 = vmatpush1.msra.mxu0 0.0
    %4256 = vmatprep.subr.mxu0 0.0
    %4257 = vmatpush1.msra.mxu0 0.0
    %4258 = vmatprep.subr.mxu0 0.0
    %4259 = vmatpush1.msra.mxu0 0.0
    %4260 = vmatprep.subr.mxu0 0.0
    %4261 = vmatpush1.msra.mxu0 0.0
    %4262 = vmatprep.subr.mxu0 0.0
    %4263 = vmatpush1.msra.mxu0 0.0
    %4264 = vmatprep.subr.mxu0 0.0
    %4265 = vmatpush1.msra.mxu0 0.0
    %4266 = vmatprep.subr.mxu0 0.0
    %4267 = vmatpush1.msra.mxu0 0.0
    %4268 = vmatprep.subr.mxu0 0.0
    %4269 = vmatpush1.msra.mxu0 0.0
    %4270 = vmatprep.subr.mxu0 0.0
    %4271 = vmatpush1.msra.mxu0 0.0
    %4272 = vmatprep.mubr.f32.mxu0 0.0
    %4273 = vmatmul.mubr.f32.gmra.mrb[0].mxu0 %v4206
    %v4274 = vpop.f32.mrb[0].mxu0
    %v4275 = vadd.f32 0.0, %v4274
    %v4276 = vpop.f32.mrb[0].mxu0
    %4277 = vdwg.mxu0
    %4278 = vmatprep.subr.mxu0 0.0
    %4279 = vmatpush1.msra.mxu0 %v4021
    %4280 = vmatprep.subr.mxu0 0.0
    %4281 = vmatpush1.msra.mxu0 %v4022
    %4282 = vmatprep.subr.mxu0 0.0
    %4283 = vmatpush1.msra.mxu0 %v4023
    %4284 = vmatprep.subr.mxu0 0.0
    %4285 = vmatpush1.msra.mxu0 %v4024
    %4286 = vmatprep.subr.mxu0 0.0
    %4287 = vmatpush1.msra.mxu0 %v4025
    %4288 = vmatprep.subr.mxu0 0.0
    %4289 = vmatpush1.msra.mxu0 %v4026
    %4290 = vmatprep.subr.mxu0 0.0
    %4291 = vmatpush1.msra.mxu0 %v4027
    %4292 = vmatprep.subr.mxu0 0.0
    %4293 = vmatpush1.msra.mxu0 %v4028
    %4294 = vmatprep.subr.mxu0 0.0
    %4295 = vmatpush1.msra.mxu0 %v4029
    %4296 = vmatprep.subr.mxu0 0.0
    %4297 = vmatpush1.msra.mxu0 %v4030
    %4298 = vmatprep.subr.mxu0 0.0
    %4299 = vmatpush1.msra.mxu0 %v4031
    %4300 = vmatprep.subr.mxu0 0.0
    %4301 = vmatpush1.msra.mxu0 %v4032
    %4302 = vmatprep.subr.mxu0 0.0
    %4303 = vmatpush1.msra.mxu0 %v4033
    %4304 = vmatprep.subr.mxu0 0.0
    %4305 = vmatpush1.msra.mxu0 %v4034
    %4306 = vmatprep.subr.mxu0 0.0
    %4307 = vmatpush1.msra.mxu0 %v4035
    %4308 = vmatprep.subr.mxu0 0.0
    %4309 = vmatpush1.msra.mxu0 %v4036
    %4310 = vmatprep.subr.mxu0 0.0
    %4311 = vmatpush1.msra.mxu0 0.0
    %4312 = vmatprep.subr.mxu0 0.0
    %4313 = vmatpush1.msra.mxu0 0.0
    %4314 = vmatprep.subr.mxu0 0.0
    %4315 = vmatpush1.msra.mxu0 0.0
    %4316 = vmatprep.subr.mxu0 0.0
    %4317 = vmatpush1.msra.mxu0 0.0
    %4318 = vmatprep.subr.mxu0 0.0
    %4319 = vmatpush1.msra.mxu0 0.0
    %4320 = vmatprep.subr.mxu0 0.0
    %4321 = vmatpush1.msra.mxu0 0.0
    %4322 = vmatprep.subr.mxu0 0.0
    %4323 = vmatpush1.msra.mxu0 0.0
    %4324 = vmatprep.subr.mxu0 0.0
    %4325 = vmatpush1.msra.mxu0 0.0
    %4326 = vmatprep.subr.mxu0 0.0
    %4327 = vmatpush1.msra.mxu0 0.0
    %4328 = vmatprep.subr.mxu0 0.0
    %4329 = vmatpush1.msra.mxu0 0.0
    %4330 = vmatprep.subr.mxu0 0.0
    %4331 = vmatpush1.msra.mxu0 0.0
    %4332 = vmatprep.subr.mxu0 0.0
    %4333 = vmatpush1.msra.mxu0 0.0
    %4334 = vmatprep.subr.mxu0 0.0
    %4335 = vmatpush1.msra.mxu0 0.0
    %4336 = vmatprep.subr.mxu0 0.0
    %4337 = vmatpush1.msra.mxu0 0.0
    %4338 = vmatprep.subr.mxu0 0.0
    %4339 = vmatpush1.msra.mxu0 0.0
    %4340 = vmatprep.subr.mxu0 0.0
    %4341 = vmatpush1.msra.mxu0 0.0
    %4342 = vmatprep.mubr.f32.mxu0 0.0
    %4343 = vmatmul.mubr.f32.gmra.mrb[0].mxu0 %v4207
    %v4344 = vpop.f32.mrb[0].mxu0
    %v4345 = vadd.f32 0.0, %v4344
    %v4346 = vpop.f32.mrb[0].mxu0
    %4347 = vdwg.mxu0
    %v4348 = vadd.f32 %v3963, %v4275
    %v4349 = vadd.f32 %v3964, %v4345
    %v4350 = vlaneseq
    %v4351 = vshrl.u32 %v4350, 7
    %v4352 = vsub.s32 5, %v4351
    %v4353 = vrot.slane %v53, %v4352
    %v4354 = vadd.f32 %v4348, %v4353
    %v4355 = vadd.f32 %v4349, %v4353
    %s4356 = scalar_lea.vmem %s9, 8
    %v4357 = vld [vmem:[%s4356] sm:$0x3f]
    %v4358 = vsel %vm54, %v4354, 0.0
    %4359 = vadd.xlane.f32.xlu0 %v4358
    %v4360 = vpop.xlane.xlu0 %4359
    %v4361 = vsel %vm54, %v4355, 0.0
    %4362 = vadd.xlane.f32.xlu0 %v4361
    %v4363 = vpop.xlane.xlu0 %4362
    %v4364 = vmul.f32 %v4360, %v61
    %v4365 = vmul.f32 %v4363, %v61
    %v4366 = vsub.f32 %v4354, %v4364
    %v4367 = vsub.f32 %v4355, %v4365
    %v4368 = vmul.f32 %v4366, %v4366
    %v4369 = vmul.f32 %v4367, %v4367
    %v4370 = vsel %vm54, %v4368, 0.0
    %4371 = vadd.xlane.f32.xlu0 %v4370
    %v4372 = vpop.xlane.xlu0 %4371
    %v4373 = vsel %vm54, %v4369, 0.0
    %4374 = vadd.xlane.f32.xlu0 %v4373
    %v4375 = vpop.xlane.xlu0 %4374
    %v4376 = vmul.f32 %v4372, 0.032258064
    %v4377 = vmul.f32 %v4375, 0.032258064
    %v4378 = vrsqrt.pop %v4376
    %v4379 = vmul.f32 %v4376, %v4378
    %vm4380 = vcmp.eq.f32.partialorder %v4376, inf
    %v4381 = vsel %vm4380, %v4376, %v4379
    %vm4382 = vcmp.eq.f32.partialorder %v4376, 0.0
    %v4383 = vand.u32 %v4376, 2147483648
    %v4384 = vsel %vm4382, %v4383, %v4381
    %v4385 = vrsqrt.pop %v4377
    %v4386 = vmul.f32 %v4377, %v4385
    %vm4387 = vcmp.eq.f32.partialorder %v4377, inf
    %v4388 = vsel %vm4387, %v4377, %v4386
    %vm4389 = vcmp.eq.f32.partialorder %v4377, 0.0
    %v4390 = vand.u32 %v4377, 2147483648
    %v4391 = vsel %vm4389, %v4390, %v4388
    %v4392 = vadd.f32 %v4384, 1e-06
    %v4393 = vadd.f32 %v4391, 1e-06
    %v4394 = vrcp.pop %v4392
    %v4395 = vrcp.pop %v4393
    %v4396 = vmul.f32 %v4366, %v4394
    %v4397 = vmul.f32 %v4367, %v4395
    %v4398 = vlaneseq
    %v4399 = vshrl.u32 %v4398, 7
    %v4400 = vsub.s32 0, %v4399
    %v4401 = vrot.slane %v4357, %v4400
    %v4402 = vmul.f32 %v4401, %v4396
    %v4403 = vmul.f32 %v4401, %v4397
    %v4404 = vlaneseq
    %v4405 = vshrl.u32 %v4404, 7
    %v4406 = vsub.s32 1, %v4405
    %v4407 = vrot.slane %v4357, %v4406
    %v4408 = vadd.f32 %v4402, %v4407
    %v4409 = vadd.f32 %v4403, %v4407
    %s4410 = scalar_lea.vmem %s3, 768
    %v4411 = vld [vmem:[%s4410] sm:$0xff]
    %v4412 = vld [vmem:[%s4410 + $0x8] sm:$0xff]
    %v4413 = vld [vmem:[%s4410 + $0x10] sm:$0xff]
    %v4414 = vld [vmem:[%s4410 + $0x18] sm:$0xff]
    %v4415 = vld [vmem:[%s4410 + $0x20] sm:$0xff]
    %v4416 = vld [vmem:[%s4410 + $0x28] sm:$0xff]
    %v4417 = vld [vmem:[%s4410 + $0x30] sm:$0xff]
    %v4418 = vld [vmem:[%s4410 + $0x38] sm:$0xff]
    %v4419 = vld [vmem:[%s4410 + $0x40] sm:$0xff]
    %v4420 = vld [vmem:[%s4410 + $0x48] sm:$0xff]
    %v4421 = vld [vmem:[%s4410 + $0x50] sm:$0xff]
    %v4422 = vld [vmem:[%s4410 + $0x58] sm:$0xff]
    %v4423 = vld [vmem:[%s4410 + $0x60] sm:$0xff]
    %v4424 = vld [vmem:[%s4410 + $0x68] sm:$0xff]
    %v4425 = vld [vmem:[%s4410 + $0x70] sm:$0xff]
    %v4426 = vld [vmem:[%s4410 + $0x78] sm:$0xff]
    %v4427 = vld [vmem:[%s4410 + $0x80] sm:$0xff]
    %v4428 = vld [vmem:[%s4410 + $0x88] sm:$0xff]
    %v4429 = vld [vmem:[%s4410 + $0x90] sm:$0xff]
    %v4430 = vld [vmem:[%s4410 + $0x98] sm:$0xff]
    %v4431 = vld [vmem:[%s4410 + $0xa0] sm:$0xff]
    %v4432 = vld [vmem:[%s4410 + $0xa8] sm:$0xff]
    %v4433 = vld [vmem:[%s4410 + $0xb0] sm:$0xff]
    %v4434 = vld [vmem:[%s4410 + $0xb8] sm:$0xff]
    %v4435 = vld [vmem:[%s4410 + $0xc0] sm:$0xff]
    %v4436 = vld [vmem:[%s4410 + $0xc8] sm:$0xff]
    %v4437 = vld [vmem:[%s4410 + $0xd0] sm:$0xff]
    %v4438 = vld [vmem:[%s4410 + $0xd8] sm:$0xff]
    %v4439 = vld [vmem:[%s4410 + $0xe0] sm:$0xff]
    %v4440 = vld [vmem:[%s4410 + $0xe8] sm:$0xff]
    %v4441 = vld [vmem:[%s4410 + $0xf0] sm:$0xff]
    %v4442 = vld [vmem:[%s4410 + $0xf8] sm:$0xff]
    %v4443 = vld [vmem:[%s4410 + $0x100] sm:$0xff]
    %v4444 = vld [vmem:[%s4410 + $0x108] sm:$0xff]
    %v4445 = vld [vmem:[%s4410 + $0x110] sm:$0xff]
    %v4446 = vld [vmem:[%s4410 + $0x118] sm:$0xff]
    %v4447 = vld [vmem:[%s4410 + $0x120] sm:$0xff]
    %v4448 = vld [vmem:[%s4410 + $0x128] sm:$0xff]
    %v4449 = vld [vmem:[%s4410 + $0x130] sm:$0xff]
    %v4450 = vld [vmem:[%s4410 + $0x138] sm:$0xff]
    %v4451 = vld [vmem:[%s4410 + $0x140] sm:$0xff]
    %v4452 = vld [vmem:[%s4410 + $0x148] sm:$0xff]
    %v4453 = vld [vmem:[%s4410 + $0x150] sm:$0xff]
    %v4454 = vld [vmem:[%s4410 + $0x158] sm:$0xff]
    %v4455 = vld [vmem:[%s4410 + $0x160] sm:$0xff]
    %v4456 = vld [vmem:[%s4410 + $0x168] sm:$0xff]
    %v4457 = vld [vmem:[%s4410 + $0x170] sm:$0xff]
    %v4458 = vld [vmem:[%s4410 + $0x178] sm:$0xff]
    %v4459 = vld [vmem:[%s4410 + $0x180] sm:$0xff]
    %v4460 = vld [vmem:[%s4410 + $0x188] sm:$0xff]
    %v4461 = vld [vmem:[%s4410 + $0x190] sm:$0xff]
    %v4462 = vld [vmem:[%s4410 + $0x198] sm:$0xff]
    %v4463 = vld [vmem:[%s4410 + $0x1a0] sm:$0xff]
    %v4464 = vld [vmem:[%s4410 + $0x1a8] sm:$0xff]
    %v4465 = vld [vmem:[%s4410 + $0x1b0] sm:$0xff]
    %v4466 = vld [vmem:[%s4410 + $0x1b8] sm:$0xff]
    %v4467 = vld [vmem:[%s4410 + $0x1c0] sm:$0xff]
    %v4468 = vld [vmem:[%s4410 + $0x1c8] sm:$0xff]
    %v4469 = vld [vmem:[%s4410 + $0x1d0] sm:$0xff]
    %v4470 = vld [vmem:[%s4410 + $0x1d8] sm:$0xff]
    %v4471 = vld [vmem:[%s4410 + $0x1e0] sm:$0xff]
    %v4472 = vld [vmem:[%s4410 + $0x1e8] sm:$0xff]
    %v4473 = vld [vmem:[%s4410 + $0x1f0] sm:$0xff]
    %v4474 = vld [vmem:[%s4410 + $0x1f8] sm:$0xff]
    %v4475 = vld [vmem:[%s4410 + $0x200] sm:$0xff]
    %v4476 = vld [vmem:[%s4410 + $0x208] sm:$0xff]
    %v4477 = vld [vmem:[%s4410 + $0x210] sm:$0xff]
    %v4478 = vld [vmem:[%s4410 + $0x218] sm:$0xff]
    %v4479 = vld [vmem:[%s4410 + $0x220] sm:$0xff]
    %v4480 = vld [vmem:[%s4410 + $0x228] sm:$0xff]
    %v4481 = vld [vmem:[%s4410 + $0x230] sm:$0xff]
    %v4482 = vld [vmem:[%s4410 + $0x238] sm:$0xff]
    %v4483 = vld [vmem:[%s4410 + $0x240] sm:$0xff]
    %v4484 = vld [vmem:[%s4410 + $0x248] sm:$0xff]
    %v4485 = vld [vmem:[%s4410 + $0x250] sm:$0xff]
    %v4486 = vld [vmem:[%s4410 + $0x258] sm:$0xff]
    %v4487 = vld [vmem:[%s4410 + $0x260] sm:$0xff]
    %v4488 = vld [vmem:[%s4410 + $0x268] sm:$0xff]
    %v4489 = vld [vmem:[%s4410 + $0x270] sm:$0xff]
    %v4490 = vld [vmem:[%s4410 + $0x278] sm:$0xff]
    %v4491 = vld [vmem:[%s4410 + $0x280] sm:$0xff]
    %v4492 = vld [vmem:[%s4410 + $0x288] sm:$0xff]
    %v4493 = vld [vmem:[%s4410 + $0x290] sm:$0xff]
    %v4494 = vld [vmem:[%s4410 + $0x298] sm:$0xff]
    %v4495 = vld [vmem:[%s4410 + $0x2a0] sm:$0xff]
    %v4496 = vld [vmem:[%s4410 + $0x2a8] sm:$0xff]
    %v4497 = vld [vmem:[%s4410 + $0x2b0] sm:$0xff]
    %v4498 = vld [vmem:[%s4410 + $0x2b8] sm:$0xff]
    %v4499 = vld [vmem:[%s4410 + $0x2c0] sm:$0xff]
    %v4500 = vld [vmem:[%s4410 + $0x2c8] sm:$0xff]
    %v4501 = vld [vmem:[%s4410 + $0x2d0] sm:$0xff]
    %v4502 = vld [vmem:[%s4410 + $0x2d8] sm:$0xff]
    %v4503 = vld [vmem:[%s4410 + $0x2e0] sm:$0xff]
    %v4504 = vld [vmem:[%s4410 + $0x2e8] sm:$0xff]
    %v4505 = vld [vmem:[%s4410 + $0x2f0] sm:$0xff]
    %v4506 = vld [vmem:[%s4410 + $0x2f8] sm:$0xff]
    %s4507 = scalar_lea.vmem %s4, 24
    %v4508 = vld [vmem:[%s4507] sm:$0x1]
    %v4509 = vld [vmem:[%s4507 + $0x1] sm:$0x1]
    %v4510 = vld [vmem:[%s4507 + $0x2] sm:$0x1]
    %v4511 = vld [vmem:[%s4507 + $0x3] sm:$0x1]
    %v4512 = vld [vmem:[%s4507 + $0x4] sm:$0x1]
    %v4513 = vld [vmem:[%s4507 + $0x5] sm:$0x1]
    %v4514 = vld [vmem:[%s4507 + $0x6] sm:$0x1]
    %v4515 = vld [vmem:[%s4507 + $0x7] sm:$0x1]
    %v4516 = vld [vmem:[%s4507 + $0x8] sm:$0x1]
    %v4517 = vld [vmem:[%s4507 + $0x9] sm:$0x1]
    %v4518 = vld [vmem:[%s4507 + $0xa] sm:$0x1]
    %v4519 = vld [vmem:[%s4507 + $0xb] sm:$0x1]
    %v4520 = vld [vmem:[%s4507 + $0xc] sm:$0x1]
    %v4521 = vld [vmem:[%s4507 + $0xd] sm:$0x1]
    %v4522 = vld [vmem:[%s4507 + $0xe] sm:$0x1]
    %v4523 = vld [vmem:[%s4507 + $0xf] sm:$0x1]
    %v4524 = vld [vmem:[%s4507 + $0x10] sm:$0x1]
    %v4525 = vld [vmem:[%s4507 + $0x11] sm:$0x1]
    %v4526 = vld [vmem:[%s4507 + $0x12] sm:$0x1]
    %v4527 = vld [vmem:[%s4507 + $0x13] sm:$0x1]
    %v4528 = vld [vmem:[%s4507 + $0x14] sm:$0x1]
    %v4529 = vld [vmem:[%s4507 + $0x15] sm:$0x1]
    %v4530 = vld [vmem:[%s4507 + $0x16] sm:$0x1]
    %v4531 = vld [vmem:[%s4507 + $0x17] sm:$0x1]
    %v4556 = vlaneseq
    %v4557 = vshrl.u32 %v4556, 7
    %v4558 = vsub.s32 0, %v4557
    %v4559 = vrot.slane %v4508, %v4558
    %v4560 = vlaneseq
    %v4561 = vshrl.u32 %v4560, 7
    %v4562 = vsub.s32 0, %v4561
    %v4563 = vrot.slane %v4509, %v4562
    %v4564 = vlaneseq
    %v4565 = vshrl.u32 %v4564, 7
    %v4566 = vsub.s32 0, %v4565
    %v4567 = vrot.slane %v4510, %v4566
    %v4568 = vlaneseq
    %v4569 = vshrl.u32 %v4568, 7
    %v4570 = vsub.s32 0, %v4569
    %v4571 = vrot.slane %v4511, %v4570
    %v4572 = vlaneseq
    %v4573 = vshrl.u32 %v4572, 7
    %v4574 = vsub.s32 0, %v4573
    %v4575 = vrot.slane %v4512, %v4574
    %v4576 = vlaneseq
    %v4577 = vshrl.u32 %v4576, 7
    %v4578 = vsub.s32 0, %v4577
    %v4579 = vrot.slane %v4513, %v4578
    %v4580 = vlaneseq
    %v4581 = vshrl.u32 %v4580, 7
    %v4582 = vsub.s32 0, %v4581
    %v4583 = vrot.slane %v4514, %v4582
    %v4584 = vlaneseq
    %v4585 = vshrl.u32 %v4584, 7
    %v4586 = vsub.s32 0, %v4585
    %v4587 = vrot.slane %v4515, %v4586
    %v4588 = vlaneseq
    %v4589 = vshrl.u32 %v4588, 7
    %v4590 = vsub.s32 0, %v4589
    %v4591 = vrot.slane %v4516, %v4590
    %v4592 = vlaneseq
    %v4593 = vshrl.u32 %v4592, 7
    %v4594 = vsub.s32 0, %v4593
    %v4595 = vrot.slane %v4517, %v4594
    %v4596 = vlaneseq
    %v4597 = vshrl.u32 %v4596, 7
    %v4598 = vsub.s32 0, %v4597
    %v4599 = vrot.slane %v4518, %v4598
    %v4600 = vlaneseq
    %v4601 = vshrl.u32 %v4600, 7
    %v4602 = vsub.s32 0, %v4601
    %v4603 = vrot.slane %v4519, %v4602
    %v4604 = vlaneseq
    %v4605 = vshrl.u32 %v4604, 7
    %v4606 = vsub.s32 0, %v4605
    %v4607 = vrot.slane %v4520, %v4606
    %v4608 = vlaneseq
    %v4609 = vshrl.u32 %v4608, 7
    %v4610 = vsub.s32 0, %v4609
    %v4611 = vrot.slane %v4521, %v4610
    %v4612 = vlaneseq
    %v4613 = vshrl.u32 %v4612, 7
    %v4614 = vsub.s32 0, %v4613
    %v4615 = vrot.slane %v4522, %v4614
    %v4616 = vlaneseq
    %v4617 = vshrl.u32 %v4616, 7
    %v4618 = vsub.s32 0, %v4617
    %v4619 = vrot.slane %v4523, %v4618
    %v4620 = vlaneseq
    %v4621 = vshrl.u32 %v4620, 7
    %v4622 = vsub.s32 0, %v4621
    %v4623 = vrot.slane %v4524, %v4622
    %v4624 = vlaneseq
    %v4625 = vshrl.u32 %v4624, 7
    %v4626 = vsub.s32 0, %v4625
    %v4627 = vrot.slane %v4525, %v4626
    %v4628 = vlaneseq
    %v4629 = vshrl.u32 %v4628, 7
    %v4630 = vsub.s32 0, %v4629
    %v4631 = vrot.slane %v4526, %v4630
    %v4632 = vlaneseq
    %v4633 = vshrl.u32 %v4632, 7
    %v4634 = vsub.s32 0, %v4633
    %v4635 = vrot.slane %v4527, %v4634
    %v4636 = vlaneseq
    %v4637 = vshrl.u32 %v4636, 7
    %v4638 = vsub.s32 0, %v4637
    %v4639 = vrot.slane %v4528, %v4638
    %v4640 = vlaneseq
    %v4641 = vshrl.u32 %v4640, 7
    %v4642 = vsub.s32 0, %v4641
    %v4643 = vrot.slane %v4529, %v4642
    %v4644 = vlaneseq
    %v4645 = vshrl.u32 %v4644, 7
    %v4646 = vsub.s32 0, %v4645
    %v4647 = vrot.slane %v4530, %v4646
    %v4648 = vlaneseq
    %v4649 = vshrl.u32 %v4648, 7
    %v4650 = vsub.s32 0, %v4649
    %v4651 = vrot.slane %v4531, %v4650
    %v4677 = vsel %vm54, %v4408, 0
    %4679 = vmatprep.subr.mxu0 0.0
    %4680 = vmatpush1.msra.mxu0 %v4411
    %4681 = vmatprep.subr.mxu0 0.0
    %4682 = vmatpush1.msra.mxu0 %v4412
    %4683 = vmatprep.subr.mxu0 0.0
    %4684 = vmatpush1.msra.mxu0 %v4413
    %4685 = vmatprep.subr.mxu0 0.0
    %4686 = vmatpush1.msra.mxu0 %v4414
    %4687 = vmatprep.subr.mxu0 0.0
    %4688 = vmatpush1.msra.mxu0 0.0
    %4689 = vmatprep.subr.mxu0 0.0
    %4690 = vmatpush1.msra.mxu0 0.0
    %4691 = vmatprep.subr.mxu0 0.0
    %4692 = vmatpush1.msra.mxu0 0.0
    %4693 = vmatprep.subr.mxu0 0.0
    %4694 = vmatpush1.msra.mxu0 0.0
    %4695 = vmatprep.subr.mxu0 0.0
    %4696 = vmatpush1.msra.mxu0 0.0
    %4697 = vmatprep.subr.mxu0 0.0
    %4698 = vmatpush1.msra.mxu0 0.0
    %4699 = vmatprep.subr.mxu0 0.0
    %4700 = vmatpush1.msra.mxu0 0.0
    %4701 = vmatprep.subr.mxu0 0.0
    %4702 = vmatpush1.msra.mxu0 0.0
    %4703 = vmatprep.subr.mxu0 0.0
    %4704 = vmatpush1.msra.mxu0 0.0
    %4705 = vmatprep.subr.mxu0 0.0
    %4706 = vmatpush1.msra.mxu0 0.0
    %4707 = vmatprep.subr.mxu0 0.0
    %4708 = vmatpush1.msra.mxu0 0.0
    %4709 = vmatprep.subr.mxu0 0.0
    %4710 = vmatpush1.msra.mxu0 0.0
    %4711 = vmatprep.subr.mxu0 0.0
    %4712 = vmatpush1.msra.mxu0 0.0
    %4713 = vmatprep.subr.mxu0 0.0
    %4714 = vmatpush1.msra.mxu0 0.0
    %4715 = vmatprep.subr.mxu0 0.0
    %4716 = vmatpush1.msra.mxu0 0.0
    %4717 = vmatprep.subr.mxu0 0.0
    %4718 = vmatpush1.msra.mxu0 0.0
    %4719 = vmatprep.subr.mxu0 0.0
    %4720 = vmatpush1.msra.mxu0 0.0
    %4721 = vmatprep.subr.mxu0 0.0
    %4722 = vmatpush1.msra.mxu0 0.0
    %4723 = vmatprep.subr.mxu0 0.0
    %4724 = vmatpush1.msra.mxu0 0.0
    %4725 = vmatprep.subr.mxu0 0.0
    %4726 = vmatpush1.msra.mxu0 0.0
    %4727 = vmatprep.subr.mxu0 0.0
    %4728 = vmatpush1.msra.mxu0 0.0
    %4729 = vmatprep.subr.mxu0 0.0
    %4730 = vmatpush1.msra.mxu0 0.0
    %4731 = vmatprep.subr.mxu0 0.0
    %4732 = vmatpush1.msra.mxu0 0.0
    %4733 = vmatprep.subr.mxu0 0.0
    %4734 = vmatpush1.msra.mxu0 0.0
    %4735 = vmatprep.subr.mxu0 0.0
    %4736 = vmatpush1.msra.mxu0 0.0
    %4737 = vmatprep.subr.mxu0 0.0
    %4738 = vmatpush1.msra.mxu0 0.0
    %4739 = vmatprep.subr.mxu0 0.0
    %4740 = vmatpush1.msra.mxu0 0.0
    %4741 = vmatprep.subr.mxu0 0.0
    %4742 = vmatpush1.msra.mxu0 0.0
    %4743 = vmatprep.mubr.f32.mxu0 0.0
    %4744 = vmatmul.mubr.f32.gmra.mrb[0].mxu0 %v4677
    %v4745 = vpop.f32.mrb[0].mxu0
    %v4746 = vadd.f32 %v4559, %v4745
    %v4747 = vpop.f32.mrb[0].mxu0
    %4748 = vdwg.mxu0
    %v4750 = vsel %vm54, %v4409, 0
    %4752 = vmatprep.subr.mxu0 0.0
    %4753 = vmatpush1.msra.mxu0 %v4415
    %4754 = vmatprep.subr.mxu0 0.0
    %4755 = vmatpush1.msra.mxu0 %v4416
    %4756 = vmatprep.subr.mxu0 0.0
    %4757 = vmatpush1.msra.mxu0 %v4417
    %4758 = vmatprep.subr.mxu0 0.0
    %4759 = vmatpush1.msra.mxu0 %v4418
    %4760 = vmatprep.subr.mxu0 0.0
    %4761 = vmatpush1.msra.mxu0 0.0
    %4762 = vmatprep.subr.mxu0 0.0
    %4763 = vmatpush1.msra.mxu0 0.0
    %4764 = vmatprep.subr.mxu0 0.0
    %4765 = vmatpush1.msra.mxu0 0.0
    %4766 = vmatprep.subr.mxu0 0.0
    %4767 = vmatpush1.msra.mxu0 0.0
    %4768 = vmatprep.subr.mxu0 0.0
    %4769 = vmatpush1.msra.mxu0 0.0
    %4770 = vmatprep.subr.mxu0 0.0
    %4771 = vmatpush1.msra.mxu0 0.0
    %4772 = vmatprep.subr.mxu0 0.0
    %4773 = vmatpush1.msra.mxu0 0.0
    %4774 = vmatprep.subr.mxu0 0.0
    %4775 = vmatpush1.msra.mxu0 0.0
    %4776 = vmatprep.subr.mxu0 0.0
    %4777 = vmatpush1.msra.mxu0 0.0
    %4778 = vmatprep.subr.mxu0 0.0
    %4779 = vmatpush1.msra.mxu0 0.0
    %4780 = vmatprep.subr.mxu0 0.0
    %4781 = vmatpush1.msra.mxu0 0.0
    %4782 = vmatprep.subr.mxu0 0.0
    %4783 = vmatpush1.msra.mxu0 0.0
    %4784 = vmatprep.subr.mxu0 0.0
    %4785 = vmatpush1.msra.mxu0 0.0
    %4786 = vmatprep.subr.mxu0 0.0
    %4787 = vmatpush1.msra.mxu0 0.0
    %4788 = vmatprep.subr.mxu0 0.0
    %4789 = vmatpush1.msra.mxu0 0.0
    %4790 = vmatprep.subr.mxu0 0.0
    %4791 = vmatpush1.msra.mxu0 0.0
    %4792 = vmatprep.subr.mxu0 0.0
    %4793 = vmatpush1.msra.mxu0 0.0
    %4794 = vmatprep.subr.mxu0 0.0
    %4795 = vmatpush1.msra.mxu0 0.0
    %4796 = vmatprep.subr.mxu0 0.0
    %4797 = vmatpush1.msra.mxu0 0.0
    %4798 = vmatprep.subr.mxu0 0.0
    %4799 = vmatpush1.msra.mxu0 0.0
    %4800 = vmatprep.subr.mxu0 0.0
    %4801 = vmatpush1.msra.mxu0 0.0
    %4802 = vmatprep.subr.mxu0 0.0
    %4803 = vmatpush1.msra.mxu0 0.0
    %4804 = vmatprep.subr.mxu0 0.0
    %4805 = vmatpush1.msra.mxu0 0.0
    %4806 = vmatprep.subr.mxu0 0.0
    %4807 = vmatpush1.msra.mxu0 0.0
    %4808 = vmatprep.subr.mxu0 0.0
    %4809 = vmatpush1.msra.mxu0 0.0
    %4810 = vmatprep.subr.mxu0 0.0
    %4811 = vmatpush1.msra.mxu0 0.0
    %4812 = vmatprep.subr.mxu0 0.0
    %4813 = vmatpush1.msra.mxu0 0.0
    %4814 = vmatprep.subr.mxu0 0.0
    %4815 = vmatpush1.msra.mxu0 0.0
    %4816 = vmatprep.mubr.f32.mxu0 0.0
    %4817 = vmatmul.mubr.f32.gmra.mrb[0].mxu0 %v4750
    %v4818 = vpop.f32.mrb[0].mxu0
    %v4819 = vadd.f32 %v4563, %v4818
    %v4820 = vpop.f32.mrb[0].mxu0
    %4821 = vdwg.mxu0
    %4822 = vmatprep.subr.mxu0 0.0
    %4823 = vmatpush1.msra.mxu0 %v4419
    %4824 = vmatprep.subr.mxu0 0.0
    %4825 = vmatpush1.msra.mxu0 %v4420
    %4826 = vmatprep.subr.mxu0 0.0
    %4827 = vmatpush1.msra.mxu0 %v4421
    %4828 = vmatprep.subr.mxu0 0.0
    %4829 = vmatpush1.msra.mxu0 %v4422
    %4830 = vmatprep.subr.mxu0 0.0
    %4831 = vmatpush1.msra.mxu0 0.0
    %4832 = vmatprep.subr.mxu0 0.0
    %4833 = vmatpush1.msra.mxu0 0.0
    %4834 = vmatprep.subr.mxu0 0.0
    %4835 = vmatpush1.msra.mxu0 0.0
    %4836 = vmatprep.subr.mxu0 0.0
    %4837 = vmatpush1.msra.mxu0 0.0
    %4838 = vmatprep.subr.mxu0 0.0
    %4839 = vmatpush1.msra.mxu0 0.0
    %4840 = vmatprep.subr.mxu0 0.0
    %4841 = vmatpush1.msra.mxu0 0.0
    %4842 = vmatprep.subr.mxu0 0.0
    %4843 = vmatpush1.msra.mxu0 0.0
    %4844 = vmatprep.subr.mxu0 0.0
    %4845 = vmatpush1.msra.mxu0 0.0
    %4846 = vmatprep.subr.mxu0 0.0
    %4847 = vmatpush1.msra.mxu0 0.0
    %4848 = vmatprep.subr.mxu0 0.0
    %4849 = vmatpush1.msra.mxu0 0.0
    %4850 = vmatprep.subr.mxu0 0.0
    %4851 = vmatpush1.msra.mxu0 0.0
    %4852 = vmatprep.subr.mxu0 0.0
    %4853 = vmatpush1.msra.mxu0 0.0
    %4854 = vmatprep.subr.mxu0 0.0
    %4855 = vmatpush1.msra.mxu0 0.0
    %4856 = vmatprep.subr.mxu0 0.0
    %4857 = vmatpush1.msra.mxu0 0.0
    %4858 = vmatprep.subr.mxu0 0.0
    %4859 = vmatpush1.msra.mxu0 0.0
    %4860 = vmatprep.subr.mxu0 0.0
    %4861 = vmatpush1.msra.mxu0 0.0
    %4862 = vmatprep.subr.mxu0 0.0
    %4863 = vmatpush1.msra.mxu0 0.0
    %4864 = vmatprep.subr.mxu0 0.0
    %4865 = vmatpush1.msra.mxu0 0.0
    %4866 = vmatprep.subr.mxu0 0.0
    %4867 = vmatpush1.msra.mxu0 0.0
    %4868 = vmatprep.subr.mxu0 0.0
    %4869 = vmatpush1.msra.mxu0 0.0
    %4870 = vmatprep.subr.mxu0 0.0
    %4871 = vmatpush1.msra.mxu0 0.0
    %4872 = vmatprep.subr.mxu0 0.0
    %4873 = vmatpush1.msra.mxu0 0.0
    %4874 = vmatprep.subr.mxu0 0.0
    %4875 = vmatpush1.msra.mxu0 0.0
    %4876 = vmatprep.subr.mxu0 0.0
    %4877 = vmatpush1.msra.mxu0 0.0
    %4878 = vmatprep.subr.mxu0 0.0
    %4879 = vmatpush1.msra.mxu0 0.0
    %4880 = vmatprep.subr.mxu0 0.0
    %4881 = vmatpush1.msra.mxu0 0.0
    %4882 = vmatprep.subr.mxu0 0.0
    %4883 = vmatpush1.msra.mxu0 0.0
    %4884 = vmatprep.subr.mxu0 0.0
    %4885 = vmatpush1.msra.mxu0 0.0
    %4886 = vmatprep.mubr.f32.mxu0 0.0
    %4887 = vmatmul.mubr.f32.gmra.mrb[0].mxu0 %v4677
    %v4888 = vpop.f32.mrb[0].mxu0
    %v4889 = vadd.f32 %v4567, %v4888
    %v4890 = vpop.f32.mrb[0].mxu0
    %4891 = vdwg.mxu0
    %4892 = vmatprep.subr.mxu0 0.0
    %4893 = vmatpush1.msra.mxu0 %v4423
    %4894 = vmatprep.subr.mxu0 0.0
    %4895 = vmatpush1.msra.mxu0 %v4424
    %4896 = vmatprep.subr.mxu0 0.0
    %4897 = vmatpush1.msra.mxu0 %v4425
    %4898 = vmatprep.subr.mxu0 0.0
    %4899 = vmatpush1.msra.mxu0 %v4426
    %4900 = vmatprep.subr.mxu0 0.0
    %4901 = vmatpush1.msra.mxu0 0.0
    %4902 = vmatprep.subr.mxu0 0.0
    %4903 = vmatpush1.msra.mxu0 0.0
    %4904 = vmatprep.subr.mxu0 0.0
    %4905 = vmatpush1.msra.mxu0 0.0
    %4906 = vmatprep.subr.mxu0 0.0
    %4907 = vmatpush1.msra.mxu0 0.0
    %4908 = vmatprep.subr.mxu0 0.0
    %4909 = vmatpush1.msra.mxu0 0.0
    %4910 = vmatprep.subr.mxu0 0.0
    %4911 = vmatpush1.msra.mxu0 0.0
    %4912 = vmatprep.subr.mxu0 0.0
    %4913 = vmatpush1.msra.mxu0 0.0
    %4914 = vmatprep.subr.mxu0 0.0
    %4915 = vmatpush1.msra.mxu0 0.0
    %4916 = vmatprep.subr.mxu0 0.0
    %4917 = vmatpush1.msra.mxu0 0.0
    %4918 = vmatprep.subr.mxu0 0.0
    %4919 = vmatpush1.msra.mxu0 0.0
    %4920 = vmatprep.subr.mxu0 0.0
    %4921 = vmatpush1.msra.mxu0 0.0
    %4922 = vmatprep.subr.mxu0 0.0
    %4923 = vmatpush1.msra.mxu0 0.0
    %4924 = vmatprep.subr.mxu0 0.0
    %4925 = vmatpush1.msra.mxu0 0.0
    %4926 = vmatprep.subr.mxu0 0.0
    %4927 = vmatpush1.msra.mxu0 0.0
    %4928 = vmatprep.subr.mxu0 0.0
    %4929 = vmatpush1.msra.mxu0 0.0
    %4930 = vmatprep.subr.mxu0 0.0
    %4931 = vmatpush1.msra.mxu0 0.0
    %4932 = vmatprep.subr.mxu0 0.0
    %4933 = vmatpush1.msra.mxu0 0.0
    %4934 = vmatprep.subr.mxu0 0.0
    %4935 = vmatpush1.msra.mxu0 0.0
    %4936 = vmatprep.subr.mxu0 0.0
    %4937 = vmatpush1.msra.mxu0 0.0
    %4938 = vmatprep.subr.mxu0 0.0
    %4939 = vmatpush1.msra.mxu0 0.0
    %4940 = vmatprep.subr.mxu0 0.0
    %4941 = vmatpush1.msra.mxu0 0.0
    %4942 = vmatprep.subr.mxu0 0.0
    %4943 = vmatpush1.msra.mxu0 0.0
    %4944 = vmatprep.subr.mxu0 0.0
    %4945 = vmatpush1.msra.mxu0 0.0
    %4946 = vmatprep.subr.mxu0 0.0
    %4947 = vmatpush1.msra.mxu0 0.0
    %4948 = vmatprep.subr.mxu0 0.0
    %4949 = vmatpush1.msra.mxu0 0.0
    %4950 = vmatprep.subr.mxu0 0.0
    %4951 = vmatpush1.msra.mxu0 0.0
    %4952 = vmatprep.subr.mxu0 0.0
    %4953 = vmatpush1.msra.mxu0 0.0
    %4954 = vmatprep.subr.mxu0 0.0
    %4955 = vmatpush1.msra.mxu0 0.0
    %4956 = vmatprep.mubr.f32.mxu0 0.0
    %4957 = vmatmul.mubr.f32.gmra.mrb[0].mxu0 %v4750
    %v4958 = vpop.f32.mrb[0].mxu0
    %v4959 = vadd.f32 %v4571, %v4958
    %v4960 = vpop.f32.mrb[0].mxu0
    %4961 = vdwg.mxu0
    %4962 = vmatprep.subr.mxu0 0.0
    %4963 = vmatpush1.msra.mxu0 %v4427
    %4964 = vmatprep.subr.mxu0 0.0
    %4965 = vmatpush1.msra.mxu0 %v4428
    %4966 = vmatprep.subr.mxu0 0.0
    %4967 = vmatpush1.msra.mxu0 %v4429
    %4968 = vmatprep.subr.mxu0 0.0
    %4969 = vmatpush1.msra.mxu0 %v4430
    %4970 = vmatprep.subr.mxu0 0.0
    %4971 = vmatpush1.msra.mxu0 0.0
    %4972 = vmatprep.subr.mxu0 0.0
    %4973 = vmatpush1.msra.mxu0 0.0
    %4974 = vmatprep.subr.mxu0 0.0
    %4975 = vmatpush1.msra.mxu0 0.0
    %4976 = vmatprep.subr.mxu0 0.0
    %4977 = vmatpush1.msra.mxu0 0.0
    %4978 = vmatprep.subr.mxu0 0.0
    %4979 = vmatpush1.msra.mxu0 0.0
    %4980 = vmatprep.subr.mxu0 0.0
    %4981 = vmatpush1.msra.mxu0 0.0
    %4982 = vmatprep.subr.mxu0 0.0
    %4983 = vmatpush1.msra.mxu0 0.0
    %4984 = vmatprep.subr.mxu0 0.0
    %4985 = vmatpush1.msra.mxu0 0.0
    %4986 = vmatprep.subr.mxu0 0.0
    %4987 = vmatpush1.msra.mxu0 0.0
    %4988 = vmatprep.subr.mxu0 0.0
    %4989 = vmatpush1.msra.mxu0 0.0
    %4990 = vmatprep.subr.mxu0 0.0
    %4991 = vmatpush1.msra.mxu0 0.0
    %4992 = vmatprep.subr.mxu0 0.0
    %4993 = vmatpush1.msra.mxu0 0.0
    %4994 = vmatprep.subr.mxu0 0.0
    %4995 = vmatpush1.msra.mxu0 0.0
    %4996 = vmatprep.subr.mxu0 0.0
    %4997 = vmatpush1.msra.mxu0 0.0
    %4998 = vmatprep.subr.mxu0 0.0
    %4999 = vmatpush1.msra.mxu0 0.0
    %5000 = vmatprep.subr.mxu0 0.0
    %5001 = vmatpush1.msra.mxu0 0.0
    %5002 = vmatprep.subr.mxu0 0.0
    %5003 = vmatpush1.msra.mxu0 0.0
    %5004 = vmatprep.subr.mxu0 0.0
    %5005 = vmatpush1.msra.mxu0 0.0
    %5006 = vmatprep.subr.mxu0 0.0
    %5007 = vmatpush1.msra.mxu0 0.0
    %5008 = vmatprep.subr.mxu0 0.0
    %5009 = vmatpush1.msra.mxu0 0.0
    %5010 = vmatprep.subr.mxu0 0.0
    %5011 = vmatpush1.msra.mxu0 0.0
    %5012 = vmatprep.subr.mxu0 0.0
    %5013 = vmatpush1.msra.mxu0 0.0
    %5014 = vmatprep.subr.mxu0 0.0
    %5015 = vmatpush1.msra.mxu0 0.0
    %5016 = vmatprep.subr.mxu0 0.0
    %5017 = vmatpush1.msra.mxu0 0.0
    %5018 = vmatprep.subr.mxu0 0.0
    %5019 = vmatpush1.msra.mxu0 0.0
    %5020 = vmatprep.subr.mxu0 0.0
    %5021 = vmatpush1.msra.mxu0 0.0
    %5022 = vmatprep.subr.mxu0 0.0
    %5023 = vmatpush1.msra.mxu0 0.0
    %5024 = vmatprep.subr.mxu0 0.0
    %5025 = vmatpush1.msra.mxu0 0.0
    %5026 = vmatprep.mubr.f32.mxu0 0.0
    %5027 = vmatmul.mubr.f32.gmra.mrb[0].mxu0 %v4677
    %v5028 = vpop.f32.mrb[0].mxu0
    %v5029 = vadd.f32 %v4575, %v5028
    %v5030 = vpop.f32.mrb[0].mxu0
    %5031 = vdwg.mxu0
    %5032 = vmatprep.subr.mxu0 0.0
    %5033 = vmatpush1.msra.mxu0 %v4431
    %5034 = vmatprep.subr.mxu0 0.0
    %5035 = vmatpush1.msra.mxu0 %v4432
    %5036 = vmatprep.subr.mxu0 0.0
    %5037 = vmatpush1.msra.mxu0 %v4433
    %5038 = vmatprep.subr.mxu0 0.0
    %5039 = vmatpush1.msra.mxu0 %v4434
    %5040 = vmatprep.subr.mxu0 0.0
    %5041 = vmatpush1.msra.mxu0 0.0
    %5042 = vmatprep.subr.mxu0 0.0
    %5043 = vmatpush1.msra.mxu0 0.0
    %5044 = vmatprep.subr.mxu0 0.0
    %5045 = vmatpush1.msra.mxu0 0.0
    %5046 = vmatprep.subr.mxu0 0.0
    %5047 = vmatpush1.msra.mxu0 0.0
    %5048 = vmatprep.subr.mxu0 0.0
    %5049 = vmatpush1.msra.mxu0 0.0
    %5050 = vmatprep.subr.mxu0 0.0
    %5051 = vmatpush1.msra.mxu0 0.0
    %5052 = vmatprep.subr.mxu0 0.0
    %5053 = vmatpush1.msra.mxu0 0.0
    %5054 = vmatprep.subr.mxu0 0.0
    %5055 = vmatpush1.msra.mxu0 0.0
    %5056 = vmatprep.subr.mxu0 0.0
    %5057 = vmatpush1.msra.mxu0 0.0
    %5058 = vmatprep.subr.mxu0 0.0
    %5059 = vmatpush1.msra.mxu0 0.0
    %5060 = vmatprep.subr.mxu0 0.0
    %5061 = vmatpush1.msra.mxu0 0.0
    %5062 = vmatprep.subr.mxu0 0.0
    %5063 = vmatpush1.msra.mxu0 0.0
    %5064 = vmatprep.subr.mxu0 0.0
    %5065 = vmatpush1.msra.mxu0 0.0
    %5066 = vmatprep.subr.mxu0 0.0
    %5067 = vmatpush1.msra.mxu0 0.0
    %5068 = vmatprep.subr.mxu0 0.0
    %5069 = vmatpush1.msra.mxu0 0.0
    %5070 = vmatprep.subr.mxu0 0.0
    %5071 = vmatpush1.msra.mxu0 0.0
    %5072 = vmatprep.subr.mxu0 0.0
    %5073 = vmatpush1.msra.mxu0 0.0
    %5074 = vmatprep.subr.mxu0 0.0
    %5075 = vmatpush1.msra.mxu0 0.0
    %5076 = vmatprep.subr.mxu0 0.0
    %5077 = vmatpush1.msra.mxu0 0.0
    %5078 = vmatprep.subr.mxu0 0.0
    %5079 = vmatpush1.msra.mxu0 0.0
    %5080 = vmatprep.subr.mxu0 0.0
    %5081 = vmatpush1.msra.mxu0 0.0
    %5082 = vmatprep.subr.mxu0 0.0
    %5083 = vmatpush1.msra.mxu0 0.0
    %5084 = vmatprep.subr.mxu0 0.0
    %5085 = vmatpush1.msra.mxu0 0.0
    %5086 = vmatprep.subr.mxu0 0.0
    %5087 = vmatpush1.msra.mxu0 0.0
    %5088 = vmatprep.subr.mxu0 0.0
    %5089 = vmatpush1.msra.mxu0 0.0
    %5090 = vmatprep.subr.mxu0 0.0
    %5091 = vmatpush1.msra.mxu0 0.0
    %5092 = vmatprep.subr.mxu0 0.0
    %5093 = vmatpush1.msra.mxu0 0.0
    %5094 = vmatprep.subr.mxu0 0.0
    %5095 = vmatpush1.msra.mxu0 0.0
    %5096 = vmatprep.mubr.f32.mxu0 0.0
    %5097 = vmatmul.mubr.f32.gmra.mrb[0].mxu0 %v4750
    %v5098 = vpop.f32.mrb[0].mxu0
    %v5099 = vadd.f32 %v4579, %v5098
    %v5100 = vpop.f32.mrb[0].mxu0
    %5101 = vdwg.mxu0
    %5102 = vmatprep.subr.mxu0 0.0
    %5103 = vmatpush1.msra.mxu0 %v4435
    %5104 = vmatprep.subr.mxu0 0.0
    %5105 = vmatpush1.msra.mxu0 %v4436
    %5106 = vmatprep.subr.mxu0 0.0
    %5107 = vmatpush1.msra.mxu0 %v4437
    %5108 = vmatprep.subr.mxu0 0.0
    %5109 = vmatpush1.msra.mxu0 %v4438
    %5110 = vmatprep.subr.mxu0 0.0
    %5111 = vmatpush1.msra.mxu0 0.0
    %5112 = vmatprep.subr.mxu0 0.0
    %5113 = vmatpush1.msra.mxu0 0.0
    %5114 = vmatprep.subr.mxu0 0.0
    %5115 = vmatpush1.msra.mxu0 0.0
    %5116 = vmatprep.subr.mxu0 0.0
    %5117 = vmatpush1.msra.mxu0 0.0
    %5118 = vmatprep.subr.mxu0 0.0
    %5119 = vmatpush1.msra.mxu0 0.0
    %5120 = vmatprep.subr.mxu0 0.0
    %5121 = vmatpush1.msra.mxu0 0.0
    %5122 = vmatprep.subr.mxu0 0.0
    %5123 = vmatpush1.msra.mxu0 0.0
    %5124 = vmatprep.subr.mxu0 0.0
    %5125 = vmatpush1.msra.mxu0 0.0
    %5126 = vmatprep.subr.mxu0 0.0
    %5127 = vmatpush1.msra.mxu0 0.0
    %5128 = vmatprep.subr.mxu0 0.0
    %5129 = vmatpush1.msra.mxu0 0.0
    %5130 = vmatprep.subr.mxu0 0.0
    %5131 = vmatpush1.msra.mxu0 0.0
    %5132 = vmatprep.subr.mxu0 0.0
    %5133 = vmatpush1.msra.mxu0 0.0
    %5134 = vmatprep.subr.mxu0 0.0
    %5135 = vmatpush1.msra.mxu0 0.0
    %5136 = vmatprep.subr.mxu0 0.0
    %5137 = vmatpush1.msra.mxu0 0.0
    %5138 = vmatprep.subr.mxu0 0.0
    %5139 = vmatpush1.msra.mxu0 0.0
    %5140 = vmatprep.subr.mxu0 0.0
    %5141 = vmatpush1.msra.mxu0 0.0
    %5142 = vmatprep.subr.mxu0 0.0
    %5143 = vmatpush1.msra.mxu0 0.0
    %5144 = vmatprep.subr.mxu0 0.0
    %5145 = vmatpush1.msra.mxu0 0.0
    %5146 = vmatprep.subr.mxu0 0.0
    %5147 = vmatpush1.msra.mxu0 0.0
    %5148 = vmatprep.subr.mxu0 0.0
    %5149 = vmatpush1.msra.mxu0 0.0
    %5150 = vmatprep.subr.mxu0 0.0
    %5151 = vmatpush1.msra.mxu0 0.0
    %5152 = vmatprep.subr.mxu0 0.0
    %5153 = vmatpush1.msra.mxu0 0.0
    %5154 = vmatprep.subr.mxu0 0.0
    %5155 = vmatpush1.msra.mxu0 0.0
    %5156 = vmatprep.subr.mxu0 0.0
    %5157 = vmatpush1.msra.mxu0 0.0
    %5158 = vmatprep.subr.mxu0 0.0
    %5159 = vmatpush1.msra.mxu0 0.0
    %5160 = vmatprep.subr.mxu0 0.0
    %5161 = vmatpush1.msra.mxu0 0.0
    %5162 = vmatprep.subr.mxu0 0.0
    %5163 = vmatpush1.msra.mxu0 0.0
    %5164 = vmatprep.subr.mxu0 0.0
    %5165 = vmatpush1.msra.mxu0 0.0
    %5166 = vmatprep.mubr.f32.mxu0 0.0
    %5167 = vmatmul.mubr.f32.gmra.mrb[0].mxu0 %v4677
    %v5168 = vpop.f32.mrb[0].mxu0
    %v5169 = vadd.f32 %v4583, %v5168
    %v5170 = vpop.f32.mrb[0].mxu0
    %5171 = vdwg.mxu0
    %5172 = vmatprep.subr.mxu0 0.0
    %5173 = vmatpush1.msra.mxu0 %v4439
    %5174 = vmatprep.subr.mxu0 0.0
    %5175 = vmatpush1.msra.mxu0 %v4440
    %5176 = vmatprep.subr.mxu0 0.0
    %5177 = vmatpush1.msra.mxu0 %v4441
    %5178 = vmatprep.subr.mxu0 0.0
    %5179 = vmatpush1.msra.mxu0 %v4442
    %5180 = vmatprep.subr.mxu0 0.0
    %5181 = vmatpush1.msra.mxu0 0.0
    %5182 = vmatprep.subr.mxu0 0.0
    %5183 = vmatpush1.msra.mxu0 0.0
    %5184 = vmatprep.subr.mxu0 0.0
    %5185 = vmatpush1.msra.mxu0 0.0
    %5186 = vmatprep.subr.mxu0 0.0
    %5187 = vmatpush1.msra.mxu0 0.0
    %5188 = vmatprep.subr.mxu0 0.0
    %5189 = vmatpush1.msra.mxu0 0.0
    %5190 = vmatprep.subr.mxu0 0.0
    %5191 = vmatpush1.msra.mxu0 0.0
    %5192 = vmatprep.subr.mxu0 0.0
    %5193 = vmatpush1.msra.mxu0 0.0
    %5194 = vmatprep.subr.mxu0 0.0
    %5195 = vmatpush1.msra.mxu0 0.0
    %5196 = vmatprep.subr.mxu0 0.0
    %5197 = vmatpush1.msra.mxu0 0.0
    %5198 = vmatprep.subr.mxu0 0.0
    %5199 = vmatpush1.msra.mxu0 0.0
    %5200 = vmatprep.subr.mxu0 0.0
    %5201 = vmatpush1.msra.mxu0 0.0
    %5202 = vmatprep.subr.mxu0 0.0
    %5203 = vmatpush1.msra.mxu0 0.0
    %5204 = vmatprep.subr.mxu0 0.0
    %5205 = vmatpush1.msra.mxu0 0.0
    %5206 = vmatprep.subr.mxu0 0.0
    %5207 = vmatpush1.msra.mxu0 0.0
    %5208 = vmatprep.subr.mxu0 0.0
    %5209 = vmatpush1.msra.mxu0 0.0
    %5210 = vmatprep.subr.mxu0 0.0
    %5211 = vmatpush1.msra.mxu0 0.0
    %5212 = vmatprep.subr.mxu0 0.0
    %5213 = vmatpush1.msra.mxu0 0.0
    %5214 = vmatprep.subr.mxu0 0.0
    %5215 = vmatpush1.msra.mxu0 0.0
    %5216 = vmatprep.subr.mxu0 0.0
    %5217 = vmatpush1.msra.mxu0 0.0
    %5218 = vmatprep.subr.mxu0 0.0
    %5219 = vmatpush1.msra.mxu0 0.0
    %5220 = vmatprep.subr.mxu0 0.0
    %5221 = vmatpush1.msra.mxu0 0.0
    %5222 = vmatprep.subr.mxu0 0.0
    %5223 = vmatpush1.msra.mxu0 0.0
    %5224 = vmatprep.subr.mxu0 0.0
    %5225 = vmatpush1.msra.mxu0 0.0
    %5226 = vmatprep.subr.mxu0 0.0
    %5227 = vmatpush1.msra.mxu0 0.0
    %5228 = vmatprep.subr.mxu0 0.0
    %5229 = vmatpush1.msra.mxu0 0.0
    %5230 = vmatprep.subr.mxu0 0.0
    %5231 = vmatpush1.msra.mxu0 0.0
    %5232 = vmatprep.subr.mxu0 0.0
    %5233 = vmatpush1.msra.mxu0 0.0
    %5234 = vmatprep.subr.mxu0 0.0
    %5235 = vmatpush1.msra.mxu0 0.0
    %5236 = vmatprep.mubr.f32.mxu0 0.0
    %5237 = vmatmul.mubr.f32.gmra.mrb[0].mxu0 %v4750
    %v5238 = vpop.f32.mrb[0].mxu0
    %v5239 = vadd.f32 %v4587, %v5238
    %v5240 = vpop.f32.mrb[0].mxu0
    %5241 = vdwg.mxu0
    %5242 = vmatprep.subr.mxu0 0.0
    %5243 = vmatpush1.msra.mxu0 %v4443
    %5244 = vmatprep.subr.mxu0 0.0
    %5245 = vmatpush1.msra.mxu0 %v4444
    %5246 = vmatprep.subr.mxu0 0.0
    %5247 = vmatpush1.msra.mxu0 %v4445
    %5248 = vmatprep.subr.mxu0 0.0
    %5249 = vmatpush1.msra.mxu0 %v4446
    %5250 = vmatprep.subr.mxu0 0.0
    %5251 = vmatpush1.msra.mxu0 0.0
    %5252 = vmatprep.subr.mxu0 0.0
    %5253 = vmatpush1.msra.mxu0 0.0
    %5254 = vmatprep.subr.mxu0 0.0
    %5255 = vmatpush1.msra.mxu0 0.0
    %5256 = vmatprep.subr.mxu0 0.0
    %5257 = vmatpush1.msra.mxu0 0.0
    %5258 = vmatprep.subr.mxu0 0.0
    %5259 = vmatpush1.msra.mxu0 0.0
    %5260 = vmatprep.subr.mxu0 0.0
    %5261 = vmatpush1.msra.mxu0 0.0
    %5262 = vmatprep.subr.mxu0 0.0
    %5263 = vmatpush1.msra.mxu0 0.0
    %5264 = vmatprep.subr.mxu0 0.0
    %5265 = vmatpush1.msra.mxu0 0.0
    %5266 = vmatprep.subr.mxu0 0.0
    %5267 = vmatpush1.msra.mxu0 0.0
    %5268 = vmatprep.subr.mxu0 0.0
    %5269 = vmatpush1.msra.mxu0 0.0
    %5270 = vmatprep.subr.mxu0 0.0
    %5271 = vmatpush1.msra.mxu0 0.0
    %5272 = vmatprep.subr.mxu0 0.0
    %5273 = vmatpush1.msra.mxu0 0.0
    %5274 = vmatprep.subr.mxu0 0.0
    %5275 = vmatpush1.msra.mxu0 0.0
    %5276 = vmatprep.subr.mxu0 0.0
    %5277 = vmatpush1.msra.mxu0 0.0
    %5278 = vmatprep.subr.mxu0 0.0
    %5279 = vmatpush1.msra.mxu0 0.0
    %5280 = vmatprep.subr.mxu0 0.0
    %5281 = vmatpush1.msra.mxu0 0.0
    %5282 = vmatprep.subr.mxu0 0.0
    %5283 = vmatpush1.msra.mxu0 0.0
    %5284 = vmatprep.subr.mxu0 0.0
    %5285 = vmatpush1.msra.mxu0 0.0
    %5286 = vmatprep.subr.mxu0 0.0
    %5287 = vmatpush1.msra.mxu0 0.0
    %5288 = vmatprep.subr.mxu0 0.0
    %5289 = vmatpush1.msra.mxu0 0.0
    %5290 = vmatprep.subr.mxu0 0.0
    %5291 = vmatpush1.msra.mxu0 0.0
    %5292 = vmatprep.subr.mxu0 0.0
    %5293 = vmatpush1.msra.mxu0 0.0
    %5294 = vmatprep.subr.mxu0 0.0
    %5295 = vmatpush1.msra.mxu0 0.0
    %5296 = vmatprep.subr.mxu0 0.0
    %5297 = vmatpush1.msra.mxu0 0.0
    %5298 = vmatprep.subr.mxu0 0.0
    %5299 = vmatpush1.msra.mxu0 0.0
    %5300 = vmatprep.subr.mxu0 0.0
    %5301 = vmatpush1.msra.mxu0 0.0
    %5302 = vmatprep.subr.mxu0 0.0
    %5303 = vmatpush1.msra.mxu0 0.0
    %5304 = vmatprep.subr.mxu0 0.0
    %5305 = vmatpush1.msra.mxu0 0.0
    %5306 = vmatprep.mubr.f32.mxu0 0.0
    %5307 = vmatmul.mubr.f32.gmra.mrb[0].mxu0 %v4677
    %v5308 = vpop.f32.mrb[0].mxu0
    %v5309 = vadd.f32 %v4591, %v5308
    %v5310 = vpop.f32.mrb[0].mxu0
    %5311 = vdwg.mxu0
    %5312 = vmatprep.subr.mxu0 0.0
    %5313 = vmatpush1.msra.mxu0 %v4447
    %5314 = vmatprep.subr.mxu0 0.0
    %5315 = vmatpush1.msra.mxu0 %v4448
    %5316 = vmatprep.subr.mxu0 0.0
    %5317 = vmatpush1.msra.mxu0 %v4449
    %5318 = vmatprep.subr.mxu0 0.0
    %5319 = vmatpush1.msra.mxu0 %v4450
    %5320 = vmatprep.subr.mxu0 0.0
    %5321 = vmatpush1.msra.mxu0 0.0
    %5322 = vmatprep.subr.mxu0 0.0
    %5323 = vmatpush1.msra.mxu0 0.0
    %5324 = vmatprep.subr.mxu0 0.0
    %5325 = vmatpush1.msra.mxu0 0.0
    %5326 = vmatprep.subr.mxu0 0.0
    %5327 = vmatpush1.msra.mxu0 0.0
    %5328 = vmatprep.subr.mxu0 0.0
    %5329 = vmatpush1.msra.mxu0 0.0
    %5330 = vmatprep.subr.mxu0 0.0
    %5331 = vmatpush1.msra.mxu0 0.0
    %5332 = vmatprep.subr.mxu0 0.0
    %5333 = vmatpush1.msra.mxu0 0.0
    %5334 = vmatprep.subr.mxu0 0.0
    %5335 = vmatpush1.msra.mxu0 0.0
    %5336 = vmatprep.subr.mxu0 0.0
    %5337 = vmatpush1.msra.mxu0 0.0
    %5338 = vmatprep.subr.mxu0 0.0
    %5339 = vmatpush1.msra.mxu0 0.0
    %5340 = vmatprep.subr.mxu0 0.0
    %5341 = vmatpush1.msra.mxu0 0.0
    %5342 = vmatprep.subr.mxu0 0.0
    %5343 = vmatpush1.msra.mxu0 0.0
    %5344 = vmatprep.subr.mxu0 0.0
    %5345 = vmatpush1.msra.mxu0 0.0
    %5346 = vmatprep.subr.mxu0 0.0
    %5347 = vmatpush1.msra.mxu0 0.0
    %5348 = vmatprep.subr.mxu0 0.0
    %5349 = vmatpush1.msra.mxu0 0.0
    %5350 = vmatprep.subr.mxu0 0.0
    %5351 = vmatpush1.msra.mxu0 0.0
    %5352 = vmatprep.subr.mxu0 0.0
    %5353 = vmatpush1.msra.mxu0 0.0
    %5354 = vmatprep.subr.mxu0 0.0
    %5355 = vmatpush1.msra.mxu0 0.0
    %5356 = vmatprep.subr.mxu0 0.0
    %5357 = vmatpush1.msra.mxu0 0.0
    %5358 = vmatprep.subr.mxu0 0.0
    %5359 = vmatpush1.msra.mxu0 0.0
    %5360 = vmatprep.subr.mxu0 0.0
    %5361 = vmatpush1.msra.mxu0 0.0
    %5362 = vmatprep.subr.mxu0 0.0
    %5363 = vmatpush1.msra.mxu0 0.0
    %5364 = vmatprep.subr.mxu0 0.0
    %5365 = vmatpush1.msra.mxu0 0.0
    %5366 = vmatprep.subr.mxu0 0.0
    %5367 = vmatpush1.msra.mxu0 0.0
    %5368 = vmatprep.subr.mxu0 0.0
    %5369 = vmatpush1.msra.mxu0 0.0
    %5370 = vmatprep.subr.mxu0 0.0
    %5371 = vmatpush1.msra.mxu0 0.0
    %5372 = vmatprep.subr.mxu0 0.0
    %5373 = vmatpush1.msra.mxu0 0.0
    %5374 = vmatprep.subr.mxu0 0.0
    %5375 = vmatpush1.msra.mxu0 0.0
    %5376 = vmatprep.mubr.f32.mxu0 0.0
    %5377 = vmatmul.mubr.f32.gmra.mrb[0].mxu0 %v4750
    %v5378 = vpop.f32.mrb[0].mxu0
    %v5379 = vadd.f32 %v4595, %v5378
    %v5380 = vpop.f32.mrb[0].mxu0
    %5381 = vdwg.mxu0
    %5382 = vmatprep.subr.mxu0 0.0
    %5383 = vmatpush1.msra.mxu0 %v4451
    %5384 = vmatprep.subr.mxu0 0.0
    %5385 = vmatpush1.msra.mxu0 %v4452
    %5386 = vmatprep.subr.mxu0 0.0
    %5387 = vmatpush1.msra.mxu0 %v4453
    %5388 = vmatprep.subr.mxu0 0.0
    %5389 = vmatpush1.msra.mxu0 %v4454
    %5390 = vmatprep.subr.mxu0 0.0
    %5391 = vmatpush1.msra.mxu0 0.0
    %5392 = vmatprep.subr.mxu0 0.0
    %5393 = vmatpush1.msra.mxu0 0.0
    %5394 = vmatprep.subr.mxu0 0.0
    %5395 = vmatpush1.msra.mxu0 0.0
    %5396 = vmatprep.subr.mxu0 0.0
    %5397 = vmatpush1.msra.mxu0 0.0
    %5398 = vmatprep.subr.mxu0 0.0
    %5399 = vmatpush1.msra.mxu0 0.0
    %5400 = vmatprep.subr.mxu0 0.0
    %5401 = vmatpush1.msra.mxu0 0.0
    %5402 = vmatprep.subr.mxu0 0.0
    %5403 = vmatpush1.msra.mxu0 0.0
    %5404 = vmatprep.subr.mxu0 0.0
    %5405 = vmatpush1.msra.mxu0 0.0
    %5406 = vmatprep.subr.mxu0 0.0
    %5407 = vmatpush1.msra.mxu0 0.0
    %5408 = vmatprep.subr.mxu0 0.0
    %5409 = vmatpush1.msra.mxu0 0.0
    %5410 = vmatprep.subr.mxu0 0.0
    %5411 = vmatpush1.msra.mxu0 0.0
    %5412 = vmatprep.subr.mxu0 0.0
    %5413 = vmatpush1.msra.mxu0 0.0
    %5414 = vmatprep.subr.mxu0 0.0
    %5415 = vmatpush1.msra.mxu0 0.0
    %5416 = vmatprep.subr.mxu0 0.0
    %5417 = vmatpush1.msra.mxu0 0.0
    %5418 = vmatprep.subr.mxu0 0.0
    %5419 = vmatpush1.msra.mxu0 0.0
    %5420 = vmatprep.subr.mxu0 0.0
    %5421 = vmatpush1.msra.mxu0 0.0
    %5422 = vmatprep.subr.mxu0 0.0
    %5423 = vmatpush1.msra.mxu0 0.0
    %5424 = vmatprep.subr.mxu0 0.0
    %5425 = vmatpush1.msra.mxu0 0.0
    %5426 = vmatprep.subr.mxu0 0.0
    %5427 = vmatpush1.msra.mxu0 0.0
    %5428 = vmatprep.subr.mxu0 0.0
    %5429 = vmatpush1.msra.mxu0 0.0
    %5430 = vmatprep.subr.mxu0 0.0
    %5431 = vmatpush1.msra.mxu0 0.0
    %5432 = vmatprep.subr.mxu0 0.0
    %5433 = vmatpush1.msra.mxu0 0.0
    %5434 = vmatprep.subr.mxu0 0.0
    %5435 = vmatpush1.msra.mxu0 0.0
    %5436 = vmatprep.subr.mxu0 0.0
    %5437 = vmatpush1.msra.mxu0 0.0
    %5438 = vmatprep.subr.mxu0 0.0
    %5439 = vmatpush1.msra.mxu0 0.0
    %5440 = vmatprep.subr.mxu0 0.0
    %5441 = vmatpush1.msra.mxu0 0.0
    %5442 = vmatprep.subr.mxu0 0.0
    %5443 = vmatpush1.msra.mxu0 0.0
    %5444 = vmatprep.subr.mxu0 0.0
    %5445 = vmatpush1.msra.mxu0 0.0
    %5446 = vmatprep.mubr.f32.mxu0 0.0
    %5447 = vmatmul.mubr.f32.gmra.mrb[0].mxu0 %v4677
    %v5448 = vpop.f32.mrb[0].mxu0
    %v5449 = vadd.f32 %v4599, %v5448
    %v5450 = vpop.f32.mrb[0].mxu0
    %5451 = vdwg.mxu0
    %5452 = vmatprep.subr.mxu0 0.0
    %5453 = vmatpush1.msra.mxu0 %v4455
    %5454 = vmatprep.subr.mxu0 0.0
    %5455 = vmatpush1.msra.mxu0 %v4456
    %5456 = vmatprep.subr.mxu0 0.0
    %5457 = vmatpush1.msra.mxu0 %v4457
    %5458 = vmatprep.subr.mxu0 0.0
    %5459 = vmatpush1.msra.mxu0 %v4458
    %5460 = vmatprep.subr.mxu0 0.0
    %5461 = vmatpush1.msra.mxu0 0.0
    %5462 = vmatprep.subr.mxu0 0.0
    %5463 = vmatpush1.msra.mxu0 0.0
    %5464 = vmatprep.subr.mxu0 0.0
    %5465 = vmatpush1.msra.mxu0 0.0
    %5466 = vmatprep.subr.mxu0 0.0
    %5467 = vmatpush1.msra.mxu0 0.0
    %5468 = vmatprep.subr.mxu0 0.0
    %5469 = vmatpush1.msra.mxu0 0.0
    %5470 = vmatprep.subr.mxu0 0.0
    %5471 = vmatpush1.msra.mxu0 0.0
    %5472 = vmatprep.subr.mxu0 0.0
    %5473 = vmatpush1.msra.mxu0 0.0
    %5474 = vmatprep.subr.mxu0 0.0
    %5475 = vmatpush1.msra.mxu0 0.0
    %5476 = vmatprep.subr.mxu0 0.0
    %5477 = vmatpush1.msra.mxu0 0.0
    %5478 = vmatprep.subr.mxu0 0.0
    %5479 = vmatpush1.msra.mxu0 0.0
    %5480 = vmatprep.subr.mxu0 0.0
    %5481 = vmatpush1.msra.mxu0 0.0
    %5482 = vmatprep.subr.mxu0 0.0
    %5483 = vmatpush1.msra.mxu0 0.0
    %5484 = vmatprep.subr.mxu0 0.0
    %5485 = vmatpush1.msra.mxu0 0.0
    %5486 = vmatprep.subr.mxu0 0.0
    %5487 = vmatpush1.msra.mxu0 0.0
    %5488 = vmatprep.subr.mxu0 0.0
    %5489 = vmatpush1.msra.mxu0 0.0
    %5490 = vmatprep.subr.mxu0 0.0
    %5491 = vmatpush1.msra.mxu0 0.0
    %5492 = vmatprep.subr.mxu0 0.0
    %5493 = vmatpush1.msra.mxu0 0.0
    %5494 = vmatprep.subr.mxu0 0.0
    %5495 = vmatpush1.msra.mxu0 0.0
    %5496 = vmatprep.subr.mxu0 0.0
    %5497 = vmatpush1.msra.mxu0 0.0
    %5498 = vmatprep.subr.mxu0 0.0
    %5499 = vmatpush1.msra.mxu0 0.0
    %5500 = vmatprep.subr.mxu0 0.0
    %5501 = vmatpush1.msra.mxu0 0.0
    %5502 = vmatprep.subr.mxu0 0.0
    %5503 = vmatpush1.msra.mxu0 0.0
    %5504 = vmatprep.subr.mxu0 0.0
    %5505 = vmatpush1.msra.mxu0 0.0
    %5506 = vmatprep.subr.mxu0 0.0
    %5507 = vmatpush1.msra.mxu0 0.0
    %5508 = vmatprep.subr.mxu0 0.0
    %5509 = vmatpush1.msra.mxu0 0.0
    %5510 = vmatprep.subr.mxu0 0.0
    %5511 = vmatpush1.msra.mxu0 0.0
    %5512 = vmatprep.subr.mxu0 0.0
    %5513 = vmatpush1.msra.mxu0 0.0
    %5514 = vmatprep.subr.mxu0 0.0
    %5515 = vmatpush1.msra.mxu0 0.0
    %5516 = vmatprep.mubr.f32.mxu0 0.0
    %5517 = vmatmul.mubr.f32.gmra.mrb[0].mxu0 %v4750
    %v5518 = vpop.f32.mrb[0].mxu0
    %v5519 = vadd.f32 %v4603, %v5518
    %v5520 = vpop.f32.mrb[0].mxu0
    %5521 = vdwg.mxu0
    %5522 = vmatprep.subr.mxu0 0.0
    %5523 = vmatpush1.msra.mxu0 %v4459
    %5524 = vmatprep.subr.mxu0 0.0
    %5525 = vmatpush1.msra.mxu0 %v4460
    %5526 = vmatprep.subr.mxu0 0.0
    %5527 = vmatpush1.msra.mxu0 %v4461
    %5528 = vmatprep.subr.mxu0 0.0
    %5529 = vmatpush1.msra.mxu0 %v4462
    %5530 = vmatprep.subr.mxu0 0.0
    %5531 = vmatpush1.msra.mxu0 0.0
    %5532 = vmatprep.subr.mxu0 0.0
    %5533 = vmatpush1.msra.mxu0 0.0
    %5534 = vmatprep.subr.mxu0 0.0
    %5535 = vmatpush1.msra.mxu0 0.0
    %5536 = vmatprep.subr.mxu0 0.0
    %5537 = vmatpush1.msra.mxu0 0.0
    %5538 = vmatprep.subr.mxu0 0.0
    %5539 = vmatpush1.msra.mxu0 0.0
    %5540 = vmatprep.subr.mxu0 0.0
    %5541 = vmatpush1.msra.mxu0 0.0
    %5542 = vmatprep.subr.mxu0 0.0
    %5543 = vmatpush1.msra.mxu0 0.0
    %5544 = vmatprep.subr.mxu0 0.0
    %5545 = vmatpush1.msra.mxu0 0.0
    %5546 = vmatprep.subr.mxu0 0.0
    %5547 = vmatpush1.msra.mxu0 0.0
    %5548 = vmatprep.subr.mxu0 0.0
    %5549 = vmatpush1.msra.mxu0 0.0
    %5550 = vmatprep.subr.mxu0 0.0
    %5551 = vmatpush1.msra.mxu0 0.0
    %5552 = vmatprep.subr.mxu0 0.0
    %5553 = vmatpush1.msra.mxu0 0.0
    %5554 = vmatprep.subr.mxu0 0.0
    %5555 = vmatpush1.msra.mxu0 0.0
    %5556 = vmatprep.subr.mxu0 0.0
    %5557 = vmatpush1.msra.mxu0 0.0
    %5558 = vmatprep.subr.mxu0 0.0
    %5559 = vmatpush1.msra.mxu0 0.0
    %5560 = vmatprep.subr.mxu0 0.0
    %5561 = vmatpush1.msra.mxu0 0.0
    %5562 = vmatprep.subr.mxu0 0.0
    %5563 = vmatpush1.msra.mxu0 0.0
    %5564 = vmatprep.subr.mxu0 0.0
    %5565 = vmatpush1.msra.mxu0 0.0
    %5566 = vmatprep.subr.mxu0 0.0
    %5567 = vmatpush1.msra.mxu0 0.0
    %5568 = vmatprep.subr.mxu0 0.0
    %5569 = vmatpush1.msra.mxu0 0.0
    %5570 = vmatprep.subr.mxu0 0.0
    %5571 = vmatpush1.msra.mxu0 0.0
    %5572 = vmatprep.subr.mxu0 0.0
    %5573 = vmatpush1.msra.mxu0 0.0
    %5574 = vmatprep.subr.mxu0 0.0
    %5575 = vmatpush1.msra.mxu0 0.0
    %5576 = vmatprep.subr.mxu0 0.0
    %5577 = vmatpush1.msra.mxu0 0.0
    %5578 = vmatprep.subr.mxu0 0.0
    %5579 = vmatpush1.msra.mxu0 0.0
    %5580 = vmatprep.subr.mxu0 0.0
    %5581 = vmatpush1.msra.mxu0 0.0
    %5582 = vmatprep.subr.mxu0 0.0
    %5583 = vmatpush1.msra.mxu0 0.0
    %5584 = vmatprep.subr.mxu0 0.0
    %5585 = vmatpush1.msra.mxu0 0.0
    %5586 = vmatprep.mubr.f32.mxu0 0.0
    %5587 = vmatmul.mubr.f32.gmra.mrb[0].mxu0 %v4677
    %v5588 = vpop.f32.mrb[0].mxu0
    %v5589 = vadd.f32 %v4607, %v5588
    %v5590 = vpop.f32.mrb[0].mxu0
    %5591 = vdwg.mxu0
    %5592 = vmatprep.subr.mxu0 0.0
    %5593 = vmatpush1.msra.mxu0 %v4463
    %5594 = vmatprep.subr.mxu0 0.0
    %5595 = vmatpush1.msra.mxu0 %v4464
    %5596 = vmatprep.subr.mxu0 0.0
    %5597 = vmatpush1.msra.mxu0 %v4465
    %5598 = vmatprep.subr.mxu0 0.0
    %5599 = vmatpush1.msra.mxu0 %v4466
    %5600 = vmatprep.subr.mxu0 0.0
    %5601 = vmatpush1.msra.mxu0 0.0
    %5602 = vmatprep.subr.mxu0 0.0
    %5603 = vmatpush1.msra.mxu0 0.0
    %5604 = vmatprep.subr.mxu0 0.0
    %5605 = vmatpush1.msra.mxu0 0.0
    %5606 = vmatprep.subr.mxu0 0.0
    %5607 = vmatpush1.msra.mxu0 0.0
    %5608 = vmatprep.subr.mxu0 0.0
    %5609 = vmatpush1.msra.mxu0 0.0
    %5610 = vmatprep.subr.mxu0 0.0
    %5611 = vmatpush1.msra.mxu0 0.0
    %5612 = vmatprep.subr.mxu0 0.0
    %5613 = vmatpush1.msra.mxu0 0.0
    %5614 = vmatprep.subr.mxu0 0.0
    %5615 = vmatpush1.msra.mxu0 0.0
    %5616 = vmatprep.subr.mxu0 0.0
    %5617 = vmatpush1.msra.mxu0 0.0
    %5618 = vmatprep.subr.mxu0 0.0
    %5619 = vmatpush1.msra.mxu0 0.0
    %5620 = vmatprep.subr.mxu0 0.0
    %5621 = vmatpush1.msra.mxu0 0.0
    %5622 = vmatprep.subr.mxu0 0.0
    %5623 = vmatpush1.msra.mxu0 0.0
    %5624 = vmatprep.subr.mxu0 0.0
    %5625 = vmatpush1.msra.mxu0 0.0
    %5626 = vmatprep.subr.mxu0 0.0
    %5627 = vmatpush1.msra.mxu0 0.0
    %5628 = vmatprep.subr.mxu0 0.0
    %5629 = vmatpush1.msra.mxu0 0.0
    %5630 = vmatprep.subr.mxu0 0.0
    %5631 = vmatpush1.msra.mxu0 0.0
    %5632 = vmatprep.subr.mxu0 0.0
    %5633 = vmatpush1.msra.mxu0 0.0
    %5634 = vmatprep.subr.mxu0 0.0
    %5635 = vmatpush1.msra.mxu0 0.0
    %5636 = vmatprep.subr.mxu0 0.0
    %5637 = vmatpush1.msra.mxu0 0.0
    %5638 = vmatprep.subr.mxu0 0.0
    %5639 = vmatpush1.msra.mxu0 0.0
    %5640 = vmatprep.subr.mxu0 0.0
    %5641 = vmatpush1.msra.mxu0 0.0
    %5642 = vmatprep.subr.mxu0 0.0
    %5643 = vmatpush1.msra.mxu0 0.0
    %5644 = vmatprep.subr.mxu0 0.0
    %5645 = vmatpush1.msra.mxu0 0.0
    %5646 = vmatprep.subr.mxu0 0.0
    %5647 = vmatpush1.msra.mxu0 0.0
    %5648 = vmatprep.subr.mxu0 0.0
    %5649 = vmatpush1.msra.mxu0 0.0
    %5650 = vmatprep.subr.mxu0 0.0
    %5651 = vmatpush1.msra.mxu0 0.0
    %5652 = vmatprep.subr.mxu0 0.0
    %5653 = vmatpush1.msra.mxu0 0.0
    %5654 = vmatprep.subr.mxu0 0.0
    %5655 = vmatpush1.msra.mxu0 0.0
    %5656 = vmatprep.mubr.f32.mxu0 0.0
    %5657 = vmatmul.mubr.f32.gmra.mrb[0].mxu0 %v4750
    %v5658 = vpop.f32.mrb[0].mxu0
    %v5659 = vadd.f32 %v4611, %v5658
    %v5660 = vpop.f32.mrb[0].mxu0
    %5661 = vdwg.mxu0
    %5662 = vmatprep.subr.mxu0 0.0
    %5663 = vmatpush1.msra.mxu0 %v4467
    %5664 = vmatprep.subr.mxu0 0.0
    %5665 = vmatpush1.msra.mxu0 %v4468
    %5666 = vmatprep.subr.mxu0 0.0
    %5667 = vmatpush1.msra.mxu0 %v4469
    %5668 = vmatprep.subr.mxu0 0.0
    %5669 = vmatpush1.msra.mxu0 %v4470
    %5670 = vmatprep.subr.mxu0 0.0
    %5671 = vmatpush1.msra.mxu0 0.0
    %5672 = vmatprep.subr.mxu0 0.0
    %5673 = vmatpush1.msra.mxu0 0.0
    %5674 = vmatprep.subr.mxu0 0.0
    %5675 = vmatpush1.msra.mxu0 0.0
    %5676 = vmatprep.subr.mxu0 0.0
    %5677 = vmatpush1.msra.mxu0 0.0
    %5678 = vmatprep.subr.mxu0 0.0
    %5679 = vmatpush1.msra.mxu0 0.0
    %5680 = vmatprep.subr.mxu0 0.0
    %5681 = vmatpush1.msra.mxu0 0.0
    %5682 = vmatprep.subr.mxu0 0.0
    %5683 = vmatpush1.msra.mxu0 0.0
    %5684 = vmatprep.subr.mxu0 0.0
    %5685 = vmatpush1.msra.mxu0 0.0
    %5686 = vmatprep.subr.mxu0 0.0
    %5687 = vmatpush1.msra.mxu0 0.0
    %5688 = vmatprep.subr.mxu0 0.0
    %5689 = vmatpush1.msra.mxu0 0.0
    %5690 = vmatprep.subr.mxu0 0.0
    %5691 = vmatpush1.msra.mxu0 0.0
    %5692 = vmatprep.subr.mxu0 0.0
    %5693 = vmatpush1.msra.mxu0 0.0
    %5694 = vmatprep.subr.mxu0 0.0
    %5695 = vmatpush1.msra.mxu0 0.0
    %5696 = vmatprep.subr.mxu0 0.0
    %5697 = vmatpush1.msra.mxu0 0.0
    %5698 = vmatprep.subr.mxu0 0.0
    %5699 = vmatpush1.msra.mxu0 0.0
    %5700 = vmatprep.subr.mxu0 0.0
    %5701 = vmatpush1.msra.mxu0 0.0
    %5702 = vmatprep.subr.mxu0 0.0
    %5703 = vmatpush1.msra.mxu0 0.0
    %5704 = vmatprep.subr.mxu0 0.0
    %5705 = vmatpush1.msra.mxu0 0.0
    %5706 = vmatprep.subr.mxu0 0.0
    %5707 = vmatpush1.msra.mxu0 0.0
    %5708 = vmatprep.subr.mxu0 0.0
    %5709 = vmatpush1.msra.mxu0 0.0
    %5710 = vmatprep.subr.mxu0 0.0
    %5711 = vmatpush1.msra.mxu0 0.0
    %5712 = vmatprep.subr.mxu0 0.0
    %5713 = vmatpush1.msra.mxu0 0.0
    %5714 = vmatprep.subr.mxu0 0.0
    %5715 = vmatpush1.msra.mxu0 0.0
    %5716 = vmatprep.subr.mxu0 0.0
    %5717 = vmatpush1.msra.mxu0 0.0
    %5718 = vmatprep.subr.mxu0 0.0
    %5719 = vmatpush1.msra.mxu0 0.0
    %5720 = vmatprep.subr.mxu0 0.0
    %5721 = vmatpush1.msra.mxu0 0.0
    %5722 = vmatprep.subr.mxu0 0.0
    %5723 = vmatpush1.msra.mxu0 0.0
    %5724 = vmatprep.subr.mxu0 0.0
    %5725 = vmatpush1.msra.mxu0 0.0
    %5726 = vmatprep.mubr.f32.mxu0 0.0
    %5727 = vmatmul.mubr.f32.gmra.mrb[0].mxu0 %v4677
    %v5728 = vpop.f32.mrb[0].mxu0
    %v5729 = vadd.f32 %v4615, %v5728
    %v5730 = vpop.f32.mrb[0].mxu0
    %5731 = vdwg.mxu0
    %5732 = vmatprep.subr.mxu0 0.0
    %5733 = vmatpush1.msra.mxu0 %v4471
    %5734 = vmatprep.subr.mxu0 0.0
    %5735 = vmatpush1.msra.mxu0 %v4472
    %5736 = vmatprep.subr.mxu0 0.0
    %5737 = vmatpush1.msra.mxu0 %v4473
    %5738 = vmatprep.subr.mxu0 0.0
    %5739 = vmatpush1.msra.mxu0 %v4474
    %5740 = vmatprep.subr.mxu0 0.0
    %5741 = vmatpush1.msra.mxu0 0.0
    %5742 = vmatprep.subr.mxu0 0.0
    %5743 = vmatpush1.msra.mxu0 0.0
    %5744 = vmatprep.subr.mxu0 0.0
    %5745 = vmatpush1.msra.mxu0 0.0
    %5746 = vmatprep.subr.mxu0 0.0
    %5747 = vmatpush1.msra.mxu0 0.0
    %5748 = vmatprep.subr.mxu0 0.0
    %5749 = vmatpush1.msra.mxu0 0.0
    %5750 = vmatprep.subr.mxu0 0.0
    %5751 = vmatpush1.msra.mxu0 0.0
    %5752 = vmatprep.subr.mxu0 0.0
    %5753 = vmatpush1.msra.mxu0 0.0
    %5754 = vmatprep.subr.mxu0 0.0
    %5755 = vmatpush1.msra.mxu0 0.0
    %5756 = vmatprep.subr.mxu0 0.0
    %5757 = vmatpush1.msra.mxu0 0.0
    %5758 = vmatprep.subr.mxu0 0.0
    %5759 = vmatpush1.msra.mxu0 0.0
    %5760 = vmatprep.subr.mxu0 0.0
    %5761 = vmatpush1.msra.mxu0 0.0
    %5762 = vmatprep.subr.mxu0 0.0
    %5763 = vmatpush1.msra.mxu0 0.0
    %5764 = vmatprep.subr.mxu0 0.0
    %5765 = vmatpush1.msra.mxu0 0.0
    %5766 = vmatprep.subr.mxu0 0.0
    %5767 = vmatpush1.msra.mxu0 0.0
    %5768 = vmatprep.subr.mxu0 0.0
    %5769 = vmatpush1.msra.mxu0 0.0
    %5770 = vmatprep.subr.mxu0 0.0
    %5771 = vmatpush1.msra.mxu0 0.0
    %5772 = vmatprep.subr.mxu0 0.0
    %5773 = vmatpush1.msra.mxu0 0.0
    %5774 = vmatprep.subr.mxu0 0.0
    %5775 = vmatpush1.msra.mxu0 0.0
    %5776 = vmatprep.subr.mxu0 0.0
    %5777 = vmatpush1.msra.mxu0 0.0
    %5778 = vmatprep.subr.mxu0 0.0
    %5779 = vmatpush1.msra.mxu0 0.0
    %5780 = vmatprep.subr.mxu0 0.0
    %5781 = vmatpush1.msra.mxu0 0.0
    %5782 = vmatprep.subr.mxu0 0.0
    %5783 = vmatpush1.msra.mxu0 0.0
    %5784 = vmatprep.subr.mxu0 0.0
    %5785 = vmatpush1.msra.mxu0 0.0
    %5786 = vmatprep.subr.mxu0 0.0
    %5787 = vmatpush1.msra.mxu0 0.0
    %5788 = vmatprep.subr.mxu0 0.0
    %5789 = vmatpush1.msra.mxu0 0.0
    %5790 = vmatprep.subr.mxu0 0.0
    %5791 = vmatpush1.msra.mxu0 0.0
    %5792 = vmatprep.subr.mxu0 0.0
    %5793 = vmatpush1.msra.mxu0 0.0
    %5794 = vmatprep.subr.mxu0 0.0
    %5795 = vmatpush1.msra.mxu0 0.0
    %5796 = vmatprep.mubr.f32.mxu0 0.0
    %5797 = vmatmul.mubr.f32.gmra.mrb[0].mxu0 %v4750
    %v5798 = vpop.f32.mrb[0].mxu0
    %v5799 = vadd.f32 %v4619, %v5798
    %v5800 = vpop.f32.mrb[0].mxu0
    %5801 = vdwg.mxu0
    %5802 = vmatprep.subr.mxu0 0.0
    %5803 = vmatpush1.msra.mxu0 %v4475
    %5804 = vmatprep.subr.mxu0 0.0
    %5805 = vmatpush1.msra.mxu0 %v4476
    %5806 = vmatprep.subr.mxu0 0.0
    %5807 = vmatpush1.msra.mxu0 %v4477
    %5808 = vmatprep.subr.mxu0 0.0
    %5809 = vmatpush1.msra.mxu0 %v4478
    %5810 = vmatprep.subr.mxu0 0.0
    %5811 = vmatpush1.msra.mxu0 0.0
    %5812 = vmatprep.subr.mxu0 0.0
    %5813 = vmatpush1.msra.mxu0 0.0
    %5814 = vmatprep.subr.mxu0 0.0
    %5815 = vmatpush1.msra.mxu0 0.0
    %5816 = vmatprep.subr.mxu0 0.0
    %5817 = vmatpush1.msra.mxu0 0.0
    %5818 = vmatprep.subr.mxu0 0.0
    %5819 = vmatpush1.msra.mxu0 0.0
    %5820 = vmatprep.subr.mxu0 0.0
    %5821 = vmatpush1.msra.mxu0 0.0
    %5822 = vmatprep.subr.mxu0 0.0
    %5823 = vmatpush1.msra.mxu0 0.0
    %5824 = vmatprep.subr.mxu0 0.0
    %5825 = vmatpush1.msra.mxu0 0.0
    %5826 = vmatprep.subr.mxu0 0.0
    %5827 = vmatpush1.msra.mxu0 0.0
    %5828 = vmatprep.subr.mxu0 0.0
    %5829 = vmatpush1.msra.mxu0 0.0
    %5830 = vmatprep.subr.mxu0 0.0
    %5831 = vmatpush1.msra.mxu0 0.0
    %5832 = vmatprep.subr.mxu0 0.0
    %5833 = vmatpush1.msra.mxu0 0.0
    %5834 = vmatprep.subr.mxu0 0.0
    %5835 = vmatpush1.msra.mxu0 0.0
    %5836 = vmatprep.subr.mxu0 0.0
    %5837 = vmatpush1.msra.mxu0 0.0
    %5838 = vmatprep.subr.mxu0 0.0
    %5839 = vmatpush1.msra.mxu0 0.0
    %5840 = vmatprep.subr.mxu0 0.0
    %5841 = vmatpush1.msra.mxu0 0.0
    %5842 = vmatprep.subr.mxu0 0.0
    %5843 = vmatpush1.msra.mxu0 0.0
    %5844 = vmatprep.subr.mxu0 0.0
    %5845 = vmatpush1.msra.mxu0 0.0
    %5846 = vmatprep.subr.mxu0 0.0
    %5847 = vmatpush1.msra.mxu0 0.0
    %5848 = vmatprep.subr.mxu0 0.0
    %5849 = vmatpush1.msra.mxu0 0.0
    %5850 = vmatprep.subr.mxu0 0.0
    %5851 = vmatpush1.msra.mxu0 0.0
    %5852 = vmatprep.subr.mxu0 0.0
    %5853 = vmatpush1.msra.mxu0 0.0
    %5854 = vmatprep.subr.mxu0 0.0
    %5855 = vmatpush1.msra.mxu0 0.0
    %5856 = vmatprep.subr.mxu0 0.0
    %5857 = vmatpush1.msra.mxu0 0.0
    %5858 = vmatprep.subr.mxu0 0.0
    %5859 = vmatpush1.msra.mxu0 0.0
    %5860 = vmatprep.subr.mxu0 0.0
    %5861 = vmatpush1.msra.mxu0 0.0
    %5862 = vmatprep.subr.mxu0 0.0
    %5863 = vmatpush1.msra.mxu0 0.0
    %5864 = vmatprep.subr.mxu0 0.0
    %5865 = vmatpush1.msra.mxu0 0.0
    %5866 = vmatprep.mubr.f32.mxu0 0.0
    %5867 = vmatmul.mubr.f32.gmra.mrb[0].mxu0 %v4677
    %v5868 = vpop.f32.mrb[0].mxu0
    %v5869 = vadd.f32 %v4623, %v5868
    %v5870 = vpop.f32.mrb[0].mxu0
    %5871 = vdwg.mxu0
    %5872 = vmatprep.subr.mxu0 0.0
    %5873 = vmatpush1.msra.mxu0 %v4479
    %5874 = vmatprep.subr.mxu0 0.0
    %5875 = vmatpush1.msra.mxu0 %v4480
    %5876 = vmatprep.subr.mxu0 0.0
    %5877 = vmatpush1.msra.mxu0 %v4481
    %5878 = vmatprep.subr.mxu0 0.0
    %5879 = vmatpush1.msra.mxu0 %v4482
    %5880 = vmatprep.subr.mxu0 0.0
    %5881 = vmatpush1.msra.mxu0 0.0
    %5882 = vmatprep.subr.mxu0 0.0
    %5883 = vmatpush1.msra.mxu0 0.0
    %5884 = vmatprep.subr.mxu0 0.0
    %5885 = vmatpush1.msra.mxu0 0.0
    %5886 = vmatprep.subr.mxu0 0.0
    %5887 = vmatpush1.msra.mxu0 0.0
    %5888 = vmatprep.subr.mxu0 0.0
    %5889 = vmatpush1.msra.mxu0 0.0
    %5890 = vmatprep.subr.mxu0 0.0
    %5891 = vmatpush1.msra.mxu0 0.0
    %5892 = vmatprep.subr.mxu0 0.0
    %5893 = vmatpush1.msra.mxu0 0.0
    %5894 = vmatprep.subr.mxu0 0.0
    %5895 = vmatpush1.msra.mxu0 0.0
    %5896 = vmatprep.subr.mxu0 0.0
    %5897 = vmatpush1.msra.mxu0 0.0
    %5898 = vmatprep.subr.mxu0 0.0
    %5899 = vmatpush1.msra.mxu0 0.0
    %5900 = vmatprep.subr.mxu0 0.0
    %5901 = vmatpush1.msra.mxu0 0.0
    %5902 = vmatprep.subr.mxu0 0.0
    %5903 = vmatpush1.msra.mxu0 0.0
    %5904 = vmatprep.subr.mxu0 0.0
    %5905 = vmatpush1.msra.mxu0 0.0
    %5906 = vmatprep.subr.mxu0 0.0
    %5907 = vmatpush1.msra.mxu0 0.0
    %5908 = vmatprep.subr.mxu0 0.0
    %5909 = vmatpush1.msra.mxu0 0.0
    %5910 = vmatprep.subr.mxu0 0.0
    %5911 = vmatpush1.msra.mxu0 0.0
    %5912 = vmatprep.subr.mxu0 0.0
    %5913 = vmatpush1.msra.mxu0 0.0
    %5914 = vmatprep.subr.mxu0 0.0
    %5915 = vmatpush1.msra.mxu0 0.0
    %5916 = vmatprep.subr.mxu0 0.0
    %5917 = vmatpush1.msra.mxu0 0.0
    %5918 = vmatprep.subr.mxu0 0.0
    %5919 = vmatpush1.msra.mxu0 0.0
    %5920 = vmatprep.subr.mxu0 0.0
    %5921 = vmatpush1.msra.mxu0 0.0
    %5922 = vmatprep.subr.mxu0 0.0
    %5923 = vmatpush1.msra.mxu0 0.0
    %5924 = vmatprep.subr.mxu0 0.0
    %5925 = vmatpush1.msra.mxu0 0.0
    %5926 = vmatprep.subr.mxu0 0.0
    %5927 = vmatpush1.msra.mxu0 0.0
    %5928 = vmatprep.subr.mxu0 0.0
    %5929 = vmatpush1.msra.mxu0 0.0
    %5930 = vmatprep.subr.mxu0 0.0
    %5931 = vmatpush1.msra.mxu0 0.0
    %5932 = vmatprep.subr.mxu0 0.0
    %5933 = vmatpush1.msra.mxu0 0.0
    %5934 = vmatprep.subr.mxu0 0.0
    %5935 = vmatpush1.msra.mxu0 0.0
    %5936 = vmatprep.mubr.f32.mxu0 0.0
    %5937 = vmatmul.mubr.f32.gmra.mrb[0].mxu0 %v4750
    %v5938 = vpop.f32.mrb[0].mxu0
    %v5939 = vadd.f32 %v4627, %v5938
    %v5940 = vpop.f32.mrb[0].mxu0
    %5941 = vdwg.mxu0
    %5942 = vmatprep.subr.mxu0 0.0
    %5943 = vmatpush1.msra.mxu0 %v4483
    %5944 = vmatprep.subr.mxu0 0.0
    %5945 = vmatpush1.msra.mxu0 %v4484
    %5946 = vmatprep.subr.mxu0 0.0
    %5947 = vmatpush1.msra.mxu0 %v4485
    %5948 = vmatprep.subr.mxu0 0.0
    %5949 = vmatpush1.msra.mxu0 %v4486
    %5950 = vmatprep.subr.mxu0 0.0
    %5951 = vmatpush1.msra.mxu0 0.0
    %5952 = vmatprep.subr.mxu0 0.0
    %5953 = vmatpush1.msra.mxu0 0.0
    %5954 = vmatprep.subr.mxu0 0.0
    %5955 = vmatpush1.msra.mxu0 0.0
    %5956 = vmatprep.subr.mxu0 0.0
    %5957 = vmatpush1.msra.mxu0 0.0
    %5958 = vmatprep.subr.mxu0 0.0
    %5959 = vmatpush1.msra.mxu0 0.0
    %5960 = vmatprep.subr.mxu0 0.0
    %5961 = vmatpush1.msra.mxu0 0.0
    %5962 = vmatprep.subr.mxu0 0.0
    %5963 = vmatpush1.msra.mxu0 0.0
    %5964 = vmatprep.subr.mxu0 0.0
    %5965 = vmatpush1.msra.mxu0 0.0
    %5966 = vmatprep.subr.mxu0 0.0
    %5967 = vmatpush1.msra.mxu0 0.0
    %5968 = vmatprep.subr.mxu0 0.0
    %5969 = vmatpush1.msra.mxu0 0.0
    %5970 = vmatprep.subr.mxu0 0.0
    %5971 = vmatpush1.msra.mxu0 0.0
    %5972 = vmatprep.subr.mxu0 0.0
    %5973 = vmatpush1.msra.mxu0 0.0
    %5974 = vmatprep.subr.mxu0 0.0
    %5975 = vmatpush1.msra.mxu0 0.0
    %5976 = vmatprep.subr.mxu0 0.0
    %5977 = vmatpush1.msra.mxu0 0.0
    %5978 = vmatprep.subr.mxu0 0.0
    %5979 = vmatpush1.msra.mxu0 0.0
    %5980 = vmatprep.subr.mxu0 0.0
    %5981 = vmatpush1.msra.mxu0 0.0
    %5982 = vmatprep.subr.mxu0 0.0
    %5983 = vmatpush1.msra.mxu0 0.0
    %5984 = vmatprep.subr.mxu0 0.0
    %5985 = vmatpush1.msra.mxu0 0.0
    %5986 = vmatprep.subr.mxu0 0.0
    %5987 = vmatpush1.msra.mxu0 0.0
    %5988 = vmatprep.subr.mxu0 0.0
    %5989 = vmatpush1.msra.mxu0 0.0
    %5990 = vmatprep.subr.mxu0 0.0
    %5991 = vmatpush1.msra.mxu0 0.0
    %5992 = vmatprep.subr.mxu0 0.0
    %5993 = vmatpush1.msra.mxu0 0.0
    %5994 = vmatprep.subr.mxu0 0.0
    %5995 = vmatpush1.msra.mxu0 0.0
    %5996 = vmatprep.subr.mxu0 0.0
    %5997 = vmatpush1.msra.mxu0 0.0
    %5998 = vmatprep.subr.mxu0 0.0
    %5999 = vmatpush1.msra.mxu0 0.0
    %6000 = vmatprep.subr.mxu0 0.0
    %6001 = vmatpush1.msra.mxu0 0.0
    %6002 = vmatprep.subr.mxu0 0.0
    %6003 = vmatpush1.msra.mxu0 0.0
    %6004 = vmatprep.subr.mxu0 0.0
    %6005 = vmatpush1.msra.mxu0 0.0
    %6006 = vmatprep.mubr.f32.mxu0 0.0
    %6007 = vmatmul.mubr.f32.gmra.mrb[0].mxu0 %v4677
    %v6008 = vpop.f32.mrb[0].mxu0
    %v6009 = vadd.f32 %v4631, %v6008
    %v6010 = vpop.f32.mrb[0].mxu0
    %6011 = vdwg.mxu0
    %6012 = vmatprep.subr.mxu0 0.0
    %6013 = vmatpush1.msra.mxu0 %v4487
    %6014 = vmatprep.subr.mxu0 0.0
    %6015 = vmatpush1.msra.mxu0 %v4488
    %6016 = vmatprep.subr.mxu0 0.0
    %6017 = vmatpush1.msra.mxu0 %v4489
    %6018 = vmatprep.subr.mxu0 0.0
    %6019 = vmatpush1.msra.mxu0 %v4490
    %6020 = vmatprep.subr.mxu0 0.0
    %6021 = vmatpush1.msra.mxu0 0.0
    %6022 = vmatprep.subr.mxu0 0.0
    %6023 = vmatpush1.msra.mxu0 0.0
    %6024 = vmatprep.subr.mxu0 0.0
    %6025 = vmatpush1.msra.mxu0 0.0
    %6026 = vmatprep.subr.mxu0 0.0
    %6027 = vmatpush1.msra.mxu0 0.0
    %6028 = vmatprep.subr.mxu0 0.0
    %6029 = vmatpush1.msra.mxu0 0.0
    %6030 = vmatprep.subr.mxu0 0.0
    %6031 = vmatpush1.msra.mxu0 0.0
    %6032 = vmatprep.subr.mxu0 0.0
    %6033 = vmatpush1.msra.mxu0 0.0
    %6034 = vmatprep.subr.mxu0 0.0
    %6035 = vmatpush1.msra.mxu0 0.0
    %6036 = vmatprep.subr.mxu0 0.0
    %6037 = vmatpush1.msra.mxu0 0.0
    %6038 = vmatprep.subr.mxu0 0.0
    %6039 = vmatpush1.msra.mxu0 0.0
    %6040 = vmatprep.subr.mxu0 0.0
    %6041 = vmatpush1.msra.mxu0 0.0
    %6042 = vmatprep.subr.mxu0 0.0
    %6043 = vmatpush1.msra.mxu0 0.0
    %6044 = vmatprep.subr.mxu0 0.0
    %6045 = vmatpush1.msra.mxu0 0.0
    %6046 = vmatprep.subr.mxu0 0.0
    %6047 = vmatpush1.msra.mxu0 0.0
    %6048 = vmatprep.subr.mxu0 0.0
    %6049 = vmatpush1.msra.mxu0 0.0
    %6050 = vmatprep.subr.mxu0 0.0
    %6051 = vmatpush1.msra.mxu0 0.0
    %6052 = vmatprep.subr.mxu0 0.0
    %6053 = vmatpush1.msra.mxu0 0.0
    %6054 = vmatprep.subr.mxu0 0.0
    %6055 = vmatpush1.msra.mxu0 0.0
    %6056 = vmatprep.subr.mxu0 0.0
    %6057 = vmatpush1.msra.mxu0 0.0
    %6058 = vmatprep.subr.mxu0 0.0
    %6059 = vmatpush1.msra.mxu0 0.0
    %6060 = vmatprep.subr.mxu0 0.0
    %6061 = vmatpush1.msra.mxu0 0.0
    %6062 = vmatprep.subr.mxu0 0.0
    %6063 = vmatpush1.msra.mxu0 0.0
    %6064 = vmatprep.subr.mxu0 0.0
    %6065 = vmatpush1.msra.mxu0 0.0
    %6066 = vmatprep.subr.mxu0 0.0
    %6067 = vmatpush1.msra.mxu0 0.0
    %6068 = vmatprep.subr.mxu0 0.0
    %6069 = vmatpush1.msra.mxu0 0.0
    %6070 = vmatprep.subr.mxu0 0.0
    %6071 = vmatpush1.msra.mxu0 0.0
    %6072 = vmatprep.subr.mxu0 0.0
    %6073 = vmatpush1.msra.mxu0 0.0
    %6074 = vmatprep.subr.mxu0 0.0
    %6075 = vmatpush1.msra.mxu0 0.0
    %6076 = vmatprep.mubr.f32.mxu0 0.0
    %6077 = vmatmul.mubr.f32.gmra.mrb[0].mxu0 %v4750
    %v6078 = vpop.f32.mrb[0].mxu0
    %v6079 = vadd.f32 %v4635, %v6078
    %v6080 = vpop.f32.mrb[0].mxu0
    %6081 = vdwg.mxu0
    %6082 = vmatprep.subr.mxu0 0.0
    %6083 = vmatpush1.msra.mxu0 %v4491
    %6084 = vmatprep.subr.mxu0 0.0
    %6085 = vmatpush1.msra.mxu0 %v4492
    %6086 = vmatprep.subr.mxu0 0.0
    %6087 = vmatpush1.msra.mxu0 %v4493
    %6088 = vmatprep.subr.mxu0 0.0
    %6089 = vmatpush1.msra.mxu0 %v4494
    %6090 = vmatprep.subr.mxu0 0.0
    %6091 = vmatpush1.msra.mxu0 0.0
    %6092 = vmatprep.subr.mxu0 0.0
    %6093 = vmatpush1.msra.mxu0 0.0
    %6094 = vmatprep.subr.mxu0 0.0
    %6095 = vmatpush1.msra.mxu0 0.0
    %6096 = vmatprep.subr.mxu0 0.0
    %6097 = vmatpush1.msra.mxu0 0.0
    %6098 = vmatprep.subr.mxu0 0.0
    %6099 = vmatpush1.msra.mxu0 0.0
    %6100 = vmatprep.subr.mxu0 0.0
    %6101 = vmatpush1.msra.mxu0 0.0
    %6102 = vmatprep.subr.mxu0 0.0
    %6103 = vmatpush1.msra.mxu0 0.0
    %6104 = vmatprep.subr.mxu0 0.0
    %6105 = vmatpush1.msra.mxu0 0.0
    %6106 = vmatprep.subr.mxu0 0.0
    %6107 = vmatpush1.msra.mxu0 0.0
    %6108 = vmatprep.subr.mxu0 0.0
    %6109 = vmatpush1.msra.mxu0 0.0
    %6110 = vmatprep.subr.mxu0 0.0
    %6111 = vmatpush1.msra.mxu0 0.0
    %6112 = vmatprep.subr.mxu0 0.0
    %6113 = vmatpush1.msra.mxu0 0.0
    %6114 = vmatprep.subr.mxu0 0.0
    %6115 = vmatpush1.msra.mxu0 0.0
    %6116 = vmatprep.subr.mxu0 0.0
    %6117 = vmatpush1.msra.mxu0 0.0
    %6118 = vmatprep.subr.mxu0 0.0
    %6119 = vmatpush1.msra.mxu0 0.0
    %6120 = vmatprep.subr.mxu0 0.0
    %6121 = vmatpush1.msra.mxu0 0.0
    %6122 = vmatprep.subr.mxu0 0.0
    %6123 = vmatpush1.msra.mxu0 0.0
    %6124 = vmatprep.subr.mxu0 0.0
    %6125 = vmatpush1.msra.mxu0 0.0
    %6126 = vmatprep.subr.mxu0 0.0
    %6127 = vmatpush1.msra.mxu0 0.0
    %6128 = vmatprep.subr.mxu0 0.0
    %6129 = vmatpush1.msra.mxu0 0.0
    %6130 = vmatprep.subr.mxu0 0.0
    %6131 = vmatpush1.msra.mxu0 0.0
    %6132 = vmatprep.subr.mxu0 0.0
    %6133 = vmatpush1.msra.mxu0 0.0
    %6134 = vmatprep.subr.mxu0 0.0
    %6135 = vmatpush1.msra.mxu0 0.0
    %6136 = vmatprep.subr.mxu0 0.0
    %6137 = vmatpush1.msra.mxu0 0.0
    %6138 = vmatprep.subr.mxu0 0.0
    %6139 = vmatpush1.msra.mxu0 0.0
    %6140 = vmatprep.subr.mxu0 0.0
    %6141 = vmatpush1.msra.mxu0 0.0
    %6142 = vmatprep.subr.mxu0 0.0
    %6143 = vmatpush1.msra.mxu0 0.0
    %6144 = vmatprep.subr.mxu0 0.0
    %6145 = vmatpush1.msra.mxu0 0.0
    %6146 = vmatprep.mubr.f32.mxu0 0.0
    %6147 = vmatmul.mubr.f32.gmra.mrb[0].mxu0 %v4677
    %v6148 = vpop.f32.mrb[0].mxu0
    %v6149 = vadd.f32 %v4639, %v6148
    %v6150 = vpop.f32.mrb[0].mxu0
    %6151 = vdwg.mxu0
    %6152 = vmatprep.subr.mxu0 0.0
    %6153 = vmatpush1.msra.mxu0 %v4495
    %6154 = vmatprep.subr.mxu0 0.0
    %6155 = vmatpush1.msra.mxu0 %v4496
    %6156 = vmatprep.subr.mxu0 0.0
    %6157 = vmatpush1.msra.mxu0 %v4497
    %6158 = vmatprep.subr.mxu0 0.0
    %6159 = vmatpush1.msra.mxu0 %v4498
    %6160 = vmatprep.subr.mxu0 0.0
    %6161 = vmatpush1.msra.mxu0 0.0
    %6162 = vmatprep.subr.mxu0 0.0
    %6163 = vmatpush1.msra.mxu0 0.0
    %6164 = vmatprep.subr.mxu0 0.0
    %6165 = vmatpush1.msra.mxu0 0.0
    %6166 = vmatprep.subr.mxu0 0.0
    %6167 = vmatpush1.msra.mxu0 0.0
    %6168 = vmatprep.subr.mxu0 0.0
    %6169 = vmatpush1.msra.mxu0 0.0
    %6170 = vmatprep.subr.mxu0 0.0
    %6171 = vmatpush1.msra.mxu0 0.0
    %6172 = vmatprep.subr.mxu0 0.0
    %6173 = vmatpush1.msra.mxu0 0.0
    %6174 = vmatprep.subr.mxu0 0.0
    %6175 = vmatpush1.msra.mxu0 0.0
    %6176 = vmatprep.subr.mxu0 0.0
    %6177 = vmatpush1.msra.mxu0 0.0
    %6178 = vmatprep.subr.mxu0 0.0
    %6179 = vmatpush1.msra.mxu0 0.0
    %6180 = vmatprep.subr.mxu0 0.0
    %6181 = vmatpush1.msra.mxu0 0.0
    %6182 = vmatprep.subr.mxu0 0.0
    %6183 = vmatpush1.msra.mxu0 0.0
    %6184 = vmatprep.subr.mxu0 0.0
    %6185 = vmatpush1.msra.mxu0 0.0
    %6186 = vmatprep.subr.mxu0 0.0
    %6187 = vmatpush1.msra.mxu0 0.0
    %6188 = vmatprep.subr.mxu0 0.0
    %6189 = vmatpush1.msra.mxu0 0.0
    %6190 = vmatprep.subr.mxu0 0.0
    %6191 = vmatpush1.msra.mxu0 0.0
    %6192 = vmatprep.subr.mxu0 0.0
    %6193 = vmatpush1.msra.mxu0 0.0
    %6194 = vmatprep.subr.mxu0 0.0
    %6195 = vmatpush1.msra.mxu0 0.0
    %6196 = vmatprep.subr.mxu0 0.0
    %6197 = vmatpush1.msra.mxu0 0.0
    %6198 = vmatprep.subr.mxu0 0.0
    %6199 = vmatpush1.msra.mxu0 0.0
    %6200 = vmatprep.subr.mxu0 0.0
    %6201 = vmatpush1.msra.mxu0 0.0
    %6202 = vmatprep.subr.mxu0 0.0
    %6203 = vmatpush1.msra.mxu0 0.0
    %6204 = vmatprep.subr.mxu0 0.0
    %6205 = vmatpush1.msra.mxu0 0.0
    %6206 = vmatprep.subr.mxu0 0.0
    %6207 = vmatpush1.msra.mxu0 0.0
    %6208 = vmatprep.subr.mxu0 0.0
    %6209 = vmatpush1.msra.mxu0 0.0
    %6210 = vmatprep.subr.mxu0 0.0
    %6211 = vmatpush1.msra.mxu0 0.0
    %6212 = vmatprep.subr.mxu0 0.0
    %6213 = vmatpush1.msra.mxu0 0.0
    %6214 = vmatprep.subr.mxu0 0.0
    %6215 = vmatpush1.msra.mxu0 0.0
    %6216 = vmatprep.mubr.f32.mxu0 0.0
    %6217 = vmatmul.mubr.f32.gmra.mrb[0].mxu0 %v4750
    %v6218 = vpop.f32.mrb[0].mxu0
    %v6219 = vadd.f32 %v4643, %v6218
    %v6220 = vpop.f32.mrb[0].mxu0
    %6221 = vdwg.mxu0
    %6222 = vmatprep.subr.mxu0 0.0
    %6223 = vmatpush1.msra.mxu0 %v4499
    %6224 = vmatprep.subr.mxu0 0.0
    %6225 = vmatpush1.msra.mxu0 %v4500
    %6226 = vmatprep.subr.mxu0 0.0
    %6227 = vmatpush1.msra.mxu0 %v4501
    %6228 = vmatprep.subr.mxu0 0.0
    %6229 = vmatpush1.msra.mxu0 %v4502
    %6230 = vmatprep.subr.mxu0 0.0
    %6231 = vmatpush1.msra.mxu0 0.0
    %6232 = vmatprep.subr.mxu0 0.0
    %6233 = vmatpush1.msra.mxu0 0.0
    %6234 = vmatprep.subr.mxu0 0.0
    %6235 = vmatpush1.msra.mxu0 0.0
    %6236 = vmatprep.subr.mxu0 0.0
    %6237 = vmatpush1.msra.mxu0 0.0
    %6238 = vmatprep.subr.mxu0 0.0
    %6239 = vmatpush1.msra.mxu0 0.0
    %6240 = vmatprep.subr.mxu0 0.0
    %6241 = vmatpush1.msra.mxu0 0.0
    %6242 = vmatprep.subr.mxu0 0.0
    %6243 = vmatpush1.msra.mxu0 0.0
    %6244 = vmatprep.subr.mxu0 0.0
    %6245 = vmatpush1.msra.mxu0 0.0
    %6246 = vmatprep.subr.mxu0 0.0
    %6247 = vmatpush1.msra.mxu0 0.0
    %6248 = vmatprep.subr.mxu0 0.0
    %6249 = vmatpush1.msra.mxu0 0.0
    %6250 = vmatprep.subr.mxu0 0.0
    %6251 = vmatpush1.msra.mxu0 0.0
    %6252 = vmatprep.subr.mxu0 0.0
    %6253 = vmatpush1.msra.mxu0 0.0
    %6254 = vmatprep.subr.mxu0 0.0
    %6255 = vmatpush1.msra.mxu0 0.0
    %6256 = vmatprep.subr.mxu0 0.0
    %6257 = vmatpush1.msra.mxu0 0.0
    %6258 = vmatprep.subr.mxu0 0.0
    %6259 = vmatpush1.msra.mxu0 0.0
    %6260 = vmatprep.subr.mxu0 0.0
    %6261 = vmatpush1.msra.mxu0 0.0
    %6262 = vmatprep.subr.mxu0 0.0
    %6263 = vmatpush1.msra.mxu0 0.0
    %6264 = vmatprep.subr.mxu0 0.0
    %6265 = vmatpush1.msra.mxu0 0.0
    %6266 = vmatprep.subr.mxu0 0.0
    %6267 = vmatpush1.msra.mxu0 0.0
    %6268 = vmatprep.subr.mxu0 0.0
    %6269 = vmatpush1.msra.mxu0 0.0
    %6270 = vmatprep.subr.mxu0 0.0
    %6271 = vmatpush1.msra.mxu0 0.0
    %6272 = vmatprep.subr.mxu0 0.0
    %6273 = vmatpush1.msra.mxu0 0.0
    %6274 = vmatprep.subr.mxu0 0.0
    %6275 = vmatpush1.msra.mxu0 0.0
    %6276 = vmatprep.subr.mxu0 0.0
    %6277 = vmatpush1.msra.mxu0 0.0
    %6278 = vmatprep.subr.mxu0 0.0
    %6279 = vmatpush1.msra.mxu0 0.0
    %6280 = vmatprep.subr.mxu0 0.0
    %6281 = vmatpush1.msra.mxu0 0.0
    %6282 = vmatprep.subr.mxu0 0.0
    %6283 = vmatpush1.msra.mxu0 0.0
    %6284 = vmatprep.subr.mxu0 0.0
    %6285 = vmatpush1.msra.mxu0 0.0
    %6286 = vmatprep.mubr.f32.mxu0 0.0
    %6287 = vmatmul.mubr.f32.gmra.mrb[0].mxu0 %v4677
    %v6288 = vpop.f32.mrb[0].mxu0
    %v6289 = vadd.f32 %v4647, %v6288
    %v6290 = vpop.f32.mrb[0].mxu0
    %6291 = vdwg.mxu0
    %6292 = vmatprep.subr.mxu0 0.0
    %6293 = vmatpush1.msra.mxu0 %v4503
    %6294 = vmatprep.subr.mxu0 0.0
    %6295 = vmatpush1.msra.mxu0 %v4504
    %6296 = vmatprep.subr.mxu0 0.0
    %6297 = vmatpush1.msra.mxu0 %v4505
    %6298 = vmatprep.subr.mxu0 0.0
    %6299 = vmatpush1.msra.mxu0 %v4506
    %6300 = vmatprep.subr.mxu0 0.0
    %6301 = vmatpush1.msra.mxu0 0.0
    %6302 = vmatprep.subr.mxu0 0.0
    %6303 = vmatpush1.msra.mxu0 0.0
    %6304 = vmatprep.subr.mxu0 0.0
    %6305 = vmatpush1.msra.mxu0 0.0
    %6306 = vmatprep.subr.mxu0 0.0
    %6307 = vmatpush1.msra.mxu0 0.0
    %6308 = vmatprep.subr.mxu0 0.0
    %6309 = vmatpush1.msra.mxu0 0.0
    %6310 = vmatprep.subr.mxu0 0.0
    %6311 = vmatpush1.msra.mxu0 0.0
    %6312 = vmatprep.subr.mxu0 0.0
    %6313 = vmatpush1.msra.mxu0 0.0
    %6314 = vmatprep.subr.mxu0 0.0
    %6315 = vmatpush1.msra.mxu0 0.0
    %6316 = vmatprep.subr.mxu0 0.0
    %6317 = vmatpush1.msra.mxu0 0.0
    %6318 = vmatprep.subr.mxu0 0.0
    %6319 = vmatpush1.msra.mxu0 0.0
    %6320 = vmatprep.subr.mxu0 0.0
    %6321 = vmatpush1.msra.mxu0 0.0
    %6322 = vmatprep.subr.mxu0 0.0
    %6323 = vmatpush1.msra.mxu0 0.0
    %6324 = vmatprep.subr.mxu0 0.0
    %6325 = vmatpush1.msra.mxu0 0.0
    %6326 = vmatprep.subr.mxu0 0.0
    %6327 = vmatpush1.msra.mxu0 0.0
    %6328 = vmatprep.subr.mxu0 0.0
    %6329 = vmatpush1.msra.mxu0 0.0
    %6330 = vmatprep.subr.mxu0 0.0
    %6331 = vmatpush1.msra.mxu0 0.0
    %6332 = vmatprep.subr.mxu0 0.0
    %6333 = vmatpush1.msra.mxu0 0.0
    %6334 = vmatprep.subr.mxu0 0.0
    %6335 = vmatpush1.msra.mxu0 0.0
    %6336 = vmatprep.subr.mxu0 0.0
    %6337 = vmatpush1.msra.mxu0 0.0
    %6338 = vmatprep.subr.mxu0 0.0
    %6339 = vmatpush1.msra.mxu0 0.0
    %6340 = vmatprep.subr.mxu0 0.0
    %6341 = vmatpush1.msra.mxu0 0.0
    %6342 = vmatprep.subr.mxu0 0.0
    %6343 = vmatpush1.msra.mxu0 0.0
    %6344 = vmatprep.subr.mxu0 0.0
    %6345 = vmatpush1.msra.mxu0 0.0
    %6346 = vmatprep.subr.mxu0 0.0
    %6347 = vmatpush1.msra.mxu0 0.0
    %6348 = vmatprep.subr.mxu0 0.0
    %6349 = vmatpush1.msra.mxu0 0.0
    %6350 = vmatprep.subr.mxu0 0.0
    %6351 = vmatpush1.msra.mxu0 0.0
    %6352 = vmatprep.subr.mxu0 0.0
    %6353 = vmatpush1.msra.mxu0 0.0
    %6354 = vmatprep.subr.mxu0 0.0
    %6355 = vmatpush1.msra.mxu0 0.0
    %6356 = vmatprep.mubr.f32.mxu0 0.0
    %6357 = vmatmul.mubr.f32.gmra.mrb[0].mxu0 %v4750
    %v6358 = vpop.f32.mrb[0].mxu0
    %v6359 = vadd.f32 %v4651, %v6358
    %v6360 = vpop.f32.mrb[0].mxu0
    %6361 = vdwg.mxu0
    %v6363 = vsel %vm2070, %v4746, 0
    %v6366 = vsel %vm2070, %v5309, 0
    %6368 = vmatprep.subr.mxu0 0.0
    %6369 = vmatpush1.xpose.msra.mxu0 %v6366
    %6370 = vmatprep.subr.mxu0 0.0
    %6371 = vmatpush1.xpose.msra.mxu0 0.0
    %6372 = vmatprep.subr.mxu0 0.0
    %6373 = vmatpush1.xpose.msra.mxu0 0.0
    %6374 = vmatprep.subr.mxu0 0.0
    %6375 = vmatpush1.xpose.msra.mxu0 0.0
    %6376 = vmatprep.subr.mxu0 0.0
    %6377 = vmatpush1.xpose.msra.mxu0 0.0
    %6378 = vmatprep.subr.mxu0 0.0
    %6379 = vmatpush1.xpose.msra.mxu0 0.0
    %6380 = vmatprep.subr.mxu0 0.0
    %6381 = vmatpush1.xpose.msra.mxu0 0.0
    %6382 = vmatprep.subr.mxu0 0.0
    %6383 = vmatpush1.xpose.msra.mxu0 0.0
    %6384 = vmatprep.subr.mxu0 0.0
    %6385 = vmatpush1.xpose.msra.mxu0 0.0
    %6386 = vmatprep.subr.mxu0 0.0
    %6387 = vmatpush1.xpose.msra.mxu0 0.0
    %6388 = vmatprep.subr.mxu0 0.0
    %6389 = vmatpush1.xpose.msra.mxu0 0.0
    %6390 = vmatprep.subr.mxu0 0.0
    %6391 = vmatpush1.xpose.msra.mxu0 0.0
    %6392 = vmatprep.subr.mxu0 0.0
    %6393 = vmatpush1.xpose.msra.mxu0 0.0
    %6394 = vmatprep.subr.mxu0 0.0
    %6395 = vmatpush1.xpose.msra.mxu0 0.0
    %6396 = vmatprep.subr.mxu0 0.0
    %6397 = vmatpush1.xpose.msra.mxu0 0.0
    %6398 = vmatprep.subr.mxu0 0.0
    %6399 = vmatpush1.xpose.msra.mxu0 0.0
    %6400 = vmatprep.subr.mxu0 0.0
    %6401 = vmatpush1.xpose.msra.mxu0 0.0
    %6402 = vmatprep.subr.mxu0 0.0
    %6403 = vmatpush1.xpose.msra.mxu0 0.0
    %6404 = vmatprep.subr.mxu0 0.0
    %6405 = vmatpush1.xpose.msra.mxu0 0.0
    %6406 = vmatprep.subr.mxu0 0.0
    %6407 = vmatpush1.xpose.msra.mxu0 0.0
    %6408 = vmatprep.subr.mxu0 0.0
    %6409 = vmatpush1.xpose.msra.mxu0 0.0
    %6410 = vmatprep.subr.mxu0 0.0
    %6411 = vmatpush1.xpose.msra.mxu0 0.0
    %6412 = vmatprep.subr.mxu0 0.0
    %6413 = vmatpush1.xpose.msra.mxu0 0.0
    %6414 = vmatprep.subr.mxu0 0.0
    %6415 = vmatpush1.xpose.msra.mxu0 0.0
    %6416 = vmatprep.subr.mxu0 0.0
    %6417 = vmatpush1.xpose.msra.mxu0 0.0
    %6418 = vmatprep.subr.mxu0 0.0
    %6419 = vmatpush1.xpose.msra.mxu0 0.0
    %6420 = vmatprep.subr.mxu0 0.0
    %6421 = vmatpush1.xpose.msra.mxu0 0.0
    %6422 = vmatprep.subr.mxu0 0.0
    %6423 = vmatpush1.xpose.msra.mxu0 0.0
    %6424 = vmatprep.subr.mxu0 0.0
    %6425 = vmatpush1.xpose.msra.mxu0 0.0
    %6426 = vmatprep.subr.mxu0 0.0
    %6427 = vmatpush1.xpose.msra.mxu0 0.0
    %6428 = vmatprep.subr.mxu0 0.0
    %6429 = vmatpush1.xpose.msra.mxu0 0.0
    %6430 = vmatprep.subr.mxu0 0.0
    %6431 = vmatpush1.xpose.msra.mxu0 0.0
    %6432 = vmatprep.mubr.f32.mxu0 0.0
    %6433 = vmatmul.mubr.f32.gmra.mrb[0].mxu0 %v6363
    %v6434 = vpop.f32.mrb[0].mxu0
    %v6435 = vadd.f32 %v2063, %v6434
    %v6436 = vpop.f32.mrb[0].mxu0
    %6437 = vdwg.mxu0
    %v6439 = vsel %vm2070, %v4819, 0
    %v6442 = vsel %vm2070, %v5379, 0
    %6444 = vmatprep.subr.mxu0 0.0
    %6445 = vmatpush1.xpose.msra.mxu0 %v6442
    %6446 = vmatprep.subr.mxu0 0.0
    %6447 = vmatpush1.xpose.msra.mxu0 0.0
    %6448 = vmatprep.subr.mxu0 0.0
    %6449 = vmatpush1.xpose.msra.mxu0 0.0
    %6450 = vmatprep.subr.mxu0 0.0
    %6451 = vmatpush1.xpose.msra.mxu0 0.0
    %6452 = vmatprep.subr.mxu0 0.0
    %6453 = vmatpush1.xpose.msra.mxu0 0.0
    %6454 = vmatprep.subr.mxu0 0.0
    %6455 = vmatpush1.xpose.msra.mxu0 0.0
    %6456 = vmatprep.subr.mxu0 0.0
    %6457 = vmatpush1.xpose.msra.mxu0 0.0
    %6458 = vmatprep.subr.mxu0 0.0
    %6459 = vmatpush1.xpose.msra.mxu0 0.0
    %6460 = vmatprep.subr.mxu0 0.0
    %6461 = vmatpush1.xpose.msra.mxu0 0.0
    %6462 = vmatprep.subr.mxu0 0.0
    %6463 = vmatpush1.xpose.msra.mxu0 0.0
    %6464 = vmatprep.subr.mxu0 0.0
    %6465 = vmatpush1.xpose.msra.mxu0 0.0
    %6466 = vmatprep.subr.mxu0 0.0
    %6467 = vmatpush1.xpose.msra.mxu0 0.0
    %6468 = vmatprep.subr.mxu0 0.0
    %6469 = vmatpush1.xpose.msra.mxu0 0.0
    %6470 = vmatprep.subr.mxu0 0.0
    %6471 = vmatpush1.xpose.msra.mxu0 0.0
    %6472 = vmatprep.subr.mxu0 0.0
    %6473 = vmatpush1.xpose.msra.mxu0 0.0
    %6474 = vmatprep.subr.mxu0 0.0
    %6475 = vmatpush1.xpose.msra.mxu0 0.0
    %6476 = vmatprep.subr.mxu0 0.0
    %6477 = vmatpush1.xpose.msra.mxu0 0.0
    %6478 = vmatprep.subr.mxu0 0.0
    %6479 = vmatpush1.xpose.msra.mxu0 0.0
    %6480 = vmatprep.subr.mxu0 0.0
    %6481 = vmatpush1.xpose.msra.mxu0 0.0
    %6482 = vmatprep.subr.mxu0 0.0
    %6483 = vmatpush1.xpose.msra.mxu0 0.0
    %6484 = vmatprep.subr.mxu0 0.0
    %6485 = vmatpush1.xpose.msra.mxu0 0.0
    %6486 = vmatprep.subr.mxu0 0.0
    %6487 = vmatpush1.xpose.msra.mxu0 0.0
    %6488 = vmatprep.subr.mxu0 0.0
    %6489 = vmatpush1.xpose.msra.mxu0 0.0
    %6490 = vmatprep.subr.mxu0 0.0
    %6491 = vmatpush1.xpose.msra.mxu0 0.0
    %6492 = vmatprep.subr.mxu0 0.0
    %6493 = vmatpush1.xpose.msra.mxu0 0.0
    %6494 = vmatprep.subr.mxu0 0.0
    %6495 = vmatpush1.xpose.msra.mxu0 0.0
    %6496 = vmatprep.subr.mxu0 0.0
    %6497 = vmatpush1.xpose.msra.mxu0 0.0
    %6498 = vmatprep.subr.mxu0 0.0
    %6499 = vmatpush1.xpose.msra.mxu0 0.0
    %6500 = vmatprep.subr.mxu0 0.0
    %6501 = vmatpush1.xpose.msra.mxu0 0.0
    %6502 = vmatprep.subr.mxu0 0.0
    %6503 = vmatpush1.xpose.msra.mxu0 0.0
    %6504 = vmatprep.subr.mxu0 0.0
    %6505 = vmatpush1.xpose.msra.mxu0 0.0
    %6506 = vmatprep.subr.mxu0 0.0
    %6507 = vmatpush1.xpose.msra.mxu0 0.0
    %6508 = vmatprep.mubr.f32.mxu0 0.0
    %6509 = vmatmul.mubr.f32.gmra.mrb[0].mxu0 %v6439
    %v6510 = vpop.f32.mrb[0].mxu0
    %v6511 = vadd.f32 %v2067, %v6510
    %v6512 = vpop.f32.mrb[0].mxu0
    %6513 = vdwg.mxu0
    %v6515 = vsel %vm2070, %v4889, 0
    %v6518 = vsel %vm2070, %v5449, 0
    %6520 = vmatprep.subr.mxu0 0.0
    %6521 = vmatpush1.xpose.msra.mxu0 %v6518
    %6522 = vmatprep.subr.mxu0 0.0
    %6523 = vmatpush1.xpose.msra.mxu0 0.0
    %6524 = vmatprep.subr.mxu0 0.0
    %6525 = vmatpush1.xpose.msra.mxu0 0.0
    %6526 = vmatprep.subr.mxu0 0.0
    %6527 = vmatpush1.xpose.msra.mxu0 0.0
    %6528 = vmatprep.subr.mxu0 0.0
    %6529 = vmatpush1.xpose.msra.mxu0 0.0
    %6530 = vmatprep.subr.mxu0 0.0
    %6531 = vmatpush1.xpose.msra.mxu0 0.0
    %6532 = vmatprep.subr.mxu0 0.0
    %6533 = vmatpush1.xpose.msra.mxu0 0.0
    %6534 = vmatprep.subr.mxu0 0.0
    %6535 = vmatpush1.xpose.msra.mxu0 0.0
    %6536 = vmatprep.subr.mxu0 0.0
    %6537 = vmatpush1.xpose.msra.mxu0 0.0
    %6538 = vmatprep.subr.mxu0 0.0
    %6539 = vmatpush1.xpose.msra.mxu0 0.0
    %6540 = vmatprep.subr.mxu0 0.0
    %6541 = vmatpush1.xpose.msra.mxu0 0.0
    %6542 = vmatprep.subr.mxu0 0.0
    %6543 = vmatpush1.xpose.msra.mxu0 0.0
    %6544 = vmatprep.subr.mxu0 0.0
    %6545 = vmatpush1.xpose.msra.mxu0 0.0
    %6546 = vmatprep.subr.mxu0 0.0
    %6547 = vmatpush1.xpose.msra.mxu0 0.0
    %6548 = vmatprep.subr.mxu0 0.0
    %6549 = vmatpush1.xpose.msra.mxu0 0.0
    %6550 = vmatprep.subr.mxu0 0.0
    %6551 = vmatpush1.xpose.msra.mxu0 0.0
    %6552 = vmatprep.subr.mxu0 0.0
    %6553 = vmatpush1.xpose.msra.mxu0 0.0
    %6554 = vmatprep.subr.mxu0 0.0
    %6555 = vmatpush1.xpose.msra.mxu0 0.0
    %6556 = vmatprep.subr.mxu0 0.0
    %6557 = vmatpush1.xpose.msra.mxu0 0.0
    %6558 = vmatprep.subr.mxu0 0.0
    %6559 = vmatpush1.xpose.msra.mxu0 0.0
    %6560 = vmatprep.subr.mxu0 0.0
    %6561 = vmatpush1.xpose.msra.mxu0 0.0
    %6562 = vmatprep.subr.mxu0 0.0
    %6563 = vmatpush1.xpose.msra.mxu0 0.0
    %6564 = vmatprep.subr.mxu0 0.0
    %6565 = vmatpush1.xpose.msra.mxu0 0.0
    %6566 = vmatprep.subr.mxu0 0.0
    %6567 = vmatpush1.xpose.msra.mxu0 0.0
    %6568 = vmatprep.subr.mxu0 0.0
    %6569 = vmatpush1.xpose.msra.mxu0 0.0
    %6570 = vmatprep.subr.mxu0 0.0
    %6571 = vmatpush1.xpose.msra.mxu0 0.0
    %6572 = vmatprep.subr.mxu0 0.0
    %6573 = vmatpush1.xpose.msra.mxu0 0.0
    %6574 = vmatprep.subr.mxu0 0.0
    %6575 = vmatpush1.xpose.msra.mxu0 0.0
    %6576 = vmatprep.subr.mxu0 0.0
    %6577 = vmatpush1.xpose.msra.mxu0 0.0
    %6578 = vmatprep.subr.mxu0 0.0
    %6579 = vmatpush1.xpose.msra.mxu0 0.0
    %6580 = vmatprep.subr.mxu0 0.0
    %6581 = vmatpush1.xpose.msra.mxu0 0.0
    %6582 = vmatprep.subr.mxu0 0.0
    %6583 = vmatpush1.xpose.msra.mxu0 0.0
    %6584 = vmatprep.mubr.f32.mxu0 0.0
    %6585 = vmatmul.mubr.f32.gmra.mrb[0].mxu0 %v6515
    %v6586 = vpop.f32.mrb[0].mxu0
    %v6587 = vadd.f32 %v2063, %v6586
    %v6588 = vpop.f32.mrb[0].mxu0
    %6589 = vdwg.mxu0
    %v6591 = vsel %vm2070, %v4959, 0
    %v6594 = vsel %vm2070, %v5519, 0
    %6596 = vmatprep.subr.mxu0 0.0
    %6597 = vmatpush1.xpose.msra.mxu0 %v6594
    %6598 = vmatprep.subr.mxu0 0.0
    %6599 = vmatpush1.xpose.msra.mxu0 0.0
    %6600 = vmatprep.subr.mxu0 0.0
    %6601 = vmatpush1.xpose.msra.mxu0 0.0
    %6602 = vmatprep.subr.mxu0 0.0
    %6603 = vmatpush1.xpose.msra.mxu0 0.0
    %6604 = vmatprep.subr.mxu0 0.0
    %6605 = vmatpush1.xpose.msra.mxu0 0.0
    %6606 = vmatprep.subr.mxu0 0.0
    %6607 = vmatpush1.xpose.msra.mxu0 0.0
    %6608 = vmatprep.subr.mxu0 0.0
    %6609 = vmatpush1.xpose.msra.mxu0 0.0
    %6610 = vmatprep.subr.mxu0 0.0
    %6611 = vmatpush1.xpose.msra.mxu0 0.0
    %6612 = vmatprep.subr.mxu0 0.0
    %6613 = vmatpush1.xpose.msra.mxu0 0.0
    %6614 = vmatprep.subr.mxu0 0.0
    %6615 = vmatpush1.xpose.msra.mxu0 0.0
    %6616 = vmatprep.subr.mxu0 0.0
    %6617 = vmatpush1.xpose.msra.mxu0 0.0
    %6618 = vmatprep.subr.mxu0 0.0
    %6619 = vmatpush1.xpose.msra.mxu0 0.0
    %6620 = vmatprep.subr.mxu0 0.0
    %6621 = vmatpush1.xpose.msra.mxu0 0.0
    %6622 = vmatprep.subr.mxu0 0.0
    %6623 = vmatpush1.xpose.msra.mxu0 0.0
    %6624 = vmatprep.subr.mxu0 0.0
    %6625 = vmatpush1.xpose.msra.mxu0 0.0
    %6626 = vmatprep.subr.mxu0 0.0
    %6627 = vmatpush1.xpose.msra.mxu0 0.0
    %6628 = vmatprep.subr.mxu0 0.0
    %6629 = vmatpush1.xpose.msra.mxu0 0.0
    %6630 = vmatprep.subr.mxu0 0.0
    %6631 = vmatpush1.xpose.msra.mxu0 0.0
    %6632 = vmatprep.subr.mxu0 0.0
    %6633 = vmatpush1.xpose.msra.mxu0 0.0
    %6634 = vmatprep.subr.mxu0 0.0
    %6635 = vmatpush1.xpose.msra.mxu0 0.0
    %6636 = vmatprep.subr.mxu0 0.0
    %6637 = vmatpush1.xpose.msra.mxu0 0.0
    %6638 = vmatprep.subr.mxu0 0.0
    %6639 = vmatpush1.xpose.msra.mxu0 0.0
    %6640 = vmatprep.subr.mxu0 0.0
    %6641 = vmatpush1.xpose.msra.mxu0 0.0
    %6642 = vmatprep.subr.mxu0 0.0
    %6643 = vmatpush1.xpose.msra.mxu0 0.0
    %6644 = vmatprep.subr.mxu0 0.0
    %6645 = vmatpush1.xpose.msra.mxu0 0.0
    %6646 = vmatprep.subr.mxu0 0.0
    %6647 = vmatpush1.xpose.msra.mxu0 0.0
    %6648 = vmatprep.subr.mxu0 0.0
    %6649 = vmatpush1.xpose.msra.mxu0 0.0
    %6650 = vmatprep.subr.mxu0 0.0
    %6651 = vmatpush1.xpose.msra.mxu0 0.0
    %6652 = vmatprep.subr.mxu0 0.0
    %6653 = vmatpush1.xpose.msra.mxu0 0.0
    %6654 = vmatprep.subr.mxu0 0.0
    %6655 = vmatpush1.xpose.msra.mxu0 0.0
    %6656 = vmatprep.subr.mxu0 0.0
    %6657 = vmatpush1.xpose.msra.mxu0 0.0
    %6658 = vmatprep.subr.mxu0 0.0
    %6659 = vmatpush1.xpose.msra.mxu0 0.0
    %6660 = vmatprep.mubr.f32.mxu0 0.0
    %6661 = vmatmul.mubr.f32.gmra.mrb[0].mxu0 %v6591
    %v6662 = vpop.f32.mrb[0].mxu0
    %v6663 = vadd.f32 %v2067, %v6662
    %v6664 = vpop.f32.mrb[0].mxu0
    %6665 = vdwg.mxu0
    %v6667 = vsel %vm2070, %v5029, 0
    %v6670 = vsel %vm2070, %v5589, 0
    %6672 = vmatprep.subr.mxu0 0.0
    %6673 = vmatpush1.xpose.msra.mxu0 %v6670
    %6674 = vmatprep.subr.mxu0 0.0
    %6675 = vmatpush1.xpose.msra.mxu0 0.0
    %6676 = vmatprep.subr.mxu0 0.0
    %6677 = vmatpush1.xpose.msra.mxu0 0.0
    %6678 = vmatprep.subr.mxu0 0.0
    %6679 = vmatpush1.xpose.msra.mxu0 0.0
    %6680 = vmatprep.subr.mxu0 0.0
    %6681 = vmatpush1.xpose.msra.mxu0 0.0
    %6682 = vmatprep.subr.mxu0 0.0
    %6683 = vmatpush1.xpose.msra.mxu0 0.0
    %6684 = vmatprep.subr.mxu0 0.0
    %6685 = vmatpush1.xpose.msra.mxu0 0.0
    %6686 = vmatprep.subr.mxu0 0.0
    %6687 = vmatpush1.xpose.msra.mxu0 0.0
    %6688 = vmatprep.subr.mxu0 0.0
    %6689 = vmatpush1.xpose.msra.mxu0 0.0
    %6690 = vmatprep.subr.mxu0 0.0
    %6691 = vmatpush1.xpose.msra.mxu0 0.0
    %6692 = vmatprep.subr.mxu0 0.0
    %6693 = vmatpush1.xpose.msra.mxu0 0.0
    %6694 = vmatprep.subr.mxu0 0.0
    %6695 = vmatpush1.xpose.msra.mxu0 0.0
    %6696 = vmatprep.subr.mxu0 0.0
    %6697 = vmatpush1.xpose.msra.mxu0 0.0
    %6698 = vmatprep.subr.mxu0 0.0
    %6699 = vmatpush1.xpose.msra.mxu0 0.0
    %6700 = vmatprep.subr.mxu0 0.0
    %6701 = vmatpush1.xpose.msra.mxu0 0.0
    %6702 = vmatprep.subr.mxu0 0.0
    %6703 = vmatpush1.xpose.msra.mxu0 0.0
    %6704 = vmatprep.subr.mxu0 0.0
    %6705 = vmatpush1.xpose.msra.mxu0 0.0
    %6706 = vmatprep.subr.mxu0 0.0
    %6707 = vmatpush1.xpose.msra.mxu0 0.0
    %6708 = vmatprep.subr.mxu0 0.0
    %6709 = vmatpush1.xpose.msra.mxu0 0.0
    %6710 = vmatprep.subr.mxu0 0.0
    %6711 = vmatpush1.xpose.msra.mxu0 0.0
    %6712 = vmatprep.subr.mxu0 0.0
    %6713 = vmatpush1.xpose.msra.mxu0 0.0
    %6714 = vmatprep.subr.mxu0 0.0
    %6715 = vmatpush1.xpose.msra.mxu0 0.0
    %6716 = vmatprep.subr.mxu0 0.0
    %6717 = vmatpush1.xpose.msra.mxu0 0.0
    %6718 = vmatprep.subr.mxu0 0.0
    %6719 = vmatpush1.xpose.msra.mxu0 0.0
    %6720 = vmatprep.subr.mxu0 0.0
    %6721 = vmatpush1.xpose.msra.mxu0 0.0
    %6722 = vmatprep.subr.mxu0 0.0
    %6723 = vmatpush1.xpose.msra.mxu0 0.0
    %6724 = vmatprep.subr.mxu0 0.0
    %6725 = vmatpush1.xpose.msra.mxu0 0.0
    %6726 = vmatprep.subr.mxu0 0.0
    %6727 = vmatpush1.xpose.msra.mxu0 0.0
    %6728 = vmatprep.subr.mxu0 0.0
    %6729 = vmatpush1.xpose.msra.mxu0 0.0
    %6730 = vmatprep.subr.mxu0 0.0
    %6731 = vmatpush1.xpose.msra.mxu0 0.0
    %6732 = vmatprep.subr.mxu0 0.0
    %6733 = vmatpush1.xpose.msra.mxu0 0.0
    %6734 = vmatprep.subr.mxu0 0.0
    %6735 = vmatpush1.xpose.msra.mxu0 0.0
    %6736 = vmatprep.mubr.f32.mxu0 0.0
    %6737 = vmatmul.mubr.f32.gmra.mrb[0].mxu0 %v6667
    %v6738 = vpop.f32.mrb[0].mxu0
    %v6739 = vadd.f32 %v2063, %v6738
    %v6740 = vpop.f32.mrb[0].mxu0
    %6741 = vdwg.mxu0
    %v6743 = vsel %vm2070, %v5099, 0
    %v6746 = vsel %vm2070, %v5659, 0
    %6748 = vmatprep.subr.mxu0 0.0
    %6749 = vmatpush1.xpose.msra.mxu0 %v6746
    %6750 = vmatprep.subr.mxu0 0.0
    %6751 = vmatpush1.xpose.msra.mxu0 0.0
    %6752 = vmatprep.subr.mxu0 0.0
    %6753 = vmatpush1.xpose.msra.mxu0 0.0
    %6754 = vmatprep.subr.mxu0 0.0
    %6755 = vmatpush1.xpose.msra.mxu0 0.0
    %6756 = vmatprep.subr.mxu0 0.0
    %6757 = vmatpush1.xpose.msra.mxu0 0.0
    %6758 = vmatprep.subr.mxu0 0.0
    %6759 = vmatpush1.xpose.msra.mxu0 0.0
    %6760 = vmatprep.subr.mxu0 0.0
    %6761 = vmatpush1.xpose.msra.mxu0 0.0
    %6762 = vmatprep.subr.mxu0 0.0
    %6763 = vmatpush1.xpose.msra.mxu0 0.0
    %6764 = vmatprep.subr.mxu0 0.0
    %6765 = vmatpush1.xpose.msra.mxu0 0.0
    %6766 = vmatprep.subr.mxu0 0.0
    %6767 = vmatpush1.xpose.msra.mxu0 0.0
    %6768 = vmatprep.subr.mxu0 0.0
    %6769 = vmatpush1.xpose.msra.mxu0 0.0
    %6770 = vmatprep.subr.mxu0 0.0
    %6771 = vmatpush1.xpose.msra.mxu0 0.0
    %6772 = vmatprep.subr.mxu0 0.0
    %6773 = vmatpush1.xpose.msra.mxu0 0.0
    %6774 = vmatprep.subr.mxu0 0.0
    %6775 = vmatpush1.xpose.msra.mxu0 0.0
    %6776 = vmatprep.subr.mxu0 0.0
    %6777 = vmatpush1.xpose.msra.mxu0 0.0
    %6778 = vmatprep.subr.mxu0 0.0
    %6779 = vmatpush1.xpose.msra.mxu0 0.0
    %6780 = vmatprep.subr.mxu0 0.0
    %6781 = vmatpush1.xpose.msra.mxu0 0.0
    %6782 = vmatprep.subr.mxu0 0.0
    %6783 = vmatpush1.xpose.msra.mxu0 0.0
    %6784 = vmatprep.subr.mxu0 0.0
    %6785 = vmatpush1.xpose.msra.mxu0 0.0
    %6786 = vmatprep.subr.mxu0 0.0
    %6787 = vmatpush1.xpose.msra.mxu0 0.0
    %6788 = vmatprep.subr.mxu0 0.0
    %6789 = vmatpush1.xpose.msra.mxu0 0.0
    %6790 = vmatprep.subr.mxu0 0.0
    %6791 = vmatpush1.xpose.msra.mxu0 0.0
    %6792 = vmatprep.subr.mxu0 0.0
    %6793 = vmatpush1.xpose.msra.mxu0 0.0
    %6794 = vmatprep.subr.mxu0 0.0
    %6795 = vmatpush1.xpose.msra.mxu0 0.0
    %6796 = vmatprep.subr.mxu0 0.0
    %6797 = vmatpush1.xpose.msra.mxu0 0.0
    %6798 = vmatprep.subr.mxu0 0.0
    %6799 = vmatpush1.xpose.msra.mxu0 0.0
    %6800 = vmatprep.subr.mxu0 0.0
    %6801 = vmatpush1.xpose.msra.mxu0 0.0
    %6802 = vmatprep.subr.mxu0 0.0
    %6803 = vmatpush1.xpose.msra.mxu0 0.0
    %6804 = vmatprep.subr.mxu0 0.0
    %6805 = vmatpush1.xpose.msra.mxu0 0.0
    %6806 = vmatprep.subr.mxu0 0.0
    %6807 = vmatpush1.xpose.msra.mxu0 0.0
    %6808 = vmatprep.subr.mxu0 0.0
    %6809 = vmatpush1.xpose.msra.mxu0 0.0
    %6810 = vmatprep.subr.mxu0 0.0
    %6811 = vmatpush1.xpose.msra.mxu0 0.0
    %6812 = vmatprep.mubr.f32.mxu0 0.0
    %6813 = vmatmul.mubr.f32.gmra.mrb[0].mxu0 %v6743
    %v6814 = vpop.f32.mrb[0].mxu0
    %v6815 = vadd.f32 %v2067, %v6814
    %v6816 = vpop.f32.mrb[0].mxu0
    %6817 = vdwg.mxu0
    %v6819 = vsel %vm2070, %v5169, 0
    %v6822 = vsel %vm2070, %v5729, 0
    %6824 = vmatprep.subr.mxu0 0.0
    %6825 = vmatpush1.xpose.msra.mxu0 %v6822
    %6826 = vmatprep.subr.mxu0 0.0
    %6827 = vmatpush1.xpose.msra.mxu0 0.0
    %6828 = vmatprep.subr.mxu0 0.0
    %6829 = vmatpush1.xpose.msra.mxu0 0.0
    %6830 = vmatprep.subr.mxu0 0.0
    %6831 = vmatpush1.xpose.msra.mxu0 0.0
    %6832 = vmatprep.subr.mxu0 0.0
    %6833 = vmatpush1.xpose.msra.mxu0 0.0
    %6834 = vmatprep.subr.mxu0 0.0
    %6835 = vmatpush1.xpose.msra.mxu0 0.0
    %6836 = vmatprep.subr.mxu0 0.0
    %6837 = vmatpush1.xpose.msra.mxu0 0.0
    %6838 = vmatprep.subr.mxu0 0.0
    %6839 = vmatpush1.xpose.msra.mxu0 0.0
    %6840 = vmatprep.subr.mxu0 0.0
    %6841 = vmatpush1.xpose.msra.mxu0 0.0
    %6842 = vmatprep.subr.mxu0 0.0
    %6843 = vmatpush1.xpose.msra.mxu0 0.0
    %6844 = vmatprep.subr.mxu0 0.0
    %6845 = vmatpush1.xpose.msra.mxu0 0.0
    %6846 = vmatprep.subr.mxu0 0.0
    %6847 = vmatpush1.xpose.msra.mxu0 0.0
    %6848 = vmatprep.subr.mxu0 0.0
    %6849 = vmatpush1.xpose.msra.mxu0 0.0
    %6850 = vmatprep.subr.mxu0 0.0
    %6851 = vmatpush1.xpose.msra.mxu0 0.0
    %6852 = vmatprep.subr.mxu0 0.0
    %6853 = vmatpush1.xpose.msra.mxu0 0.0
    %6854 = vmatprep.subr.mxu0 0.0
    %6855 = vmatpush1.xpose.msra.mxu0 0.0
    %6856 = vmatprep.subr.mxu0 0.0
    %6857 = vmatpush1.xpose.msra.mxu0 0.0
    %6858 = vmatprep.subr.mxu0 0.0
    %6859 = vmatpush1.xpose.msra.mxu0 0.0
    %6860 = vmatprep.subr.mxu0 0.0
    %6861 = vmatpush1.xpose.msra.mxu0 0.0
    %6862 = vmatprep.subr.mxu0 0.0
    %6863 = vmatpush1.xpose.msra.mxu0 0.0
    %6864 = vmatprep.subr.mxu0 0.0
    %6865 = vmatpush1.xpose.msra.mxu0 0.0
    %6866 = vmatprep.subr.mxu0 0.0
    %6867 = vmatpush1.xpose.msra.mxu0 0.0
    %6868 = vmatprep.subr.mxu0 0.0
    %6869 = vmatpush1.xpose.msra.mxu0 0.0
    %6870 = vmatprep.subr.mxu0 0.0
    %6871 = vmatpush1.xpose.msra.mxu0 0.0
    %6872 = vmatprep.subr.mxu0 0.0
    %6873 = vmatpush1.xpose.msra.mxu0 0.0
    %6874 = vmatprep.subr.mxu0 0.0
    %6875 = vmatpush1.xpose.msra.mxu0 0.0
    %6876 = vmatprep.subr.mxu0 0.0
    %6877 = vmatpush1.xpose.msra.mxu0 0.0
    %6878 = vmatprep.subr.mxu0 0.0
    %6879 = vmatpush1.xpose.msra.mxu0 0.0
    %6880 = vmatprep.subr.mxu0 0.0
    %6881 = vmatpush1.xpose.msra.mxu0 0.0
    %6882 = vmatprep.subr.mxu0 0.0
    %6883 = vmatpush1.xpose.msra.mxu0 0.0
    %6884 = vmatprep.subr.mxu0 0.0
    %6885 = vmatpush1.xpose.msra.mxu0 0.0
    %6886 = vmatprep.subr.mxu0 0.0
    %6887 = vmatpush1.xpose.msra.mxu0 0.0
    %6888 = vmatprep.mubr.f32.mxu0 0.0
    %6889 = vmatmul.mubr.f32.gmra.mrb[0].mxu0 %v6819
    %v6890 = vpop.f32.mrb[0].mxu0
    %v6891 = vadd.f32 %v2063, %v6890
    %v6892 = vpop.f32.mrb[0].mxu0
    %6893 = vdwg.mxu0
    %v6895 = vsel %vm2070, %v5239, 0
    %v6898 = vsel %vm2070, %v5799, 0
    %6900 = vmatprep.subr.mxu0 0.0
    %6901 = vmatpush1.xpose.msra.mxu0 %v6898
    %6902 = vmatprep.subr.mxu0 0.0
    %6903 = vmatpush1.xpose.msra.mxu0 0.0
    %6904 = vmatprep.subr.mxu0 0.0
    %6905 = vmatpush1.xpose.msra.mxu0 0.0
    %6906 = vmatprep.subr.mxu0 0.0
    %6907 = vmatpush1.xpose.msra.mxu0 0.0
    %6908 = vmatprep.subr.mxu0 0.0
    %6909 = vmatpush1.xpose.msra.mxu0 0.0
    %6910 = vmatprep.subr.mxu0 0.0
    %6911 = vmatpush1.xpose.msra.mxu0 0.0
    %6912 = vmatprep.subr.mxu0 0.0
    %6913 = vmatpush1.xpose.msra.mxu0 0.0
    %6914 = vmatprep.subr.mxu0 0.0
    %6915 = vmatpush1.xpose.msra.mxu0 0.0
    %6916 = vmatprep.subr.mxu0 0.0
    %6917 = vmatpush1.xpose.msra.mxu0 0.0
    %6918 = vmatprep.subr.mxu0 0.0
    %6919 = vmatpush1.xpose.msra.mxu0 0.0
    %6920 = vmatprep.subr.mxu0 0.0
    %6921 = vmatpush1.xpose.msra.mxu0 0.0
    %6922 = vmatprep.subr.mxu0 0.0
    %6923 = vmatpush1.xpose.msra.mxu0 0.0
    %6924 = vmatprep.subr.mxu0 0.0
    %6925 = vmatpush1.xpose.msra.mxu0 0.0
    %6926 = vmatprep.subr.mxu0 0.0
    %6927 = vmatpush1.xpose.msra.mxu0 0.0
    %6928 = vmatprep.subr.mxu0 0.0
    %6929 = vmatpush1.xpose.msra.mxu0 0.0
    %6930 = vmatprep.subr.mxu0 0.0
    %6931 = vmatpush1.xpose.msra.mxu0 0.0
    %6932 = vmatprep.subr.mxu0 0.0
    %6933 = vmatpush1.xpose.msra.mxu0 0.0
    %6934 = vmatprep.subr.mxu0 0.0
    %6935 = vmatpush1.xpose.msra.mxu0 0.0
    %6936 = vmatprep.subr.mxu0 0.0
    %6937 = vmatpush1.xpose.msra.mxu0 0.0
    %6938 = vmatprep.subr.mxu0 0.0
    %6939 = vmatpush1.xpose.msra.mxu0 0.0
    %6940 = vmatprep.subr.mxu0 0.0
    %6941 = vmatpush1.xpose.msra.mxu0 0.0
    %6942 = vmatprep.subr.mxu0 0.0
    %6943 = vmatpush1.xpose.msra.mxu0 0.0
    %6944 = vmatprep.subr.mxu0 0.0
    %6945 = vmatpush1.xpose.msra.mxu0 0.0
    %6946 = vmatprep.subr.mxu0 0.0
    %6947 = vmatpush1.xpose.msra.mxu0 0.0
    %6948 = vmatprep.subr.mxu0 0.0
    %6949 = vmatpush1.xpose.msra.mxu0 0.0
    %6950 = vmatprep.subr.mxu0 0.0
    %6951 = vmatpush1.xpose.msra.mxu0 0.0
    %6952 = vmatprep.subr.mxu0 0.0
    %6953 = vmatpush1.xpose.msra.mxu0 0.0
    %6954 = vmatprep.subr.mxu0 0.0
    %6955 = vmatpush1.xpose.msra.mxu0 0.0
    %6956 = vmatprep.subr.mxu0 0.0
    %6957 = vmatpush1.xpose.msra.mxu0 0.0
    %6958 = vmatprep.subr.mxu0 0.0
    %6959 = vmatpush1.xpose.msra.mxu0 0.0
    %6960 = vmatprep.subr.mxu0 0.0
    %6961 = vmatpush1.xpose.msra.mxu0 0.0
    %6962 = vmatprep.subr.mxu0 0.0
    %6963 = vmatpush1.xpose.msra.mxu0 0.0
    %6964 = vmatprep.mubr.f32.mxu0 0.0
    %6965 = vmatmul.mubr.f32.gmra.mrb[0].mxu0 %v6895
    %v6966 = vpop.f32.mrb[0].mxu0
    %v6967 = vadd.f32 %v2067, %v6966
    %v6968 = vpop.f32.mrb[0].mxu0
    %6969 = vdwg.mxu0
    %v6970 = vsel %vm2070, %v6435, -inf
    %6971 = vmax.xlane.f32.xlu0 %v6970
    %v6972 = vpop.xlane.xlu0 %6971
    %v6973 = vsel %vm2070, %v6511, -inf
    %6974 = vmax.xlane.f32.xlu0 %v6973
    %v6975 = vpop.xlane.xlu0 %6974
    %v6976 = vsel %vm2070, %v6587, -inf
    %6977 = vmax.xlane.f32.xlu0 %v6976
    %v6978 = vpop.xlane.xlu0 %6977
    %v6979 = vsel %vm2070, %v6663, -inf
    %6980 = vmax.xlane.f32.xlu0 %v6979
    %v6981 = vpop.xlane.xlu0 %6980
    %v6982 = vsel %vm2070, %v6739, -inf
    %6983 = vmax.xlane.f32.xlu0 %v6982
    %v6984 = vpop.xlane.xlu0 %6983
    %v6985 = vsel %vm2070, %v6815, -inf
    %6986 = vmax.xlane.f32.xlu0 %v6985
    %v6987 = vpop.xlane.xlu0 %6986
    %v6988 = vsel %vm2070, %v6891, -inf
    %6989 = vmax.xlane.f32.xlu0 %v6988
    %v6990 = vpop.xlane.xlu0 %6989
    %v6991 = vsel %vm2070, %v6967, -inf
    %6992 = vmax.xlane.f32.xlu0 %v6991
    %v6993 = vpop.xlane.xlu0 %6992
    %v6994 = vsub.f32 %v6435, %v6972
    %v6995 = vsub.f32 %v6511, %v6975
    %v6996 = vsub.f32 %v6587, %v6978
    %v6997 = vsub.f32 %v6663, %v6981
    %v6998 = vsub.f32 %v6739, %v6984
    %v6999 = vsub.f32 %v6815, %v6987
    %v7000 = vsub.f32 %v6891, %v6990
    %v7001 = vsub.f32 %v6967, %v6993
    %v7002 = vmul.f32 %v6994, 1.442695
    %v7003 = vpow.pop %v7002
    %v7004 = vmul.f32 %v6995, 1.442695
    %v7005 = vpow.pop %v7004
    %v7006 = vmul.f32 %v6996, 1.442695
    %v7007 = vpow.pop %v7006
    %v7008 = vmul.f32 %v6997, 1.442695
    %v7009 = vpow.pop %v7008
    %v7010 = vmul.f32 %v6998, 1.442695
    %v7011 = vpow.pop %v7010
    %v7012 = vmul.f32 %v6999, 1.442695
    %v7013 = vpow.pop %v7012
    %v7014 = vmul.f32 %v7000, 1.442695
    %v7015 = vpow.pop %v7014
    %v7016 = vmul.f32 %v7001, 1.442695
    %v7017 = vpow.pop %v7016
    %v7018 = vsel %vm2070, %v7003, 0.0
    %7019 = vadd.xlane.f32.xlu0 %v7018
    %v7020 = vpop.xlane.xlu0 %7019
    %v7021 = vsel %vm2070, %v7005, 0.0
    %7022 = vadd.xlane.f32.xlu0 %v7021
    %v7023 = vpop.xlane.xlu0 %7022
    %v7024 = vsel %vm2070, %v7007, 0.0
    %7025 = vadd.xlane.f32.xlu0 %v7024
    %v7026 = vpop.xlane.xlu0 %7025
    %v7027 = vsel %vm2070, %v7009, 0.0
    %7028 = vadd.xlane.f32.xlu0 %v7027
    %v7029 = vpop.xlane.xlu0 %7028
    %v7030 = vsel %vm2070, %v7011, 0.0
    %7031 = vadd.xlane.f32.xlu0 %v7030
    %v7032 = vpop.xlane.xlu0 %7031
    %v7033 = vsel %vm2070, %v7013, 0.0
    %7034 = vadd.xlane.f32.xlu0 %v7033
    %v7035 = vpop.xlane.xlu0 %7034
    %v7036 = vsel %vm2070, %v7015, 0.0
    %7037 = vadd.xlane.f32.xlu0 %v7036
    %v7038 = vpop.xlane.xlu0 %7037
    %v7039 = vsel %vm2070, %v7017, 0.0
    %7040 = vadd.xlane.f32.xlu0 %v7039
    %v7041 = vpop.xlane.xlu0 %7040
    %v7042 = vrcp.pop %v7020
    %v7043 = vrcp.pop %v7023
    %v7044 = vrcp.pop %v7026
    %v7045 = vrcp.pop %v7029
    %v7046 = vrcp.pop %v7032
    %v7047 = vrcp.pop %v7035
    %v7048 = vrcp.pop %v7038
    %v7049 = vrcp.pop %v7041
    %v7050 = vmul.f32 %v7003, %v7042
    %v7051 = vmul.f32 %v7005, %v7043
    %v7052 = vmul.f32 %v7007, %v7044
    %v7053 = vmul.f32 %v7009, %v7045
    %v7054 = vmul.f32 %v7011, %v7046
    %v7055 = vmul.f32 %v7013, %v7047
    %v7056 = vmul.f32 %v7015, %v7048
    %v7057 = vmul.f32 %v7017, %v7049
    %v7059 = vsel %vm2070, %v7050, 0
    %7061 = vmatprep.subr.mxu0 0.0
    %7062 = vmatpush1.msra.mxu0 %v5869
    %7063 = vmatprep.subr.mxu0 0.0
    %7064 = vmatpush1.msra.mxu0 0.0
    %7065 = vmatprep.subr.mxu0 0.0
    %7066 = vmatpush1.msra.mxu0 0.0
    %7067 = vmatprep.subr.mxu0 0.0
    %7068 = vmatpush1.msra.mxu0 0.0
    %7069 = vmatprep.subr.mxu0 0.0
    %7070 = vmatpush1.msra.mxu0 0.0
    %7071 = vmatprep.subr.mxu0 0.0
    %7072 = vmatpush1.msra.mxu0 0.0
    %7073 = vmatprep.subr.mxu0 0.0
    %7074 = vmatpush1.msra.mxu0 0.0
    %7075 = vmatprep.subr.mxu0 0.0
    %7076 = vmatpush1.msra.mxu0 0.0
    %7077 = vmatprep.subr.mxu0 0.0
    %7078 = vmatpush1.msra.mxu0 0.0
    %7079 = vmatprep.subr.mxu0 0.0
    %7080 = vmatpush1.msra.mxu0 0.0
    %7081 = vmatprep.subr.mxu0 0.0
    %7082 = vmatpush1.msra.mxu0 0.0
    %7083 = vmatprep.subr.mxu0 0.0
    %7084 = vmatpush1.msra.mxu0 0.0
    %7085 = vmatprep.subr.mxu0 0.0
    %7086 = vmatpush1.msra.mxu0 0.0
    %7087 = vmatprep.subr.mxu0 0.0
    %7088 = vmatpush1.msra.mxu0 0.0
    %7089 = vmatprep.subr.mxu0 0.0
    %7090 = vmatpush1.msra.mxu0 0.0
    %7091 = vmatprep.subr.mxu0 0.0
    %7092 = vmatpush1.msra.mxu0 0.0
    %7093 = vmatprep.subr.mxu0 0.0
    %7094 = vmatpush1.msra.mxu0 0.0
    %7095 = vmatprep.subr.mxu0 0.0
    %7096 = vmatpush1.msra.mxu0 0.0
    %7097 = vmatprep.subr.mxu0 0.0
    %7098 = vmatpush1.msra.mxu0 0.0
    %7099 = vmatprep.subr.mxu0 0.0
    %7100 = vmatpush1.msra.mxu0 0.0
    %7101 = vmatprep.subr.mxu0 0.0
    %7102 = vmatpush1.msra.mxu0 0.0
    %7103 = vmatprep.subr.mxu0 0.0
    %7104 = vmatpush1.msra.mxu0 0.0
    %7105 = vmatprep.subr.mxu0 0.0
    %7106 = vmatpush1.msra.mxu0 0.0
    %7107 = vmatprep.subr.mxu0 0.0
    %7108 = vmatpush1.msra.mxu0 0.0
    %7109 = vmatprep.subr.mxu0 0.0
    %7110 = vmatpush1.msra.mxu0 0.0
    %7111 = vmatprep.subr.mxu0 0.0
    %7112 = vmatpush1.msra.mxu0 0.0
    %7113 = vmatprep.subr.mxu0 0.0
    %7114 = vmatpush1.msra.mxu0 0.0
    %7115 = vmatprep.subr.mxu0 0.0
    %7116 = vmatpush1.msra.mxu0 0.0
    %7117 = vmatprep.subr.mxu0 0.0
    %7118 = vmatpush1.msra.mxu0 0.0
    %7119 = vmatprep.subr.mxu0 0.0
    %7120 = vmatpush1.msra.mxu0 0.0
    %7121 = vmatprep.subr.mxu0 0.0
    %7122 = vmatpush1.msra.mxu0 0.0
    %7123 = vmatprep.subr.mxu0 0.0
    %7124 = vmatpush1.msra.mxu0 0.0
    %7125 = vmatprep.mubr.f32.mxu0 0.0
    %7126 = vmatmul.mubr.f32.gmra.mrb[0].mxu0 %v7059
    %v7127 = vpop.f32.mrb[0].mxu0
    %v7128 = vadd.f32 0.0, %v7127
    %v7129 = vpop.f32.mrb[0].mxu0
    %7130 = vdwg.mxu0
    %v7132 = vsel %vm2070, %v7051, 0
    %7134 = vmatprep.subr.mxu0 0.0
    %7135 = vmatpush1.msra.mxu0 %v5939
    %7136 = vmatprep.subr.mxu0 0.0
    %7137 = vmatpush1.msra.mxu0 0.0
    %7138 = vmatprep.subr.mxu0 0.0
    %7139 = vmatpush1.msra.mxu0 0.0
    %7140 = vmatprep.subr.mxu0 0.0
    %7141 = vmatpush1.msra.mxu0 0.0
    %7142 = vmatprep.subr.mxu0 0.0
    %7143 = vmatpush1.msra.mxu0 0.0
    %7144 = vmatprep.subr.mxu0 0.0
    %7145 = vmatpush1.msra.mxu0 0.0
    %7146 = vmatprep.subr.mxu0 0.0
    %7147 = vmatpush1.msra.mxu0 0.0
    %7148 = vmatprep.subr.mxu0 0.0
    %7149 = vmatpush1.msra.mxu0 0.0
    %7150 = vmatprep.subr.mxu0 0.0
    %7151 = vmatpush1.msra.mxu0 0.0
    %7152 = vmatprep.subr.mxu0 0.0
    %7153 = vmatpush1.msra.mxu0 0.0
    %7154 = vmatprep.subr.mxu0 0.0
    %7155 = vmatpush1.msra.mxu0 0.0
    %7156 = vmatprep.subr.mxu0 0.0
    %7157 = vmatpush1.msra.mxu0 0.0
    %7158 = vmatprep.subr.mxu0 0.0
    %7159 = vmatpush1.msra.mxu0 0.0
    %7160 = vmatprep.subr.mxu0 0.0
    %7161 = vmatpush1.msra.mxu0 0.0
    %7162 = vmatprep.subr.mxu0 0.0
    %7163 = vmatpush1.msra.mxu0 0.0
    %7164 = vmatprep.subr.mxu0 0.0
    %7165 = vmatpush1.msra.mxu0 0.0
    %7166 = vmatprep.subr.mxu0 0.0
    %7167 = vmatpush1.msra.mxu0 0.0
    %7168 = vmatprep.subr.mxu0 0.0
    %7169 = vmatpush1.msra.mxu0 0.0
    %7170 = vmatprep.subr.mxu0 0.0
    %7171 = vmatpush1.msra.mxu0 0.0
    %7172 = vmatprep.subr.mxu0 0.0
    %7173 = vmatpush1.msra.mxu0 0.0
    %7174 = vmatprep.subr.mxu0 0.0
    %7175 = vmatpush1.msra.mxu0 0.0
    %7176 = vmatprep.subr.mxu0 0.0
    %7177 = vmatpush1.msra.mxu0 0.0
    %7178 = vmatprep.subr.mxu0 0.0
    %7179 = vmatpush1.msra.mxu0 0.0
    %7180 = vmatprep.subr.mxu0 0.0
    %7181 = vmatpush1.msra.mxu0 0.0
    %7182 = vmatprep.subr.mxu0 0.0
    %7183 = vmatpush1.msra.mxu0 0.0
    %7184 = vmatprep.subr.mxu0 0.0
    %7185 = vmatpush1.msra.mxu0 0.0
    %7186 = vmatprep.subr.mxu0 0.0
    %7187 = vmatpush1.msra.mxu0 0.0
    %7188 = vmatprep.subr.mxu0 0.0
    %7189 = vmatpush1.msra.mxu0 0.0
    %7190 = vmatprep.subr.mxu0 0.0
    %7191 = vmatpush1.msra.mxu0 0.0
    %7192 = vmatprep.subr.mxu0 0.0
    %7193 = vmatpush1.msra.mxu0 0.0
    %7194 = vmatprep.subr.mxu0 0.0
    %7195 = vmatpush1.msra.mxu0 0.0
    %7196 = vmatprep.subr.mxu0 0.0
    %7197 = vmatpush1.msra.mxu0 0.0
    %7198 = vmatprep.mubr.f32.mxu0 0.0
    %7199 = vmatmul.mubr.f32.gmra.mrb[0].mxu0 %v7132
    %v7200 = vpop.f32.mrb[0].mxu0
    %v7201 = vadd.f32 0.0, %v7200
    %v7202 = vpop.f32.mrb[0].mxu0
    %7203 = vdwg.mxu0
    %v7205 = vsel %vm2070, %v7052, 0
    %7207 = vmatprep.subr.mxu0 0.0
    %7208 = vmatpush1.msra.mxu0 %v6009
    %7209 = vmatprep.subr.mxu0 0.0
    %7210 = vmatpush1.msra.mxu0 0.0
    %7211 = vmatprep.subr.mxu0 0.0
    %7212 = vmatpush1.msra.mxu0 0.0
    %7213 = vmatprep.subr.mxu0 0.0
    %7214 = vmatpush1.msra.mxu0 0.0
    %7215 = vmatprep.subr.mxu0 0.0
    %7216 = vmatpush1.msra.mxu0 0.0
    %7217 = vmatprep.subr.mxu0 0.0
    %7218 = vmatpush1.msra.mxu0 0.0
    %7219 = vmatprep.subr.mxu0 0.0
    %7220 = vmatpush1.msra.mxu0 0.0
    %7221 = vmatprep.subr.mxu0 0.0
    %7222 = vmatpush1.msra.mxu0 0.0
    %7223 = vmatprep.subr.mxu0 0.0
    %7224 = vmatpush1.msra.mxu0 0.0
    %7225 = vmatprep.subr.mxu0 0.0
    %7226 = vmatpush1.msra.mxu0 0.0
    %7227 = vmatprep.subr.mxu0 0.0
    %7228 = vmatpush1.msra.mxu0 0.0
    %7229 = vmatprep.subr.mxu0 0.0
    %7230 = vmatpush1.msra.mxu0 0.0
    %7231 = vmatprep.subr.mxu0 0.0
    %7232 = vmatpush1.msra.mxu0 0.0
    %7233 = vmatprep.subr.mxu0 0.0
    %7234 = vmatpush1.msra.mxu0 0.0
    %7235 = vmatprep.subr.mxu0 0.0
    %7236 = vmatpush1.msra.mxu0 0.0
    %7237 = vmatprep.subr.mxu0 0.0
    %7238 = vmatpush1.msra.mxu0 0.0
    %7239 = vmatprep.subr.mxu0 0.0
    %7240 = vmatpush1.msra.mxu0 0.0
    %7241 = vmatprep.subr.mxu0 0.0
    %7242 = vmatpush1.msra.mxu0 0.0
    %7243 = vmatprep.subr.mxu0 0.0
    %7244 = vmatpush1.msra.mxu0 0.0
    %7245 = vmatprep.subr.mxu0 0.0
    %7246 = vmatpush1.msra.mxu0 0.0
    %7247 = vmatprep.subr.mxu0 0.0
    %7248 = vmatpush1.msra.mxu0 0.0
    %7249 = vmatprep.subr.mxu0 0.0
    %7250 = vmatpush1.msra.mxu0 0.0
    %7251 = vmatprep.subr.mxu0 0.0
    %7252 = vmatpush1.msra.mxu0 0.0
    %7253 = vmatprep.subr.mxu0 0.0
    %7254 = vmatpush1.msra.mxu0 0.0
    %7255 = vmatprep.subr.mxu0 0.0
    %7256 = vmatpush1.msra.mxu0 0.0
    %7257 = vmatprep.subr.mxu0 0.0
    %7258 = vmatpush1.msra.mxu0 0.0
    %7259 = vmatprep.subr.mxu0 0.0
    %7260 = vmatpush1.msra.mxu0 0.0
    %7261 = vmatprep.subr.mxu0 0.0
    %7262 = vmatpush1.msra.mxu0 0.0
    %7263 = vmatprep.subr.mxu0 0.0
    %7264 = vmatpush1.msra.mxu0 0.0
    %7265 = vmatprep.subr.mxu0 0.0
    %7266 = vmatpush1.msra.mxu0 0.0
    %7267 = vmatprep.subr.mxu0 0.0
    %7268 = vmatpush1.msra.mxu0 0.0
    %7269 = vmatprep.subr.mxu0 0.0
    %7270 = vmatpush1.msra.mxu0 0.0
    %7271 = vmatprep.mubr.f32.mxu0 0.0
    %7272 = vmatmul.mubr.f32.gmra.mrb[0].mxu0 %v7205
    %v7273 = vpop.f32.mrb[0].mxu0
    %v7274 = vadd.f32 0.0, %v7273
    %v7275 = vpop.f32.mrb[0].mxu0
    %7276 = vdwg.mxu0
    %v7278 = vsel %vm2070, %v7053, 0
    %7280 = vmatprep.subr.mxu0 0.0
    %7281 = vmatpush1.msra.mxu0 %v6079
    %7282 = vmatprep.subr.mxu0 0.0
    %7283 = vmatpush1.msra.mxu0 0.0
    %7284 = vmatprep.subr.mxu0 0.0
    %7285 = vmatpush1.msra.mxu0 0.0
    %7286 = vmatprep.subr.mxu0 0.0
    %7287 = vmatpush1.msra.mxu0 0.0
    %7288 = vmatprep.subr.mxu0 0.0
    %7289 = vmatpush1.msra.mxu0 0.0
    %7290 = vmatprep.subr.mxu0 0.0
    %7291 = vmatpush1.msra.mxu0 0.0
    %7292 = vmatprep.subr.mxu0 0.0
    %7293 = vmatpush1.msra.mxu0 0.0
    %7294 = vmatprep.subr.mxu0 0.0
    %7295 = vmatpush1.msra.mxu0 0.0
    %7296 = vmatprep.subr.mxu0 0.0
    %7297 = vmatpush1.msra.mxu0 0.0
    %7298 = vmatprep.subr.mxu0 0.0
    %7299 = vmatpush1.msra.mxu0 0.0
    %7300 = vmatprep.subr.mxu0 0.0
    %7301 = vmatpush1.msra.mxu0 0.0
    %7302 = vmatprep.subr.mxu0 0.0
    %7303 = vmatpush1.msra.mxu0 0.0
    %7304 = vmatprep.subr.mxu0 0.0
    %7305 = vmatpush1.msra.mxu0 0.0
    %7306 = vmatprep.subr.mxu0 0.0
    %7307 = vmatpush1.msra.mxu0 0.0
    %7308 = vmatprep.subr.mxu0 0.0
    %7309 = vmatpush1.msra.mxu0 0.0
    %7310 = vmatprep.subr.mxu0 0.0
    %7311 = vmatpush1.msra.mxu0 0.0
    %7312 = vmatprep.subr.mxu0 0.0
    %7313 = vmatpush1.msra.mxu0 0.0
    %7314 = vmatprep.subr.mxu0 0.0
    %7315 = vmatpush1.msra.mxu0 0.0
    %7316 = vmatprep.subr.mxu0 0.0
    %7317 = vmatpush1.msra.mxu0 0.0
    %7318 = vmatprep.subr.mxu0 0.0
    %7319 = vmatpush1.msra.mxu0 0.0
    %7320 = vmatprep.subr.mxu0 0.0
    %7321 = vmatpush1.msra.mxu0 0.0
    %7322 = vmatprep.subr.mxu0 0.0
    %7323 = vmatpush1.msra.mxu0 0.0
    %7324 = vmatprep.subr.mxu0 0.0
    %7325 = vmatpush1.msra.mxu0 0.0
    %7326 = vmatprep.subr.mxu0 0.0
    %7327 = vmatpush1.msra.mxu0 0.0
    %7328 = vmatprep.subr.mxu0 0.0
    %7329 = vmatpush1.msra.mxu0 0.0
    %7330 = vmatprep.subr.mxu0 0.0
    %7331 = vmatpush1.msra.mxu0 0.0
    %7332 = vmatprep.subr.mxu0 0.0
    %7333 = vmatpush1.msra.mxu0 0.0
    %7334 = vmatprep.subr.mxu0 0.0
    %7335 = vmatpush1.msra.mxu0 0.0
    %7336 = vmatprep.subr.mxu0 0.0
    %7337 = vmatpush1.msra.mxu0 0.0
    %7338 = vmatprep.subr.mxu0 0.0
    %7339 = vmatpush1.msra.mxu0 0.0
    %7340 = vmatprep.subr.mxu0 0.0
    %7341 = vmatpush1.msra.mxu0 0.0
    %7342 = vmatprep.subr.mxu0 0.0
    %7343 = vmatpush1.msra.mxu0 0.0
    %7344 = vmatprep.mubr.f32.mxu0 0.0
    %7345 = vmatmul.mubr.f32.gmra.mrb[0].mxu0 %v7278
    %v7346 = vpop.f32.mrb[0].mxu0
    %v7347 = vadd.f32 0.0, %v7346
    %v7348 = vpop.f32.mrb[0].mxu0
    %7349 = vdwg.mxu0
    %v7351 = vsel %vm2070, %v7054, 0
    %7353 = vmatprep.subr.mxu0 0.0
    %7354 = vmatpush1.msra.mxu0 %v6149
    %7355 = vmatprep.subr.mxu0 0.0
    %7356 = vmatpush1.msra.mxu0 0.0
    %7357 = vmatprep.subr.mxu0 0.0
    %7358 = vmatpush1.msra.mxu0 0.0
    %7359 = vmatprep.subr.mxu0 0.0
    %7360 = vmatpush1.msra.mxu0 0.0
    %7361 = vmatprep.subr.mxu0 0.0
    %7362 = vmatpush1.msra.mxu0 0.0
    %7363 = vmatprep.subr.mxu0 0.0
    %7364 = vmatpush1.msra.mxu0 0.0
    %7365 = vmatprep.subr.mxu0 0.0
    %7366 = vmatpush1.msra.mxu0 0.0
    %7367 = vmatprep.subr.mxu0 0.0
    %7368 = vmatpush1.msra.mxu0 0.0
    %7369 = vmatprep.subr.mxu0 0.0
    %7370 = vmatpush1.msra.mxu0 0.0
    %7371 = vmatprep.subr.mxu0 0.0
    %7372 = vmatpush1.msra.mxu0 0.0
    %7373 = vmatprep.subr.mxu0 0.0
    %7374 = vmatpush1.msra.mxu0 0.0
    %7375 = vmatprep.subr.mxu0 0.0
    %7376 = vmatpush1.msra.mxu0 0.0
    %7377 = vmatprep.subr.mxu0 0.0
    %7378 = vmatpush1.msra.mxu0 0.0
    %7379 = vmatprep.subr.mxu0 0.0
    %7380 = vmatpush1.msra.mxu0 0.0
    %7381 = vmatprep.subr.mxu0 0.0
    %7382 = vmatpush1.msra.mxu0 0.0
    %7383 = vmatprep.subr.mxu0 0.0
    %7384 = vmatpush1.msra.mxu0 0.0
    %7385 = vmatprep.subr.mxu0 0.0
    %7386 = vmatpush1.msra.mxu0 0.0
    %7387 = vmatprep.subr.mxu0 0.0
    %7388 = vmatpush1.msra.mxu0 0.0
    %7389 = vmatprep.subr.mxu0 0.0
    %7390 = vmatpush1.msra.mxu0 0.0
    %7391 = vmatprep.subr.mxu0 0.0
    %7392 = vmatpush1.msra.mxu0 0.0
    %7393 = vmatprep.subr.mxu0 0.0
    %7394 = vmatpush1.msra.mxu0 0.0
    %7395 = vmatprep.subr.mxu0 0.0
    %7396 = vmatpush1.msra.mxu0 0.0
    %7397 = vmatprep.subr.mxu0 0.0
    %7398 = vmatpush1.msra.mxu0 0.0
    %7399 = vmatprep.subr.mxu0 0.0
    %7400 = vmatpush1.msra.mxu0 0.0
    %7401 = vmatprep.subr.mxu0 0.0
    %7402 = vmatpush1.msra.mxu0 0.0
    %7403 = vmatprep.subr.mxu0 0.0
    %7404 = vmatpush1.msra.mxu0 0.0
    %7405 = vmatprep.subr.mxu0 0.0
    %7406 = vmatpush1.msra.mxu0 0.0
    %7407 = vmatprep.subr.mxu0 0.0
    %7408 = vmatpush1.msra.mxu0 0.0
    %7409 = vmatprep.subr.mxu0 0.0
    %7410 = vmatpush1.msra.mxu0 0.0
    %7411 = vmatprep.subr.mxu0 0.0
    %7412 = vmatpush1.msra.mxu0 0.0
    %7413 = vmatprep.subr.mxu0 0.0
    %7414 = vmatpush1.msra.mxu0 0.0
    %7415 = vmatprep.subr.mxu0 0.0
    %7416 = vmatpush1.msra.mxu0 0.0
    %7417 = vmatprep.mubr.f32.mxu0 0.0
    %7418 = vmatmul.mubr.f32.gmra.mrb[0].mxu0 %v7351
    %v7419 = vpop.f32.mrb[0].mxu0
    %v7420 = vadd.f32 0.0, %v7419
    %v7421 = vpop.f32.mrb[0].mxu0
    %7422 = vdwg.mxu0
    %v7424 = vsel %vm2070, %v7055, 0
    %7426 = vmatprep.subr.mxu0 0.0
    %7427 = vmatpush1.msra.mxu0 %v6219
    %7428 = vmatprep.subr.mxu0 0.0
    %7429 = vmatpush1.msra.mxu0 0.0
    %7430 = vmatprep.subr.mxu0 0.0
    %7431 = vmatpush1.msra.mxu0 0.0
    %7432 = vmatprep.subr.mxu0 0.0
    %7433 = vmatpush1.msra.mxu0 0.0
    %7434 = vmatprep.subr.mxu0 0.0
    %7435 = vmatpush1.msra.mxu0 0.0
    %7436 = vmatprep.subr.mxu0 0.0
    %7437 = vmatpush1.msra.mxu0 0.0
    %7438 = vmatprep.subr.mxu0 0.0
    %7439 = vmatpush1.msra.mxu0 0.0
    %7440 = vmatprep.subr.mxu0 0.0
    %7441 = vmatpush1.msra.mxu0 0.0
    %7442 = vmatprep.subr.mxu0 0.0
    %7443 = vmatpush1.msra.mxu0 0.0
    %7444 = vmatprep.subr.mxu0 0.0
    %7445 = vmatpush1.msra.mxu0 0.0
    %7446 = vmatprep.subr.mxu0 0.0
    %7447 = vmatpush1.msra.mxu0 0.0
    %7448 = vmatprep.subr.mxu0 0.0
    %7449 = vmatpush1.msra.mxu0 0.0
    %7450 = vmatprep.subr.mxu0 0.0
    %7451 = vmatpush1.msra.mxu0 0.0
    %7452 = vmatprep.subr.mxu0 0.0
    %7453 = vmatpush1.msra.mxu0 0.0
    %7454 = vmatprep.subr.mxu0 0.0
    %7455 = vmatpush1.msra.mxu0 0.0
    %7456 = vmatprep.subr.mxu0 0.0
    %7457 = vmatpush1.msra.mxu0 0.0
    %7458 = vmatprep.subr.mxu0 0.0
    %7459 = vmatpush1.msra.mxu0 0.0
    %7460 = vmatprep.subr.mxu0 0.0
    %7461 = vmatpush1.msra.mxu0 0.0
    %7462 = vmatprep.subr.mxu0 0.0
    %7463 = vmatpush1.msra.mxu0 0.0
    %7464 = vmatprep.subr.mxu0 0.0
    %7465 = vmatpush1.msra.mxu0 0.0
    %7466 = vmatprep.subr.mxu0 0.0
    %7467 = vmatpush1.msra.mxu0 0.0
    %7468 = vmatprep.subr.mxu0 0.0
    %7469 = vmatpush1.msra.mxu0 0.0
    %7470 = vmatprep.subr.mxu0 0.0
    %7471 = vmatpush1.msra.mxu0 0.0
    %7472 = vmatprep.subr.mxu0 0.0
    %7473 = vmatpush1.msra.mxu0 0.0
    %7474 = vmatprep.subr.mxu0 0.0
    %7475 = vmatpush1.msra.mxu0 0.0
    %7476 = vmatprep.subr.mxu0 0.0
    %7477 = vmatpush1.msra.mxu0 0.0
    %7478 = vmatprep.subr.mxu0 0.0
    %7479 = vmatpush1.msra.mxu0 0.0
    %7480 = vmatprep.subr.mxu0 0.0
    %7481 = vmatpush1.msra.mxu0 0.0
    %7482 = vmatprep.subr.mxu0 0.0
    %7483 = vmatpush1.msra.mxu0 0.0
    %7484 = vmatprep.subr.mxu0 0.0
    %7485 = vmatpush1.msra.mxu0 0.0
    %7486 = vmatprep.subr.mxu0 0.0
    %7487 = vmatpush1.msra.mxu0 0.0
    %7488 = vmatprep.subr.mxu0 0.0
    %7489 = vmatpush1.msra.mxu0 0.0
    %7490 = vmatprep.mubr.f32.mxu0 0.0
    %7491 = vmatmul.mubr.f32.gmra.mrb[0].mxu0 %v7424
    %v7492 = vpop.f32.mrb[0].mxu0
    %v7493 = vadd.f32 0.0, %v7492
    %v7494 = vpop.f32.mrb[0].mxu0
    %7495 = vdwg.mxu0
    %v7497 = vsel %vm2070, %v7056, 0
    %7499 = vmatprep.subr.mxu0 0.0
    %7500 = vmatpush1.msra.mxu0 %v6289
    %7501 = vmatprep.subr.mxu0 0.0
    %7502 = vmatpush1.msra.mxu0 0.0
    %7503 = vmatprep.subr.mxu0 0.0
    %7504 = vmatpush1.msra.mxu0 0.0
    %7505 = vmatprep.subr.mxu0 0.0
    %7506 = vmatpush1.msra.mxu0 0.0
    %7507 = vmatprep.subr.mxu0 0.0
    %7508 = vmatpush1.msra.mxu0 0.0
    %7509 = vmatprep.subr.mxu0 0.0
    %7510 = vmatpush1.msra.mxu0 0.0
    %7511 = vmatprep.subr.mxu0 0.0
    %7512 = vmatpush1.msra.mxu0 0.0
    %7513 = vmatprep.subr.mxu0 0.0
    %7514 = vmatpush1.msra.mxu0 0.0
    %7515 = vmatprep.subr.mxu0 0.0
    %7516 = vmatpush1.msra.mxu0 0.0
    %7517 = vmatprep.subr.mxu0 0.0
    %7518 = vmatpush1.msra.mxu0 0.0
    %7519 = vmatprep.subr.mxu0 0.0
    %7520 = vmatpush1.msra.mxu0 0.0
    %7521 = vmatprep.subr.mxu0 0.0
    %7522 = vmatpush1.msra.mxu0 0.0
    %7523 = vmatprep.subr.mxu0 0.0
    %7524 = vmatpush1.msra.mxu0 0.0
    %7525 = vmatprep.subr.mxu0 0.0
    %7526 = vmatpush1.msra.mxu0 0.0
    %7527 = vmatprep.subr.mxu0 0.0
    %7528 = vmatpush1.msra.mxu0 0.0
    %7529 = vmatprep.subr.mxu0 0.0
    %7530 = vmatpush1.msra.mxu0 0.0
    %7531 = vmatprep.subr.mxu0 0.0
    %7532 = vmatpush1.msra.mxu0 0.0
    %7533 = vmatprep.subr.mxu0 0.0
    %7534 = vmatpush1.msra.mxu0 0.0
    %7535 = vmatprep.subr.mxu0 0.0
    %7536 = vmatpush1.msra.mxu0 0.0
    %7537 = vmatprep.subr.mxu0 0.0
    %7538 = vmatpush1.msra.mxu0 0.0
    %7539 = vmatprep.subr.mxu0 0.0
    %7540 = vmatpush1.msra.mxu0 0.0
    %7541 = vmatprep.subr.mxu0 0.0
    %7542 = vmatpush1.msra.mxu0 0.0
    %7543 = vmatprep.subr.mxu0 0.0
    %7544 = vmatpush1.msra.mxu0 0.0
    %7545 = vmatprep.subr.mxu0 0.0
    %7546 = vmatpush1.msra.mxu0 0.0
    %7547 = vmatprep.subr.mxu0 0.0
    %7548 = vmatpush1.msra.mxu0 0.0
    %7549 = vmatprep.subr.mxu0 0.0
    %7550 = vmatpush1.msra.mxu0 0.0
    %7551 = vmatprep.subr.mxu0 0.0
    %7552 = vmatpush1.msra.mxu0 0.0
    %7553 = vmatprep.subr.mxu0 0.0
    %7554 = vmatpush1.msra.mxu0 0.0
    %7555 = vmatprep.subr.mxu0 0.0
    %7556 = vmatpush1.msra.mxu0 0.0
    %7557 = vmatprep.subr.mxu0 0.0
    %7558 = vmatpush1.msra.mxu0 0.0
    %7559 = vmatprep.subr.mxu0 0.0
    %7560 = vmatpush1.msra.mxu0 0.0
    %7561 = vmatprep.subr.mxu0 0.0
    %7562 = vmatpush1.msra.mxu0 0.0
    %7563 = vmatprep.mubr.f32.mxu0 0.0
    %7564 = vmatmul.mubr.f32.gmra.mrb[0].mxu0 %v7497
    %v7565 = vpop.f32.mrb[0].mxu0
    %v7566 = vadd.f32 0.0, %v7565
    %v7567 = vpop.f32.mrb[0].mxu0
    %7568 = vdwg.mxu0
    %v7570 = vsel %vm2070, %v7057, 0
    %7572 = vmatprep.subr.mxu0 0.0
    %7573 = vmatpush1.msra.mxu0 %v6359
    %7574 = vmatprep.subr.mxu0 0.0
    %7575 = vmatpush1.msra.mxu0 0.0
    %7576 = vmatprep.subr.mxu0 0.0
    %7577 = vmatpush1.msra.mxu0 0.0
    %7578 = vmatprep.subr.mxu0 0.0
    %7579 = vmatpush1.msra.mxu0 0.0
    %7580 = vmatprep.subr.mxu0 0.0
    %7581 = vmatpush1.msra.mxu0 0.0
    %7582 = vmatprep.subr.mxu0 0.0
    %7583 = vmatpush1.msra.mxu0 0.0
    %7584 = vmatprep.subr.mxu0 0.0
    %7585 = vmatpush1.msra.mxu0 0.0
    %7586 = vmatprep.subr.mxu0 0.0
    %7587 = vmatpush1.msra.mxu0 0.0
    %7588 = vmatprep.subr.mxu0 0.0
    %7589 = vmatpush1.msra.mxu0 0.0
    %7590 = vmatprep.subr.mxu0 0.0
    %7591 = vmatpush1.msra.mxu0 0.0
    %7592 = vmatprep.subr.mxu0 0.0
    %7593 = vmatpush1.msra.mxu0 0.0
    %7594 = vmatprep.subr.mxu0 0.0
    %7595 = vmatpush1.msra.mxu0 0.0
    %7596 = vmatprep.subr.mxu0 0.0
    %7597 = vmatpush1.msra.mxu0 0.0
    %7598 = vmatprep.subr.mxu0 0.0
    %7599 = vmatpush1.msra.mxu0 0.0
    %7600 = vmatprep.subr.mxu0 0.0
    %7601 = vmatpush1.msra.mxu0 0.0
    %7602 = vmatprep.subr.mxu0 0.0
    %7603 = vmatpush1.msra.mxu0 0.0
    %7604 = vmatprep.subr.mxu0 0.0
    %7605 = vmatpush1.msra.mxu0 0.0
    %7606 = vmatprep.subr.mxu0 0.0
    %7607 = vmatpush1.msra.mxu0 0.0
    %7608 = vmatprep.subr.mxu0 0.0
    %7609 = vmatpush1.msra.mxu0 0.0
    %7610 = vmatprep.subr.mxu0 0.0
    %7611 = vmatpush1.msra.mxu0 0.0
    %7612 = vmatprep.subr.mxu0 0.0
    %7613 = vmatpush1.msra.mxu0 0.0
    %7614 = vmatprep.subr.mxu0 0.0
    %7615 = vmatpush1.msra.mxu0 0.0
    %7616 = vmatprep.subr.mxu0 0.0
    %7617 = vmatpush1.msra.mxu0 0.0
    %7618 = vmatprep.subr.mxu0 0.0
    %7619 = vmatpush1.msra.mxu0 0.0
    %7620 = vmatprep.subr.mxu0 0.0
    %7621 = vmatpush1.msra.mxu0 0.0
    %7622 = vmatprep.subr.mxu0 0.0
    %7623 = vmatpush1.msra.mxu0 0.0
    %7624 = vmatprep.subr.mxu0 0.0
    %7625 = vmatpush1.msra.mxu0 0.0
    %7626 = vmatprep.subr.mxu0 0.0
    %7627 = vmatpush1.msra.mxu0 0.0
    %7628 = vmatprep.subr.mxu0 0.0
    %7629 = vmatpush1.msra.mxu0 0.0
    %7630 = vmatprep.subr.mxu0 0.0
    %7631 = vmatpush1.msra.mxu0 0.0
    %7632 = vmatprep.subr.mxu0 0.0
    %7633 = vmatpush1.msra.mxu0 0.0
    %7634 = vmatprep.subr.mxu0 0.0
    %7635 = vmatpush1.msra.mxu0 0.0
    %7636 = vmatprep.mubr.f32.mxu0 0.0
    %7637 = vmatmul.mubr.f32.gmra.mrb[0].mxu0 %v7570
    %v7638 = vpop.f32.mrb[0].mxu0
    %v7639 = vadd.f32 0.0, %v7638
    %v7640 = vpop.f32.mrb[0].mxu0
    %7641 = vdwg.mxu0
    %s7642 = scalar_lea.vmem %s5, 64
    %v7643 = vld [vmem:[%s7642] sm:$0xff]
    %v7644 = vld [vmem:[%s7642 + $0x8] sm:$0xff]
    %v7645 = vld [vmem:[%s7642 + $0x10] sm:$0xff]
    %v7646 = vld [vmem:[%s7642 + $0x18] sm:$0xff]
    %v7647 = vld [vmem:[%s7642 + $0x20] sm:$0xff]
    %v7648 = vld [vmem:[%s7642 + $0x28] sm:$0xff]
    %v7649 = vld [vmem:[%s7642 + $0x30] sm:$0xff]
    %v7650 = vld [vmem:[%s7642 + $0x38] sm:$0xff]
    %v7652 = vsel %vm2070, %v7128, 0
    %7654 = vmatprep.subr.mxu0 0.0
    %7655 = vmatpush1.msra.mxu0 %v7643
    %7656 = vmatprep.subr.mxu0 0.0
    %7657 = vmatpush1.msra.mxu0 0.0
    %7658 = vmatprep.subr.mxu0 0.0
    %7659 = vmatpush1.msra.mxu0 0.0
    %7660 = vmatprep.subr.mxu0 0.0
    %7661 = vmatpush1.msra.mxu0 0.0
    %7662 = vmatprep.subr.mxu0 0.0
    %7663 = vmatpush1.msra.mxu0 0.0
    %7664 = vmatprep.subr.mxu0 0.0
    %7665 = vmatpush1.msra.mxu0 0.0
    %7666 = vmatprep.subr.mxu0 0.0
    %7667 = vmatpush1.msra.mxu0 0.0
    %7668 = vmatprep.subr.mxu0 0.0
    %7669 = vmatpush1.msra.mxu0 0.0
    %7670 = vmatprep.subr.mxu0 0.0
    %7671 = vmatpush1.msra.mxu0 0.0
    %7672 = vmatprep.subr.mxu0 0.0
    %7673 = vmatpush1.msra.mxu0 0.0
    %7674 = vmatprep.subr.mxu0 0.0
    %7675 = vmatpush1.msra.mxu0 0.0
    %7676 = vmatprep.subr.mxu0 0.0
    %7677 = vmatpush1.msra.mxu0 0.0
    %7678 = vmatprep.subr.mxu0 0.0
    %7679 = vmatpush1.msra.mxu0 0.0
    %7680 = vmatprep.subr.mxu0 0.0
    %7681 = vmatpush1.msra.mxu0 0.0
    %7682 = vmatprep.subr.mxu0 0.0
    %7683 = vmatpush1.msra.mxu0 0.0
    %7684 = vmatprep.subr.mxu0 0.0
    %7685 = vmatpush1.msra.mxu0 0.0
    %7686 = vmatprep.subr.mxu0 0.0
    %7687 = vmatpush1.msra.mxu0 0.0
    %7688 = vmatprep.subr.mxu0 0.0
    %7689 = vmatpush1.msra.mxu0 0.0
    %7690 = vmatprep.subr.mxu0 0.0
    %7691 = vmatpush1.msra.mxu0 0.0
    %7692 = vmatprep.subr.mxu0 0.0
    %7693 = vmatpush1.msra.mxu0 0.0
    %7694 = vmatprep.subr.mxu0 0.0
    %7695 = vmatpush1.msra.mxu0 0.0
    %7696 = vmatprep.subr.mxu0 0.0
    %7697 = vmatpush1.msra.mxu0 0.0
    %7698 = vmatprep.subr.mxu0 0.0
    %7699 = vmatpush1.msra.mxu0 0.0
    %7700 = vmatprep.subr.mxu0 0.0
    %7701 = vmatpush1.msra.mxu0 0.0
    %7702 = vmatprep.subr.mxu0 0.0
    %7703 = vmatpush1.msra.mxu0 0.0
    %7704 = vmatprep.subr.mxu0 0.0
    %7705 = vmatpush1.msra.mxu0 0.0
    %7706 = vmatprep.subr.mxu0 0.0
    %7707 = vmatpush1.msra.mxu0 0.0
    %7708 = vmatprep.subr.mxu0 0.0
    %7709 = vmatpush1.msra.mxu0 0.0
    %7710 = vmatprep.subr.mxu0 0.0
    %7711 = vmatpush1.msra.mxu0 0.0
    %7712 = vmatprep.subr.mxu0 0.0
    %7713 = vmatpush1.msra.mxu0 0.0
    %7714 = vmatprep.subr.mxu0 0.0
    %7715 = vmatpush1.msra.mxu0 0.0
    %7716 = vmatprep.subr.mxu0 0.0
    %7717 = vmatpush1.msra.mxu0 0.0
    %7718 = vmatprep.mubr.f32.mxu0 0.0
    %7719 = vmatmul.mubr.f32.gmra.mrb[0].mxu0 %v7652
    %v7720 = vpop.f32.mrb[0].mxu0
    %v7721 = vadd.f32 0.0, %v7720
    %v7722 = vpop.f32.mrb[0].mxu0
    %7723 = vdwg.mxu0
    %v7725 = vsel %vm2070, %v7201, 0
    %7727 = vmatprep.subr.mxu0 0.0
    %7728 = vmatpush1.msra.mxu0 %v7644
    %7729 = vmatprep.subr.mxu0 0.0
    %7730 = vmatpush1.msra.mxu0 0.0
    %7731 = vmatprep.subr.mxu0 0.0
    %7732 = vmatpush1.msra.mxu0 0.0
    %7733 = vmatprep.subr.mxu0 0.0
    %7734 = vmatpush1.msra.mxu0 0.0
    %7735 = vmatprep.subr.mxu0 0.0
    %7736 = vmatpush1.msra.mxu0 0.0
    %7737 = vmatprep.subr.mxu0 0.0
    %7738 = vmatpush1.msra.mxu0 0.0
    %7739 = vmatprep.subr.mxu0 0.0
    %7740 = vmatpush1.msra.mxu0 0.0
    %7741 = vmatprep.subr.mxu0 0.0
    %7742 = vmatpush1.msra.mxu0 0.0
    %7743 = vmatprep.subr.mxu0 0.0
    %7744 = vmatpush1.msra.mxu0 0.0
    %7745 = vmatprep.subr.mxu0 0.0
    %7746 = vmatpush1.msra.mxu0 0.0
    %7747 = vmatprep.subr.mxu0 0.0
    %7748 = vmatpush1.msra.mxu0 0.0
    %7749 = vmatprep.subr.mxu0 0.0
    %7750 = vmatpush1.msra.mxu0 0.0
    %7751 = vmatprep.subr.mxu0 0.0
    %7752 = vmatpush1.msra.mxu0 0.0
    %7753 = vmatprep.subr.mxu0 0.0
    %7754 = vmatpush1.msra.mxu0 0.0
    %7755 = vmatprep.subr.mxu0 0.0
    %7756 = vmatpush1.msra.mxu0 0.0
    %7757 = vmatprep.subr.mxu0 0.0
    %7758 = vmatpush1.msra.mxu0 0.0
    %7759 = vmatprep.subr.mxu0 0.0
    %7760 = vmatpush1.msra.mxu0 0.0
    %7761 = vmatprep.subr.mxu0 0.0
    %7762 = vmatpush1.msra.mxu0 0.0
    %7763 = vmatprep.subr.mxu0 0.0
    %7764 = vmatpush1.msra.mxu0 0.0
    %7765 = vmatprep.subr.mxu0 0.0
    %7766 = vmatpush1.msra.mxu0 0.0
    %7767 = vmatprep.subr.mxu0 0.0
    %7768 = vmatpush1.msra.mxu0 0.0
    %7769 = vmatprep.subr.mxu0 0.0
    %7770 = vmatpush1.msra.mxu0 0.0
    %7771 = vmatprep.subr.mxu0 0.0
    %7772 = vmatpush1.msra.mxu0 0.0
    %7773 = vmatprep.subr.mxu0 0.0
    %7774 = vmatpush1.msra.mxu0 0.0
    %7775 = vmatprep.subr.mxu0 0.0
    %7776 = vmatpush1.msra.mxu0 0.0
    %7777 = vmatprep.subr.mxu0 0.0
    %7778 = vmatpush1.msra.mxu0 0.0
    %7779 = vmatprep.subr.mxu0 0.0
    %7780 = vmatpush1.msra.mxu0 0.0
    %7781 = vmatprep.subr.mxu0 0.0
    %7782 = vmatpush1.msra.mxu0 0.0
    %7783 = vmatprep.subr.mxu0 0.0
    %7784 = vmatpush1.msra.mxu0 0.0
    %7785 = vmatprep.subr.mxu0 0.0
    %7786 = vmatpush1.msra.mxu0 0.0
    %7787 = vmatprep.subr.mxu0 0.0
    %7788 = vmatpush1.msra.mxu0 0.0
    %7789 = vmatprep.subr.mxu0 0.0
    %7790 = vmatpush1.msra.mxu0 0.0
    %7791 = vmatprep.mubr.f32.mxu0 0.0
    %7792 = vmatmul.mubr.f32.gmra.mrb[0].mxu0 %v7725
    %v7793 = vpop.f32.mrb[0].mxu0
    %v7794 = vadd.f32 0.0, %v7793
    %v7795 = vpop.f32.mrb[0].mxu0
    %7796 = vdwg.mxu0
    %v7798 = vsel %vm2070, %v7274, 0
    %7800 = vmatprep.subr.mxu0 0.0
    %7801 = vmatpush1.msra.mxu0 %v7645
    %7802 = vmatprep.subr.mxu0 0.0
    %7803 = vmatpush1.msra.mxu0 0.0
    %7804 = vmatprep.subr.mxu0 0.0
    %7805 = vmatpush1.msra.mxu0 0.0
    %7806 = vmatprep.subr.mxu0 0.0
    %7807 = vmatpush1.msra.mxu0 0.0
    %7808 = vmatprep.subr.mxu0 0.0
    %7809 = vmatpush1.msra.mxu0 0.0
    %7810 = vmatprep.subr.mxu0 0.0
    %7811 = vmatpush1.msra.mxu0 0.0
    %7812 = vmatprep.subr.mxu0 0.0
    %7813 = vmatpush1.msra.mxu0 0.0
    %7814 = vmatprep.subr.mxu0 0.0
    %7815 = vmatpush1.msra.mxu0 0.0
    %7816 = vmatprep.subr.mxu0 0.0
    %7817 = vmatpush1.msra.mxu0 0.0
    %7818 = vmatprep.subr.mxu0 0.0
    %7819 = vmatpush1.msra.mxu0 0.0
    %7820 = vmatprep.subr.mxu0 0.0
    %7821 = vmatpush1.msra.mxu0 0.0
    %7822 = vmatprep.subr.mxu0 0.0
    %7823 = vmatpush1.msra.mxu0 0.0
    %7824 = vmatprep.subr.mxu0 0.0
    %7825 = vmatpush1.msra.mxu0 0.0
    %7826 = vmatprep.subr.mxu0 0.0
    %7827 = vmatpush1.msra.mxu0 0.0
    %7828 = vmatprep.subr.mxu0 0.0
    %7829 = vmatpush1.msra.mxu0 0.0
    %7830 = vmatprep.subr.mxu0 0.0
    %7831 = vmatpush1.msra.mxu0 0.0
    %7832 = vmatprep.subr.mxu0 0.0
    %7833 = vmatpush1.msra.mxu0 0.0
    %7834 = vmatprep.subr.mxu0 0.0
    %7835 = vmatpush1.msra.mxu0 0.0
    %7836 = vmatprep.subr.mxu0 0.0
    %7837 = vmatpush1.msra.mxu0 0.0
    %7838 = vmatprep.subr.mxu0 0.0
    %7839 = vmatpush1.msra.mxu0 0.0
    %7840 = vmatprep.subr.mxu0 0.0
    %7841 = vmatpush1.msra.mxu0 0.0
    %7842 = vmatprep.subr.mxu0 0.0
    %7843 = vmatpush1.msra.mxu0 0.0
    %7844 = vmatprep.subr.mxu0 0.0
    %7845 = vmatpush1.msra.mxu0 0.0
    %7846 = vmatprep.subr.mxu0 0.0
    %7847 = vmatpush1.msra.mxu0 0.0
    %7848 = vmatprep.subr.mxu0 0.0
    %7849 = vmatpush1.msra.mxu0 0.0
    %7850 = vmatprep.subr.mxu0 0.0
    %7851 = vmatpush1.msra.mxu0 0.0
    %7852 = vmatprep.subr.mxu0 0.0
    %7853 = vmatpush1.msra.mxu0 0.0
    %7854 = vmatprep.subr.mxu0 0.0
    %7855 = vmatpush1.msra.mxu0 0.0
    %7856 = vmatprep.subr.mxu0 0.0
    %7857 = vmatpush1.msra.mxu0 0.0
    %7858 = vmatprep.subr.mxu0 0.0
    %7859 = vmatpush1.msra.mxu0 0.0
    %7860 = vmatprep.subr.mxu0 0.0
    %7861 = vmatpush1.msra.mxu0 0.0
    %7862 = vmatprep.subr.mxu0 0.0
    %7863 = vmatpush1.msra.mxu0 0.0
    %7864 = vmatprep.mubr.f32.mxu0 0.0
    %7865 = vmatmul.mubr.f32.gmra.mrb[0].mxu0 %v7798
    %v7866 = vpop.f32.mrb[0].mxu0
    %v7867 = vadd.f32 0.0, %v7866
    %v7868 = vpop.f32.mrb[0].mxu0
    %7869 = vdwg.mxu0
    %v7871 = vsel %vm2070, %v7347, 0
    %7873 = vmatprep.subr.mxu0 0.0
    %7874 = vmatpush1.msra.mxu0 %v7646
    %7875 = vmatprep.subr.mxu0 0.0
    %7876 = vmatpush1.msra.mxu0 0.0
    %7877 = vmatprep.subr.mxu0 0.0
    %7878 = vmatpush1.msra.mxu0 0.0
    %7879 = vmatprep.subr.mxu0 0.0
    %7880 = vmatpush1.msra.mxu0 0.0
    %7881 = vmatprep.subr.mxu0 0.0
    %7882 = vmatpush1.msra.mxu0 0.0
    %7883 = vmatprep.subr.mxu0 0.0
    %7884 = vmatpush1.msra.mxu0 0.0
    %7885 = vmatprep.subr.mxu0 0.0
    %7886 = vmatpush1.msra.mxu0 0.0
    %7887 = vmatprep.subr.mxu0 0.0
    %7888 = vmatpush1.msra.mxu0 0.0
    %7889 = vmatprep.subr.mxu0 0.0
    %7890 = vmatpush1.msra.mxu0 0.0
    %7891 = vmatprep.subr.mxu0 0.0
    %7892 = vmatpush1.msra.mxu0 0.0
    %7893 = vmatprep.subr.mxu0 0.0
    %7894 = vmatpush1.msra.mxu0 0.0
    %7895 = vmatprep.subr.mxu0 0.0
    %7896 = vmatpush1.msra.mxu0 0.0
    %7897 = vmatprep.subr.mxu0 0.0
    %7898 = vmatpush1.msra.mxu0 0.0
    %7899 = vmatprep.subr.mxu0 0.0
    %7900 = vmatpush1.msra.mxu0 0.0
    %7901 = vmatprep.subr.mxu0 0.0
    %7902 = vmatpush1.msra.mxu0 0.0
    %7903 = vmatprep.subr.mxu0 0.0
    %7904 = vmatpush1.msra.mxu0 0.0
    %7905 = vmatprep.subr.mxu0 0.0
    %7906 = vmatpush1.msra.mxu0 0.0
    %7907 = vmatprep.subr.mxu0 0.0
    %7908 = vmatpush1.msra.mxu0 0.0
    %7909 = vmatprep.subr.mxu0 0.0
    %7910 = vmatpush1.msra.mxu0 0.0
    %7911 = vmatprep.subr.mxu0 0.0
    %7912 = vmatpush1.msra.mxu0 0.0
    %7913 = vmatprep.subr.mxu0 0.0
    %7914 = vmatpush1.msra.mxu0 0.0
    %7915 = vmatprep.subr.mxu0 0.0
    %7916 = vmatpush1.msra.mxu0 0.0
    %7917 = vmatprep.subr.mxu0 0.0
    %7918 = vmatpush1.msra.mxu0 0.0
    %7919 = vmatprep.subr.mxu0 0.0
    %7920 = vmatpush1.msra.mxu0 0.0
    %7921 = vmatprep.subr.mxu0 0.0
    %7922 = vmatpush1.msra.mxu0 0.0
    %7923 = vmatprep.subr.mxu0 0.0
    %7924 = vmatpush1.msra.mxu0 0.0
    %7925 = vmatprep.subr.mxu0 0.0
    %7926 = vmatpush1.msra.mxu0 0.0
    %7927 = vmatprep.subr.mxu0 0.0
    %7928 = vmatpush1.msra.mxu0 0.0
    %7929 = vmatprep.subr.mxu0 0.0
    %7930 = vmatpush1.msra.mxu0 0.0
    %7931 = vmatprep.subr.mxu0 0.0
    %7932 = vmatpush1.msra.mxu0 0.0
    %7933 = vmatprep.subr.mxu0 0.0
    %7934 = vmatpush1.msra.mxu0 0.0
    %7935 = vmatprep.subr.mxu0 0.0
    %7936 = vmatpush1.msra.mxu0 0.0
    %7937 = vmatprep.mubr.f32.mxu0 0.0
    %7938 = vmatmul.mubr.f32.gmra.mrb[0].mxu0 %v7871
    %v7939 = vpop.f32.mrb[0].mxu0
    %v7940 = vadd.f32 0.0, %v7939
    %v7941 = vpop.f32.mrb[0].mxu0
    %7942 = vdwg.mxu0
    %v7944 = vsel %vm2070, %v7420, 0
    %7946 = vmatprep.subr.mxu0 0.0
    %7947 = vmatpush1.msra.mxu0 %v7647
    %7948 = vmatprep.subr.mxu0 0.0
    %7949 = vmatpush1.msra.mxu0 0.0
    %7950 = vmatprep.subr.mxu0 0.0
    %7951 = vmatpush1.msra.mxu0 0.0
    %7952 = vmatprep.subr.mxu0 0.0
    %7953 = vmatpush1.msra.mxu0 0.0
    %7954 = vmatprep.subr.mxu0 0.0
    %7955 = vmatpush1.msra.mxu0 0.0
    %7956 = vmatprep.subr.mxu0 0.0
    %7957 = vmatpush1.msra.mxu0 0.0
    %7958 = vmatprep.subr.mxu0 0.0
    %7959 = vmatpush1.msra.mxu0 0.0
    %7960 = vmatprep.subr.mxu0 0.0
    %7961 = vmatpush1.msra.mxu0 0.0
    %7962 = vmatprep.subr.mxu0 0.0
    %7963 = vmatpush1.msra.mxu0 0.0
    %7964 = vmatprep.subr.mxu0 0.0
    %7965 = vmatpush1.msra.mxu0 0.0
    %7966 = vmatprep.subr.mxu0 0.0
    %7967 = vmatpush1.msra.mxu0 0.0
    %7968 = vmatprep.subr.mxu0 0.0
    %7969 = vmatpush1.msra.mxu0 0.0
    %7970 = vmatprep.subr.mxu0 0.0
    %7971 = vmatpush1.msra.mxu0 0.0
    %7972 = vmatprep.subr.mxu0 0.0
    %7973 = vmatpush1.msra.mxu0 0.0
    %7974 = vmatprep.subr.mxu0 0.0
    %7975 = vmatpush1.msra.mxu0 0.0
    %7976 = vmatprep.subr.mxu0 0.0
    %7977 = vmatpush1.msra.mxu0 0.0
    %7978 = vmatprep.subr.mxu0 0.0
    %7979 = vmatpush1.msra.mxu0 0.0
    %7980 = vmatprep.subr.mxu0 0.0
    %7981 = vmatpush1.msra.mxu0 0.0
    %7982 = vmatprep.subr.mxu0 0.0
    %7983 = vmatpush1.msra.mxu0 0.0
    %7984 = vmatprep.subr.mxu0 0.0
    %7985 = vmatpush1.msra.mxu0 0.0
    %7986 = vmatprep.subr.mxu0 0.0
    %7987 = vmatpush1.msra.mxu0 0.0
    %7988 = vmatprep.subr.mxu0 0.0
    %7989 = vmatpush1.msra.mxu0 0.0
    %7990 = vmatprep.subr.mxu0 0.0
    %7991 = vmatpush1.msra.mxu0 0.0
    %7992 = vmatprep.subr.mxu0 0.0
    %7993 = vmatpush1.msra.mxu0 0.0
    %7994 = vmatprep.subr.mxu0 0.0
    %7995 = vmatpush1.msra.mxu0 0.0
    %7996 = vmatprep.subr.mxu0 0.0
    %7997 = vmatpush1.msra.mxu0 0.0
    %7998 = vmatprep.subr.mxu0 0.0
    %7999 = vmatpush1.msra.mxu0 0.0
    %8000 = vmatprep.subr.mxu0 0.0
    %8001 = vmatpush1.msra.mxu0 0.0
    %8002 = vmatprep.subr.mxu0 0.0
    %8003 = vmatpush1.msra.mxu0 0.0
    %8004 = vmatprep.subr.mxu0 0.0
    %8005 = vmatpush1.msra.mxu0 0.0
    %8006 = vmatprep.subr.mxu0 0.0
    %8007 = vmatpush1.msra.mxu0 0.0
    %8008 = vmatprep.subr.mxu0 0.0
    %8009 = vmatpush1.msra.mxu0 0.0
    %8010 = vmatprep.mubr.f32.mxu0 0.0
    %8011 = vmatmul.mubr.f32.gmra.mrb[0].mxu0 %v7944
    %v8012 = vpop.f32.mrb[0].mxu0
    %v8013 = vadd.f32 0.0, %v8012
    %v8014 = vpop.f32.mrb[0].mxu0
    %8015 = vdwg.mxu0
    %v8017 = vsel %vm2070, %v7493, 0
    %8019 = vmatprep.subr.mxu0 0.0
    %8020 = vmatpush1.msra.mxu0 %v7648
    %8021 = vmatprep.subr.mxu0 0.0
    %8022 = vmatpush1.msra.mxu0 0.0
    %8023 = vmatprep.subr.mxu0 0.0
    %8024 = vmatpush1.msra.mxu0 0.0
    %8025 = vmatprep.subr.mxu0 0.0
    %8026 = vmatpush1.msra.mxu0 0.0
    %8027 = vmatprep.subr.mxu0 0.0
    %8028 = vmatpush1.msra.mxu0 0.0
    %8029 = vmatprep.subr.mxu0 0.0
    %8030 = vmatpush1.msra.mxu0 0.0
    %8031 = vmatprep.subr.mxu0 0.0
    %8032 = vmatpush1.msra.mxu0 0.0
    %8033 = vmatprep.subr.mxu0 0.0
    %8034 = vmatpush1.msra.mxu0 0.0
    %8035 = vmatprep.subr.mxu0 0.0
    %8036 = vmatpush1.msra.mxu0 0.0
    %8037 = vmatprep.subr.mxu0 0.0
    %8038 = vmatpush1.msra.mxu0 0.0
    %8039 = vmatprep.subr.mxu0 0.0
    %8040 = vmatpush1.msra.mxu0 0.0
    %8041 = vmatprep.subr.mxu0 0.0
    %8042 = vmatpush1.msra.mxu0 0.0
    %8043 = vmatprep.subr.mxu0 0.0
    %8044 = vmatpush1.msra.mxu0 0.0
    %8045 = vmatprep.subr.mxu0 0.0
    %8046 = vmatpush1.msra.mxu0 0.0
    %8047 = vmatprep.subr.mxu0 0.0
    %8048 = vmatpush1.msra.mxu0 0.0
    %8049 = vmatprep.subr.mxu0 0.0
    %8050 = vmatpush1.msra.mxu0 0.0
    %8051 = vmatprep.subr.mxu0 0.0
    %8052 = vmatpush1.msra.mxu0 0.0
    %8053 = vmatprep.subr.mxu0 0.0
    %8054 = vmatpush1.msra.mxu0 0.0
    %8055 = vmatprep.subr.mxu0 0.0
    %8056 = vmatpush1.msra.mxu0 0.0
    %8057 = vmatprep.subr.mxu0 0.0
    %8058 = vmatpush1.msra.mxu0 0.0
    %8059 = vmatprep.subr.mxu0 0.0
    %8060 = vmatpush1.msra.mxu0 0.0
    %8061 = vmatprep.subr.mxu0 0.0
    %8062 = vmatpush1.msra.mxu0 0.0
    %8063 = vmatprep.subr.mxu0 0.0
    %8064 = vmatpush1.msra.mxu0 0.0
    %8065 = vmatprep.subr.mxu0 0.0
    %8066 = vmatpush1.msra.mxu0 0.0
    %8067 = vmatprep.subr.mxu0 0.0
    %8068 = vmatpush1.msra.mxu0 0.0
    %8069 = vmatprep.subr.mxu0 0.0
    %8070 = vmatpush1.msra.mxu0 0.0
    %8071 = vmatprep.subr.mxu0 0.0
    %8072 = vmatpush1.msra.mxu0 0.0
    %8073 = vmatprep.subr.mxu0 0.0
    %8074 = vmatpush1.msra.mxu0 0.0
    %8075 = vmatprep.subr.mxu0 0.0
    %8076 = vmatpush1.msra.mxu0 0.0
    %8077 = vmatprep.subr.mxu0 0.0
    %8078 = vmatpush1.msra.mxu0 0.0
    %8079 = vmatprep.subr.mxu0 0.0
    %8080 = vmatpush1.msra.mxu0 0.0
    %8081 = vmatprep.subr.mxu0 0.0
    %8082 = vmatpush1.msra.mxu0 0.0
    %8083 = vmatprep.mubr.f32.mxu0 0.0
    %8084 = vmatmul.mubr.f32.gmra.mrb[0].mxu0 %v8017
    %v8085 = vpop.f32.mrb[0].mxu0
    %v8086 = vadd.f32 0.0, %v8085
    %v8087 = vpop.f32.mrb[0].mxu0
    %8088 = vdwg.mxu0
    %v8090 = vsel %vm2070, %v7566, 0
    %8092 = vmatprep.subr.mxu0 0.0
    %8093 = vmatpush1.msra.mxu0 %v7649
    %8094 = vmatprep.subr.mxu0 0.0
    %8095 = vmatpush1.msra.mxu0 0.0
    %8096 = vmatprep.subr.mxu0 0.0
    %8097 = vmatpush1.msra.mxu0 0.0
    %8098 = vmatprep.subr.mxu0 0.0
    %8099 = vmatpush1.msra.mxu0 0.0
    %8100 = vmatprep.subr.mxu0 0.0
    %8101 = vmatpush1.msra.mxu0 0.0
    %8102 = vmatprep.subr.mxu0 0.0
    %8103 = vmatpush1.msra.mxu0 0.0
    %8104 = vmatprep.subr.mxu0 0.0
    %8105 = vmatpush1.msra.mxu0 0.0
    %8106 = vmatprep.subr.mxu0 0.0
    %8107 = vmatpush1.msra.mxu0 0.0
    %8108 = vmatprep.subr.mxu0 0.0
    %8109 = vmatpush1.msra.mxu0 0.0
    %8110 = vmatprep.subr.mxu0 0.0
    %8111 = vmatpush1.msra.mxu0 0.0
    %8112 = vmatprep.subr.mxu0 0.0
    %8113 = vmatpush1.msra.mxu0 0.0
    %8114 = vmatprep.subr.mxu0 0.0
    %8115 = vmatpush1.msra.mxu0 0.0
    %8116 = vmatprep.subr.mxu0 0.0
    %8117 = vmatpush1.msra.mxu0 0.0
    %8118 = vmatprep.subr.mxu0 0.0
    %8119 = vmatpush1.msra.mxu0 0.0
    %8120 = vmatprep.subr.mxu0 0.0
    %8121 = vmatpush1.msra.mxu0 0.0
    %8122 = vmatprep.subr.mxu0 0.0
    %8123 = vmatpush1.msra.mxu0 0.0
    %8124 = vmatprep.subr.mxu0 0.0
    %8125 = vmatpush1.msra.mxu0 0.0
    %8126 = vmatprep.subr.mxu0 0.0
    %8127 = vmatpush1.msra.mxu0 0.0
    %8128 = vmatprep.subr.mxu0 0.0
    %8129 = vmatpush1.msra.mxu0 0.0
    %8130 = vmatprep.subr.mxu0 0.0
    %8131 = vmatpush1.msra.mxu0 0.0
    %8132 = vmatprep.subr.mxu0 0.0
    %8133 = vmatpush1.msra.mxu0 0.0
    %8134 = vmatprep.subr.mxu0 0.0
    %8135 = vmatpush1.msra.mxu0 0.0
    %8136 = vmatprep.subr.mxu0 0.0
    %8137 = vmatpush1.msra.mxu0 0.0
    %8138 = vmatprep.subr.mxu0 0.0
    %8139 = vmatpush1.msra.mxu0 0.0
    %8140 = vmatprep.subr.mxu0 0.0
    %8141 = vmatpush1.msra.mxu0 0.0
    %8142 = vmatprep.subr.mxu0 0.0
    %8143 = vmatpush1.msra.mxu0 0.0
    %8144 = vmatprep.subr.mxu0 0.0
    %8145 = vmatpush1.msra.mxu0 0.0
    %8146 = vmatprep.subr.mxu0 0.0
    %8147 = vmatpush1.msra.mxu0 0.0
    %8148 = vmatprep.subr.mxu0 0.0
    %8149 = vmatpush1.msra.mxu0 0.0
    %8150 = vmatprep.subr.mxu0 0.0
    %8151 = vmatpush1.msra.mxu0 0.0
    %8152 = vmatprep.subr.mxu0 0.0
    %8153 = vmatpush1.msra.mxu0 0.0
    %8154 = vmatprep.subr.mxu0 0.0
    %8155 = vmatpush1.msra.mxu0 0.0
    %8156 = vmatprep.mubr.f32.mxu0 0.0
    %8157 = vmatmul.mubr.f32.gmra.mrb[0].mxu0 %v8090
    %v8158 = vpop.f32.mrb[0].mxu0
    %v8159 = vadd.f32 0.0, %v8158
    %v8160 = vpop.f32.mrb[0].mxu0
    %8161 = vdwg.mxu0
    %v8163 = vsel %vm2070, %v7639, 0
    %8165 = vmatprep.subr.mxu0 0.0
    %8166 = vmatpush1.msra.mxu0 %v7650
    %8167 = vmatprep.subr.mxu0 0.0
    %8168 = vmatpush1.msra.mxu0 0.0
    %8169 = vmatprep.subr.mxu0 0.0
    %8170 = vmatpush1.msra.mxu0 0.0
    %8171 = vmatprep.subr.mxu0 0.0
    %8172 = vmatpush1.msra.mxu0 0.0
    %8173 = vmatprep.subr.mxu0 0.0
    %8174 = vmatpush1.msra.mxu0 0.0
    %8175 = vmatprep.subr.mxu0 0.0
    %8176 = vmatpush1.msra.mxu0 0.0
    %8177 = vmatprep.subr.mxu0 0.0
    %8178 = vmatpush1.msra.mxu0 0.0
    %8179 = vmatprep.subr.mxu0 0.0
    %8180 = vmatpush1.msra.mxu0 0.0
    %8181 = vmatprep.subr.mxu0 0.0
    %8182 = vmatpush1.msra.mxu0 0.0
    %8183 = vmatprep.subr.mxu0 0.0
    %8184 = vmatpush1.msra.mxu0 0.0
    %8185 = vmatprep.subr.mxu0 0.0
    %8186 = vmatpush1.msra.mxu0 0.0
    %8187 = vmatprep.subr.mxu0 0.0
    %8188 = vmatpush1.msra.mxu0 0.0
    %8189 = vmatprep.subr.mxu0 0.0
    %8190 = vmatpush1.msra.mxu0 0.0
    %8191 = vmatprep.subr.mxu0 0.0
    %8192 = vmatpush1.msra.mxu0 0.0
    %8193 = vmatprep.subr.mxu0 0.0
    %8194 = vmatpush1.msra.mxu0 0.0
    %8195 = vmatprep.subr.mxu0 0.0
    %8196 = vmatpush1.msra.mxu0 0.0
    %8197 = vmatprep.subr.mxu0 0.0
    %8198 = vmatpush1.msra.mxu0 0.0
    %8199 = vmatprep.subr.mxu0 0.0
    %8200 = vmatpush1.msra.mxu0 0.0
    %8201 = vmatprep.subr.mxu0 0.0
    %8202 = vmatpush1.msra.mxu0 0.0
    %8203 = vmatprep.subr.mxu0 0.0
    %8204 = vmatpush1.msra.mxu0 0.0
    %8205 = vmatprep.subr.mxu0 0.0
    %8206 = vmatpush1.msra.mxu0 0.0
    %8207 = vmatprep.subr.mxu0 0.0
    %8208 = vmatpush1.msra.mxu0 0.0
    %8209 = vmatprep.subr.mxu0 0.0
    %8210 = vmatpush1.msra.mxu0 0.0
    %8211 = vmatprep.subr.mxu0 0.0
    %8212 = vmatpush1.msra.mxu0 0.0
    %8213 = vmatprep.subr.mxu0 0.0
    %8214 = vmatpush1.msra.mxu0 0.0
    %8215 = vmatprep.subr.mxu0 0.0
    %8216 = vmatpush1.msra.mxu0 0.0
    %8217 = vmatprep.subr.mxu0 0.0
    %8218 = vmatpush1.msra.mxu0 0.0
    %8219 = vmatprep.subr.mxu0 0.0
    %8220 = vmatpush1.msra.mxu0 0.0
    %8221 = vmatprep.subr.mxu0 0.0
    %8222 = vmatpush1.msra.mxu0 0.0
    %8223 = vmatprep.subr.mxu0 0.0
    %8224 = vmatpush1.msra.mxu0 0.0
    %8225 = vmatprep.subr.mxu0 0.0
    %8226 = vmatpush1.msra.mxu0 0.0
    %8227 = vmatprep.subr.mxu0 0.0
    %8228 = vmatpush1.msra.mxu0 0.0
    %8229 = vmatprep.mubr.f32.mxu0 0.0
    %8230 = vmatmul.mubr.f32.gmra.mrb[0].mxu0 %v8163
    %v8231 = vpop.f32.mrb[0].mxu0
    %v8232 = vadd.f32 0.0, %v8231
    %v8233 = vpop.f32.mrb[0].mxu0
    %8234 = vdwg.mxu0
    %v8235 = vsel %vm54, %v7721, 0.0
    %v8236 = vsel %vm54, %v7867, 0.0
    %v8237 = vadd.f32 %v8235, %v8236
    %v8238 = vsel %vm54, %v8013, 0.0
    %v8239 = vadd.f32 %v8237, %v8238
    %v8240 = vsel %vm54, %v8159, 0.0
    %v8241 = vadd.f32 %v8239, %v8240
    %v8242 = vsel %vm54, %v7794, 0.0
    %v8243 = vsel %vm54, %v7940, 0.0
    %v8244 = vadd.f32 %v8242, %v8243
    %v8245 = vsel %vm54, %v8086, 0.0
    %v8246 = vadd.f32 %v8244, %v8245
    %v8247 = vsel %vm54, %v8232, 0.0
    %v8248 = vadd.f32 %v8246, %v8247
    %v8249 = vadd.f32 %v4354, %v8241
    %v8250 = vadd.f32 %v4355, %v8248
    %v8251 = vlaneseq
    %v8252 = vshrl.u32 %v8251, 7
    %v8253 = vsub.s32 4, %v8252
    %v8254 = vrot.slane %v4357, %v8253
    %v8255 = vadd.f32 %v8249, %v8254
    %v8256 = vadd.f32 %v8250, %v8254
    %v8257 = vsel %vm54, %v8255, 0.0
    %8258 = vadd.xlane.f32.xlu0 %v8257
    %v8259 = vpop.xlane.xlu0 %8258
    %v8260 = vsel %vm54, %v8256, 0.0
    %8261 = vadd.xlane.f32.xlu0 %v8260
    %v8262 = vpop.xlane.xlu0 %8261
    %v8263 = vmul.f32 %v8259, %v61
    %v8264 = vmul.f32 %v8262, %v61
    %v8265 = vsub.f32 %v8255, %v8263
    %v8266 = vsub.f32 %v8256, %v8264
    %v8267 = vmul.f32 %v8265, %v8265
    %v8268 = vmul.f32 %v8266, %v8266
    %v8269 = vsel %vm54, %v8267, 0.0
    %8270 = vadd.xlane.f32.xlu0 %v8269
    %v8271 = vpop.xlane.xlu0 %8270
    %v8272 = vsel %vm54, %v8268, 0.0
    %8273 = vadd.xlane.f32.xlu0 %v8272
    %v8274 = vpop.xlane.xlu0 %8273
    %v8275 = vmul.f32 %v8271, 0.032258064
    %v8276 = vmul.f32 %v8274, 0.032258064
    %v8277 = vrsqrt.pop %v8275
    %v8278 = vmul.f32 %v8275, %v8277
    %vm8279 = vcmp.eq.f32.partialorder %v8275, inf
    %v8280 = vsel %vm8279, %v8275, %v8278
    %vm8281 = vcmp.eq.f32.partialorder %v8275, 0.0
    %v8282 = vand.u32 %v8275, 2147483648
    %v8283 = vsel %vm8281, %v8282, %v8280
    %v8284 = vrsqrt.pop %v8276
    %v8285 = vmul.f32 %v8276, %v8284
    %vm8286 = vcmp.eq.f32.partialorder %v8276, inf
    %v8287 = vsel %vm8286, %v8276, %v8285
    %vm8288 = vcmp.eq.f32.partialorder %v8276, 0.0
    %v8289 = vand.u32 %v8276, 2147483648
    %v8290 = vsel %vm8288, %v8289, %v8287
    %v8291 = vadd.f32 %v8283, 1e-06
    %v8292 = vadd.f32 %v8290, 1e-06
    %v8293 = vrcp.pop %v8291
    %v8294 = vrcp.pop %v8292
    %v8295 = vmul.f32 %v8265, %v8293
    %v8296 = vmul.f32 %v8266, %v8294
    %v8297 = vlaneseq
    %v8298 = vshrl.u32 %v8297, 7
    %v8299 = vsub.s32 2, %v8298
    %v8300 = vrot.slane %v4357, %v8299
    %v8301 = vmul.f32 %v8300, %v8295
    %v8302 = vmul.f32 %v8300, %v8296
    %v8303 = vlaneseq
    %v8304 = vshrl.u32 %v8303, 7
    %v8305 = vsub.s32 3, %v8304
    %v8306 = vrot.slane %v4357, %v8305
    %v8307 = vadd.f32 %v8301, %v8306
    %v8308 = vadd.f32 %v8302, %v8306
    %s8309 = scalar_lea.vmem %s6, 32
    %v8310 = vld [vmem:[%s8309] sm:$0xff]
    %v8311 = vld [vmem:[%s8309 + $0x8] sm:$0xff]
    %v8312 = vld [vmem:[%s8309 + $0x10] sm:$0xff]
    %v8313 = vld [vmem:[%s8309 + $0x18] sm:$0xff]
    %s8314 = scalar_lea.vmem %s8, 128
    %v8315 = vld [vmem:[%s8314] sm:$0xff]
    %v8316 = vld [vmem:[%s8314 + $0x8] sm:$0xff]
    %v8317 = vld [vmem:[%s8314 + $0x10] sm:$0xff]
    %v8318 = vld [vmem:[%s8314 + $0x18] sm:$0xff]
    %v8319 = vld [vmem:[%s8314 + $0x20] sm:$0xff]
    %v8320 = vld [vmem:[%s8314 + $0x28] sm:$0xff]
    %v8321 = vld [vmem:[%s8314 + $0x30] sm:$0xff]
    %v8322 = vld [vmem:[%s8314 + $0x38] sm:$0xff]
    %v8323 = vld [vmem:[%s8314 + $0x40] sm:$0xff]
    %v8324 = vld [vmem:[%s8314 + $0x48] sm:$0xff]
    %v8325 = vld [vmem:[%s8314 + $0x50] sm:$0xff]
    %v8326 = vld [vmem:[%s8314 + $0x58] sm:$0xff]
    %v8327 = vld [vmem:[%s8314 + $0x60] sm:$0xff]
    %v8328 = vld [vmem:[%s8314 + $0x68] sm:$0xff]
    %v8329 = vld [vmem:[%s8314 + $0x70] sm:$0xff]
    %v8330 = vld [vmem:[%s8314 + $0x78] sm:$0xff]
    %s8331 = scalar_lea.vmem %s7, 1
    %v8332 = vld [vmem:[%s8331] sm:$0x1]
    %v8334 = vlaneseq
    %v8335 = vshrl.u32 %v8334, 7
    %v8336 = vsub.s32 0, %v8335
    %v8337 = vrot.slane %v8332, %v8336
    %v8340 = vsel %vm54, %v8307, 0
    %8342 = vmatprep.subr.mxu0 0.0
    %8343 = vmatpush1.msra.mxu0 %v8310
    %8344 = vmatprep.subr.mxu0 0.0
    %8345 = vmatpush1.msra.mxu0 %v8311
    %8346 = vmatprep.subr.mxu0 0.0
    %8347 = vmatpush1.msra.mxu0 %v8312
    %8348 = vmatprep.subr.mxu0 0.0
    %8349 = vmatpush1.msra.mxu0 %v8313
    %8350 = vmatprep.subr.mxu0 0.0
    %8351 = vmatpush1.msra.mxu0 0.0
    %8352 = vmatprep.subr.mxu0 0.0
    %8353 = vmatpush1.msra.mxu0 0.0
    %8354 = vmatprep.subr.mxu0 0.0
    %8355 = vmatpush1.msra.mxu0 0.0
    %8356 = vmatprep.subr.mxu0 0.0
    %8357 = vmatpush1.msra.mxu0 0.0
    %8358 = vmatprep.subr.mxu0 0.0
    %8359 = vmatpush1.msra.mxu0 0.0
    %8360 = vmatprep.subr.mxu0 0.0
    %8361 = vmatpush1.msra.mxu0 0.0
    %8362 = vmatprep.subr.mxu0 0.0
    %8363 = vmatpush1.msra.mxu0 0.0
    %8364 = vmatprep.subr.mxu0 0.0
    %8365 = vmatpush1.msra.mxu0 0.0
    %8366 = vmatprep.subr.mxu0 0.0
    %8367 = vmatpush1.msra.mxu0 0.0
    %8368 = vmatprep.subr.mxu0 0.0
    %8369 = vmatpush1.msra.mxu0 0.0
    %8370 = vmatprep.subr.mxu0 0.0
    %8371 = vmatpush1.msra.mxu0 0.0
    %8372 = vmatprep.subr.mxu0 0.0
    %8373 = vmatpush1.msra.mxu0 0.0
    %8374 = vmatprep.subr.mxu0 0.0
    %8375 = vmatpush1.msra.mxu0 0.0
    %8376 = vmatprep.subr.mxu0 0.0
    %8377 = vmatpush1.msra.mxu0 0.0
    %8378 = vmatprep.subr.mxu0 0.0
    %8379 = vmatpush1.msra.mxu0 0.0
    %8380 = vmatprep.subr.mxu0 0.0
    %8381 = vmatpush1.msra.mxu0 0.0
    %8382 = vmatprep.subr.mxu0 0.0
    %8383 = vmatpush1.msra.mxu0 0.0
    %8384 = vmatprep.subr.mxu0 0.0
    %8385 = vmatpush1.msra.mxu0 0.0
    %8386 = vmatprep.subr.mxu0 0.0
    %8387 = vmatpush1.msra.mxu0 0.0
    %8388 = vmatprep.subr.mxu0 0.0
    %8389 = vmatpush1.msra.mxu0 0.0
    %8390 = vmatprep.subr.mxu0 0.0
    %8391 = vmatpush1.msra.mxu0 0.0
    %8392 = vmatprep.subr.mxu0 0.0
    %8393 = vmatpush1.msra.mxu0 0.0
    %8394 = vmatprep.subr.mxu0 0.0
    %8395 = vmatpush1.msra.mxu0 0.0
    %8396 = vmatprep.subr.mxu0 0.0
    %8397 = vmatpush1.msra.mxu0 0.0
    %8398 = vmatprep.subr.mxu0 0.0
    %8399 = vmatpush1.msra.mxu0 0.0
    %8400 = vmatprep.subr.mxu0 0.0
    %8401 = vmatpush1.msra.mxu0 0.0
    %8402 = vmatprep.subr.mxu0 0.0
    %8403 = vmatpush1.msra.mxu0 0.0
    %8404 = vmatprep.subr.mxu0 0.0
    %8405 = vmatpush1.msra.mxu0 0.0
    %8406 = vmatprep.mubr.f32.mxu0 0.0
    %8407 = vmatmul.mubr.f32.gmra.mrb[0].mxu0 %v8340
    %v8408 = vpop.f32.mrb[0].mxu0
    %v8409 = vadd.f32 %v8337, %v8408
    %v8410 = vpop.f32.mrb[0].mxu0
    %8411 = vdwg.mxu0
    %v8413 = vsel %vm54, %v8308, 0
    %8415 = vmatprep.subr.mxu0 0.0
    %8416 = vmatpush1.msra.mxu0 %v8310
    %8417 = vmatprep.subr.mxu0 0.0
    %8418 = vmatpush1.msra.mxu0 %v8311
    %8419 = vmatprep.subr.mxu0 0.0
    %8420 = vmatpush1.msra.mxu0 %v8312
    %8421 = vmatprep.subr.mxu0 0.0
    %8422 = vmatpush1.msra.mxu0 %v8313
    %8423 = vmatprep.subr.mxu0 0.0
    %8424 = vmatpush1.msra.mxu0 0.0
    %8425 = vmatprep.subr.mxu0 0.0
    %8426 = vmatpush1.msra.mxu0 0.0
    %8427 = vmatprep.subr.mxu0 0.0
    %8428 = vmatpush1.msra.mxu0 0.0
    %8429 = vmatprep.subr.mxu0 0.0
    %8430 = vmatpush1.msra.mxu0 0.0
    %8431 = vmatprep.subr.mxu0 0.0
    %8432 = vmatpush1.msra.mxu0 0.0
    %8433 = vmatprep.subr.mxu0 0.0
    %8434 = vmatpush1.msra.mxu0 0.0
    %8435 = vmatprep.subr.mxu0 0.0
    %8436 = vmatpush1.msra.mxu0 0.0
    %8437 = vmatprep.subr.mxu0 0.0
    %8438 = vmatpush1.msra.mxu0 0.0
    %8439 = vmatprep.subr.mxu0 0.0
    %8440 = vmatpush1.msra.mxu0 0.0
    %8441 = vmatprep.subr.mxu0 0.0
    %8442 = vmatpush1.msra.mxu0 0.0
    %8443 = vmatprep.subr.mxu0 0.0
    %8444 = vmatpush1.msra.mxu0 0.0
    %8445 = vmatprep.subr.mxu0 0.0
    %8446 = vmatpush1.msra.mxu0 0.0
    %8447 = vmatprep.subr.mxu0 0.0
    %8448 = vmatpush1.msra.mxu0 0.0
    %8449 = vmatprep.subr.mxu0 0.0
    %8450 = vmatpush1.msra.mxu0 0.0
    %8451 = vmatprep.subr.mxu0 0.0
    %8452 = vmatpush1.msra.mxu0 0.0
    %8453 = vmatprep.subr.mxu0 0.0
    %8454 = vmatpush1.msra.mxu0 0.0
    %8455 = vmatprep.subr.mxu0 0.0
    %8456 = vmatpush1.msra.mxu0 0.0
    %8457 = vmatprep.subr.mxu0 0.0
    %8458 = vmatpush1.msra.mxu0 0.0
    %8459 = vmatprep.subr.mxu0 0.0
    %8460 = vmatpush1.msra.mxu0 0.0
    %8461 = vmatprep.subr.mxu0 0.0
    %8462 = vmatpush1.msra.mxu0 0.0
    %8463 = vmatprep.subr.mxu0 0.0
    %8464 = vmatpush1.msra.mxu0 0.0
    %8465 = vmatprep.subr.mxu0 0.0
    %8466 = vmatpush1.msra.mxu0 0.0
    %8467 = vmatprep.subr.mxu0 0.0
    %8468 = vmatpush1.msra.mxu0 0.0
    %8469 = vmatprep.subr.mxu0 0.0
    %8470 = vmatpush1.msra.mxu0 0.0
    %8471 = vmatprep.subr.mxu0 0.0
    %8472 = vmatpush1.msra.mxu0 0.0
    %8473 = vmatprep.subr.mxu0 0.0
    %8474 = vmatpush1.msra.mxu0 0.0
    %8475 = vmatprep.subr.mxu0 0.0
    %8476 = vmatpush1.msra.mxu0 0.0
    %8477 = vmatprep.subr.mxu0 0.0
    %8478 = vmatpush1.msra.mxu0 0.0
    %8479 = vmatprep.mubr.f32.mxu0 0.0
    %8480 = vmatmul.mubr.f32.gmra.mrb[0].mxu0 %v8413
    %v8481 = vpop.f32.mrb[0].mxu0
    %v8482 = vadd.f32 %v8337, %v8481
    %v8483 = vpop.f32.mrb[0].mxu0
    %8484 = vdwg.mxu0
    %v8485 = vmul.f32 %v8409, 0.5
    %v8486 = vmul.f32 %v8482, 0.5
    %v8487 = vmul.f32 %v8409, %v8409
    %v8488 = vmul.f32 %v8482, %v8482
    %v8489 = vmul.f32 %v8487, %v8409
    %v8490 = vmul.f32 %v8488, %v8482
    %v8491 = vmul.f32 %v8489, 0.044715
    %v8492 = vmul.f32 %v8490, 0.044715
    %v8493 = vadd.f32 %v8409, %v8491
    %v8494 = vadd.f32 %v8482, %v8492
    %v8495 = vmul.f32 %v8493, 0.7978846
    %v8496 = vmul.f32 %v8494, 0.7978846
    %v8497 = vtanh.pop %v8495
    %v8498 = vtanh.pop %v8496
    %v8499 = vadd.f32 %v8497, 1.0
    %v8500 = vadd.f32 %v8498, 1.0
    %v8501 = vmul.f32 %v8485, %v8499
    %v8502 = vmul.f32 %v8486, %v8500
    %8503 = vmatprep.subr.mxu0 0.0
    %8504 = vmatpush1.msra.mxu0 %v8315
    %8505 = vmatprep.subr.mxu0 0.0
    %8506 = vmatpush1.msra.mxu0 %v8316
    %8507 = vmatprep.subr.mxu0 0.0
    %8508 = vmatpush1.msra.mxu0 %v8317
    %8509 = vmatprep.subr.mxu0 0.0
    %8510 = vmatpush1.msra.mxu0 %v8318
    %8511 = vmatprep.subr.mxu0 0.0
    %8512 = vmatpush1.msra.mxu0 %v8319
    %8513 = vmatprep.subr.mxu0 0.0
    %8514 = vmatpush1.msra.mxu0 %v8320
    %8515 = vmatprep.subr.mxu0 0.0
    %8516 = vmatpush1.msra.mxu0 %v8321
    %8517 = vmatprep.subr.mxu0 0.0
    %8518 = vmatpush1.msra.mxu0 %v8322
    %8519 = vmatprep.subr.mxu0 0.0
    %8520 = vmatpush1.msra.mxu0 %v8323
    %8521 = vmatprep.subr.mxu0 0.0
    %8522 = vmatpush1.msra.mxu0 %v8324
    %8523 = vmatprep.subr.mxu0 0.0
    %8524 = vmatpush1.msra.mxu0 %v8325
    %8525 = vmatprep.subr.mxu0 0.0
    %8526 = vmatpush1.msra.mxu0 %v8326
    %8527 = vmatprep.subr.mxu0 0.0
    %8528 = vmatpush1.msra.mxu0 %v8327
    %8529 = vmatprep.subr.mxu0 0.0
    %8530 = vmatpush1.msra.mxu0 %v8328
    %8531 = vmatprep.subr.mxu0 0.0
    %8532 = vmatpush1.msra.mxu0 %v8329
    %8533 = vmatprep.subr.mxu0 0.0
    %8534 = vmatpush1.msra.mxu0 %v8330
    %8535 = vmatprep.subr.mxu0 0.0
    %8536 = vmatpush1.msra.mxu0 0.0
    %8537 = vmatprep.subr.mxu0 0.0
    %8538 = vmatpush1.msra.mxu0 0.0
    %8539 = vmatprep.subr.mxu0 0.0
    %8540 = vmatpush1.msra.mxu0 0.0
    %8541 = vmatprep.subr.mxu0 0.0
    %8542 = vmatpush1.msra.mxu0 0.0
    %8543 = vmatprep.subr.mxu0 0.0
    %8544 = vmatpush1.msra.mxu0 0.0
    %8545 = vmatprep.subr.mxu0 0.0
    %8546 = vmatpush1.msra.mxu0 0.0
    %8547 = vmatprep.subr.mxu0 0.0
    %8548 = vmatpush1.msra.mxu0 0.0
    %8549 = vmatprep.subr.mxu0 0.0
    %8550 = vmatpush1.msra.mxu0 0.0
    %8551 = vmatprep.subr.mxu0 0.0
    %8552 = vmatpush1.msra.mxu0 0.0
    %8553 = vmatprep.subr.mxu0 0.0
    %8554 = vmatpush1.msra.mxu0 0.0
    %8555 = vmatprep.subr.mxu0 0.0
    %8556 = vmatpush1.msra.mxu0 0.0
    %8557 = vmatprep.subr.mxu0 0.0
    %8558 = vmatpush1.msra.mxu0 0.0
    %8559 = vmatprep.subr.mxu0 0.0
    %8560 = vmatpush1.msra.mxu0 0.0
    %8561 = vmatprep.subr.mxu0 0.0
    %8562 = vmatpush1.msra.mxu0 0.0
    %8563 = vmatprep.subr.mxu0 0.0
    %8564 = vmatpush1.msra.mxu0 0.0
    %8565 = vmatprep.subr.mxu0 0.0
    %8566 = vmatpush1.msra.mxu0 0.0
    %8567 = vmatprep.mubr.f32.mxu0 0.0
    %8568 = vmatmul.mubr.f32.gmra.mrb[0].mxu0 %v8501
    %v8569 = vpop.f32.mrb[0].mxu0
    %v8570 = vadd.f32 0.0, %v8569
    %v8571 = vpop.f32.mrb[0].mxu0
    %8572 = vdwg.mxu0
    %8573 = vmatprep.subr.mxu0 0.0
    %8574 = vmatpush1.msra.mxu0 %v8315
    %8575 = vmatprep.subr.mxu0 0.0
    %8576 = vmatpush1.msra.mxu0 %v8316
    %8577 = vmatprep.subr.mxu0 0.0
    %8578 = vmatpush1.msra.mxu0 %v8317
    %8579 = vmatprep.subr.mxu0 0.0
    %8580 = vmatpush1.msra.mxu0 %v8318
    %8581 = vmatprep.subr.mxu0 0.0
    %8582 = vmatpush1.msra.mxu0 %v8319
    %8583 = vmatprep.subr.mxu0 0.0
    %8584 = vmatpush1.msra.mxu0 %v8320
    %8585 = vmatprep.subr.mxu0 0.0
    %8586 = vmatpush1.msra.mxu0 %v8321
    %8587 = vmatprep.subr.mxu0 0.0
    %8588 = vmatpush1.msra.mxu0 %v8322
    %8589 = vmatprep.subr.mxu0 0.0
    %8590 = vmatpush1.msra.mxu0 %v8323
    %8591 = vmatprep.subr.mxu0 0.0
    %8592 = vmatpush1.msra.mxu0 %v8324
    %8593 = vmatprep.subr.mxu0 0.0
    %8594 = vmatpush1.msra.mxu0 %v8325
    %8595 = vmatprep.subr.mxu0 0.0
    %8596 = vmatpush1.msra.mxu0 %v8326
    %8597 = vmatprep.subr.mxu0 0.0
    %8598 = vmatpush1.msra.mxu0 %v8327
    %8599 = vmatprep.subr.mxu0 0.0
    %8600 = vmatpush1.msra.mxu0 %v8328
    %8601 = vmatprep.subr.mxu0 0.0
    %8602 = vmatpush1.msra.mxu0 %v8329
    %8603 = vmatprep.subr.mxu0 0.0
    %8604 = vmatpush1.msra.mxu0 %v8330
    %8605 = vmatprep.subr.mxu0 0.0
    %8606 = vmatpush1.msra.mxu0 0.0
    %8607 = vmatprep.subr.mxu0 0.0
    %8608 = vmatpush1.msra.mxu0 0.0
    %8609 = vmatprep.subr.mxu0 0.0
    %8610 = vmatpush1.msra.mxu0 0.0
    %8611 = vmatprep.subr.mxu0 0.0
    %8612 = vmatpush1.msra.mxu0 0.0
    %8613 = vmatprep.subr.mxu0 0.0
    %8614 = vmatpush1.msra.mxu0 0.0
    %8615 = vmatprep.subr.mxu0 0.0
    %8616 = vmatpush1.msra.mxu0 0.0
    %8617 = vmatprep.subr.mxu0 0.0
    %8618 = vmatpush1.msra.mxu0 0.0
    %8619 = vmatprep.subr.mxu0 0.0
    %8620 = vmatpush1.msra.mxu0 0.0
    %8621 = vmatprep.subr.mxu0 0.0
    %8622 = vmatpush1.msra.mxu0 0.0
    %8623 = vmatprep.subr.mxu0 0.0
    %8624 = vmatpush1.msra.mxu0 0.0
    %8625 = vmatprep.subr.mxu0 0.0
    %8626 = vmatpush1.msra.mxu0 0.0
    %8627 = vmatprep.subr.mxu0 0.0
    %8628 = vmatpush1.msra.mxu0 0.0
    %8629 = vmatprep.subr.mxu0 0.0
    %8630 = vmatpush1.msra.mxu0 0.0
    %8631 = vmatprep.subr.mxu0 0.0
    %8632 = vmatpush1.msra.mxu0 0.0
    %8633 = vmatprep.subr.mxu0 0.0
    %8634 = vmatpush1.msra.mxu0 0.0
    %8635 = vmatprep.subr.mxu0 0.0
    %8636 = vmatpush1.msra.mxu0 0.0
    %8637 = vmatprep.mubr.f32.mxu0 0.0
    %8638 = vmatmul.mubr.f32.gmra.mrb[0].mxu0 %v8502
    %v8639 = vpop.f32.mrb[0].mxu0
    %v8640 = vadd.f32 0.0, %v8639
    %v8641 = vpop.f32.mrb[0].mxu0
    %8642 = vdwg.mxu0
    %v8643 = vadd.f32 %v8255, %v8570
    %v8644 = vadd.f32 %v8256, %v8640
    %v8645 = vlaneseq
    %v8646 = vshrl.u32 %v8645, 7
    %v8647 = vsub.s32 5, %v8646
    %v8648 = vrot.slane %v4357, %v8647
    %v8649 = vadd.f32 %v8643, %v8648
    %v8650 = vadd.f32 %v8644, %v8648
    %v8651 = vld [vmem:[%s10] sm:$0xff]
    %v8652 = vld [vmem:[%s10 + $0x8] sm:$0xff]
    %v8653 = vld [vmem:[%s10 + $0x10] sm:$0xff]
    %v8654 = vld [vmem:[%s10 + $0x18] sm:$0xff]
    %v8655 = vld [vmem:[%s11] sm:$0x1]
    %v8657 = vlaneseq
    %v8658 = vshrl.u32 %v8657, 7
    %v8659 = vsub.s32 0, %v8658
    %v8660 = vrot.slane %v8655, %v8659
    %v8663 = vsel %vm54, %v8649, 0
    %8665 = vmatprep.subr.mxu0 0.0
    %8666 = vmatpush1.msra.mxu0 %v8651
    %8667 = vmatprep.subr.mxu0 0.0
    %8668 = vmatpush1.msra.mxu0 %v8652
    %8669 = vmatprep.subr.mxu0 0.0
    %8670 = vmatpush1.msra.mxu0 %v8653
    %8671 = vmatprep.subr.mxu0 0.0
    %8672 = vmatpush1.msra.mxu0 %v8654
    %8673 = vmatprep.subr.mxu0 0.0
    %8674 = vmatpush1.msra.mxu0 0.0
    %8675 = vmatprep.subr.mxu0 0.0
    %8676 = vmatpush1.msra.mxu0 0.0
    %8677 = vmatprep.subr.mxu0 0.0
    %8678 = vmatpush1.msra.mxu0 0.0
    %8679 = vmatprep.subr.mxu0 0.0
    %8680 = vmatpush1.msra.mxu0 0.0
    %8681 = vmatprep.subr.mxu0 0.0
    %8682 = vmatpush1.msra.mxu0 0.0
    %8683 = vmatprep.subr.mxu0 0.0
    %8684 = vmatpush1.msra.mxu0 0.0
    %8685 = vmatprep.subr.mxu0 0.0
    %8686 = vmatpush1.msra.mxu0 0.0
    %8687 = vmatprep.subr.mxu0 0.0
    %8688 = vmatpush1.msra.mxu0 0.0
    %8689 = vmatprep.subr.mxu0 0.0
    %8690 = vmatpush1.msra.mxu0 0.0
    %8691 = vmatprep.subr.mxu0 0.0
    %8692 = vmatpush1.msra.mxu0 0.0
    %8693 = vmatprep.subr.mxu0 0.0
    %8694 = vmatpush1.msra.mxu0 0.0
    %8695 = vmatprep.subr.mxu0 0.0
    %8696 = vmatpush1.msra.mxu0 0.0
    %8697 = vmatprep.subr.mxu0 0.0
    %8698 = vmatpush1.msra.mxu0 0.0
    %8699 = vmatprep.subr.mxu0 0.0
    %8700 = vmatpush1.msra.mxu0 0.0
    %8701 = vmatprep.subr.mxu0 0.0
    %8702 = vmatpush1.msra.mxu0 0.0
    %8703 = vmatprep.subr.mxu0 0.0
    %8704 = vmatpush1.msra.mxu0 0.0
    %8705 = vmatprep.subr.mxu0 0.0
    %8706 = vmatpush1.msra.mxu0 0.0
    %8707 = vmatprep.subr.mxu0 0.0
    %8708 = vmatpush1.msra.mxu0 0.0
    %8709 = vmatprep.subr.mxu0 0.0
    %8710 = vmatpush1.msra.mxu0 0.0
    %8711 = vmatprep.subr.mxu0 0.0
    %8712 = vmatpush1.msra.mxu0 0.0
    %8713 = vmatprep.subr.mxu0 0.0
    %8714 = vmatpush1.msra.mxu0 0.0
    %8715 = vmatprep.subr.mxu0 0.0
    %8716 = vmatpush1.msra.mxu0 0.0
    %8717 = vmatprep.subr.mxu0 0.0
    %8718 = vmatpush1.msra.mxu0 0.0
    %8719 = vmatprep.subr.mxu0 0.0
    %8720 = vmatpush1.msra.mxu0 0.0
    %8721 = vmatprep.subr.mxu0 0.0
    %8722 = vmatpush1.msra.mxu0 0.0
    %8723 = vmatprep.subr.mxu0 0.0
    %8724 = vmatpush1.msra.mxu0 0.0
    %8725 = vmatprep.subr.mxu0 0.0
    %8726 = vmatpush1.msra.mxu0 0.0
    %8727 = vmatprep.subr.mxu0 0.0
    %8728 = vmatpush1.msra.mxu0 0.0
    %8729 = vmatprep.mubr.f32.mxu0 0.0
    %8730 = vmatmul.mubr.f32.gmra.mrb[0].mxu0 %v8663
    %v8731 = vpop.f32.mrb[0].mxu0
    %v8732 = vadd.f32 %v8660, %v8731
    %v8733 = vpop.f32.mrb[0].mxu0
    %8734 = vdwg.mxu0
    %v8736 = vsel %vm54, %v8650, 0
    %8738 = vmatprep.subr.mxu0 0.0
    %8739 = vmatpush1.msra.mxu0 %v8651
    %8740 = vmatprep.subr.mxu0 0.0
    %8741 = vmatpush1.msra.mxu0 %v8652
    %8742 = vmatprep.subr.mxu0 0.0
    %8743 = vmatpush1.msra.mxu0 %v8653
    %8744 = vmatprep.subr.mxu0 0.0
    %8745 = vmatpush1.msra.mxu0 %v8654
    %8746 = vmatprep.subr.mxu0 0.0
    %8747 = vmatpush1.msra.mxu0 0.0
    %8748 = vmatprep.subr.mxu0 0.0
    %8749 = vmatpush1.msra.mxu0 0.0
    %8750 = vmatprep.subr.mxu0 0.0
    %8751 = vmatpush1.msra.mxu0 0.0
    %8752 = vmatprep.subr.mxu0 0.0
    %8753 = vmatpush1.msra.mxu0 0.0
    %8754 = vmatprep.subr.mxu0 0.0
    %8755 = vmatpush1.msra.mxu0 0.0
    %8756 = vmatprep.subr.mxu0 0.0
    %8757 = vmatpush1.msra.mxu0 0.0
    %8758 = vmatprep.subr.mxu0 0.0
    %8759 = vmatpush1.msra.mxu0 0.0
    %8760 = vmatprep.subr.mxu0 0.0
    %8761 = vmatpush1.msra.mxu0 0.0
    %8762 = vmatprep.subr.mxu0 0.0
    %8763 = vmatpush1.msra.mxu0 0.0
    %8764 = vmatprep.subr.mxu0 0.0
    %8765 = vmatpush1.msra.mxu0 0.0
    %8766 = vmatprep.subr.mxu0 0.0
    %8767 = vmatpush1.msra.mxu0 0.0
    %8768 = vmatprep.subr.mxu0 0.0
    %8769 = vmatpush1.msra.mxu0 0.0
    %8770 = vmatprep.subr.mxu0 0.0
    %8771 = vmatpush1.msra.mxu0 0.0
    %8772 = vmatprep.subr.mxu0 0.0
    %8773 = vmatpush1.msra.mxu0 0.0
    %8774 = vmatprep.subr.mxu0 0.0
    %8775 = vmatpush1.msra.mxu0 0.0
    %8776 = vmatprep.subr.mxu0 0.0
    %8777 = vmatpush1.msra.mxu0 0.0
    %8778 = vmatprep.subr.mxu0 0.0
    %8779 = vmatpush1.msra.mxu0 0.0
    %8780 = vmatprep.subr.mxu0 0.0
    %8781 = vmatpush1.msra.mxu0 0.0
    %8782 = vmatprep.subr.mxu0 0.0
    %8783 = vmatpush1.msra.mxu0 0.0
    %8784 = vmatprep.subr.mxu0 0.0
    %8785 = vmatpush1.msra.mxu0 0.0
    %8786 = vmatprep.subr.mxu0 0.0
    %8787 = vmatpush1.msra.mxu0 0.0
    %8788 = vmatprep.subr.mxu0 0.0
    %8789 = vmatpush1.msra.mxu0 0.0
    %8790 = vmatprep.subr.mxu0 0.0
    %8791 = vmatpush1.msra.mxu0 0.0
    %8792 = vmatprep.subr.mxu0 0.0
    %8793 = vmatpush1.msra.mxu0 0.0
    %8794 = vmatprep.subr.mxu0 0.0
    %8795 = vmatpush1.msra.mxu0 0.0
    %8796 = vmatprep.subr.mxu0 0.0
    %8797 = vmatpush1.msra.mxu0 0.0
    %8798 = vmatprep.subr.mxu0 0.0
    %8799 = vmatpush1.msra.mxu0 0.0
    %8800 = vmatprep.subr.mxu0 0.0
    %8801 = vmatpush1.msra.mxu0 0.0
    %8802 = vmatprep.mubr.f32.mxu0 0.0
    %8803 = vmatmul.mubr.f32.gmra.mrb[0].mxu0 %v8736
    %v8804 = vpop.f32.mrb[0].mxu0
    %v8805 = vadd.f32 %v8660, %v8804
    %v8806 = vpop.f32.mrb[0].mxu0
    %8807 = vdwg.mxu0
    %8808 = vst.msk [vmem:[#allocation2] sm:$0xff] %vm54, %v8732
    %8809 = vst.msk [vmem:[#allocation2 + $0x8] sm:$0xff] %vm54, %v8805
    // Predicated region
    $region50: #{tpu_custom_call.1} parent=1 // pred_check
      _
    $region51: #{tpu_custom_call.1} parent=1 // pred_check_branch
      %8811 = sbr.rel (0) target = $region53
    $region52: #{tpu_custom_call.1} parent=1 // pred_region
      %s8813 = ssub.s32 256, 256
      %8814 = vsyncadd [#allocation3], %s8813
      %s8815 = sshll.u32 [#allocation2], 4
      %s8816 = int_to_ptr.vmem [resolvable:$true] %s8815
      %8821 = dma.vmem_to_hbm [thread:$0]  %s8816, 256, %s12, [#allocation3], 128, 128, 8
    $region53: #{tpu_custom_call.1} parent=1 // pred_fallthru
      _
    // Predicated region
    $region54: #{tpu_custom_call.1} parent=1 // pred_check
      _
    $region55: #{tpu_custom_call.1} parent=1 // pred_check_branch
      %8823 = sbr.rel (0) target = $region57
    $region56: #{tpu_custom_call.1} parent=1 // pred_region
      %8824 = dma.done [#allocation3], 256
    $region57: #{tpu_custom_call.1} parent=1 // pred_fallthru
      _
    %8825 = vsyncpa [#allocation3], 1

</llo_original>
